<compile_context>
chip_gen: v5e
topology: v5e:2x2
jax: 0.10.0
libtpu: 0.0.40
codegen_flags: <defaults>
</compile_context>

<pallas_src>
import functools

import jax
import jax.numpy as jnp
from jax.experimental import pallas as pl
from jax.experimental.pallas import tpu as pltpu

BN_EPS = 1e-5        # PyTorch BatchNorm2d default
_TM = 512            # rows (N*Ho*Wo) per M tile of the tiled conv path
_LANE = 128          # packed Cout is padded to a multiple of this (lane-dense stores)


def _default_vmem_limit():
    # ~3/4 of physical VMEM, capped at 96 MiB -> ~96 MiB on v5e/v6e (128 MiB VMEM),
    # 48 MiB on v7x (64 MiB VMEM).  Falls back to 48 MiB if the query fails.
    try:
        cap = int(pltpu.get_tpu_info().vmem_capacity_bytes)
    except Exception:
        cap = 64 * 1024 * 1024
    return int(min((cap * 3) // 4, 96 * 1024 * 1024))


_VMEM_LIMIT = _default_vmem_limit()
_VMEM = pl.BlockSpec(memory_space=pltpu.MemorySpace.VMEM)


# --------------------------------------------------------------------------
# Pallas kernels
# --------------------------------------------------------------------------
def _conv_bn_fused_kernel(a_ref, b_ref, gamma_ref, beta_ref, o_ref, *, inv_m, post_relu):
    """Single-block path (M <= _TM): bf16 matmul + training-mode BN, fused.
    Optionally fuses the consumer's pre-ReLU; emits bf16."""
    y = jnp.dot(a_ref[...], b_ref[...], preferred_element_type=jnp.float32)
    mean = jnp.sum(y, axis=0, keepdims=True) * inv_m
    var = jnp.maximum(jnp.sum(y * y, axis=0, keepdims=True) * inv_m - mean * mean, 0.0)
    scale = gamma_ref[...] * jax.lax.rsqrt(var + BN_EPS)
    out = y * scale + (beta_ref[...] - mean * scale)
    if post_relu:
        out = jnp.maximum(out, 0.0)
    o_ref[...] = out.astype(o_ref.dtype)


def _matmul_stats_kernel(a_ref, b_ref, y_ref, s1_ref, s2_ref, *, tm, m_true):
    """Tiled pass 1 ("parallel" grid): Y tile = A_tile @ B (bf16 -> f32 acc),
    invalid rows of the last tile masked with an iota row index, per-tile
    partial channel sums written to (1, 8, Cp) blocks (reduced in XLA)."""
    i = pl.program_id(0)
    y = jnp.dot(a_ref[...], b_ref[...], preferred_element_type=jnp.float32)
    row = jax.lax.broadcasted_iota(jnp.int32, y.shape, 0) + i * tm
    y = jnp.where(row < m_true, y, 0.0)             # mask padded rows of last tile
    y_ref[...] = y.astype(y_ref.dtype)              # bf16 intermediate
    s1 = jnp.sum(y, axis=0, keepdims=True)          # (1, Cp)  f32
    s2 = jnp.sum(y * y, axis=0, keepdims=True)
    s1_ref[...] = jnp.broadcast_to(s1[None], s1_ref.shape)
    s2_ref[...] = jnp.broadcast_to(s2[None], s2_ref.shape)


def _bn_apply_kernel(y_ref, s1_ref, s2_ref, gamma_ref, beta_ref, o_ref, *, inv_m, post_relu):
    """Tiled pass 2 ("parallel" grid): apply BN affine from global statistics,
    optionally fuse the consumer's pre-ReLU, emit bf16."""
    mean = s1_ref[...] * inv_m
    var = jnp.maximum(s2_ref[...] * inv_m - mean * mean, 0.0)
    scale = gamma_ref[...] * jax.lax.rsqrt(var + BN_EPS)
    shift = beta_ref[...] - mean * scale
    out = y_ref[...].astype(jnp.float32) * scale + shift
    if post_relu:
        out = jnp.maximum(out, 0.0)
    o_ref[...] = out.astype(o_ref.dtype)


def _gap_linear_kernel(x_ref, w_ref, b_ref, o_ref):
    """Fused global-average-pool (over H*W) + linear head. x: [N, H*W, C] bf16."""
    pooled = jnp.mean(x_ref[...].astype(jnp.float32), axis=1)      # [N, C]
    o_ref[...] = jnp.dot(pooled, w_ref[...],
                         preferred_element_type=jnp.float32) + b_ref[...]


# --------------------------------------------------------------------------
# Conv + BN wrappers
# --------------------------------------------------------------------------
def _im2col_nhwc(x, kh, kw, stride, padding):
    """x: [N, H, W, C] (bf16) -> A: [N*Ho*Wo, kh*kw*C], K ordered (kh, kw, C)."""
    n, h, w, c = x.shape
    if padding:
        x = jnp.pad(x, ((0, 0), (padding, padding), (padding, padding), (0, 0)))
    hp, wp = h + 2 * padding, w + 2 * padding
    ho = (hp - kh) // stride + 1
    wo = (wp - kw) // stride + 1
    if kh == 1 and kw == 1 and padding == 0:        # 1x1: no patch concat needed
        a = x if stride == 1 else x[:, ::stride, ::stride, :]
        return a.reshape(n * ho * wo, c), ho, wo
    cols = []
    for i in range(kh):
        for j in range(kw):
            cols.append(x[:, i:i + (ho - 1) * stride + 1:stride,
                          j:j + (wo - 1) * stride + 1:stride, :])
    a = jnp.concatenate(cols, axis=-1)              # [N, Ho, Wo, kh*kw*C]
    return a.reshape(n * ho * wo, kh * kw * c), ho, wo


def _conv_bn_tiled(a, b, gamma_row, beta_row, post_relu):
    """Two-pass M-tiled Conv(matmul) + BN. Pass 1 is fully 'parallel' (per-tile
    partial stats, v7x megacore friendly); pass 2 applies the global BN affine."""
    m, k = a.shape
    coutp = b.shape[1]
    g = pl.cdiv(m, _TM)

    y, s1p, s2p = pl.pallas_call(
        functools.partial(_matmul_stats_kernel, tm=_TM, m_true=m),
        out_shape=(jax.ShapeDtypeStruct((m, coutp), jnp.bfloat16),
                   jax.ShapeDtypeStruct((g, 8, coutp), jnp.float32),
                   jax.ShapeDtypeStruct((g, 8, coutp), jnp.float32)),
        grid=(g,),
        in_specs=[pl.BlockSpec((_TM, k), lambda i: (i, 0)),
                  pl.BlockSpec((k, coutp), lambda i: (0, 0))],
        out_specs=(pl.BlockSpec((_TM, coutp), lambda i: (i, 0)),
                   pl.BlockSpec((1, 8, coutp), lambda i: (i, 0, 0)),
                   pl.BlockSpec((1, 8, coutp), lambda i: (i, 0, 0))),
        compiler_params=pltpu.CompilerParams(
            dimension_semantics=("parallel",),
            vmem_limit_bytes=_VMEM_LIMIT),
    )(a, b)

    # Tiny reduction of the per-tile partials (G x Cp) -> (1 x Cp) in XLA.
    s1 = jnp.sum(s1p[:, 0, :], axis=0, keepdims=True)
    s2 = jnp.sum(s2p[:, 0, :], axis=0, keepdims=True)

    out = pl.pallas_call(
        functools.partial(_bn_apply_kernel, inv_m=1.0 / m, post_relu=post_relu),
        out_shape=jax.ShapeDtypeStruct((m, coutp), jnp.bfloat16),
        grid=(g,),
        in_specs=[pl.BlockSpec((_TM, coutp), lambda i: (i, 0)),
                  pl.BlockSpec((1, coutp), lambda i: (0, 0)),
                  pl.BlockSpec((1, coutp), lambda i: (0, 0)),
                  pl.BlockSpec((1, coutp), lambda i: (0, 0)),
                  pl.BlockSpec((1, coutp), lambda i: (0, 0))],
        out_specs=pl.BlockSpec((_TM, coutp), lambda i: (i, 0)),
        compiler_params=pltpu.CompilerParams(
            dimension_semantics=("parallel",),
            vmem_limit_bytes=_VMEM_LIMIT),
    )(y, s1, s2, gamma_row, beta_row)
    return out


def relu_conv_bn(x, b_mat, gamma_row, beta_row, *, cout, kh, kw, stride, padding,
                 pre_relu, post_relu):
    """NHWC (optional pre-ReLU) -> Conv2d(bias=False) -> BatchNorm2d (training
    batch stats) -> (optional fused next-layer pre-ReLU).  Returns bf16 NHWC
    with the valid (unpadded) `cout` channels."""
    if x.dtype != jnp.bfloat16:
        x = x.astype(jnp.bfloat16)                  # cast BEFORE im2col (halve A bytes)
    if pre_relu:
        x = jnp.maximum(x, 0)                       # ReLU once, before patch replication
    n = x.shape[0]
    a, ho, wo = _im2col_nhwc(x, kh, kw, stride, padding)
    m = a.shape[0]
    coutp = b_mat.shape[1]                          # lane-padded Cout

    if m <= _TM:                                    # everything fits: one fused call
        y = pl.pallas_call(
            functools.partial(_conv_bn_fused_kernel, inv_m=1.0 / m, post_relu=post_relu),
            out_shape=jax.ShapeDtypeStruct((m, coutp), jnp.bfloat16),
            in_specs=[_VMEM] * 4,
            out_specs=_VMEM,
            compiler_params=pltpu.CompilerParams(vmem_limit_bytes=_VMEM_LIMIT),
        )(a, b_mat, gamma_row, beta_row)
    else:                                           # M-tiled two-pass pipeline
        y = _conv_bn_tiled(a, b_mat, gamma_row, beta_row, post_relu)

    if cout != coutp:
        y = y[:, :cout]                             # drop lane-padding channels
    return y.reshape(n, ho, wo, cout)


def factorized_reduce(x, p, *, input_relued):
    """ReLU -> two 1x1 stride-2 convs (second on x[:, 1:, 1:]) -> concat -> BN.
    BN is per-channel, so it is applied per half (identical semantics).  Both
    halves carry the consumer's pre-ReLU fused (output feeds edge convs only)."""
    if x.dtype != jnp.bfloat16:
        x = x.astype(jnp.bfloat16)
    if not input_relued:
        x = jnp.maximum(x, 0)
    o1 = relu_conv_bn(x, p["b1"], p["gamma1"], p["beta1"], cout=p["half"],
                      kh=1, kw=1, stride=2, padding=0, pre_relu=False, post_relu=True)
    o2 = relu_conv_bn(x[:, 1:, 1:, :], p["b2"], p["gamma2"], p["beta2"], cout=p["half"],
                      kh=1, kw=1, stride=2, padding=0, pre_relu=False, post_relu=True)
    return jnp.concatenate([o1, o2], axis=-1)


# --------------------------------------------------------------------------
# DARTS cell / network (NHWC, bf16 activations)
# --------------------------------------------------------------------------
def darts_cell(s0_in, s1_in, cell, n_nodes):
    (x0, r0), (x1, r1) = s0_in, s1_in               # (tensor, already-ReLU'd flag)
    if cell["p_reduction"]:
        s0 = factorized_reduce(x0, cell["pre0"], input_relued=r0)
    else:
        p = cell["pre0"]
        s0 = relu_conv_bn(x0, p["b"], p["gamma"], p["beta"], cout=p["cout"],
                          kh=1, kw=1, stride=1, padding=0,
                          pre_relu=not r0, post_relu=True)
    p = cell["pre1"]
    s1 = relu_conv_bn(x1, p["b"], p["gamma"], p["beta"], cout=p["cout"],
                      kh=1, kw=1, stride=1, padding=0,
                      pre_relu=not r1, post_relu=True)

    cur = cell["cur"]
    states = [(s0, True), (s1, True)]               # preprocessing fused the ReLU
    node_out = [None] * n_nodes
    # One SOURCE state at a time: all outgoing 3x3 edges are batched along Cout
    # into a single matmul (BN is per output channel, so per-edge BN statistics
    # are preserved exactly by this fusion).
    for j in range(n_nodes + 1):
        if j >= 2:
            states.append((node_out[j - 2], False))  # node j-2 finalized, not ReLU'd
        h, relued = states[j]
        stride = 2 if (cell["reduction"] and j < 2) else 1
        sp = cell["src"][j]
        y = relu_conv_bn(h, sp["b"], sp["gamma"], sp["beta"], cout=sp["cout"],
                         kh=3, kw=3, stride=stride, padding=1,
                         pre_relu=not relued, post_relu=False)
        t0 = max(j - 1, 0)
        for i in range(sp["n_out"]):
            chunk = y[..., i * cur:(i + 1) * cur]
            t = t0 + i
            node_out[t] = chunk if node_out[t] is None else node_out[t] + chunk
        # TODO(synk): DropPath is identity here (p = 0 default).
    return jnp.concatenate(node_out, axis=-1)


def darts_stacked_cells_forward(params, x, n_nodes):
    # Accept NCHW (PyTorch convention); convert + cast ONCE for the whole net.
    x = jnp.transpose(x, (0, 2, 3, 1)).astype(jnp.bfloat16)
    st = params["stem"]
    s = relu_conv_bn(x, st["b"], st["gamma"], st["beta"], cout=st["cout"],
                     kh=3, kw=3, stride=1, padding=1,
                     pre_relu=False, post_relu=True)     # all consumers ReLU the stem
    s0 = (s, True)
    s1 = (s, True)
    for cell in params["cells"]:
        new = darts_cell(s0, s1, cell, n_nodes)
        s0, s1 = s1, (new, False)

    xt = s1[0]
    n, h, w, c = xt.shape
    xf = xt.reshape(n, h * w, c)
    n_classes = params["linear_wt"].shape[1]
    out = pl.pallas_call(
        _gap_linear_kernel,
        out_shape=jax.ShapeDtypeStruct((n, n_classes), jnp.float32),
        in_specs=[_VMEM] * 3,
        out_specs=_VMEM,
        compiler_params=pltpu.CompilerParams(vmem_limit_bytes=_VMEM_LIMIT),
    )(xf, params["linear_wt"], params["linear_b"])
    return out


# --------------------------------------------------------------------------
# Deterministic parameter init (mirrors the PyTorch __init__ channel bookkeeping).
# Weights are pre-packed [K, Cout_pad] bf16 matmul operands (Cout padded to a
# multiple of 128 lanes), per-source batched 3x3 edge weights, transposed linear
# weight, (1, Cout_pad) gamma/beta rows.
# --------------------------------------------------------------------------
def init_params(key, in_channels, channels, n_classes, n_layers,
                n_nodes=4, stem_multiplier=2):
    keys = iter(jax.random.split(key, 4096))

    def nrm(shape, scale=0.1):
        return scale * jax.random.normal(next(keys), shape, jnp.float32)

    def pack(w):  # [Cout, Cin, kh, kw] -> [kh*kw*Cin, Cout] bf16, K ordered (kh, kw, Cin)
        cout, cin, kh, kw = w.shape
        return jnp.transpose(w, (2, 3, 1, 0)).reshape(kh * kw * cin, cout).astype(jnp.bfloat16)

    def pad_cout(b):  # pad packed weight to a lane-dense Cout (multiple of 128)
        k, c = b.shape
        cp = ((c + _LANE - 1) // _LANE) * _LANE
        return b if cp == c else jnp.pad(b, ((0, 0), (0, cp - c)))

    def bn_rows(cp):
        return jnp.ones((1, cp), jnp.float32), jnp.zeros((1, cp), jnp.float32)

    def conv_bn_p(cin, cout, k):
        b = pad_cout(pack(nrm((cout, cin, k, k))))
        g, be = bn_rows(b.shape[1])
        return dict(b=b, gamma=g, beta=be, cout=cout)

    def fr_p(cin, cout):
        half = cout // 2
        b1 = pad_cout(pack(nrm((half, cin, 1, 1))))
        b2 = pad_cout(pack(nrm((half, cin, 1, 1))))
        g1, be1 = bn_rows(b1.shape[1])
        g2, be2 = bn_rows(b2.shape[1])
        return dict(b1=b1, b2=b2, gamma1=g1, beta1=be1, gamma2=g2, beta2=be2, half=half)

    def src_p(cur, n_out):
        # One Cout-batched weight for all `n_out` outgoing 3x3 edges of a source state.
        b = jnp.concatenate([pack(nrm((cur, cur, 3, 3))) for _ in range(n_out)], axis=1)
        b = pad_cout(b)
        g, be = bn_rows(b.shape[1])
        return dict(b=b, gamma=g, beta=be, cout=cur * n_out, n_out=n_out)

    params = {}
    cur = stem_multiplier * channels
    params["stem"] = conv_bn_p(in_channels, cur, 3)

    pp, p, cur = cur, cur, channels
    cells = []
    p_red, red = False, False
    for i in range(n_layers):
        p_red, red = red, False
        if i in [n_layers // 3, 2 * n_layers // 3]:
            cur *= 2
            red = True
        cell = dict(reduction=red, p_reduction=p_red, cur=cur)
        cell["pre0"] = fr_p(pp, cur) if p_red else conv_bn_p(pp, cur, 1)
        cell["pre1"] = conv_bn_p(p, cur, 1)
        cell["src"] = [src_p(cur, n_nodes - max(j - 1, 0)) for j in range(n_nodes + 1)]
        cells.append(cell)
        pp, p = p, cur * n_nodes
    params["cells"] = cells

    params["linear_wt"] = nrm((n_classes, p)).T                 # pre-transposed [p, n_classes]
    params["linear_b"] = jnp.zeros((1, n_classes), jnp.float32)
    return params


# --------------------------------------------------------------------------
if __name__ == "__main__":
    in_channels, channels, n_classes = 3, 4, 10
    n_layers, n_nodes, stem_multiplier = 3, 2, 2

    key = jax.random.PRNGKey(0)
    k_param, k_x = jax.random.split(key)
    params = init_params(k_param, in_channels, channels, n_classes,
                         n_layers, n_nodes, stem_multiplier)

    # Spatial 20 exercises both the M-tiled (masked last tile) and fused conv paths.
    x = jax.random.normal(k_x, (2, in_channels, 20, 20), jnp.float32)

    fwd = jax.jit(functools.partial(darts_stacked_cells_forward, params, n_nodes=n_nodes))
    out = jax.block_until_ready(fwd(x))
    assert out.shape == (2, n_classes), out.shape
    assert bool(jnp.all(jnp.isfinite(out))), "non-finite output"
    print("KERNEL_OK")
</pallas_src>

<mosaic_0001>
module attributes {stable_mosaic.version = 11 : i64} {
  func.func @_matmul_stats_kernel(%arg0: i32, %arg1: memref<512x27xbf16, #tpu.memory_space<vmem>>, %arg2: memref<27x128xbf16, #tpu.memory_space<vmem>>, %arg3: memref<512x128xbf16, #tpu.memory_space<vmem>>, %arg4: memref<1x8x128xf32, #tpu.memory_space<vmem>>, %arg5: memref<1x8x128xf32, #tpu.memory_space<vmem>>) attributes {dimension_semantics = [#tpu.dimension_semantics<parallel>], iteration_bounds = array<i64: 2>, scalar_prefetch = 0 : i64, scratch_operands = 0 : i64, tpu.core_type = #tpu.core_type<tc>, window_params = [{transform_indices = @transform_0, window_bounds = array<i64: 512, 27>}, {pipeline_mode = #tpu.pipeline_mode<synchronous>, transform_indices = @transform_1, window_bounds = array<i64: 27, 128>}, {transform_indices = @transform_2, window_bounds = array<i64: 512, 128>}, {transform_indices = @transform_3, window_bounds = array<i64: 1, 8, 128>}, {transform_indices = @transform_4, window_bounds = array<i64: 1, 8, 128>}]} {
    %c0 = arith.constant 0 : index
    %c0_0 = arith.constant 0 : index
    %0 = vector.load %arg1[%c0, %c0_0] : memref<512x27xbf16, #tpu.memory_space<vmem>>, vector<512x27xbf16>
    %c0_1 = arith.constant 0 : index
    %c0_2 = arith.constant 0 : index
    %1 = vector.load %arg2[%c0_1, %c0_2] : memref<27x128xbf16, #tpu.memory_space<vmem>>, vector<27x128xbf16>
    %cst = arith.constant dense<0.000000e+00> : vector<512x128xf32>
    %2 = tpu.matmul %0, %1, %cst {dimension_numbers = #tpu.dot_dimension_numbers<[1], [0], [0], [1], [0, 0, 1, 1], [], []>} : vector<512x27xbf16>, vector<27x128xbf16>, vector<512x128xf32> -> vector<512x128xf32>
    %3 = tpu.iota {dimensions = array<i32: 0>} : vector<512x128xi32>
    %c512_i32 = arith.constant 512 : i32
    %4 = arith.muli %arg0, %c512_i32 : i32
    %5 = vector.broadcast %4 : i32 to vector<512x128xi32>
    %6 = arith.addi %3, %5 : vector<512x128xi32>
    %c800_i32 = arith.constant 800 : i32
    %7 = vector.broadcast %c800_i32 : i32 to vector<512x128xi32>
    %8 = arith.cmpi slt, %6, %7 : vector<512x128xi32>
    %cst_3 = arith.constant 0.000000e+00 : f32
    %9 = vector.broadcast %cst_3 : f32 to vector<512x128xf32>
    %10 = arith.select %8, %2, %9 : vector<512x128xi1>, vector<512x128xf32>
    %11 = arith.truncf %10 : vector<512x128xf32> to vector<512x128xbf16>
    %c0_4 = arith.constant 0 : index
    %c0_5 = arith.constant 0 : index
    %12 = vector.load %arg3[%c0_4, %c0_5] : memref<512x128xbf16, #tpu.memory_space<vmem>>, vector<512x128xbf16>
    tpu.vector_store %arg3[%c0_4, %c0_5], %11 {strides = array<i32>} : memref<512x128xbf16, #tpu.memory_space<vmem>>, vector<512x128xbf16>,
    %cst_6 = arith.constant dense<0.000000e+00> : vector<128xf32>
    %13 = vector.multi_reduction <add>, %10, %cst_6 [0] : vector<512x128xf32> to vector<128xf32>
    %14 = vector.shape_cast %13 : vector<128xf32> to vector<1x128xf32>
    %15 = arith.mulf %10, %10 : vector<512x128xf32>
    %cst_7 = arith.constant dense<0.000000e+00> : vector<128xf32>
    %16 = vector.multi_reduction <add>, %15, %cst_7 [0] : vector<512x128xf32> to vector<128xf32>
    %17 = vector.shape_cast %16 : vector<128xf32> to vector<1x128xf32>
    %18 = vector.shape_cast %14 : vector<1x128xf32> to vector<1x1x128xf32>
    %19 = vector.shape_cast %18 : vector<1x1x128xf32> to vector<1x1x128xf32>
    %20 = vector.broadcast %19 : vector<1x1x128xf32> to vector<1x8x128xf32>
    %c0_8 = arith.constant 0 : index
    %c0_9 = arith.constant 0 : index
    %c0_10 = arith.constant 0 : index
    %21 = vector.load %arg4[%c0_8, %c0_9, %c0_10] : memref<1x8x128xf32, #tpu.memory_space<vmem>>, vector<1x8x128xf32>
    tpu.vector_store %arg4[%c0_8, %c0_9, %c0_10], %20 {strides = array<i32>} : memref<1x8x128xf32, #tpu.memory_space<vmem>>, vector<1x8x128xf32>,
    %22 = vector.shape_cast %17 : vector<1x128xf32> to vector<1x1x128xf32>
    %23 = vector.shape_cast %22 : vector<1x1x128xf32> to vector<1x1x128xf32>
    %24 = vector.broadcast %23 : vector<1x1x128xf32> to vector<1x8x128xf32>
    %c0_11 = arith.constant 0 : index
    %c0_12 = arith.constant 0 : index
    %c0_13 = arith.constant 0 : index
    %25 = vector.load %arg5[%c0_11, %c0_12, %c0_13] : memref<1x8x128xf32, #tpu.memory_space<vmem>>, vector<1x8x128xf32>
    tpu.vector_store %arg5[%c0_11, %c0_12, %c0_13], %24 {strides = array<i32>} : memref<1x8x128xf32, #tpu.memory_space<vmem>>, vector<1x8x128xf32>,
    return
  }
  func.func @transform_0(%arg0: i32) -> (i32, i32) {
    %c0_i32 = arith.constant 0 : i32
    %c0_i32_0 = arith.constant 0 : i32
    return %arg0, %c0_i32 : i32, i32
  }
  func.func @transform_1(%arg0: i32) -> (i32, i32) {
    %c0_i32 = arith.constant 0 : i32
    %c0_i32_0 = arith.constant 0 : i32
    %c0_i32_1 = arith.constant 0 : i32
    return %c0_i32, %c0_i32_0 : i32, i32
  }
  func.func @transform_2(%arg0: i32) -> (i32, i32) {
    %c0_i32 = arith.constant 0 : i32
    %c0_i32_0 = arith.constant 0 : i32
    return %arg0, %c0_i32 : i32, i32
  }
  func.func @transform_3(%arg0: i32) -> (i32, i32, i32) {
    %c0_i32 = arith.constant 0 : i32
    %c0_i32_0 = arith.constant 0 : i32
    %c0_i32_1 = arith.constant 0 : i32
    return %arg0, %c0_i32, %c0_i32_0 : i32, i32, i32
  }
  func.func @transform_4(%arg0: i32) -> (i32, i32, i32) {
    %c0_i32 = arith.constant 0 : i32
    %c0_i32_0 = arith.constant 0 : i32
    %c0_i32_1 = arith.constant 0 : i32
    return %arg0, %c0_i32, %c0_i32_0 : i32, i32, i32
  }
}

module attributes {stable_mosaic.version = 11 : i64} {
  func.func @_bn_apply_kernel(%arg0: i32, %arg1: memref<512x128xbf16, #tpu.memory_space<vmem>>, %arg2: memref<1x128xf32, #tpu.memory_space<vmem>>, %arg3: memref<1x128xf32, #tpu.memory_space<vmem>>, %arg4: memref<1x128xf32, #tpu.memory_space<vmem>>, %arg5: memref<1x128xf32, #tpu.memory_space<vmem>>, %arg6: memref<512x128xbf16, #tpu.memory_space<vmem>>) attributes {dimension_semantics = [#tpu.dimension_semantics<parallel>], iteration_bounds = array<i64: 2>, scalar_prefetch = 0 : i64, scratch_operands = 0 : i64, tpu.core_type = #tpu.core_type<tc>, window_params = [{transform_indices = @transform_0, window_bounds = array<i64: 512, 128>}, {pipeline_mode = #tpu.pipeline_mode<synchronous>, transform_indices = @transform_1, window_bounds = array<i64: 1, 128>}, {pipeline_mode = #tpu.pipeline_mode<synchronous>, transform_indices = @transform_2, window_bounds = array<i64: 1, 128>}, {pipeline_mode = #tpu.pipeline_mode<synchronous>, transform_indices = @transform_3, window_bounds = array<i64: 1, 128>}, {pipeline_mode = #tpu.pipeline_mode<synchronous>, transform_indices = @transform_4, window_bounds = array<i64: 1, 128>}, {transform_indices = @transform_5, window_bounds = array<i64: 512, 128>}]} {
    %c0 = arith.constant 0 : index
    %c0_0 = arith.constant 0 : index
    %0 = vector.load %arg2[%c0, %c0_0] : memref<1x128xf32, #tpu.memory_space<vmem>>, vector<1x128xf32>
    %cst = arith.constant 1.250000e-03 : f32
    %1 = vector.broadcast %cst : f32 to vector<1x128xf32>
    %2 = arith.mulf %0, %1 : vector<1x128xf32>
    %c0_1 = arith.constant 0 : index
    %c0_2 = arith.constant 0 : index
    %3 = vector.load %arg3[%c0_1, %c0_2] : memref<1x128xf32, #tpu.memory_space<vmem>>, vector<1x128xf32>
    %cst_3 = arith.constant 1.250000e-03 : f32
    %4 = vector.broadcast %cst_3 : f32 to vector<1x128xf32>
    %5 = arith.mulf %3, %4 : vector<1x128xf32>
    %6 = arith.mulf %2, %2 : vector<1x128xf32>
    %7 = arith.subf %5, %6 : vector<1x128xf32>
    %cst_4 = arith.constant 0.000000e+00 : f32
    %8 = vector.broadcast %cst_4 : f32 to vector<1x128xf32>
    %9 = arith.maximumf %7, %8 : vector<1x128xf32>
    %c0_5 = arith.constant 0 : index
    %c0_6 = arith.constant 0 : index
    %10 = vector.load %arg4[%c0_5, %c0_6] : memref<1x128xf32, #tpu.memory_space<vmem>>, vector<1x128xf32>
    %cst_7 = arith.constant 9.99999974E-6 : f32
    %11 = vector.broadcast %cst_7 : f32 to vector<1x128xf32>
    %12 = arith.addf %9, %11 : vector<1x128xf32>
    %13 = math.rsqrt %12 : vector<1x128xf32>
    %14 = arith.mulf %10, %13 : vector<1x128xf32>
    %c0_8 = arith.constant 0 : index
    %c0_9 = arith.constant 0 : index
    %15 = vector.load %arg5[%c0_8, %c0_9] : memref<1x128xf32, #tpu.memory_space<vmem>>, vector<1x128xf32>
    %16 = arith.mulf %2, %14 : vector<1x128xf32>
    %17 = arith.subf %15, %16 : vector<1x128xf32>
    %c0_10 = arith.constant 0 : index
    %c0_11 = arith.constant 0 : index
    %18 = vector.load %arg1[%c0_10, %c0_11] : memref<512x128xbf16, #tpu.memory_space<vmem>>, vector<512x128xbf16>
    %19 = arith.extf %18 : vector<512x128xbf16> to vector<512x128xf32>
    %20 = vector.broadcast %14 : vector<1x128xf32> to vector<512x128xf32>
    %21 = arith.mulf %19, %20 : vector<512x128xf32>
    %22 = vector.broadcast %17 : vector<1x128xf32> to vector<512x128xf32>
    %23 = arith.addf %21, %22 : vector<512x128xf32>
    %cst_12 = arith.constant 0.000000e+00 : f32
    %24 = vector.broadcast %cst_12 : f32 to vector<512x128xf32>
    %25 = arith.maximumf %23, %24 : vector<512x128xf32>
    %26 = arith.truncf %25 : vector<512x128xf32> to vector<512x128xbf16>
    %c0_13 = arith.constant 0 : index
    %c0_14 = arith.constant 0 : index
    %27 = vector.load %arg6[%c0_13, %c0_14] : memref<512x128xbf16, #tpu.memory_space<vmem>>, vector<512x128xbf16>
    tpu.vector_store %arg6[%c0_13, %c0_14], %26 {strides = array<i32>} : memref<512x128xbf16, #tpu.memory_space<vmem>>, vector<512x128xbf16>,
    return
  }
  func.func @transform_0(%arg0: i32) -> (i32, i32) {
    %c0_i32 = arith.constant 0 : i32
    %c0_i32_0 = arith.constant 0 : i32
    return %arg0, %c0_i32 : i32, i32
  }
  func.func @transform_1(%arg0: i32) -> (i32, i32) {
    %c0_i32 = arith.constant 0 : i32
    %c0_i32_0 = arith.constant 0 : i32
    %c0_i32_1 = arith.constant 0 : i32
    return %c0_i32, %c0_i32_0 : i32, i32
  }
  func.func @transform_2(%arg0: i32) -> (i32, i32) {
    %c0_i32 = arith.constant 0 : i32
    %c0_i32_0 = arith.constant 0 : i32
    %c0_i32_1 = arith.constant 0 : i32
    return %c0_i32, %c0_i32_0 : i32, i32
  }
  func.func @transform_3(%arg0: i32) -> (i32, i32) {
    %c0_i32 = arith.constant 0 : i32
    %c0_i32_0 = arith.constant 0 : i32
    %c0_i32_1 = arith.constant 0 : i32
    return %c0_i32, %c0_i32_0 : i32, i32
  }
  func.func @transform_4(%arg0: i32) -> (i32, i32) {
    %c0_i32 = arith.constant 0 : i32
    %c0_i32_0 = arith.constant 0 : i32
    %c0_i32_1 = arith.constant 0 : i32
    return %c0_i32, %c0_i32_0 : i32, i32
  }
  func.func @transform_5(%arg0: i32) -> (i32, i32) {
    %c0_i32 = arith.constant 0 : i32
    %c0_i32_0 = arith.constant 0 : i32
    return %arg0, %c0_i32 : i32, i32
  }
}

module attributes {stable_mosaic.version = 11 : i64} {
  func.func @_matmul_stats_kernel(%arg0: i32, %arg1: memref<512x8xbf16, #tpu.memory_space<vmem>>, %arg2: memref<8x128xbf16, #tpu.memory_space<vmem>>, %arg3: memref<512x128xbf16, #tpu.memory_space<vmem>>, %arg4: memref<1x8x128xf32, #tpu.memory_space<vmem>>, %arg5: memref<1x8x128xf32, #tpu.memory_space<vmem>>) attributes {dimension_semantics = [#tpu.dimension_semantics<parallel>], iteration_bounds = array<i64: 2>, scalar_prefetch = 0 : i64, scratch_operands = 0 : i64, tpu.core_type = #tpu.core_type<tc>, window_params = [{transform_indices = @transform_0, window_bounds = array<i64: 512, 8>}, {pipeline_mode = #tpu.pipeline_mode<synchronous>, transform_indices = @transform_1, window_bounds = array<i64: 8, 128>}, {transform_indices = @transform_2, window_bounds = array<i64: 512, 128>}, {transform_indices = @transform_3, window_bounds = array<i64: 1, 8, 128>}, {transform_indices = @transform_4, window_bounds = array<i64: 1, 8, 128>}]} {
    %c0 = arith.constant 0 : index
    %c0_0 = arith.constant 0 : index
    %0 = vector.load %arg1[%c0, %c0_0] : memref<512x8xbf16, #tpu.memory_space<vmem>>, vector<512x8xbf16>
    %c0_1 = arith.constant 0 : index
    %c0_2 = arith.constant 0 : index
    %1 = vector.load %arg2[%c0_1, %c0_2] : memref<8x128xbf16, #tpu.memory_space<vmem>>, vector<8x128xbf16>
    %cst = arith.constant dense<0.000000e+00> : vector<512x128xf32>
    %2 = tpu.matmul %0, %1, %cst {dimension_numbers = #tpu.dot_dimension_numbers<[1], [0], [0], [1], [0, 0, 1, 1], [], []>} : vector<512x8xbf16>, vector<8x128xbf16>, vector<512x128xf32> -> vector<512x128xf32>
    %3 = tpu.iota {dimensions = array<i32: 0>} : vector<512x128xi32>
    %c512_i32 = arith.constant 512 : i32
    %4 = arith.muli %arg0, %c512_i32 : i32
    %5 = vector.broadcast %4 : i32 to vector<512x128xi32>
    %6 = arith.addi %3, %5 : vector<512x128xi32>
    %c800_i32 = arith.constant 800 : i32
    %7 = vector.broadcast %c800_i32 : i32 to vector<512x128xi32>
    %8 = arith.cmpi slt, %6, %7 : vector<512x128xi32>
    %cst_3 = arith.constant 0.000000e+00 : f32
    %9 = vector.broadcast %cst_3 : f32 to vector<512x128xf32>
    %10 = arith.select %8, %2, %9 : vector<512x128xi1>, vector<512x128xf32>
    %11 = arith.truncf %10 : vector<512x128xf32> to vector<512x128xbf16>
    %c0_4 = arith.constant 0 : index
    %c0_5 = arith.constant 0 : index
    %12 = vector.load %arg3[%c0_4, %c0_5] : memref<512x128xbf16, #tpu.memory_space<vmem>>, vector<512x128xbf16>
    tpu.vector_store %arg3[%c0_4, %c0_5], %11 {strides = array<i32>} : memref<512x128xbf16, #tpu.memory_space<vmem>>, vector<512x128xbf16>,
    %cst_6 = arith.constant dense<0.000000e+00> : vector<128xf32>
    %13 = vector.multi_reduction <add>, %10, %cst_6 [0] : vector<512x128xf32> to vector<128xf32>
    %14 = vector.shape_cast %13 : vector<128xf32> to vector<1x128xf32>
    %15 = arith.mulf %10, %10 : vector<512x128xf32>
    %cst_7 = arith.constant dense<0.000000e+00> : vector<128xf32>
    %16 = vector.multi_reduction <add>, %15, %cst_7 [0] : vector<512x128xf32> to vector<128xf32>
    %17 = vector.shape_cast %16 : vector<128xf32> to vector<1x128xf32>
    %18 = vector.shape_cast %14 : vector<1x128xf32> to vector<1x1x128xf32>
    %19 = vector.shape_cast %18 : vector<1x1x128xf32> to vector<1x1x128xf32>
    %20 = vector.broadcast %19 : vector<1x1x128xf32> to vector<1x8x128xf32>
    %c0_8 = arith.constant 0 : index
    %c0_9 = arith.constant 0 : index
    %c0_10 = arith.constant 0 : index
    %21 = vector.load %arg4[%c0_8, %c0_9, %c0_10] : memref<1x8x128xf32, #tpu.memory_space<vmem>>, vector<1x8x128xf32>
    tpu.vector_store %arg4[%c0_8, %c0_9, %c0_10], %20 {strides = array<i32>} : memref<1x8x128xf32, #tpu.memory_space<vmem>>, vector<1x8x128xf32>,
    %22 = vector.shape_cast %17 : vector<1x128xf32> to vector<1x1x128xf32>
    %23 = vector.shape_cast %22 : vector<1x1x128xf32> to vector<1x1x128xf32>
    %24 = vector.broadcast %23 : vector<1x1x128xf32> to vector<1x8x128xf32>
    %c0_11 = arith.constant 0 : index
    %c0_12 = arith.constant 0 : index
    %c0_13 = arith.constant 0 : index
    %25 = vector.load %arg5[%c0_11, %c0_12, %c0_13] : memref<1x8x128xf32, #tpu.memory_space<vmem>>, vector<1x8x128xf32>
    tpu.vector_store %arg5[%c0_11, %c0_12, %c0_13], %24 {strides = array<i32>} : memref<1x8x128xf32, #tpu.memory_space<vmem>>, vector<1x8x128xf32>,
    return
  }
  func.func @transform_0(%arg0: i32) -> (i32, i32) {
    %c0_i32 = arith.constant 0 : i32
    %c0_i32_0 = arith.constant 0 : i32
    return %arg0, %c0_i32 : i32, i32
  }
  func.func @transform_1(%arg0: i32) -> (i32, i32) {
    %c0_i32 = arith.constant 0 : i32
    %c0_i32_0 = arith.constant 0 : i32
    %c0_i32_1 = arith.constant 0 : i32
    return %c0_i32, %c0_i32_0 : i32, i32
  }
  func.func @transform_2(%arg0: i32) -> (i32, i32) {
    %c0_i32 = arith.constant 0 : i32
    %c0_i32_0 = arith.constant 0 : i32
    return %arg0, %c0_i32 : i32, i32
  }
  func.func @transform_3(%arg0: i32) -> (i32, i32, i32) {
    %c0_i32 = arith.constant 0 : i32
    %c0_i32_0 = arith.constant 0 : i32
    %c0_i32_1 = arith.constant 0 : i32
    return %arg0, %c0_i32, %c0_i32_0 : i32, i32, i32
  }
  func.func @transform_4(%arg0: i32) -> (i32, i32, i32) {
    %c0_i32 = arith.constant 0 : i32
    %c0_i32_0 = arith.constant 0 : i32
    %c0_i32_1 = arith.constant 0 : i32
    return %arg0, %c0_i32, %c0_i32_0 : i32, i32, i32
  }
}

module attributes {stable_mosaic.version = 11 : i64} {
  func.func @_matmul_stats_kernel(%arg0: i32, %arg1: memref<512x36xbf16, #tpu.memory_space<vmem>>, %arg2: memref<36x128xbf16, #tpu.memory_space<vmem>>, %arg3: memref<512x128xbf16, #tpu.memory_space<vmem>>, %arg4: memref<1x8x128xf32, #tpu.memory_space<vmem>>, %arg5: memref<1x8x128xf32, #tpu.memory_space<vmem>>) attributes {dimension_semantics = [#tpu.dimension_semantics<parallel>], iteration_bounds = array<i64: 2>, scalar_prefetch = 0 : i64, scratch_operands = 0 : i64, tpu.core_type = #tpu.core_type<tc>, window_params = [{transform_indices = @transform_0, window_bounds = array<i64: 512, 36>}, {pipeline_mode = #tpu.pipeline_mode<synchronous>, transform_indices = @transform_1, window_bounds = array<i64: 36, 128>}, {transform_indices = @transform_2, window_bounds = array<i64: 512, 128>}, {transform_indices = @transform_3, window_bounds = array<i64: 1, 8, 128>}, {transform_indices = @transform_4, window_bounds = array<i64: 1, 8, 128>}]} {
    %c0 = arith.constant 0 : index
    %c0_0 = arith.constant 0 : index
    %0 = vector.load %arg1[%c0, %c0_0] : memref<512x36xbf16, #tpu.memory_space<vmem>>, vector<512x36xbf16>
    %c0_1 = arith.constant 0 : index
    %c0_2 = arith.constant 0 : index
    %1 = vector.load %arg2[%c0_1, %c0_2] : memref<36x128xbf16, #tpu.memory_space<vmem>>, vector<36x128xbf16>
    %cst = arith.constant dense<0.000000e+00> : vector<512x128xf32>
    %2 = tpu.matmul %0, %1, %cst {dimension_numbers = #tpu.dot_dimension_numbers<[1], [0], [0], [1], [0, 0, 1, 1], [], []>} : vector<512x36xbf16>, vector<36x128xbf16>, vector<512x128xf32> -> vector<512x128xf32>
    %3 = tpu.iota {dimensions = array<i32: 0>} : vector<512x128xi32>
    %c512_i32 = arith.constant 512 : i32
    %4 = arith.muli %arg0, %c512_i32 : i32
    %5 = vector.broadcast %4 : i32 to vector<512x128xi32>
    %6 = arith.addi %3, %5 : vector<512x128xi32>
    %c800_i32 = arith.constant 800 : i32
    %7 = vector.broadcast %c800_i32 : i32 to vector<512x128xi32>
    %8 = arith.cmpi slt, %6, %7 : vector<512x128xi32>
    %cst_3 = arith.constant 0.000000e+00 : f32
    %9 = vector.broadcast %cst_3 : f32 to vector<512x128xf32>
    %10 = arith.select %8, %2, %9 : vector<512x128xi1>, vector<512x128xf32>
    %11 = arith.truncf %10 : vector<512x128xf32> to vector<512x128xbf16>
    %c0_4 = arith.constant 0 : index
    %c0_5 = arith.constant 0 : index
    %12 = vector.load %arg3[%c0_4, %c0_5] : memref<512x128xbf16, #tpu.memory_space<vmem>>, vector<512x128xbf16>
    tpu.vector_store %arg3[%c0_4, %c0_5], %11 {strides = array<i32>} : memref<512x128xbf16, #tpu.memory_space<vmem>>, vector<512x128xbf16>,
    %cst_6 = arith.constant dense<0.000000e+00> : vector<128xf32>
    %13 = vector.multi_reduction <add>, %10, %cst_6 [0] : vector<512x128xf32> to vector<128xf32>
    %14 = vector.shape_cast %13 : vector<128xf32> to vector<1x128xf32>
    %15 = arith.mulf %10, %10 : vector<512x128xf32>
    %cst_7 = arith.constant dense<0.000000e+00> : vector<128xf32>
    %16 = vector.multi_reduction <add>, %15, %cst_7 [0] : vector<512x128xf32> to vector<128xf32>
    %17 = vector.shape_cast %16 : vector<128xf32> to vector<1x128xf32>
    %18 = vector.shape_cast %14 : vector<1x128xf32> to vector<1x1x128xf32>
    %19 = vector.shape_cast %18 : vector<1x1x128xf32> to vector<1x1x128xf32>
    %20 = vector.broadcast %19 : vector<1x1x128xf32> to vector<1x8x128xf32>
    %c0_8 = arith.constant 0 : index
    %c0_9 = arith.constant 0 : index
    %c0_10 = arith.constant 0 : index
    %21 = vector.load %arg4[%c0_8, %c0_9, %c0_10] : memref<1x8x128xf32, #tpu.memory_space<vmem>>, vector<1x8x128xf32>
    tpu.vector_store %arg4[%c0_8, %c0_9, %c0_10], %20 {strides = array<i32>} : memref<1x8x128xf32, #tpu.memory_space<vmem>>, vector<1x8x128xf32>,
    %22 = vector.shape_cast %17 : vector<1x128xf32> to vector<1x1x128xf32>
    %23 = vector.shape_cast %22 : vector<1x1x128xf32> to vector<1x1x128xf32>
    %24 = vector.broadcast %23 : vector<1x1x128xf32> to vector<1x8x128xf32>
    %c0_11 = arith.constant 0 : index
    %c0_12 = arith.constant 0 : index
    %c0_13 = arith.constant 0 : index
    %25 = vector.load %arg5[%c0_11, %c0_12, %c0_13] : memref<1x8x128xf32, #tpu.memory_space<vmem>>, vector<1x8x128xf32>
    tpu.vector_store %arg5[%c0_11, %c0_12, %c0_13], %24 {strides = array<i32>} : memref<1x8x128xf32, #tpu.memory_space<vmem>>, vector<1x8x128xf32>,
    return
  }
  func.func @transform_0(%arg0: i32) -> (i32, i32) {
    %c0_i32 = arith.constant 0 : i32
    %c0_i32_0 = arith.constant 0 : i32
    return %arg0, %c0_i32 : i32, i32
  }
  func.func @transform_1(%arg0: i32) -> (i32, i32) {
    %c0_i32 = arith.constant 0 : i32
    %c0_i32_0 = arith.constant 0 : i32
    %c0_i32_1 = arith.constant 0 : i32
    return %c0_i32, %c0_i32_0 : i32, i32
  }
  func.func @transform_2(%arg0: i32) -> (i32, i32) {
    %c0_i32 = arith.constant 0 : i32
    %c0_i32_0 = arith.constant 0 : i32
    return %arg0, %c0_i32 : i32, i32
  }
  func.func @transform_3(%arg0: i32) -> (i32, i32, i32) {
    %c0_i32 = arith.constant 0 : i32
    %c0_i32_0 = arith.constant 0 : i32
    %c0_i32_1 = arith.constant 0 : i32
    return %arg0, %c0_i32, %c0_i32_0 : i32, i32, i32
  }
  func.func @transform_4(%arg0: i32) -> (i32, i32, i32) {
    %c0_i32 = arith.constant 0 : i32
    %c0_i32_0 = arith.constant 0 : i32
    %c0_i32_1 = arith.constant 0 : i32
    return %arg0, %c0_i32, %c0_i32_0 : i32, i32, i32
  }
}

module attributes {stable_mosaic.version = 11 : i64} {
  func.func @_bn_apply_kernel(%arg0: i32, %arg1: memref<512x128xbf16, #tpu.memory_space<vmem>>, %arg2: memref<1x128xf32, #tpu.memory_space<vmem>>, %arg3: memref<1x128xf32, #tpu.memory_space<vmem>>, %arg4: memref<1x128xf32, #tpu.memory_space<vmem>>, %arg5: memref<1x128xf32, #tpu.memory_space<vmem>>, %arg6: memref<512x128xbf16, #tpu.memory_space<vmem>>) attributes {dimension_semantics = [#tpu.dimension_semantics<parallel>], iteration_bounds = array<i64: 2>, scalar_prefetch = 0 : i64, scratch_operands = 0 : i64, tpu.core_type = #tpu.core_type<tc>, window_params = [{transform_indices = @transform_0, window_bounds = array<i64: 512, 128>}, {pipeline_mode = #tpu.pipeline_mode<synchronous>, transform_indices = @transform_1, window_bounds = array<i64: 1, 128>}, {pipeline_mode = #tpu.pipeline_mode<synchronous>, transform_indices = @transform_2, window_bounds = array<i64: 1, 128>}, {pipeline_mode = #tpu.pipeline_mode<synchronous>, transform_indices = @transform_3, window_bounds = array<i64: 1, 128>}, {pipeline_mode = #tpu.pipeline_mode<synchronous>, transform_indices = @transform_4, window_bounds = array<i64: 1, 128>}, {transform_indices = @transform_5, window_bounds = array<i64: 512, 128>}]} {
    %c0 = arith.constant 0 : index
    %c0_0 = arith.constant 0 : index
    %0 = vector.load %arg2[%c0, %c0_0] : memref<1x128xf32, #tpu.memory_space<vmem>>, vector<1x128xf32>
    %cst = arith.constant 1.250000e-03 : f32
    %1 = vector.broadcast %cst : f32 to vector<1x128xf32>
    %2 = arith.mulf %0, %1 : vector<1x128xf32>
    %c0_1 = arith.constant 0 : index
    %c0_2 = arith.constant 0 : index
    %3 = vector.load %arg3[%c0_1, %c0_2] : memref<1x128xf32, #tpu.memory_space<vmem>>, vector<1x128xf32>
    %cst_3 = arith.constant 1.250000e-03 : f32
    %4 = vector.broadcast %cst_3 : f32 to vector<1x128xf32>
    %5 = arith.mulf %3, %4 : vector<1x128xf32>
    %6 = arith.mulf %2, %2 : vector<1x128xf32>
    %7 = arith.subf %5, %6 : vector<1x128xf32>
    %cst_4 = arith.constant 0.000000e+00 : f32
    %8 = vector.broadcast %cst_4 : f32 to vector<1x128xf32>
    %9 = arith.maximumf %7, %8 : vector<1x128xf32>
    %c0_5 = arith.constant 0 : index
    %c0_6 = arith.constant 0 : index
    %10 = vector.load %arg4[%c0_5, %c0_6] : memref<1x128xf32, #tpu.memory_space<vmem>>, vector<1x128xf32>
    %cst_7 = arith.constant 9.99999974E-6 : f32
    %11 = vector.broadcast %cst_7 : f32 to vector<1x128xf32>
    %12 = arith.addf %9, %11 : vector<1x128xf32>
    %13 = math.rsqrt %12 : vector<1x128xf32>
    %14 = arith.mulf %10, %13 : vector<1x128xf32>
    %c0_8 = arith.constant 0 : index
    %c0_9 = arith.constant 0 : index
    %15 = vector.load %arg5[%c0_8, %c0_9] : memref<1x128xf32, #tpu.memory_space<vmem>>, vector<1x128xf32>
    %16 = arith.mulf %2, %14 : vector<1x128xf32>
    %17 = arith.subf %15, %16 : vector<1x128xf32>
    %c0_10 = arith.constant 0 : index
    %c0_11 = arith.constant 0 : index
    %18 = vector.load %arg1[%c0_10, %c0_11] : memref<512x128xbf16, #tpu.memory_space<vmem>>, vector<512x128xbf16>
    %19 = arith.extf %18 : vector<512x128xbf16> to vector<512x128xf32>
    %20 = vector.broadcast %14 : vector<1x128xf32> to vector<512x128xf32>
    %21 = arith.mulf %19, %20 : vector<512x128xf32>
    %22 = vector.broadcast %17 : vector<1x128xf32> to vector<512x128xf32>
    %23 = arith.addf %21, %22 : vector<512x128xf32>
    %24 = arith.truncf %23 : vector<512x128xf32> to vector<512x128xbf16>
    %c0_12 = arith.constant 0 : index
    %c0_13 = arith.constant 0 : index
    %25 = vector.load %arg6[%c0_12, %c0_13] : memref<512x128xbf16, #tpu.memory_space<vmem>>, vector<512x128xbf16>
    tpu.vector_store %arg6[%c0_12, %c0_13], %24 {strides = array<i32>} : memref<512x128xbf16, #tpu.memory_space<vmem>>, vector<512x128xbf16>,
    return
  }
  func.func @transform_0(%arg0: i32) -> (i32, i32) {
    %c0_i32 = arith.constant 0 : i32
    %c0_i32_0 = arith.constant 0 : i32
    return %arg0, %c0_i32 : i32, i32
  }
  func.func @transform_1(%arg0: i32) -> (i32, i32) {
    %c0_i32 = arith.constant 0 : i32
    %c0_i32_0 = arith.constant 0 : i32
    %c0_i32_1 = arith.constant 0 : i32
    return %c0_i32, %c0_i32_0 : i32, i32
  }
  func.func @transform_2(%arg0: i32) -> (i32, i32) {
    %c0_i32 = arith.constant 0 : i32
    %c0_i32_0 = arith.constant 0 : i32
    %c0_i32_1 = arith.constant 0 : i32
    return %c0_i32, %c0_i32_0 : i32, i32
  }
  func.func @transform_3(%arg0: i32) -> (i32, i32) {
    %c0_i32 = arith.constant 0 : i32
    %c0_i32_0 = arith.constant 0 : i32
    %c0_i32_1 = arith.constant 0 : i32
    return %c0_i32, %c0_i32_0 : i32, i32
  }
  func.func @transform_4(%arg0: i32) -> (i32, i32) {
    %c0_i32 = arith.constant 0 : i32
    %c0_i32_0 = arith.constant 0 : i32
    %c0_i32_1 = arith.constant 0 : i32
    return %c0_i32, %c0_i32_0 : i32, i32
  }
  func.func @transform_5(%arg0: i32) -> (i32, i32) {
    %c0_i32 = arith.constant 0 : i32
    %c0_i32_0 = arith.constant 0 : i32
    return %arg0, %c0_i32 : i32, i32
  }
}

module attributes {stable_mosaic.version = 11 : i64} {
  func.func @_conv_bn_fused_kernel(%arg0: memref<200x8xbf16, #tpu.memory_space<vmem>>, %arg1: memref<8x128xbf16, #tpu.memory_space<vmem>>, %arg2: memref<1x128xf32, #tpu.memory_space<vmem>>, %arg3: memref<1x128xf32, #tpu.memory_space<vmem>>, %arg4: memref<200x128xbf16, #tpu.memory_space<vmem>>) attributes {dimension_semantics = [], scalar_prefetch = 0 : i64, scratch_operands = 0 : i64, tpu.core_type = #tpu.core_type<tc>} {
    %c0 = arith.constant 0 : index
    %c0_0 = arith.constant 0 : index
    %0 = vector.load %arg0[%c0, %c0_0] : memref<200x8xbf16, #tpu.memory_space<vmem>>, vector<200x8xbf16>
    %c0_1 = arith.constant 0 : index
    %c0_2 = arith.constant 0 : index
    %1 = vector.load %arg1[%c0_1, %c0_2] : memref<8x128xbf16, #tpu.memory_space<vmem>>, vector<8x128xbf16>
    %cst = arith.constant dense<0.000000e+00> : vector<200x128xf32>
    %2 = tpu.matmul %0, %1, %cst {dimension_numbers = #tpu.dot_dimension_numbers<[1], [0], [0], [1], [0, 0, 1, 1], [], []>} : vector<200x8xbf16>, vector<8x128xbf16>, vector<200x128xf32> -> vector<200x128xf32>
    %cst_3 = arith.constant dense<0.000000e+00> : vector<128xf32>
    %3 = vector.multi_reduction <add>, %2, %cst_3 [0] : vector<200x128xf32> to vector<128xf32>
    %4 = vector.shape_cast %3 : vector<128xf32> to vector<1x128xf32>
    %cst_4 = arith.constant 5.000000e-03 : f32
    %5 = vector.broadcast %cst_4 : f32 to vector<1x128xf32>
    %6 = arith.mulf %4, %5 : vector<1x128xf32>
    %7 = arith.mulf %2, %2 : vector<200x128xf32>
    %cst_5 = arith.constant dense<0.000000e+00> : vector<128xf32>
    %8 = vector.multi_reduction <add>, %7, %cst_5 [0] : vector<200x128xf32> to vector<128xf32>
    %9 = vector.shape_cast %8 : vector<128xf32> to vector<1x128xf32>
    %cst_6 = arith.constant 5.000000e-03 : f32
    %10 = vector.broadcast %cst_6 : f32 to vector<1x128xf32>
    %11 = arith.mulf %9, %10 : vector<1x128xf32>
    %12 = arith.mulf %6, %6 : vector<1x128xf32>
    %13 = arith.subf %11, %12 : vector<1x128xf32>
    %cst_7 = arith.constant 0.000000e+00 : f32
    %14 = vector.broadcast %cst_7 : f32 to vector<1x128xf32>
    %15 = arith.maximumf %13, %14 : vector<1x128xf32>
    %c0_8 = arith.constant 0 : index
    %c0_9 = arith.constant 0 : index
    %16 = vector.load %arg2[%c0_8, %c0_9] : memref<1x128xf32, #tpu.memory_space<vmem>>, vector<1x128xf32>
    %cst_10 = arith.constant 9.99999974E-6 : f32
    %17 = vector.broadcast %cst_10 : f32 to vector<1x128xf32>
    %18 = arith.addf %15, %17 : vector<1x128xf32>
    %19 = math.rsqrt %18 : vector<1x128xf32>
    %20 = arith.mulf %16, %19 : vector<1x128xf32>
    %21 = vector.broadcast %20 : vector<1x128xf32> to vector<200x128xf32>
    %22 = arith.mulf %2, %21 : vector<200x128xf32>
    %c0_11 = arith.constant 0 : index
    %c0_12 = arith.constant 0 : index
    %23 = vector.load %arg3[%c0_11, %c0_12] : memref<1x128xf32, #tpu.memory_space<vmem>>, vector<1x128xf32>
    %24 = arith.mulf %6, %20 : vector<1x128xf32>
    %25 = arith.subf %23, %24 : vector<1x128xf32>
    %26 = vector.broadcast %25 : vector<1x128xf32> to vector<200x128xf32>
    %27 = arith.addf %22, %26 : vector<200x128xf32>
    %cst_13 = arith.constant 0.000000e+00 : f32
    %28 = vector.broadcast %cst_13 : f32 to vector<200x128xf32>
    %29 = arith.maximumf %27, %28 : vector<200x128xf32>
    %30 = arith.truncf %29 : vector<200x128xf32> to vector<200x128xbf16>
    %c0_14 = arith.constant 0 : index
    %c0_15 = arith.constant 0 : index
    %31 = vector.load %arg4[%c0_14, %c0_15] : memref<200x128xbf16, #tpu.memory_space<vmem>>, vector<200x128xbf16>
    tpu.vector_store %arg4[%c0_14, %c0_15], %30 {strides = array<i32>} : memref<200x128xbf16, #tpu.memory_space<vmem>>, vector<200x128xbf16>,
    return
  }
}

module attributes {stable_mosaic.version = 11 : i64} {
  func.func @_conv_bn_fused_kernel(%arg0: memref<50x144xbf16, #tpu.memory_space<vmem>>, %arg1: memref<144x128xbf16, #tpu.memory_space<vmem>>, %arg2: memref<1x128xf32, #tpu.memory_space<vmem>>, %arg3: memref<1x128xf32, #tpu.memory_space<vmem>>, %arg4: memref<50x128xbf16, #tpu.memory_space<vmem>>) attributes {dimension_semantics = [], scalar_prefetch = 0 : i64, scratch_operands = 0 : i64, tpu.core_type = #tpu.core_type<tc>} {
    %c0 = arith.constant 0 : index
    %c0_0 = arith.constant 0 : index
    %0 = vector.load %arg0[%c0, %c0_0] : memref<50x144xbf16, #tpu.memory_space<vmem>>, vector<50x144xbf16>
    %c0_1 = arith.constant 0 : index
    %c0_2 = arith.constant 0 : index
    %1 = vector.load %arg1[%c0_1, %c0_2] : memref<144x128xbf16, #tpu.memory_space<vmem>>, vector<144x128xbf16>
    %cst = arith.constant dense<0.000000e+00> : vector<50x128xf32>
    %2 = tpu.matmul %0, %1, %cst {dimension_numbers = #tpu.dot_dimension_numbers<[1], [0], [0], [1], [0, 0, 1, 1], [], []>} : vector<50x144xbf16>, vector<144x128xbf16>, vector<50x128xf32> -> vector<50x128xf32>
    %cst_3 = arith.constant dense<0.000000e+00> : vector<128xf32>
    %3 = vector.multi_reduction <add>, %2, %cst_3 [0] : vector<50x128xf32> to vector<128xf32>
    %4 = vector.shape_cast %3 : vector<128xf32> to vector<1x128xf32>
    %cst_4 = arith.constant 2.000000e-02 : f32
    %5 = vector.broadcast %cst_4 : f32 to vector<1x128xf32>
    %6 = arith.mulf %4, %5 : vector<1x128xf32>
    %7 = arith.mulf %2, %2 : vector<50x128xf32>
    %cst_5 = arith.constant dense<0.000000e+00> : vector<128xf32>
    %8 = vector.multi_reduction <add>, %7, %cst_5 [0] : vector<50x128xf32> to vector<128xf32>
    %9 = vector.shape_cast %8 : vector<128xf32> to vector<1x128xf32>
    %cst_6 = arith.constant 2.000000e-02 : f32
    %10 = vector.broadcast %cst_6 : f32 to vector<1x128xf32>
    %11 = arith.mulf %9, %10 : vector<1x128xf32>
    %12 = arith.mulf %6, %6 : vector<1x128xf32>
    %13 = arith.subf %11, %12 : vector<1x128xf32>
    %cst_7 = arith.constant 0.000000e+00 : f32
    %14 = vector.broadcast %cst_7 : f32 to vector<1x128xf32>
    %15 = arith.maximumf %13, %14 : vector<1x128xf32>
    %c0_8 = arith.constant 0 : index
    %c0_9 = arith.constant 0 : index
    %16 = vector.load %arg2[%c0_8, %c0_9] : memref<1x128xf32, #tpu.memory_space<vmem>>, vector<1x128xf32>
    %cst_10 = arith.constant 9.99999974E-6 : f32
    %17 = vector.broadcast %cst_10 : f32 to vector<1x128xf32>
    %18 = arith.addf %15, %17 : vector<1x128xf32>
    %19 = math.rsqrt %18 : vector<1x128xf32>
    %20 = arith.mulf %16, %19 : vector<1x128xf32>
    %21 = vector.broadcast %20 : vector<1x128xf32> to vector<50x128xf32>
    %22 = arith.mulf %2, %21 : vector<50x128xf32>
    %c0_11 = arith.constant 0 : index
    %c0_12 = arith.constant 0 : index
    %23 = vector.load %arg3[%c0_11, %c0_12] : memref<1x128xf32, #tpu.memory_space<vmem>>, vector<1x128xf32>
    %24 = arith.mulf %6, %20 : vector<1x128xf32>
    %25 = arith.subf %23, %24 : vector<1x128xf32>
    %26 = vector.broadcast %25 : vector<1x128xf32> to vector<50x128xf32>
    %27 = arith.addf %22, %26 : vector<50x128xf32>
    %28 = arith.truncf %27 : vector<50x128xf32> to vector<50x128xbf16>
    %c0_13 = arith.constant 0 : index
    %c0_14 = arith.constant 0 : index
    %29 = vector.load %arg4[%c0_13, %c0_14] : memref<50x128xbf16, #tpu.memory_space<vmem>>, vector<50x128xbf16>
    tpu.vector_store %arg4[%c0_13, %c0_14], %28 {strides = array<i32>} : memref<50x128xbf16, #tpu.memory_space<vmem>>, vector<50x128xbf16>,
    return
  }
}

module attributes {stable_mosaic.version = 11 : i64} {
  func.func @_conv_bn_fused_kernel(%arg0: memref<200x72xbf16, #tpu.memory_space<vmem>>, %arg1: memref<72x128xbf16, #tpu.memory_space<vmem>>, %arg2: memref<1x128xf32, #tpu.memory_space<vmem>>, %arg3: memref<1x128xf32, #tpu.memory_space<vmem>>, %arg4: memref<200x128xbf16, #tpu.memory_space<vmem>>) attributes {dimension_semantics = [], scalar_prefetch = 0 : i64, scratch_operands = 0 : i64, tpu.core_type = #tpu.core_type<tc>} {
    %c0 = arith.constant 0 : index
    %c0_0 = arith.constant 0 : index
    %0 = vector.load %arg0[%c0, %c0_0] : memref<200x72xbf16, #tpu.memory_space<vmem>>, vector<200x72xbf16>
    %c0_1 = arith.constant 0 : index
    %c0_2 = arith.constant 0 : index
    %1 = vector.load %arg1[%c0_1, %c0_2] : memref<72x128xbf16, #tpu.memory_space<vmem>>, vector<72x128xbf16>
    %cst = arith.constant dense<0.000000e+00> : vector<200x128xf32>
    %2 = tpu.matmul %0, %1, %cst {dimension_numbers = #tpu.dot_dimension_numbers<[1], [0], [0], [1], [0, 0, 1, 1], [], []>} : vector<200x72xbf16>, vector<72x128xbf16>, vector<200x128xf32> -> vector<200x128xf32>
    %cst_3 = arith.constant dense<0.000000e+00> : vector<128xf32>
    %3 = vector.multi_reduction <add>, %2, %cst_3 [0] : vector<200x128xf32> to vector<128xf32>
    %4 = vector.shape_cast %3 : vector<128xf32> to vector<1x128xf32>
    %cst_4 = arith.constant 5.000000e-03 : f32
    %5 = vector.broadcast %cst_4 : f32 to vector<1x128xf32>
    %6 = arith.mulf %4, %5 : vector<1x128xf32>
    %7 = arith.mulf %2, %2 : vector<200x128xf32>
    %cst_5 = arith.constant dense<0.000000e+00> : vector<128xf32>
    %8 = vector.multi_reduction <add>, %7, %cst_5 [0] : vector<200x128xf32> to vector<128xf32>
    %9 = vector.shape_cast %8 : vector<128xf32> to vector<1x128xf32>
    %cst_6 = arith.constant 5.000000e-03 : f32
    %10 = vector.broadcast %cst_6 : f32 to vector<1x128xf32>
    %11 = arith.mulf %9, %10 : vector<1x128xf32>
    %12 = arith.mulf %6, %6 : vector<1x128xf32>
    %13 = arith.subf %11, %12 : vector<1x128xf32>
    %cst_7 = arith.constant 0.000000e+00 : f32
    %14 = vector.broadcast %cst_7 : f32 to vector<1x128xf32>
    %15 = arith.maximumf %13, %14 : vector<1x128xf32>
    %c0_8 = arith.constant 0 : index
    %c0_9 = arith.constant 0 : index
    %16 = vector.load %arg2[%c0_8, %c0_9] : memref<1x128xf32, #tpu.memory_space<vmem>>, vector<1x128xf32>
    %cst_10 = arith.constant 9.99999974E-6 : f32
    %17 = vector.broadcast %cst_10 : f32 to vector<1x128xf32>
    %18 = arith.addf %15, %17 : vector<1x128xf32>
    %19 = math.rsqrt %18 : vector<1x128xf32>
    %20 = arith.mulf %16, %19 : vector<1x128xf32>
    %21 = vector.broadcast %20 : vector<1x128xf32> to vector<200x128xf32>
    %22 = arith.mulf %2, %21 : vector<200x128xf32>
    %c0_11 = arith.constant 0 : index
    %c0_12 = arith.constant 0 : index
    %23 = vector.load %arg3[%c0_11, %c0_12] : memref<1x128xf32, #tpu.memory_space<vmem>>, vector<1x128xf32>
    %24 = arith.mulf %6, %20 : vector<1x128xf32>
    %25 = arith.subf %23, %24 : vector<1x128xf32>
    %26 = vector.broadcast %25 : vector<1x128xf32> to vector<200x128xf32>
    %27 = arith.addf %22, %26 : vector<200x128xf32>
    %28 = arith.truncf %27 : vector<200x128xf32> to vector<200x128xbf16>
    %c0_13 = arith.constant 0 : index
    %c0_14 = arith.constant 0 : index
    %29 = vector.load %arg4[%c0_13, %c0_14] : memref<200x128xbf16, #tpu.memory_space<vmem>>, vector<200x128xbf16>
    tpu.vector_store %arg4[%c0_13, %c0_14], %28 {strides = array<i32>} : memref<200x128xbf16, #tpu.memory_space<vmem>>, vector<200x128xbf16>,
    return
  }
}

module attributes {stable_mosaic.version = 11 : i64} {
  func.func @_conv_bn_fused_kernel(%arg0: memref<200x16xbf16, #tpu.memory_space<vmem>>, %arg1: memref<16x128xbf16, #tpu.memory_space<vmem>>, %arg2: memref<1x128xf32, #tpu.memory_space<vmem>>, %arg3: memref<1x128xf32, #tpu.memory_space<vmem>>, %arg4: memref<200x128xbf16, #tpu.memory_space<vmem>>) attributes {dimension_semantics = [], scalar_prefetch = 0 : i64, scratch_operands = 0 : i64, tpu.core_type = #tpu.core_type<tc>} {
    %c0 = arith.constant 0 : index
    %c0_0 = arith.constant 0 : index
    %0 = vector.load %arg0[%c0, %c0_0] : memref<200x16xbf16, #tpu.memory_space<vmem>>, vector<200x16xbf16>
    %c0_1 = arith.constant 0 : index
    %c0_2 = arith.constant 0 : index
    %1 = vector.load %arg1[%c0_1, %c0_2] : memref<16x128xbf16, #tpu.memory_space<vmem>>, vector<16x128xbf16>
    %cst = arith.constant dense<0.000000e+00> : vector<200x128xf32>
    %2 = tpu.matmul %0, %1, %cst {dimension_numbers = #tpu.dot_dimension_numbers<[1], [0], [0], [1], [0, 0, 1, 1], [], []>} : vector<200x16xbf16>, vector<16x128xbf16>, vector<200x128xf32> -> vector<200x128xf32>
    %cst_3 = arith.constant dense<0.000000e+00> : vector<128xf32>
    %3 = vector.multi_reduction <add>, %2, %cst_3 [0] : vector<200x128xf32> to vector<128xf32>
    %4 = vector.shape_cast %3 : vector<128xf32> to vector<1x128xf32>
    %cst_4 = arith.constant 5.000000e-03 : f32
    %5 = vector.broadcast %cst_4 : f32 to vector<1x128xf32>
    %6 = arith.mulf %4, %5 : vector<1x128xf32>
    %7 = arith.mulf %2, %2 : vector<200x128xf32>
    %cst_5 = arith.constant dense<0.000000e+00> : vector<128xf32>
    %8 = vector.multi_reduction <add>, %7, %cst_5 [0] : vector<200x128xf32> to vector<128xf32>
    %9 = vector.shape_cast %8 : vector<128xf32> to vector<1x128xf32>
    %cst_6 = arith.constant 5.000000e-03 : f32
    %10 = vector.broadcast %cst_6 : f32 to vector<1x128xf32>
    %11 = arith.mulf %9, %10 : vector<1x128xf32>
    %12 = arith.mulf %6, %6 : vector<1x128xf32>
    %13 = arith.subf %11, %12 : vector<1x128xf32>
    %cst_7 = arith.constant 0.000000e+00 : f32
    %14 = vector.broadcast %cst_7 : f32 to vector<1x128xf32>
    %15 = arith.maximumf %13, %14 : vector<1x128xf32>
    %c0_8 = arith.constant 0 : index
    %c0_9 = arith.constant 0 : index
    %16 = vector.load %arg2[%c0_8, %c0_9] : memref<1x128xf32, #tpu.memory_space<vmem>>, vector<1x128xf32>
    %cst_10 = arith.constant 9.99999974E-6 : f32
    %17 = vector.broadcast %cst_10 : f32 to vector<1x128xf32>
    %18 = arith.addf %15, %17 : vector<1x128xf32>
    %19 = math.rsqrt %18 : vector<1x128xf32>
    %20 = arith.mulf %16, %19 : vector<1x128xf32>
    %21 = vector.broadcast %20 : vector<1x128xf32> to vector<200x128xf32>
    %22 = arith.mulf %2, %21 : vector<200x128xf32>
    %c0_11 = arith.constant 0 : index
    %c0_12 = arith.constant 0 : index
    %23 = vector.load %arg3[%c0_11, %c0_12] : memref<1x128xf32, #tpu.memory_space<vmem>>, vector<1x128xf32>
    %24 = arith.mulf %6, %20 : vector<1x128xf32>
    %25 = arith.subf %23, %24 : vector<1x128xf32>
    %26 = vector.broadcast %25 : vector<1x128xf32> to vector<200x128xf32>
    %27 = arith.addf %22, %26 : vector<200x128xf32>
    %cst_13 = arith.constant 0.000000e+00 : f32
    %28 = vector.broadcast %cst_13 : f32 to vector<200x128xf32>
    %29 = arith.maximumf %27, %28 : vector<200x128xf32>
    %30 = arith.truncf %29 : vector<200x128xf32> to vector<200x128xbf16>
    %c0_14 = arith.constant 0 : index
    %c0_15 = arith.constant 0 : index
    %31 = vector.load %arg4[%c0_14, %c0_15] : memref<200x128xbf16, #tpu.memory_space<vmem>>, vector<200x128xbf16>
    tpu.vector_store %arg4[%c0_14, %c0_15], %30 {strides = array<i32>} : memref<200x128xbf16, #tpu.memory_space<vmem>>, vector<200x128xbf16>,
    return
  }
}

module attributes {stable_mosaic.version = 11 : i64} {
  func.func @_gap_linear_kernel(%arg0: memref<2x25x32xbf16, #tpu.memory_space<vmem>>, %arg1: memref<32x10xf32, #tpu.memory_space<vmem>>, %arg2: memref<1x10xf32, #tpu.memory_space<vmem>>, %arg3: memref<2x10xf32, #tpu.memory_space<vmem>>) attributes {dimension_semantics = [], scalar_prefetch = 0 : i64, scratch_operands = 0 : i64, tpu.core_type = #tpu.core_type<tc>} {
    %c0 = arith.constant 0 : index
    %c0_0 = arith.constant 0 : index
    %c0_1 = arith.constant 0 : index
    %0 = vector.load %arg0[%c0, %c0_0, %c0_1] : memref<2x25x32xbf16, #tpu.memory_space<vmem>>, vector<2x25x32xbf16>
    %1 = arith.extf %0 : vector<2x25x32xbf16> to vector<2x25x32xf32>
    %cst = arith.constant dense<0.000000e+00> : vector<2x32xf32>
    %2 = vector.multi_reduction <add>, %1, %cst [1] : vector<2x25x32xf32> to vector<2x32xf32>
    %cst_2 = arith.constant 2.500000e+01 : f32
    %3 = vector.broadcast %cst_2 : f32 to vector<2x32xf32>
    %4 = arith.divf %2, %3 : vector<2x32xf32>
    %c0_3 = arith.constant 0 : index
    %c0_4 = arith.constant 0 : index
    %5 = vector.load %arg1[%c0_3, %c0_4] : memref<32x10xf32, #tpu.memory_space<vmem>>, vector<32x10xf32>
    %cst_5 = arith.constant dense<0.000000e+00> : vector<2x10xf32>
    %6 = tpu.matmul %4, %5, %cst_5 {dimension_numbers = #tpu.dot_dimension_numbers<[1], [0], [0], [1], [0, 0, 1, 1], [], []>} : vector<2x32xf32>, vector<32x10xf32>, vector<2x10xf32> -> vector<2x10xf32>
    %c0_6 = arith.constant 0 : index
    %c0_7 = arith.constant 0 : index
    %7 = vector.load %arg2[%c0_6, %c0_7] : memref<1x10xf32, #tpu.memory_space<vmem>>, vector<1x10xf32>
    %8 = vector.broadcast %7 : vector<1x10xf32> to vector<2x10xf32>
    %9 = arith.addf %6, %8 : vector<2x10xf32>
    %c0_8 = arith.constant 0 : index
    %c0_9 = arith.constant 0 : index
    %10 = vector.load %arg3[%c0_8, %c0_9] : memref<2x10xf32, #tpu.memory_space<vmem>>, vector<2x10xf32>
    tpu.vector_store %arg3[%c0_8, %c0_9], %9 {strides = array<i32>} : memref<2x10xf32, #tpu.memory_space<vmem>>, vector<2x10xf32>,
    return
  }
}

</mosaic_0001>

<llo_original>
// kernel: darts_stacked_cells_forward.27
$region0: #{darts_stacked_cells_forward.27}
  #allocation0 [shape = 'u32[]', space=smem, size = 0x4, offset = 0x4, fixed_abs, tag = 'smem constant byte address 0x4 - core index']
  #allocation1 [shape = 'u32[72,128]{1,0:T(1,128)}', space=vmem, size = 0x9000, scoped, tag = 'internal scratch']
  %s0 = inlined_call_operand.vmem [shape: bf16[800,128], index: 0, kind: input, shape index: {}]
  %s1 = inlined_call_operand.vmem [shape: f32[1,128], index: 1, kind: input, shape index: {}]
  %s2 = inlined_call_operand.vmem [shape: f32[1,128], index: 2, kind: input, shape index: {}]
  %s3 = inlined_call_operand.vmem [shape: f32[1,128], index: 3, kind: input, shape index: {}]
  %s4 = inlined_call_operand.vmem [shape: f32[1,128], index: 4, kind: input, shape index: {}]
  %s5 = inlined_call_operand.vmem [shape: bf16[800,128], index: 5, kind: output, shape index: {}]
  %s6 = sld [smem:[#allocation0]]
  $region97: #{darts_stacked_cells_forward.27} parent=0
    _
  %s8 = ssub.s32 1, %s6
  %s9 = scalar_select 0, %s8, %s6
  $region1: #{darts_stacked_cells_forward.27} parent=0
    #allocation2 [shape = 'u8[262144]{0}', space=vmem, size = 0x40000, scoped, tag = 'output window, operand 0']
    loop: start=0, step=1, limit=4
    $region2: #{darts_stacked_cells_forward.27} parent=1 // loop_pre_header
      _
    $region3: #{darts_stacked_cells_forward.27} parent=1 // loop_header
      %s11 = sphi 0, %s15
      %p12 = scmp.ge.s32.totalorder %s11, 4
      %s21 = sphi 0, %s23
      %s24 = sphi 0, %s21
      %s25 = sphi 0, %s24
      %s41 = sphi 0, %s25
      %s45 = sphi 0, %s45
      %s47 = sphi 0, %s45
      %s48 = sphi 0, %s47
      %s62 = sphi 0, %s48
      %s66 = sphi 0, %s66
      %s68 = sphi 0, %s66
      %s69 = sphi 0, %s68
      %s83 = sphi 0, %s69
      %s87 = sphi 0, %s87
      %s89 = sphi 0, %s87
      %s90 = sphi 0, %s89
      %s104 = sphi 0, %s90
      %s108 = sphi 0, %s108
      %s110 = sphi 0, %s108
      %s111 = sphi 0, %s110
      %s125 = sphi 0, %s111
      %s131 = sphi 0, %s133
      %s134 = sphi 0, %s131
      %s135 = sphi 0, %s134
      %s151 = sphi 0, %s135
    $region4: #{darts_stacked_cells_forward.27} parent=1 // loop_header_branch
      %14 = sbr.rel (%p12) target = $region8
    $region5: #{darts_stacked_cells_forward.27} parent=1 // loop_body
      %s16 = ssub.s32 %s11, 1
      %s17 = ssub.s32 %s11, 2
      %s18 = sadd.s32 %s11, 1
      %s19 = ssub.s32 %s11, %s18
      %p20 = scmp.eq.s32.totalorder %s19, 0
      %s22 = sadd.s32 %s21, 1
      %s23 = scalar_select %p20, %s21, %s22
      %p26 = pneg %p20
      %p27 = scmp.eq.s32.totalorder %s11, 1
      %p28 = por %p26, %p27
      %p29 = scmp.ne.s32.totalorder %s21, %s24
      %p30 = scmp.eq.s32.totalorder %s11, 0
      %p31 = por %p29, %p30
      %p32 = scmp.ne.s32.totalorder %s21, %s24
      %p33 = scmp.eq.s32.totalorder %s16, 1
      %p34 = por %p32, %p33
      %p35 = scmp.ne.s32.totalorder %s24, %s25
      %p36 = scmp.eq.s32.totalorder %s16, 0
      %p37 = por %p35, %p36
      %p38 = scmp.ne.s32.totalorder %s24, %s25
      %p39 = scmp.eq.s32.totalorder %s17, 1
      %p40 = por %p38, %p39
      %p42 = scmp.ne.s32.totalorder %s25, %s41
      %p43 = scmp.eq.s32.totalorder %s17, 0
      %p44 = por %p42, %p43
      %s46 = sadd.s32 %s45, 1
      %p49 = scmp.eq.s32.totalorder %s11, 1
      %p50 = scmp.ne.s32.totalorder %s45, %s47
      %p51 = scmp.eq.s32.totalorder %s11, 0
      %p52 = por %p50, %p51
      %p53 = scmp.ne.s32.totalorder %s45, %s47
      %p54 = scmp.eq.s32.totalorder %s16, 1
      %p55 = por %p53, %p54
      %p56 = scmp.ne.s32.totalorder %s47, %s48
      %p57 = scmp.eq.s32.totalorder %s16, 0
      %p58 = por %p56, %p57
      %p59 = scmp.ne.s32.totalorder %s47, %s48
      %p60 = scmp.eq.s32.totalorder %s17, 1
      %p61 = por %p59, %p60
      %p63 = scmp.ne.s32.totalorder %s48, %s62
      %p64 = scmp.eq.s32.totalorder %s17, 0
      %p65 = por %p63, %p64
      %s67 = sadd.s32 %s66, 1
      %p70 = scmp.eq.s32.totalorder %s11, 1
      %p71 = scmp.ne.s32.totalorder %s66, %s68
      %p72 = scmp.eq.s32.totalorder %s11, 0
      %p73 = por %p71, %p72
      %p74 = scmp.ne.s32.totalorder %s66, %s68
      %p75 = scmp.eq.s32.totalorder %s16, 1
      %p76 = por %p74, %p75
      %p77 = scmp.ne.s32.totalorder %s68, %s69
      %p78 = scmp.eq.s32.totalorder %s16, 0
      %p79 = por %p77, %p78
      %p80 = scmp.ne.s32.totalorder %s68, %s69
      %p81 = scmp.eq.s32.totalorder %s17, 1
      %p82 = por %p80, %p81
      %p84 = scmp.ne.s32.totalorder %s69, %s83
      %p85 = scmp.eq.s32.totalorder %s17, 0
      %p86 = por %p84, %p85
      %s88 = sadd.s32 %s87, 1
      %p91 = scmp.eq.s32.totalorder %s11, 1
      %p92 = scmp.ne.s32.totalorder %s87, %s89
      %p93 = scmp.eq.s32.totalorder %s11, 0
      %p94 = por %p92, %p93
      %p95 = scmp.ne.s32.totalorder %s87, %s89
      %p96 = scmp.eq.s32.totalorder %s16, 1
      %p97 = por %p95, %p96
      %p98 = scmp.ne.s32.totalorder %s89, %s90
      %p99 = scmp.eq.s32.totalorder %s16, 0
      %p100 = por %p98, %p99
      %p101 = scmp.ne.s32.totalorder %s89, %s90
      %p102 = scmp.eq.s32.totalorder %s17, 1
      %p103 = por %p101, %p102
      %p105 = scmp.ne.s32.totalorder %s90, %s104
      %p106 = scmp.eq.s32.totalorder %s17, 0
      %p107 = por %p105, %p106
      %s109 = sadd.s32 %s108, 1
      %p112 = scmp.eq.s32.totalorder %s11, 1
      %p113 = scmp.ne.s32.totalorder %s108, %s110
      %p114 = scmp.eq.s32.totalorder %s11, 0
      %p115 = por %p113, %p114
      %p116 = scmp.ne.s32.totalorder %s108, %s110
      %p117 = scmp.eq.s32.totalorder %s16, 1
      %p118 = por %p116, %p117
      %p119 = scmp.ne.s32.totalorder %s110, %s111
      %p120 = scmp.eq.s32.totalorder %s16, 0
      %p121 = por %p119, %p120
      %p122 = scmp.ne.s32.totalorder %s110, %s111
      %p123 = scmp.eq.s32.totalorder %s17, 1
      %p124 = por %p122, %p123
      %p126 = scmp.ne.s32.totalorder %s111, %s125
      %p127 = scmp.eq.s32.totalorder %s17, 0
      %p128 = por %p126, %p127
      %s129 = ssub.s32 %s11, %s18
      %p130 = scmp.eq.s32.totalorder %s129, 0
      %s132 = sadd.s32 %s131, 1
      %s133 = scalar_select %p130, %s131, %s132
      %p136 = pneg %p130
      %p137 = scmp.eq.s32.totalorder %s11, 1
      %p138 = por %p136, %p137
      %p139 = scmp.ne.s32.totalorder %s131, %s134
      %p140 = scmp.eq.s32.totalorder %s11, 0
      %p141 = por %p139, %p140
      %p142 = scmp.ne.s32.totalorder %s131, %s134
      %p143 = scmp.eq.s32.totalorder %s16, 1
      %p144 = por %p142, %p143
      %p145 = scmp.ne.s32.totalorder %s134, %s135
      %p146 = scmp.eq.s32.totalorder %s16, 0
      %p147 = por %p145, %p146
      %p148 = scmp.ne.s32.totalorder %s134, %s135
      %p149 = scmp.eq.s32.totalorder %s17, 1
      %p150 = por %p148, %p149
      %p152 = scmp.ne.s32.totalorder %s135, %s151
      %p153 = scmp.eq.s32.totalorder %s17, 0
      %p154 = por %p152, %p153
      %p155 = scmp.le.s32.totalorder 1, %s11
      %p156 = scmp.lt.s32.totalorder %s11, 3
      %p157 = pnand %p155, %p156
      %p158 = pneg %p157
      // Predicated region
      $region9: #{darts_stacked_cells_forward.27} parent=5 // pred_check
        _
      $region10: #{darts_stacked_cells_forward.27} parent=5 // pred_check_branch
        %160 = sbr.rel (%p157) target = $region12
      $region11: #{darts_stacked_cells_forward.27} parent=5 // pred_region
        %s161 = ssub.s32 %s11, 1
        // Predicated region
        $region13: #{darts_stacked_cells_forward.27} parent=11 // pred_check
          %p162 = pneg %p58
        $region14: #{darts_stacked_cells_forward.27} parent=11 // pred_check_branch
          %164 = sbr.rel (%p162) target = $region16
        $region15: #{darts_stacked_cells_forward.27} parent=11 // pred_region
          _
        $region16: #{darts_stacked_cells_forward.27} parent=11 // pred_fallthru
          _
        // Predicated region
        $region17: #{darts_stacked_cells_forward.27} parent=11 // pred_check
          %p165 = pneg %p79
        $region18: #{darts_stacked_cells_forward.27} parent=11 // pred_check_branch
          %167 = sbr.rel (%p165) target = $region20
        $region19: #{darts_stacked_cells_forward.27} parent=11 // pred_region
          _
        $region20: #{darts_stacked_cells_forward.27} parent=11 // pred_fallthru
          _
        // Predicated region
        $region21: #{darts_stacked_cells_forward.27} parent=11 // pred_check
          %p168 = pneg %p100
        $region22: #{darts_stacked_cells_forward.27} parent=11 // pred_check_branch
          %170 = sbr.rel (%p168) target = $region24
        $region23: #{darts_stacked_cells_forward.27} parent=11 // pred_region
          _
        $region24: #{darts_stacked_cells_forward.27} parent=11 // pred_fallthru
          _
        // Predicated region
        $region25: #{darts_stacked_cells_forward.27} parent=11 // pred_check
          %p171 = pneg %p121
        $region26: #{darts_stacked_cells_forward.27} parent=11 // pred_check_branch
          %173 = sbr.rel (%p171) target = $region28
        $region27: #{darts_stacked_cells_forward.27} parent=11 // pred_region
          _
        $region28: #{darts_stacked_cells_forward.27} parent=11 // pred_fallthru
          _
      $region12: #{darts_stacked_cells_forward.27} parent=5 // pred_fallthru
        _
      %p174 = scmp.lt.s32.totalorder %s11, 2
      // Predicated region
      $region29: #{darts_stacked_cells_forward.27} parent=5 // pred_check
        %p175 = pneg %p174
      $region30: #{darts_stacked_cells_forward.27} parent=5 // pred_check_branch
        %177 = sbr.rel (%p175) target = $region32
      $region31: #{darts_stacked_cells_forward.27} parent=5 // pred_region
        // Predicated region
        $region33: #{darts_stacked_cells_forward.27} parent=31 // pred_check
          %p178 = pneg %p31
        $region34: #{darts_stacked_cells_forward.27} parent=31 // pred_check_branch
          %180 = sbr.rel (%p178) target = $region36
        $region35: #{darts_stacked_cells_forward.27} parent=31 // pred_region
          %s181 = smul.u32 64, %s11
          %s182 = ssub.s32 100, %s181
          %p183 = scmp.lt.s32.totalorder %s182, 64
          %s184 = scalar_select %p183, %s182, 64
          %s185 = smul.u32 4, %s184
          %p186 = scmp.lt.s32.totalorder %s181, 99
          %s187 = scalar_select %p186, %s181, 99
          %s188 = smul.addr %s187, 4
          %s189 = scalar_lea.vmem %s0, %s188
          %s190 = smul.u32 64, %s11
          %s191 = ssub.s32 100, %s190
          %p192 = scmp.lt.s32.totalorder %s191, 64
          %s193 = scalar_select %p192, %s191, 64
          %s194 = smul.u32 4, %s193
        $region36: #{darts_stacked_cells_forward.27} parent=31 // pred_fallthru
          _
      $region32: #{darts_stacked_cells_forward.27} parent=5 // pred_fallthru
        _
      %p195 = scmp.le.s32.totalorder 1, %s11
      %p196 = scmp.lt.s32.totalorder %s11, 3
      %p197 = pnand %p195, %p196
      %p198 = pneg %p197
      // Predicated region
      $region37: #{darts_stacked_cells_forward.27} parent=5 // pred_check
        _
      $region38: #{darts_stacked_cells_forward.27} parent=5 // pred_check_branch
        %200 = sbr.rel (%p197) target = $region40
      $region39: #{darts_stacked_cells_forward.27} parent=5 // pred_region
        %s201 = ssub.s32 %s11, 1
        %s202 = smul.u32 64, %s16
        %s203 = ssub.s32 100, %s202
        %p204 = scmp.lt.s32.totalorder %s203, 64
        %s205 = scalar_select %p204, %s203, 64
        %s206 = smul.u32 4, %s205
        %p207 = scmp.lt.s32.totalorder %s202, 99
        %s208 = scalar_select %p207, %s202, 99
        %s209 = smul.addr %s208, 4
        %s210 = scalar_lea.vmem %s0, %s209
        %p211 = pneg %p37
        %p212 = pneg %p34
        %p213 = pneg %p58
        %p214 = pneg %p55
        %p215 = pneg %p79
        %p216 = pneg %p76
        %p217 = pneg %p100
        %p218 = pneg %p97
        %p219 = pneg %p121
        %p220 = pneg %p118
        %p221 = pneg %p147
        %p222 = pneg %p144
        %s223 = sand.u32 %s134, 1
        %s224 = sand.u32 %s134, 1
        %s225 = smul.addr %s224, 256
        %s226 = scalar_lea.vmem [#allocation2], %s225
        %s227 = smul.u32 64, %s16
        %s228 = ssub.s32 100, %s227
        %p229 = scmp.lt.s32.totalorder %s228, 64
        %s230 = scalar_select %p229, %s228, 64
        %s231 = smul.u32 4, %s230
        %p232 = scmp.lt.s32.totalorder %s227, 99
        %s233 = scalar_select %p232, %s227, 99
        %s234 = smul.addr %s233, 4
        %s235 = scalar_lea.vmem %s0, %s234
        %s236 = smul.u32 64, %s16
        %s237 = ssub.s32 100, %s236
        %p238 = scmp.lt.s32.totalorder %s237, 64
        %s239 = scalar_select %p238, %s237, 64
        %s240 = smul.u32 4, %s239
        %s241 = smul.u32 64, %s16
        %s242 = ssub.s32 100, %s241
        %p243 = scmp.lt.s32.totalorder %s242, 64
        %s244 = scalar_select %p243, %s242, 64
        %s245 = smul.u32 4, %s244
        %v246 = vld [vmem:[%s1] sm:$0x1]
        %v247 = vmul.f32 %v246, 0.00125
        %v248 = vld [vmem:[%s2] sm:$0x1]
        %v249 = vmul.f32 %v248, 0.00125
        %v250 = vmul.f32 %v247, %v247
        %v251 = vsub.f32 %v249, %v250
        %v252 = vmax.f32 %v251, 0.0
        %v253 = vld [vmem:[%s3] sm:$0x1]
        %v254 = vadd.f32 %v252, 1e-05
        %v255 = vrsqrt.pop %v254
        %v256 = vmul.f32 %v255, %v254
        %v257 = vmul.f32 %v256, %v255
        %v258 = vmul.f32 0.5, %v257
        %v259 = vsub.f32 1.5, %v258
        %v260 = vmul.f32 %v255, %v259
        %vm261 = vweird.f32 %v254
        %vm262 = vweird.f32 %v255
        %vm263 = vmor %vm261, %vm262
        %v264 = vsel %vm263, %v255, %v260
        %v265 = vmul.f32 %v253, %v264
        %v266 = vld [vmem:[%s4] sm:$0x1]
        %v267 = vmul.f32 %v247, %v265
        %v268 = vsub.f32 %v266, %v267
        %v269 = vld [vmem:[%s235] sm:$0xf]
        %v270 = vld [vmem:[%s235 + $0x4] sm:$0xf]
        %v271 = vld [vmem:[%s235 + $0x8] sm:$0xf]
        %v272 = vld [vmem:[%s235 + $0xc] sm:$0xf]
        %v273 = vld [vmem:[%s235 + $0x10] sm:$0xf]
        %v274 = vld [vmem:[%s235 + $0x14] sm:$0xf]
        %v275 = vld [vmem:[%s235 + $0x18] sm:$0xf]
        %v276 = vld [vmem:[%s235 + $0x1c] sm:$0xf]
        %v277 = vld [vmem:[%s235 + $0x20] sm:$0xf]
        %v278 = vld [vmem:[%s235 + $0x24] sm:$0xf]
        %v279 = vld [vmem:[%s235 + $0x28] sm:$0xf]
        %v280 = vld [vmem:[%s235 + $0x2c] sm:$0xf]
        %v281 = vld [vmem:[%s235 + $0x30] sm:$0xf]
        %v282 = vld [vmem:[%s235 + $0x34] sm:$0xf]
        %v283 = vld [vmem:[%s235 + $0x38] sm:$0xf]
        %v284 = vld [vmem:[%s235 + $0x3c] sm:$0xf]
        %v285 = vld [vmem:[%s235 + $0x40] sm:$0xf]
        %v286 = vld [vmem:[%s235 + $0x44] sm:$0xf]
        %v287 = vld [vmem:[%s235 + $0x48] sm:$0xf]
        %v288 = vld [vmem:[%s235 + $0x4c] sm:$0xf]
        %v289 = vld [vmem:[%s235 + $0x50] sm:$0xf]
        %v290 = vld [vmem:[%s235 + $0x54] sm:$0xf]
        %v291 = vld [vmem:[%s235 + $0x58] sm:$0xf]
        %v292 = vld [vmem:[%s235 + $0x5c] sm:$0xf]
        %v293 = vld [vmem:[%s235 + $0x60] sm:$0xf]
        %v294 = vld [vmem:[%s235 + $0x64] sm:$0xf]
        %v295 = vld [vmem:[%s235 + $0x68] sm:$0xf]
        %v296 = vld [vmem:[%s235 + $0x6c] sm:$0xf]
        %v297 = vld [vmem:[%s235 + $0x70] sm:$0xf]
        %v298 = vld [vmem:[%s235 + $0x74] sm:$0xf]
        %v299 = vld [vmem:[%s235 + $0x78] sm:$0xf]
        %v300 = vld [vmem:[%s235 + $0x7c] sm:$0xf]
        %v301 = vld [vmem:[%s235 + $0x80] sm:$0xf]
        %v302 = vld [vmem:[%s235 + $0x84] sm:$0xf]
        %v303 = vld [vmem:[%s235 + $0x88] sm:$0xf]
        %v304 = vld [vmem:[%s235 + $0x8c] sm:$0xf]
        %v305 = vld [vmem:[%s235 + $0x90] sm:$0xf]
        %v306 = vld [vmem:[%s235 + $0x94] sm:$0xf]
        %v307 = vld [vmem:[%s235 + $0x98] sm:$0xf]
        %v308 = vld [vmem:[%s235 + $0x9c] sm:$0xf]
        %v309 = vld [vmem:[%s235 + $0xa0] sm:$0xf]
        %v310 = vld [vmem:[%s235 + $0xa4] sm:$0xf]
        %v311 = vld [vmem:[%s235 + $0xa8] sm:$0xf]
        %v312 = vld [vmem:[%s235 + $0xac] sm:$0xf]
        %v313 = vld [vmem:[%s235 + $0xb0] sm:$0xf]
        %v314 = vld [vmem:[%s235 + $0xb4] sm:$0xf]
        %v315 = vld [vmem:[%s235 + $0xb8] sm:$0xf]
        %v316 = vld [vmem:[%s235 + $0xbc] sm:$0xf]
        %v317 = vld [vmem:[%s235 + $0xc0] sm:$0xf]
        %v318 = vld [vmem:[%s235 + $0xc4] sm:$0xf]
        %v319 = vld [vmem:[%s235 + $0xc8] sm:$0xf]
        %v320 = vld [vmem:[%s235 + $0xcc] sm:$0xf]
        %v321 = vld [vmem:[%s235 + $0xd0] sm:$0xf]
        %v322 = vld [vmem:[%s235 + $0xd4] sm:$0xf]
        %v323 = vld [vmem:[%s235 + $0xd8] sm:$0xf]
        %v324 = vld [vmem:[%s235 + $0xdc] sm:$0xf]
        %v325 = vld [vmem:[%s235 + $0xe0] sm:$0xf]
        %v326 = vld [vmem:[%s235 + $0xe4] sm:$0xf]
        %v327 = vld [vmem:[%s235 + $0xe8] sm:$0xf]
        %v328 = vld [vmem:[%s235 + $0xec] sm:$0xf]
        %v329 = vld [vmem:[%s235 + $0xf0] sm:$0xf]
        %v330 = vld [vmem:[%s235 + $0xf4] sm:$0xf]
        %v331 = vld [vmem:[%s235 + $0xf8] sm:$0xf]
        %v332 = vld [vmem:[%s235 + $0xfc] sm:$0xf]
        %v333 = vunpack.c.l.bf16 %v269
        %v334 = vunpack.c.l.bf16 %v270
        %v335 = vunpack.c.l.bf16 %v271
        %v336 = vunpack.c.l.bf16 %v272
        %v337 = vunpack.c.l.bf16 %v273
        %v338 = vunpack.c.l.bf16 %v274
        %v339 = vunpack.c.l.bf16 %v275
        %v340 = vunpack.c.l.bf16 %v276
        %v341 = vunpack.c.l.bf16 %v277
        %v342 = vunpack.c.l.bf16 %v278
        %v343 = vunpack.c.l.bf16 %v279
        %v344 = vunpack.c.l.bf16 %v280
        %v345 = vunpack.c.l.bf16 %v281
        %v346 = vunpack.c.l.bf16 %v282
        %v347 = vunpack.c.l.bf16 %v283
        %v348 = vunpack.c.l.bf16 %v284
        %v349 = vunpack.c.l.bf16 %v285
        %v350 = vunpack.c.l.bf16 %v286
        %v351 = vunpack.c.l.bf16 %v287
        %v352 = vunpack.c.l.bf16 %v288
        %v353 = vunpack.c.l.bf16 %v289
        %v354 = vunpack.c.l.bf16 %v290
        %v355 = vunpack.c.l.bf16 %v291
        %v356 = vunpack.c.l.bf16 %v292
        %v357 = vunpack.c.l.bf16 %v293
        %v358 = vunpack.c.l.bf16 %v294
        %v359 = vunpack.c.l.bf16 %v295
        %v360 = vunpack.c.l.bf16 %v296
        %v361 = vunpack.c.l.bf16 %v297
        %v362 = vunpack.c.l.bf16 %v298
        %v363 = vunpack.c.l.bf16 %v299
        %v364 = vunpack.c.l.bf16 %v300
        %v365 = vunpack.c.l.bf16 %v301
        %v366 = vunpack.c.l.bf16 %v302
        %v367 = vunpack.c.l.bf16 %v303
        %v368 = vunpack.c.l.bf16 %v304
        %v369 = vunpack.c.l.bf16 %v305
        %v370 = vunpack.c.l.bf16 %v306
        %v371 = vunpack.c.l.bf16 %v307
        %v372 = vunpack.c.l.bf16 %v308
        %v373 = vunpack.c.l.bf16 %v309
        %v374 = vunpack.c.l.bf16 %v310
        %v375 = vunpack.c.l.bf16 %v311
        %v376 = vunpack.c.l.bf16 %v312
        %v377 = vunpack.c.l.bf16 %v313
        %v378 = vunpack.c.l.bf16 %v314
        %v379 = vunpack.c.l.bf16 %v315
        %v380 = vunpack.c.l.bf16 %v316
        %v381 = vunpack.c.l.bf16 %v317
        %v382 = vunpack.c.l.bf16 %v318
        %v383 = vunpack.c.l.bf16 %v319
        %v384 = vunpack.c.l.bf16 %v320
        %v385 = vunpack.c.l.bf16 %v321
        %v386 = vunpack.c.l.bf16 %v322
        %v387 = vunpack.c.l.bf16 %v323
        %v388 = vunpack.c.l.bf16 %v324
        %v389 = vunpack.c.l.bf16 %v325
        %v390 = vunpack.c.l.bf16 %v326
        %v391 = vunpack.c.l.bf16 %v327
        %v392 = vunpack.c.l.bf16 %v328
        %v393 = vunpack.c.l.bf16 %v329
        %v394 = vunpack.c.l.bf16 %v330
        %v395 = vunpack.c.l.bf16 %v331
        %v396 = vunpack.c.l.bf16 %v332
        %v398 = vperm.slane %v265, 0
        %v400 = vmul.f32 %v333, %v398
        %v401 = vmul.f32 %v334, %v398
        %v402 = vmul.f32 %v335, %v398
        %v403 = vmul.f32 %v336, %v398
        %v404 = vmul.f32 %v337, %v398
        %v405 = vmul.f32 %v338, %v398
        %v406 = vmul.f32 %v339, %v398
        %v407 = vmul.f32 %v340, %v398
        %v408 = vmul.f32 %v341, %v398
        %v409 = vmul.f32 %v342, %v398
        %v410 = vmul.f32 %v343, %v398
        %v411 = vmul.f32 %v344, %v398
        %v412 = vmul.f32 %v345, %v398
        %v413 = vmul.f32 %v346, %v398
        %v414 = vmul.f32 %v347, %v398
        %v415 = vmul.f32 %v348, %v398
        %v416 = vmul.f32 %v349, %v398
        %v417 = vmul.f32 %v350, %v398
        %v418 = vmul.f32 %v351, %v398
        %v419 = vmul.f32 %v352, %v398
        %v420 = vmul.f32 %v353, %v398
        %v421 = vmul.f32 %v354, %v398
        %v422 = vmul.f32 %v355, %v398
        %v423 = vmul.f32 %v356, %v398
        %v424 = vmul.f32 %v357, %v398
        %v425 = vmul.f32 %v358, %v398
        %v426 = vmul.f32 %v359, %v398
        %v427 = vmul.f32 %v360, %v398
        %v428 = vmul.f32 %v361, %v398
        %v429 = vmul.f32 %v362, %v398
        %v430 = vmul.f32 %v363, %v398
        %v431 = vmul.f32 %v364, %v398
        %v432 = vmul.f32 %v365, %v398
        %v433 = vmul.f32 %v366, %v398
        %v434 = vmul.f32 %v367, %v398
        %v435 = vmul.f32 %v368, %v398
        %v436 = vmul.f32 %v369, %v398
        %v437 = vmul.f32 %v370, %v398
        %v438 = vmul.f32 %v371, %v398
        %v439 = vmul.f32 %v372, %v398
        %v440 = vmul.f32 %v373, %v398
        %v441 = vmul.f32 %v374, %v398
        %v442 = vmul.f32 %v375, %v398
        %v443 = vmul.f32 %v376, %v398
        %v444 = vmul.f32 %v377, %v398
        %v445 = vmul.f32 %v378, %v398
        %v446 = vmul.f32 %v379, %v398
        %v447 = vmul.f32 %v380, %v398
        %v448 = vmul.f32 %v381, %v398
        %v449 = vmul.f32 %v382, %v398
        %v450 = vmul.f32 %v383, %v398
        %v451 = vmul.f32 %v384, %v398
        %v452 = vmul.f32 %v385, %v398
        %v453 = vmul.f32 %v386, %v398
        %v454 = vmul.f32 %v387, %v398
        %v455 = vmul.f32 %v388, %v398
        %v456 = vmul.f32 %v389, %v398
        %v457 = vmul.f32 %v390, %v398
        %v458 = vmul.f32 %v391, %v398
        %v459 = vmul.f32 %v392, %v398
        %v460 = vmul.f32 %v393, %v398
        %v461 = vmul.f32 %v394, %v398
        %v462 = vmul.f32 %v395, %v398
        %v463 = vmul.f32 %v396, %v398
        %v465 = vperm.slane %v268, 0
        %v467 = vadd.f32 %v400, %v465
        %v468 = vadd.f32 %v401, %v465
        %v469 = vadd.f32 %v402, %v465
        %v470 = vadd.f32 %v403, %v465
        %v471 = vadd.f32 %v404, %v465
        %v472 = vadd.f32 %v405, %v465
        %v473 = vadd.f32 %v406, %v465
        %v474 = vadd.f32 %v407, %v465
        %v475 = vadd.f32 %v408, %v465
        %v476 = vadd.f32 %v409, %v465
        %v477 = vadd.f32 %v410, %v465
        %v478 = vadd.f32 %v411, %v465
        %v479 = vadd.f32 %v412, %v465
        %v480 = vadd.f32 %v413, %v465
        %v481 = vadd.f32 %v414, %v465
        %v482 = vadd.f32 %v415, %v465
        %v483 = vadd.f32 %v416, %v465
        %v484 = vadd.f32 %v417, %v465
        %v485 = vadd.f32 %v418, %v465
        %v486 = vadd.f32 %v419, %v465
        %v487 = vadd.f32 %v420, %v465
        %v488 = vadd.f32 %v421, %v465
        %v489 = vadd.f32 %v422, %v465
        %v490 = vadd.f32 %v423, %v465
        %v491 = vadd.f32 %v424, %v465
        %v492 = vadd.f32 %v425, %v465
        %v493 = vadd.f32 %v426, %v465
        %v494 = vadd.f32 %v427, %v465
        %v495 = vadd.f32 %v428, %v465
        %v496 = vadd.f32 %v429, %v465
        %v497 = vadd.f32 %v430, %v465
        %v498 = vadd.f32 %v431, %v465
        %v499 = vadd.f32 %v432, %v465
        %v500 = vadd.f32 %v433, %v465
        %v501 = vadd.f32 %v434, %v465
        %v502 = vadd.f32 %v435, %v465
        %v503 = vadd.f32 %v436, %v465
        %v504 = vadd.f32 %v437, %v465
        %v505 = vadd.f32 %v438, %v465
        %v506 = vadd.f32 %v439, %v465
        %v507 = vadd.f32 %v440, %v465
        %v508 = vadd.f32 %v441, %v465
        %v509 = vadd.f32 %v442, %v465
        %v510 = vadd.f32 %v443, %v465
        %v511 = vadd.f32 %v444, %v465
        %v512 = vadd.f32 %v445, %v465
        %v513 = vadd.f32 %v446, %v465
        %v514 = vadd.f32 %v447, %v465
        %v515 = vadd.f32 %v448, %v465
        %v516 = vadd.f32 %v449, %v465
        %v517 = vadd.f32 %v450, %v465
        %v518 = vadd.f32 %v451, %v465
        %v519 = vadd.f32 %v452, %v465
        %v520 = vadd.f32 %v453, %v465
        %v521 = vadd.f32 %v454, %v465
        %v522 = vadd.f32 %v455, %v465
        %v523 = vadd.f32 %v456, %v465
        %v524 = vadd.f32 %v457, %v465
        %v525 = vadd.f32 %v458, %v465
        %v526 = vadd.f32 %v459, %v465
        %v527 = vadd.f32 %v460, %v465
        %v528 = vadd.f32 %v461, %v465
        %v529 = vadd.f32 %v462, %v465
        %v530 = vadd.f32 %v463, %v465
        %v531 = vmax.f32 %v467, 0.0
        %v532 = vmax.f32 %v468, 0.0
        %v533 = vmax.f32 %v469, 0.0
        %v534 = vmax.f32 %v470, 0.0
        %v535 = vmax.f32 %v471, 0.0
        %v536 = vmax.f32 %v472, 0.0
        %v537 = vmax.f32 %v473, 0.0
        %v538 = vmax.f32 %v474, 0.0
        %v539 = vmax.f32 %v475, 0.0
        %v540 = vmax.f32 %v476, 0.0
        %v541 = vmax.f32 %v477, 0.0
        %v542 = vmax.f32 %v478, 0.0
        %v543 = vmax.f32 %v479, 0.0
        %v544 = vmax.f32 %v480, 0.0
        %v545 = vmax.f32 %v481, 0.0
        %v546 = vmax.f32 %v482, 0.0
        %v547 = vmax.f32 %v483, 0.0
        %v548 = vmax.f32 %v484, 0.0
        %v549 = vmax.f32 %v485, 0.0
        %v550 = vmax.f32 %v486, 0.0
        %v551 = vmax.f32 %v487, 0.0
        %v552 = vmax.f32 %v488, 0.0
        %v553 = vmax.f32 %v489, 0.0
        %v554 = vmax.f32 %v490, 0.0
        %v555 = vmax.f32 %v491, 0.0
        %v556 = vmax.f32 %v492, 0.0
        %v557 = vmax.f32 %v493, 0.0
        %v558 = vmax.f32 %v494, 0.0
        %v559 = vmax.f32 %v495, 0.0
        %v560 = vmax.f32 %v496, 0.0
        %v561 = vmax.f32 %v497, 0.0
        %v562 = vmax.f32 %v498, 0.0
        %v563 = vmax.f32 %v499, 0.0
        %v564 = vmax.f32 %v500, 0.0
        %v565 = vmax.f32 %v501, 0.0
        %v566 = vmax.f32 %v502, 0.0
        %v567 = vmax.f32 %v503, 0.0
        %v568 = vmax.f32 %v504, 0.0
        %v569 = vmax.f32 %v505, 0.0
        %v570 = vmax.f32 %v506, 0.0
        %v571 = vmax.f32 %v507, 0.0
        %v572 = vmax.f32 %v508, 0.0
        %v573 = vmax.f32 %v509, 0.0
        %v574 = vmax.f32 %v510, 0.0
        %v575 = vmax.f32 %v511, 0.0
        %v576 = vmax.f32 %v512, 0.0
        %v577 = vmax.f32 %v513, 0.0
        %v578 = vmax.f32 %v514, 0.0
        %v579 = vmax.f32 %v515, 0.0
        %v580 = vmax.f32 %v516, 0.0
        %v581 = vmax.f32 %v517, 0.0
        %v582 = vmax.f32 %v518, 0.0
        %v583 = vmax.f32 %v519, 0.0
        %v584 = vmax.f32 %v520, 0.0
        %v585 = vmax.f32 %v521, 0.0
        %v586 = vmax.f32 %v522, 0.0
        %v587 = vmax.f32 %v523, 0.0
        %v588 = vmax.f32 %v524, 0.0
        %v589 = vmax.f32 %v525, 0.0
        %v590 = vmax.f32 %v526, 0.0
        %v591 = vmax.f32 %v527, 0.0
        %v592 = vmax.f32 %v528, 0.0
        %v593 = vmax.f32 %v529, 0.0
        %v594 = vmax.f32 %v530, 0.0
        %v595 = vpack.c.bf16 %v531, %v531
        %v596 = vpack.c.bf16 %v532, %v532
        %v597 = vpack.c.bf16 %v533, %v533
        %v598 = vpack.c.bf16 %v534, %v534
        %v599 = vpack.c.bf16 %v535, %v535
        %v600 = vpack.c.bf16 %v536, %v536
        %v601 = vpack.c.bf16 %v537, %v537
        %v602 = vpack.c.bf16 %v538, %v538
        %v603 = vpack.c.bf16 %v539, %v539
        %v604 = vpack.c.bf16 %v540, %v540
        %v605 = vpack.c.bf16 %v541, %v541
        %v606 = vpack.c.bf16 %v542, %v542
        %v607 = vpack.c.bf16 %v543, %v543
        %v608 = vpack.c.bf16 %v544, %v544
        %v609 = vpack.c.bf16 %v545, %v545
        %v610 = vpack.c.bf16 %v546, %v546
        %v611 = vpack.c.bf16 %v547, %v547
        %v612 = vpack.c.bf16 %v548, %v548
        %v613 = vpack.c.bf16 %v549, %v549
        %v614 = vpack.c.bf16 %v550, %v550
        %v615 = vpack.c.bf16 %v551, %v551
        %v616 = vpack.c.bf16 %v552, %v552
        %v617 = vpack.c.bf16 %v553, %v553
        %v618 = vpack.c.bf16 %v554, %v554
        %v619 = vpack.c.bf16 %v555, %v555
        %v620 = vpack.c.bf16 %v556, %v556
        %v621 = vpack.c.bf16 %v557, %v557
        %v622 = vpack.c.bf16 %v558, %v558
        %v623 = vpack.c.bf16 %v559, %v559
        %v624 = vpack.c.bf16 %v560, %v560
        %v625 = vpack.c.bf16 %v561, %v561
        %v626 = vpack.c.bf16 %v562, %v562
        %v627 = vpack.c.bf16 %v563, %v563
        %v628 = vpack.c.bf16 %v564, %v564
        %v629 = vpack.c.bf16 %v565, %v565
        %v630 = vpack.c.bf16 %v566, %v566
        %v631 = vpack.c.bf16 %v567, %v567
        %v632 = vpack.c.bf16 %v568, %v568
        %v633 = vpack.c.bf16 %v569, %v569
        %v634 = vpack.c.bf16 %v570, %v570
        %v635 = vpack.c.bf16 %v571, %v571
        %v636 = vpack.c.bf16 %v572, %v572
        %v637 = vpack.c.bf16 %v573, %v573
        %v638 = vpack.c.bf16 %v574, %v574
        %v639 = vpack.c.bf16 %v575, %v575
        %v640 = vpack.c.bf16 %v576, %v576
        %v641 = vpack.c.bf16 %v577, %v577
        %v642 = vpack.c.bf16 %v578, %v578
        %v643 = vpack.c.bf16 %v579, %v579
        %v644 = vpack.c.bf16 %v580, %v580
        %v645 = vpack.c.bf16 %v581, %v581
        %v646 = vpack.c.bf16 %v582, %v582
        %v647 = vpack.c.bf16 %v583, %v583
        %v648 = vpack.c.bf16 %v584, %v584
        %v649 = vpack.c.bf16 %v585, %v585
        %v650 = vpack.c.bf16 %v586, %v586
        %v651 = vpack.c.bf16 %v587, %v587
        %v652 = vpack.c.bf16 %v588, %v588
        %v653 = vpack.c.bf16 %v589, %v589
        %v654 = vpack.c.bf16 %v590, %v590
        %v655 = vpack.c.bf16 %v591, %v591
        %v656 = vpack.c.bf16 %v592, %v592
        %v657 = vpack.c.bf16 %v593, %v593
        %v658 = vpack.c.bf16 %v594, %v594
        %659 = vst [vmem:[%s226] sm:$0xf] %v595
        %660 = vst [vmem:[%s226 + $0x4] sm:$0xf] %v596
        %661 = vst [vmem:[%s226 + $0x8] sm:$0xf] %v597
        %662 = vst [vmem:[%s226 + $0xc] sm:$0xf] %v598
        %663 = vst [vmem:[%s226 + $0x10] sm:$0xf] %v599
        %664 = vst [vmem:[%s226 + $0x14] sm:$0xf] %v600
        %665 = vst [vmem:[%s226 + $0x18] sm:$0xf] %v601
        %666 = vst [vmem:[%s226 + $0x1c] sm:$0xf] %v602
        %667 = vst [vmem:[%s226 + $0x20] sm:$0xf] %v603
        %668 = vst [vmem:[%s226 + $0x24] sm:$0xf] %v604
        %669 = vst [vmem:[%s226 + $0x28] sm:$0xf] %v605
        %670 = vst [vmem:[%s226 + $0x2c] sm:$0xf] %v606
        %671 = vst [vmem:[%s226 + $0x30] sm:$0xf] %v607
        %672 = vst [vmem:[%s226 + $0x34] sm:$0xf] %v608
        %673 = vst [vmem:[%s226 + $0x38] sm:$0xf] %v609
        %674 = vst [vmem:[%s226 + $0x3c] sm:$0xf] %v610
        %675 = vst [vmem:[%s226 + $0x40] sm:$0xf] %v611
        %676 = vst [vmem:[%s226 + $0x44] sm:$0xf] %v612
        %677 = vst [vmem:[%s226 + $0x48] sm:$0xf] %v613
        %678 = vst [vmem:[%s226 + $0x4c] sm:$0xf] %v614
        %679 = vst [vmem:[%s226 + $0x50] sm:$0xf] %v615
        %680 = vst [vmem:[%s226 + $0x54] sm:$0xf] %v616
        %681 = vst [vmem:[%s226 + $0x58] sm:$0xf] %v617
        %682 = vst [vmem:[%s226 + $0x5c] sm:$0xf] %v618
        %683 = vst [vmem:[%s226 + $0x60] sm:$0xf] %v619
        %684 = vst [vmem:[%s226 + $0x64] sm:$0xf] %v620
        %685 = vst [vmem:[%s226 + $0x68] sm:$0xf] %v621
        %686 = vst [vmem:[%s226 + $0x6c] sm:$0xf] %v622
        %687 = vst [vmem:[%s226 + $0x70] sm:$0xf] %v623
        %688 = vst [vmem:[%s226 + $0x74] sm:$0xf] %v624
        %689 = vst [vmem:[%s226 + $0x78] sm:$0xf] %v625
        %690 = vst [vmem:[%s226 + $0x7c] sm:$0xf] %v626
        %691 = vst [vmem:[%s226 + $0x80] sm:$0xf] %v627
        %692 = vst [vmem:[%s226 + $0x84] sm:$0xf] %v628
        %693 = vst [vmem:[%s226 + $0x88] sm:$0xf] %v629
        %694 = vst [vmem:[%s226 + $0x8c] sm:$0xf] %v630
        %695 = vst [vmem:[%s226 + $0x90] sm:$0xf] %v631
        %696 = vst [vmem:[%s226 + $0x94] sm:$0xf] %v632
        %697 = vst [vmem:[%s226 + $0x98] sm:$0xf] %v633
        %698 = vst [vmem:[%s226 + $0x9c] sm:$0xf] %v634
        %699 = vst [vmem:[%s226 + $0xa0] sm:$0xf] %v635
        %700 = vst [vmem:[%s226 + $0xa4] sm:$0xf] %v636
        %701 = vst [vmem:[%s226 + $0xa8] sm:$0xf] %v637
        %702 = vst [vmem:[%s226 + $0xac] sm:$0xf] %v638
        %703 = vst [vmem:[%s226 + $0xb0] sm:$0xf] %v639
        %704 = vst [vmem:[%s226 + $0xb4] sm:$0xf] %v640
        %705 = vst [vmem:[%s226 + $0xb8] sm:$0xf] %v641
        %706 = vst [vmem:[%s226 + $0xbc] sm:$0xf] %v642
        %707 = vst [vmem:[%s226 + $0xc0] sm:$0xf] %v643
        %708 = vst [vmem:[%s226 + $0xc4] sm:$0xf] %v644
        %709 = vst [vmem:[%s226 + $0xc8] sm:$0xf] %v645
        %710 = vst [vmem:[%s226 + $0xcc] sm:$0xf] %v646
        %711 = vst [vmem:[%s226 + $0xd0] sm:$0xf] %v647
        %712 = vst [vmem:[%s226 + $0xd4] sm:$0xf] %v648
        %713 = vst [vmem:[%s226 + $0xd8] sm:$0xf] %v649
        %714 = vst [vmem:[%s226 + $0xdc] sm:$0xf] %v650
        %715 = vst [vmem:[%s226 + $0xe0] sm:$0xf] %v651
        %716 = vst [vmem:[%s226 + $0xe4] sm:$0xf] %v652
        %717 = vst [vmem:[%s226 + $0xe8] sm:$0xf] %v653
        %718 = vst [vmem:[%s226 + $0xec] sm:$0xf] %v654
        %719 = vst [vmem:[%s226 + $0xf0] sm:$0xf] %v655
        %720 = vst [vmem:[%s226 + $0xf4] sm:$0xf] %v656
        %721 = vst [vmem:[%s226 + $0xf8] sm:$0xf] %v657
        %722 = vst [vmem:[%s226 + $0xfc] sm:$0xf] %v658
        %s723 = sand.u32 %s134, 1
        %s724 = sand.u32 %s134, 1
        %s725 = smul.addr %s724, 256
        %s726 = scalar_lea.vmem [#allocation2], %s725
        // Predicated region
        $region41: #{darts_stacked_cells_forward.27} parent=39 // pred_check
          %p727 = pneg %p144
        $region42: #{darts_stacked_cells_forward.27} parent=39 // pred_check_branch
          %729 = sbr.rel (%p727) target = $region44
        $region43: #{darts_stacked_cells_forward.27} parent=39 // pred_region
          %s730 = smul.u32 64, %s16
          %s731 = ssub.s32 100, %s730
          %p732 = scmp.lt.s32.totalorder %s731, 64
          %s733 = scalar_select %p732, %s731, 64
          %s734 = smul.u32 4, %s733
          %p735 = scmp.ne.s32.totalorder 0, %s734
          %s736 = smul.addr %s730, 4
          %s737 = scalar_lea.vmem %s5, %s736
          // Predicated region
          $region45: #{darts_stacked_cells_forward.27} parent=43 // pred_check
            %p738 = pneg %p735
          $region46: #{darts_stacked_cells_forward.27} parent=43 // pred_check_branch
            %740 = sbr.rel (%p738) target = $region48
          $region47: #{darts_stacked_cells_forward.27} parent=43 // pred_region
            // Predicated region
            $region49: #{darts_stacked_cells_forward.27} parent=47 // pred_check
              _
            $region50: #{darts_stacked_cells_forward.27} parent=47 // pred_check_branch
              %742 = sbr.rel target = $region52
            $region51: #{darts_stacked_cells_forward.27} parent=47 // pred_region
              // Predicated region
              $region71: #{darts_stacked_cells_forward.27} parent=51 // pred_check
                _
              $region72: #{darts_stacked_cells_forward.27} parent=51 // pred_check_branch
                %854 = sbr.rel (0) target = $region74
              $region73: #{darts_stacked_cells_forward.27} parent=51 // pred_region
                %s856 = ssub.s32 16, 1
                %s857 = sshrl.u32 %s733, 5
                // While loop
                $region75: #{darts_stacked_cells_forward.27} parent=73 // loop_pre_header
                  _
                $region76: #{darts_stacked_cells_forward.27} parent=73 // loop_header
                  %s859 = sphi 0, %s861
                  %p860 = scmp.ge.s32.totalorder %s859, %s857
                  %s864 = sphi 0, %s933
                  %s865 = sphi %s726, %s936
                  %s866 = sphi %s737, %s937
                $region77: #{darts_stacked_cells_forward.27} parent=73 // loop_header_branch
                  %863 = sbr.rel (%p860) target = $region81
                $region78: #{darts_stacked_cells_forward.27} parent=73 // loop_body
                  %v867 = vld [vmem:[%s865] sm:%s856]
                  %868 = vst [vmem:[%s866] sm:%s856] %v867
                  %v869 = vld [vmem:[%s865 + $0x4] sm:%s856]
                  %870 = vst [vmem:[%s866 + $0x4] sm:%s856] %v869
                  %v871 = vld [vmem:[%s865 + $0x8] sm:%s856]
                  %872 = vst [vmem:[%s866 + $0x8] sm:%s856] %v871
                  %v873 = vld [vmem:[%s865 + $0xc] sm:%s856]
                  %874 = vst [vmem:[%s866 + $0xc] sm:%s856] %v873
                  %v875 = vld [vmem:[%s865 + $0x10] sm:%s856]
                  %876 = vst [vmem:[%s866 + $0x10] sm:%s856] %v875
                  %v877 = vld [vmem:[%s865 + $0x14] sm:%s856]
                  %878 = vst [vmem:[%s866 + $0x14] sm:%s856] %v877
                  %v879 = vld [vmem:[%s865 + $0x18] sm:%s856]
                  %880 = vst [vmem:[%s866 + $0x18] sm:%s856] %v879
                  %v881 = vld [vmem:[%s865 + $0x1c] sm:%s856]
                  %882 = vst [vmem:[%s866 + $0x1c] sm:%s856] %v881
                  %v883 = vld [vmem:[%s865 + $0x20] sm:%s856]
                  %884 = vst [vmem:[%s866 + $0x20] sm:%s856] %v883
                  %v885 = vld [vmem:[%s865 + $0x24] sm:%s856]
                  %886 = vst [vmem:[%s866 + $0x24] sm:%s856] %v885
                  %v887 = vld [vmem:[%s865 + $0x28] sm:%s856]
                  %888 = vst [vmem:[%s866 + $0x28] sm:%s856] %v887
                  %v889 = vld [vmem:[%s865 + $0x2c] sm:%s856]
                  %890 = vst [vmem:[%s866 + $0x2c] sm:%s856] %v889
                  %v891 = vld [vmem:[%s865 + $0x30] sm:%s856]
                  %892 = vst [vmem:[%s866 + $0x30] sm:%s856] %v891
                  %v893 = vld [vmem:[%s865 + $0x34] sm:%s856]
                  %894 = vst [vmem:[%s866 + $0x34] sm:%s856] %v893
                  %v895 = vld [vmem:[%s865 + $0x38] sm:%s856]
                  %896 = vst [vmem:[%s866 + $0x38] sm:%s856] %v895
                  %v897 = vld [vmem:[%s865 + $0x3c] sm:%s856]
                  %898 = vst [vmem:[%s866 + $0x3c] sm:%s856] %v897
                  %v899 = vld [vmem:[%s865 + $0x40] sm:%s856]
                  %900 = vst [vmem:[%s866 + $0x40] sm:%s856] %v899
                  %v901 = vld [vmem:[%s865 + $0x44] sm:%s856]
                  %902 = vst [vmem:[%s866 + $0x44] sm:%s856] %v901
                  %v903 = vld [vmem:[%s865 + $0x48] sm:%s856]
                  %904 = vst [vmem:[%s866 + $0x48] sm:%s856] %v903
                  %v905 = vld [vmem:[%s865 + $0x4c] sm:%s856]
                  %906 = vst [vmem:[%s866 + $0x4c] sm:%s856] %v905
                  %v907 = vld [vmem:[%s865 + $0x50] sm:%s856]
                  %908 = vst [vmem:[%s866 + $0x50] sm:%s856] %v907
                  %v909 = vld [vmem:[%s865 + $0x54] sm:%s856]
                  %910 = vst [vmem:[%s866 + $0x54] sm:%s856] %v909
                  %v911 = vld [vmem:[%s865 + $0x58] sm:%s856]
                  %912 = vst [vmem:[%s866 + $0x58] sm:%s856] %v911
                  %v913 = vld [vmem:[%s865 + $0x5c] sm:%s856]
                  %914 = vst [vmem:[%s866 + $0x5c] sm:%s856] %v913
                  %v915 = vld [vmem:[%s865 + $0x60] sm:%s856]
                  %916 = vst [vmem:[%s866 + $0x60] sm:%s856] %v915
                  %v917 = vld [vmem:[%s865 + $0x64] sm:%s856]
                  %918 = vst [vmem:[%s866 + $0x64] sm:%s856] %v917
                  %v919 = vld [vmem:[%s865 + $0x68] sm:%s856]
                  %920 = vst [vmem:[%s866 + $0x68] sm:%s856] %v919
                  %v921 = vld [vmem:[%s865 + $0x6c] sm:%s856]
                  %922 = vst [vmem:[%s866 + $0x6c] sm:%s856] %v921
                  %v923 = vld [vmem:[%s865 + $0x70] sm:%s856]
                  %924 = vst [vmem:[%s866 + $0x70] sm:%s856] %v923
                  %v925 = vld [vmem:[%s865 + $0x74] sm:%s856]
                  %926 = vst [vmem:[%s866 + $0x74] sm:%s856] %v925
                  %v927 = vld [vmem:[%s865 + $0x78] sm:%s856]
                  %928 = vst [vmem:[%s866 + $0x78] sm:%s856] %v927
                  %v929 = vld [vmem:[%s865 + $0x7c] sm:%s856]
                  %930 = vst [vmem:[%s866 + $0x7c] sm:%s856] %v929
                  %s931 = sadd.s32 1, %s864
                  %p932 = scmp.ge.s32.totalorder %s931, %s857
                  %s933 = scalar_select %p932, 0, %s931
                  %s934 = smul.u32 %s933, 128
                  %s935 = smul.u32 %s933, 128
                  %s936 = scalar_lea.vmem %s726, %s934 [#allocation2]
                  %s937 = scalar_lea.vmem %s737, %s935
                $region79: #{darts_stacked_cells_forward.27} parent=73 // loop_footer
                  %s861 = sadd.s32 %s859, 1
                $region80: #{darts_stacked_cells_forward.27} parent=73 // loop_footer_branch
                  %858 = sbr.rel target = $region76
                $region81: #{darts_stacked_cells_forward.27} parent=73 // loop_exit
                  _
                %s938 = sshrl.u32 %s733, 5
                %s939 = sand.u32 %s733, 31
                %s940 = smul.u32 %s938, 32
                %s941 = smul.u32 4, %s940
                %s942 = scalar_lea.vmem %s726, %s941 [#allocation2]
                %s943 = smul.u32 4, %s940
                %s944 = scalar_lea.vmem %s737, %s943
                // While loop
                $region82: #{darts_stacked_cells_forward.27} parent=73 // loop_pre_header
                  _
                $region83: #{darts_stacked_cells_forward.27} parent=73 // loop_header
                  %s946 = sphi 0, %s948
                  %p947 = scmp.ge.s32.totalorder %s946, %s939
                  %s951 = sphi 0, %s958
                  %s952 = sphi %s942, %s961
                  %s953 = sphi %s944, %s962
                $region84: #{darts_stacked_cells_forward.27} parent=73 // loop_header_branch
                  %950 = sbr.rel (%p947) target = $region88
                $region85: #{darts_stacked_cells_forward.27} parent=73 // loop_body
                  %v954 = vld [vmem:[%s952] sm:%s856]
                  %955 = vst [vmem:[%s953] sm:%s856] %v954
                  %s956 = sadd.s32 1, %s951
                  %p957 = scmp.ge.s32.totalorder %s956, %s939
                  %s958 = scalar_select %p957, 0, %s956
                  %s959 = smul.u32 %s958, 4
                  %s960 = smul.u32 %s958, 4
                  %s961 = scalar_lea.vmem %s942, %s959 [#allocation2]
                  %s962 = scalar_lea.vmem %s944, %s960
                $region86: #{darts_stacked_cells_forward.27} parent=73 // loop_footer
                  %s948 = sadd.s32 %s946, 1
                $region87: #{darts_stacked_cells_forward.27} parent=73 // loop_footer_branch
                  %945 = sbr.rel target = $region83
                $region88: #{darts_stacked_cells_forward.27} parent=73 // loop_exit
                  _
              $region74: #{darts_stacked_cells_forward.27} parent=51 // pred_fallthru
                _
            $region52: #{darts_stacked_cells_forward.27} parent=47 // pred_fallthru
              _
            // Predicated region
            $region53: #{darts_stacked_cells_forward.27} parent=47 // pred_check
              _
            $region54: #{darts_stacked_cells_forward.27} parent=47 // pred_check_branch
              %744 = sbr.rel (0) target = $region56
            $region55: #{darts_stacked_cells_forward.27} parent=47 // pred_region
              %s746 = ssub.s32 16, 1
              %s747 = sshrl.u32 %s733, 5
              // While loop
              $region57: #{darts_stacked_cells_forward.27} parent=55 // loop_pre_header
                _
              $region58: #{darts_stacked_cells_forward.27} parent=55 // loop_header
                %s749 = sphi 0, %s751
                %p750 = scmp.ge.s32.totalorder %s749, %s747
                %s754 = sphi 0, %s823
                %s755 = sphi %s726, %s826
                %s756 = sphi %s737, %s827
              $region59: #{darts_stacked_cells_forward.27} parent=55 // loop_header_branch
                %753 = sbr.rel (%p750) target = $region63
              $region60: #{darts_stacked_cells_forward.27} parent=55 // loop_body
                %v757 = vld [vmem:[%s755] sm:%s746]
                %758 = vst [vmem:[%s756] sm:%s746] %v757
                %v759 = vld [vmem:[%s755 + $0x4] sm:%s746]
                %760 = vst [vmem:[%s756 + $0x4] sm:%s746] %v759
                %v761 = vld [vmem:[%s755 + $0x8] sm:%s746]
                %762 = vst [vmem:[%s756 + $0x8] sm:%s746] %v761
                %v763 = vld [vmem:[%s755 + $0xc] sm:%s746]
                %764 = vst [vmem:[%s756 + $0xc] sm:%s746] %v763
                %v765 = vld [vmem:[%s755 + $0x10] sm:%s746]
                %766 = vst [vmem:[%s756 + $0x10] sm:%s746] %v765
                %v767 = vld [vmem:[%s755 + $0x14] sm:%s746]
                %768 = vst [vmem:[%s756 + $0x14] sm:%s746] %v767
                %v769 = vld [vmem:[%s755 + $0x18] sm:%s746]
                %770 = vst [vmem:[%s756 + $0x18] sm:%s746] %v769
                %v771 = vld [vmem:[%s755 + $0x1c] sm:%s746]
                %772 = vst [vmem:[%s756 + $0x1c] sm:%s746] %v771
                %v773 = vld [vmem:[%s755 + $0x20] sm:%s746]
                %774 = vst [vmem:[%s756 + $0x20] sm:%s746] %v773
                %v775 = vld [vmem:[%s755 + $0x24] sm:%s746]
                %776 = vst [vmem:[%s756 + $0x24] sm:%s746] %v775
                %v777 = vld [vmem:[%s755 + $0x28] sm:%s746]
                %778 = vst [vmem:[%s756 + $0x28] sm:%s746] %v777
                %v779 = vld [vmem:[%s755 + $0x2c] sm:%s746]
                %780 = vst [vmem:[%s756 + $0x2c] sm:%s746] %v779
                %v781 = vld [vmem:[%s755 + $0x30] sm:%s746]
                %782 = vst [vmem:[%s756 + $0x30] sm:%s746] %v781
                %v783 = vld [vmem:[%s755 + $0x34] sm:%s746]
                %784 = vst [vmem:[%s756 + $0x34] sm:%s746] %v783
                %v785 = vld [vmem:[%s755 + $0x38] sm:%s746]
                %786 = vst [vmem:[%s756 + $0x38] sm:%s746] %v785
                %v787 = vld [vmem:[%s755 + $0x3c] sm:%s746]
                %788 = vst [vmem:[%s756 + $0x3c] sm:%s746] %v787
                %v789 = vld [vmem:[%s755 + $0x40] sm:%s746]
                %790 = vst [vmem:[%s756 + $0x40] sm:%s746] %v789
                %v791 = vld [vmem:[%s755 + $0x44] sm:%s746]
                %792 = vst [vmem:[%s756 + $0x44] sm:%s746] %v791
                %v793 = vld [vmem:[%s755 + $0x48] sm:%s746]
                %794 = vst [vmem:[%s756 + $0x48] sm:%s746] %v793
                %v795 = vld [vmem:[%s755 + $0x4c] sm:%s746]
                %796 = vst [vmem:[%s756 + $0x4c] sm:%s746] %v795
                %v797 = vld [vmem:[%s755 + $0x50] sm:%s746]
                %798 = vst [vmem:[%s756 + $0x50] sm:%s746] %v797
                %v799 = vld [vmem:[%s755 + $0x54] sm:%s746]
                %800 = vst [vmem:[%s756 + $0x54] sm:%s746] %v799
                %v801 = vld [vmem:[%s755 + $0x58] sm:%s746]
                %802 = vst [vmem:[%s756 + $0x58] sm:%s746] %v801
                %v803 = vld [vmem:[%s755 + $0x5c] sm:%s746]
                %804 = vst [vmem:[%s756 + $0x5c] sm:%s746] %v803
                %v805 = vld [vmem:[%s755 + $0x60] sm:%s746]
                %806 = vst [vmem:[%s756 + $0x60] sm:%s746] %v805
                %v807 = vld [vmem:[%s755 + $0x64] sm:%s746]
                %808 = vst [vmem:[%s756 + $0x64] sm:%s746] %v807
                %v809 = vld [vmem:[%s755 + $0x68] sm:%s746]
                %810 = vst [vmem:[%s756 + $0x68] sm:%s746] %v809
                %v811 = vld [vmem:[%s755 + $0x6c] sm:%s746]
                %812 = vst [vmem:[%s756 + $0x6c] sm:%s746] %v811
                %v813 = vld [vmem:[%s755 + $0x70] sm:%s746]
                %814 = vst [vmem:[%s756 + $0x70] sm:%s746] %v813
                %v815 = vld [vmem:[%s755 + $0x74] sm:%s746]
                %816 = vst [vmem:[%s756 + $0x74] sm:%s746] %v815
                %v817 = vld [vmem:[%s755 + $0x78] sm:%s746]
                %818 = vst [vmem:[%s756 + $0x78] sm:%s746] %v817
                %v819 = vld [vmem:[%s755 + $0x7c] sm:%s746]
                %820 = vst [vmem:[%s756 + $0x7c] sm:%s746] %v819
                %s821 = sadd.s32 1, %s754
                %p822 = scmp.ge.s32.totalorder %s821, %s747
                %s823 = scalar_select %p822, 0, %s821
                %s824 = smul.u32 %s823, 128
                %s825 = smul.u32 %s823, 128
                %s826 = scalar_lea.vmem %s726, %s824 [#allocation2]
                %s827 = scalar_lea.vmem %s737, %s825
              $region61: #{darts_stacked_cells_forward.27} parent=55 // loop_footer
                %s751 = sadd.s32 %s749, 1
              $region62: #{darts_stacked_cells_forward.27} parent=55 // loop_footer_branch
                %748 = sbr.rel target = $region58
              $region63: #{darts_stacked_cells_forward.27} parent=55 // loop_exit
                _
              %s828 = sshrl.u32 %s733, 5
              %s829 = sand.u32 %s733, 31
              %s830 = smul.u32 %s828, 32
              %s831 = smul.u32 4, %s830
              %s832 = scalar_lea.vmem %s726, %s831 [#allocation2]
              %s833 = smul.u32 4, %s830
              %s834 = scalar_lea.vmem %s737, %s833
              // While loop
              $region64: #{darts_stacked_cells_forward.27} parent=55 // loop_pre_header
                _
              $region65: #{darts_stacked_cells_forward.27} parent=55 // loop_header
                %s836 = sphi 0, %s838
                %p837 = scmp.ge.s32.totalorder %s836, %s829
                %s841 = sphi 0, %s848
                %s842 = sphi %s832, %s851
                %s843 = sphi %s834, %s852
              $region66: #{darts_stacked_cells_forward.27} parent=55 // loop_header_branch
                %840 = sbr.rel (%p837) target = $region70
              $region67: #{darts_stacked_cells_forward.27} parent=55 // loop_body
                %v844 = vld [vmem:[%s842] sm:%s746]
                %845 = vst [vmem:[%s843] sm:%s746] %v844
                %s846 = sadd.s32 1, %s841
                %p847 = scmp.ge.s32.totalorder %s846, %s829
                %s848 = scalar_select %p847, 0, %s846
                %s849 = smul.u32 %s848, 4
                %s850 = smul.u32 %s848, 4
                %s851 = scalar_lea.vmem %s832, %s849 [#allocation2]
                %s852 = scalar_lea.vmem %s834, %s850
              $region68: #{darts_stacked_cells_forward.27} parent=55 // loop_footer
                %s838 = sadd.s32 %s836, 1
              $region69: #{darts_stacked_cells_forward.27} parent=55 // loop_footer_branch
                %835 = sbr.rel target = $region65
              $region70: #{darts_stacked_cells_forward.27} parent=55 // loop_exit
                _
            $region56: #{darts_stacked_cells_forward.27} parent=47 // pred_fallthru
              _
          $region48: #{darts_stacked_cells_forward.27} parent=43 // pred_fallthru
            _
          %963 = vnop
        $region44: #{darts_stacked_cells_forward.27} parent=39 // pred_fallthru
          _
      $region40: #{darts_stacked_cells_forward.27} parent=5 // pred_fallthru
        _
      %p964 = scmp.le.s32.totalorder 2, %s11
      // Predicated region
      $region89: #{darts_stacked_cells_forward.27} parent=5 // pred_check
        %p965 = pneg %p964
      $region90: #{darts_stacked_cells_forward.27} parent=5 // pred_check_branch
        %967 = sbr.rel (%p965) target = $region92
      $region91: #{darts_stacked_cells_forward.27} parent=5 // pred_region
        %s968 = ssub.s32 %s11, 2
        // Predicated region
        $region93: #{darts_stacked_cells_forward.27} parent=91 // pred_check
          %p969 = pneg %p150
        $region94: #{darts_stacked_cells_forward.27} parent=91 // pred_check_branch
          %971 = sbr.rel (%p969) target = $region96
        $region95: #{darts_stacked_cells_forward.27} parent=91 // pred_region
          %s972 = sand.u32 %s135, 1
          %s973 = sand.u32 %s135, 1
          %s974 = smul.addr %s973, 256
          %s975 = scalar_lea.vmem [#allocation2], %s974
        $region96: #{darts_stacked_cells_forward.27} parent=91 // pred_fallthru
          _
      $region92: #{darts_stacked_cells_forward.27} parent=5 // pred_fallthru
        _
    $region6: #{darts_stacked_cells_forward.27} parent=1 // loop_footer
      %s15 = sadd.s32 1, %s11
    $region7: #{darts_stacked_cells_forward.27} parent=1 // loop_footer_branch
      %10 = sbr.rel target = $region3
    $region8: #{darts_stacked_cells_forward.27} parent=1 // loop_exit
      _

// kernel: darts_stacked_cells_forward.26
$region0: #{darts_stacked_cells_forward.26}
  #allocation0 [shape = 'u32[]', space=smem, size = 0x4, offset = 0x4, fixed_abs, tag = 'smem constant byte address 0x4 - core index']
  #allocation1 [shape = 'u32[72,128]{1,0:T(1,128)}', space=vmem, size = 0x9000, scoped, tag = 'internal scratch']
  %s0 = inlined_call_operand.vmem [shape: bf16[800,27], index: 0, kind: input, shape index: {}]
  %s1 = inlined_call_operand.vmem [shape: bf16[27,128], index: 1, kind: input, shape index: {}]
  %s2 = inlined_call_operand.vmem [shape: bf16[800,128], index: 2, kind: output, shape index: {0}]
  %s3 = inlined_call_operand.vmem [shape: f32[2,8,128], index: 3, kind: output, shape index: {1}]
  %s4 = inlined_call_operand.vmem [shape: f32[2,8,128], index: 4, kind: output, shape index: {2}]
  %5 = xla_tuple %s2, %s3, %s4
  %s6 = sld [smem:[#allocation0]]
  $region101: #{darts_stacked_cells_forward.26} parent=0
    _
  %s8 = ssub.s32 1, %s6
  %s9 = scalar_select 0, %s8, %s6
  $region1: #{darts_stacked_cells_forward.26} parent=0
    #allocation2 [shape = 'u8[262144]{0}', space=vmem, size = 0x40000, scoped, tag = 'output window, operand 0']
    loop: start=0, step=1, limit=4
    $region2: #{darts_stacked_cells_forward.26} parent=1 // loop_pre_header
      _
    $region3: #{darts_stacked_cells_forward.26} parent=1 // loop_header
      %s11 = sphi 0, %s15
      %p12 = scmp.ge.s32.totalorder %s11, 4
      %s21 = sphi 0, %s23
      %s24 = sphi 0, %s21
      %s25 = sphi 0, %s24
      %s41 = sphi 0, %s25
      %s45 = sphi 0, %s45
      %s47 = sphi 0, %s45
      %s48 = sphi 0, %s47
      %s62 = sphi 0, %s48
      %s68 = sphi 0, %s70
      %s71 = sphi 0, %s68
      %s72 = sphi 0, %s71
      %s88 = sphi 0, %s72
      %s94 = sphi 0, %s96
      %s97 = sphi 0, %s94
      %s98 = sphi 0, %s97
      %s114 = sphi 0, %s98
      %s120 = sphi 0, %s122
      %s123 = sphi 0, %s120
      %s124 = sphi 0, %s123
      %s140 = sphi 0, %s124
    $region4: #{darts_stacked_cells_forward.26} parent=1 // loop_header_branch
      %14 = sbr.rel (%p12) target = $region8
    $region5: #{darts_stacked_cells_forward.26} parent=1 // loop_body
      %s16 = ssub.s32 %s11, 1
      %s17 = ssub.s32 %s11, 2
      %s18 = sadd.s32 %s11, 1
      %s19 = ssub.s32 %s11, %s18
      %p20 = scmp.eq.s32.totalorder %s19, 0
      %s22 = sadd.s32 %s21, 1
      %s23 = scalar_select %p20, %s21, %s22
      %p26 = pneg %p20
      %p27 = scmp.eq.s32.totalorder %s11, 1
      %p28 = por %p26, %p27
      %p29 = scmp.ne.s32.totalorder %s21, %s24
      %p30 = scmp.eq.s32.totalorder %s11, 0
      %p31 = por %p29, %p30
      %p32 = scmp.ne.s32.totalorder %s21, %s24
      %p33 = scmp.eq.s32.totalorder %s16, 1
      %p34 = por %p32, %p33
      %p35 = scmp.ne.s32.totalorder %s24, %s25
      %p36 = scmp.eq.s32.totalorder %s16, 0
      %p37 = por %p35, %p36
      %p38 = scmp.ne.s32.totalorder %s24, %s25
      %p39 = scmp.eq.s32.totalorder %s17, 1
      %p40 = por %p38, %p39
      %p42 = scmp.ne.s32.totalorder %s25, %s41
      %p43 = scmp.eq.s32.totalorder %s17, 0
      %p44 = por %p42, %p43
      %s46 = sadd.s32 %s45, 1
      %p49 = scmp.eq.s32.totalorder %s11, 1
      %p50 = scmp.ne.s32.totalorder %s45, %s47
      %p51 = scmp.eq.s32.totalorder %s11, 0
      %p52 = por %p50, %p51
      %p53 = scmp.ne.s32.totalorder %s45, %s47
      %p54 = scmp.eq.s32.totalorder %s16, 1
      %p55 = por %p53, %p54
      %p56 = scmp.ne.s32.totalorder %s47, %s48
      %p57 = scmp.eq.s32.totalorder %s16, 0
      %p58 = por %p56, %p57
      %p59 = scmp.ne.s32.totalorder %s47, %s48
      %p60 = scmp.eq.s32.totalorder %s17, 1
      %p61 = por %p59, %p60
      %p63 = scmp.ne.s32.totalorder %s48, %s62
      %p64 = scmp.eq.s32.totalorder %s17, 0
      %p65 = por %p63, %p64
      %s66 = ssub.s32 %s11, %s18
      %p67 = scmp.eq.s32.totalorder %s66, 0
      %s69 = sadd.s32 %s68, 1
      %s70 = scalar_select %p67, %s68, %s69
      %p73 = pneg %p67
      %p74 = scmp.eq.s32.totalorder %s11, 1
      %p75 = por %p73, %p74
      %p76 = scmp.ne.s32.totalorder %s68, %s71
      %p77 = scmp.eq.s32.totalorder %s11, 0
      %p78 = por %p76, %p77
      %p79 = scmp.ne.s32.totalorder %s68, %s71
      %p80 = scmp.eq.s32.totalorder %s16, 1
      %p81 = por %p79, %p80
      %p82 = scmp.ne.s32.totalorder %s71, %s72
      %p83 = scmp.eq.s32.totalorder %s16, 0
      %p84 = por %p82, %p83
      %p85 = scmp.ne.s32.totalorder %s71, %s72
      %p86 = scmp.eq.s32.totalorder %s17, 1
      %p87 = por %p85, %p86
      %p89 = scmp.ne.s32.totalorder %s72, %s88
      %p90 = scmp.eq.s32.totalorder %s17, 0
      %p91 = por %p89, %p90
      %s92 = ssub.s32 %s11, %s18
      %p93 = scmp.eq.s32.totalorder %s92, 0
      %s95 = sadd.s32 %s94, 1
      %s96 = scalar_select %p93, %s94, %s95
      %p99 = pneg %p93
      %p100 = scmp.eq.s32.totalorder %s11, 1
      %p101 = por %p99, %p100
      %p102 = scmp.ne.s32.totalorder %s94, %s97
      %p103 = scmp.eq.s32.totalorder %s11, 0
      %p104 = por %p102, %p103
      %p105 = scmp.ne.s32.totalorder %s94, %s97
      %p106 = scmp.eq.s32.totalorder %s16, 1
      %p107 = por %p105, %p106
      %p108 = scmp.ne.s32.totalorder %s97, %s98
      %p109 = scmp.eq.s32.totalorder %s16, 0
      %p110 = por %p108, %p109
      %p111 = scmp.ne.s32.totalorder %s97, %s98
      %p112 = scmp.eq.s32.totalorder %s17, 1
      %p113 = por %p111, %p112
      %p115 = scmp.ne.s32.totalorder %s98, %s114
      %p116 = scmp.eq.s32.totalorder %s17, 0
      %p117 = por %p115, %p116
      %s118 = ssub.s32 %s11, %s18
      %p119 = scmp.eq.s32.totalorder %s118, 0
      %s121 = sadd.s32 %s120, 1
      %s122 = scalar_select %p119, %s120, %s121
      %p125 = pneg %p119
      %p126 = scmp.eq.s32.totalorder %s11, 1
      %p127 = por %p125, %p126
      %p128 = scmp.ne.s32.totalorder %s120, %s123
      %p129 = scmp.eq.s32.totalorder %s11, 0
      %p130 = por %p128, %p129
      %p131 = scmp.ne.s32.totalorder %s120, %s123
      %p132 = scmp.eq.s32.totalorder %s16, 1
      %p133 = por %p131, %p132
      %p134 = scmp.ne.s32.totalorder %s123, %s124
      %p135 = scmp.eq.s32.totalorder %s16, 0
      %p136 = por %p134, %p135
      %p137 = scmp.ne.s32.totalorder %s123, %s124
      %p138 = scmp.eq.s32.totalorder %s17, 1
      %p139 = por %p137, %p138
      %p141 = scmp.ne.s32.totalorder %s124, %s140
      %p142 = scmp.eq.s32.totalorder %s17, 0
      %p143 = por %p141, %p142
      %p144 = scmp.le.s32.totalorder 1, %s11
      %p145 = scmp.lt.s32.totalorder %s11, 3
      %p146 = pnand %p144, %p145
      %p147 = pneg %p146
      // Predicated region
      $region9: #{darts_stacked_cells_forward.26} parent=5 // pred_check
        _
      $region10: #{darts_stacked_cells_forward.26} parent=5 // pred_check_branch
        %149 = sbr.rel (%p146) target = $region12
      $region11: #{darts_stacked_cells_forward.26} parent=5 // pred_region
        %s150 = ssub.s32 %s11, 1
        // Predicated region
        $region13: #{darts_stacked_cells_forward.26} parent=11 // pred_check
          %p151 = pneg %p58
        $region14: #{darts_stacked_cells_forward.26} parent=11 // pred_check_branch
          %153 = sbr.rel (%p151) target = $region16
        $region15: #{darts_stacked_cells_forward.26} parent=11 // pred_region
          _
        $region16: #{darts_stacked_cells_forward.26} parent=11 // pred_fallthru
          _
      $region12: #{darts_stacked_cells_forward.26} parent=5 // pred_fallthru
        _
      %p154 = scmp.lt.s32.totalorder %s11, 2
      // Predicated region
      $region17: #{darts_stacked_cells_forward.26} parent=5 // pred_check
        %p155 = pneg %p154
      $region18: #{darts_stacked_cells_forward.26} parent=5 // pred_check_branch
        %157 = sbr.rel (%p155) target = $region20
      $region19: #{darts_stacked_cells_forward.26} parent=5 // pred_region
        // Predicated region
        $region21: #{darts_stacked_cells_forward.26} parent=19 // pred_check
          %p158 = pneg %p31
        $region22: #{darts_stacked_cells_forward.26} parent=19 // pred_check_branch
          %160 = sbr.rel (%p158) target = $region24
        $region23: #{darts_stacked_cells_forward.26} parent=19 // pred_region
          %s161 = smul.u32 64, %s11
          %s162 = ssub.s32 100, %s161
          %p163 = scmp.lt.s32.totalorder %s162, 64
          %s164 = scalar_select %p163, %s162, 64
          %s165 = smul.u32 4, %s164
          %p166 = scmp.lt.s32.totalorder %s161, 99
          %s167 = scalar_select %p166, %s161, 99
          %s168 = smul.addr %s167, 4
          %s169 = scalar_lea.vmem %s0, %s168
          %s170 = smul.u32 64, %s11
          %s171 = ssub.s32 100, %s170
          %p172 = scmp.lt.s32.totalorder %s171, 64
          %s173 = scalar_select %p172, %s171, 64
          %s174 = smul.u32 4, %s173
        $region24: #{darts_stacked_cells_forward.26} parent=19 // pred_fallthru
          _
      $region20: #{darts_stacked_cells_forward.26} parent=5 // pred_fallthru
        _
      %p175 = scmp.le.s32.totalorder 1, %s11
      %p176 = scmp.lt.s32.totalorder %s11, 3
      %p177 = pnand %p175, %p176
      %p178 = pneg %p177
      // Predicated region
      $region25: #{darts_stacked_cells_forward.26} parent=5 // pred_check
        _
      $region26: #{darts_stacked_cells_forward.26} parent=5 // pred_check_branch
        %180 = sbr.rel (%p177) target = $region28
      $region27: #{darts_stacked_cells_forward.26} parent=5 // pred_region
        %s181 = ssub.s32 %s11, 1
        %s182 = smul.u32 64, %s16
        %s183 = ssub.s32 100, %s182
        %p184 = scmp.lt.s32.totalorder %s183, 64
        %s185 = scalar_select %p184, %s183, 64
        %s186 = smul.u32 4, %s185
        %p187 = scmp.lt.s32.totalorder %s182, 99
        %s188 = scalar_select %p187, %s182, 99
        %s189 = smul.addr %s188, 4
        %s190 = scalar_lea.vmem %s0, %s189
        %p191 = pneg %p37
        %p192 = pneg %p34
        %p193 = pneg %p58
        %p194 = pneg %p55
        %p195 = pneg %p84
        %p196 = pneg %p81
        %s197 = sand.u32 %s71, 1
        %s198 = sand.u32 %s71, 1
        %s199 = smul.addr %s198, 256
        %s200 = scalar_lea.vmem [#allocation2], %s199
        %p201 = pneg %p110
        %p202 = pneg %p107
        %p203 = scmp.lt.s32.totalorder %s16, 1
        %s204 = scalar_select %p203, %s16, 1
        %s205 = smul.addr %s204, 8
        %s206 = scalar_lea.vmem %s3, %s205
        %p207 = pneg %p136
        %p208 = pneg %p133
        %p209 = scmp.lt.s32.totalorder %s16, 1
        %s210 = scalar_select %p209, %s16, 1
        %s211 = smul.addr %s210, 8
        %s212 = scalar_lea.vmem %s4, %s211
        %s213 = smul.u32 64, %s16
        %s214 = ssub.s32 100, %s213
        %p215 = scmp.lt.s32.totalorder %s214, 64
        %s216 = scalar_select %p215, %s214, 64
        %s217 = smul.u32 4, %s216
        %p218 = scmp.lt.s32.totalorder %s213, 99
        %s219 = scalar_select %p218, %s213, 99
        %s220 = smul.addr %s219, 4
        %s221 = scalar_lea.vmem %s0, %s220
        %s222 = smul.u32 64, %s16
        %s223 = ssub.s32 100, %s222
        %p224 = scmp.lt.s32.totalorder %s223, 64
        %s225 = scalar_select %p224, %s223, 64
        %s226 = smul.u32 4, %s225
        %s227 = smul.u32 64, %s16
        %s228 = ssub.s32 100, %s227
        %p229 = scmp.lt.s32.totalorder %s228, 64
        %s230 = scalar_select %p229, %s228, 64
        %s231 = smul.u32 4, %s230
        %p232 = scmp.lt.s32.totalorder %s16, 1
        %s233 = scalar_select %p232, %s16, 1
        %s234 = smul.addr %s233, 8
        %s235 = scalar_lea.vmem %s3, %s234
        %p236 = scmp.lt.s32.totalorder %s16, 1
        %s237 = scalar_select %p236, %s16, 1
        %s238 = smul.addr %s237, 8
        %s239 = scalar_lea.vmem %s4, %s238
        %v241 = vld [vmem:[%s221] sm:$0xf]
        %v242 = vld [vmem:[%s221 + $0x4] sm:$0xf]
        %v243 = vld [vmem:[%s221 + $0x8] sm:$0xf]
        %v244 = vld [vmem:[%s221 + $0xc] sm:$0xf]
        %v245 = vld [vmem:[%s221 + $0x10] sm:$0xf]
        %v246 = vld [vmem:[%s221 + $0x14] sm:$0xf]
        %v247 = vld [vmem:[%s221 + $0x18] sm:$0xf]
        %v248 = vld [vmem:[%s221 + $0x1c] sm:$0xf]
        %v249 = vld [vmem:[%s221 + $0x20] sm:$0xf]
        %v250 = vld [vmem:[%s221 + $0x24] sm:$0xf]
        %v251 = vld [vmem:[%s221 + $0x28] sm:$0xf]
        %v252 = vld [vmem:[%s221 + $0x2c] sm:$0xf]
        %v253 = vld [vmem:[%s221 + $0x30] sm:$0xf]
        %v254 = vld [vmem:[%s221 + $0x34] sm:$0xf]
        %v255 = vld [vmem:[%s221 + $0x38] sm:$0xf]
        %v256 = vld [vmem:[%s221 + $0x3c] sm:$0xf]
        %v257 = vld [vmem:[%s221 + $0x40] sm:$0xf]
        %v258 = vld [vmem:[%s221 + $0x44] sm:$0xf]
        %v259 = vld [vmem:[%s221 + $0x48] sm:$0xf]
        %v260 = vld [vmem:[%s221 + $0x4c] sm:$0xf]
        %v261 = vld [vmem:[%s221 + $0x50] sm:$0xf]
        %v262 = vld [vmem:[%s221 + $0x54] sm:$0xf]
        %v263 = vld [vmem:[%s221 + $0x58] sm:$0xf]
        %v264 = vld [vmem:[%s221 + $0x5c] sm:$0xf]
        %v265 = vld [vmem:[%s221 + $0x60] sm:$0xf]
        %v266 = vld [vmem:[%s221 + $0x64] sm:$0xf]
        %v267 = vld [vmem:[%s221 + $0x68] sm:$0xf]
        %v268 = vld [vmem:[%s221 + $0x6c] sm:$0xf]
        %v269 = vld [vmem:[%s221 + $0x70] sm:$0xf]
        %v270 = vld [vmem:[%s221 + $0x74] sm:$0xf]
        %v271 = vld [vmem:[%s221 + $0x78] sm:$0xf]
        %v272 = vld [vmem:[%s221 + $0x7c] sm:$0xf]
        %v273 = vld [vmem:[%s221 + $0x80] sm:$0xf]
        %v274 = vld [vmem:[%s221 + $0x84] sm:$0xf]
        %v275 = vld [vmem:[%s221 + $0x88] sm:$0xf]
        %v276 = vld [vmem:[%s221 + $0x8c] sm:$0xf]
        %v277 = vld [vmem:[%s221 + $0x90] sm:$0xf]
        %v278 = vld [vmem:[%s221 + $0x94] sm:$0xf]
        %v279 = vld [vmem:[%s221 + $0x98] sm:$0xf]
        %v280 = vld [vmem:[%s221 + $0x9c] sm:$0xf]
        %v281 = vld [vmem:[%s221 + $0xa0] sm:$0xf]
        %v282 = vld [vmem:[%s221 + $0xa4] sm:$0xf]
        %v283 = vld [vmem:[%s221 + $0xa8] sm:$0xf]
        %v284 = vld [vmem:[%s221 + $0xac] sm:$0xf]
        %v285 = vld [vmem:[%s221 + $0xb0] sm:$0xf]
        %v286 = vld [vmem:[%s221 + $0xb4] sm:$0xf]
        %v287 = vld [vmem:[%s221 + $0xb8] sm:$0xf]
        %v288 = vld [vmem:[%s221 + $0xbc] sm:$0xf]
        %v289 = vld [vmem:[%s221 + $0xc0] sm:$0xf]
        %v290 = vld [vmem:[%s221 + $0xc4] sm:$0xf]
        %v291 = vld [vmem:[%s221 + $0xc8] sm:$0xf]
        %v292 = vld [vmem:[%s221 + $0xcc] sm:$0xf]
        %v293 = vld [vmem:[%s221 + $0xd0] sm:$0xf]
        %v294 = vld [vmem:[%s221 + $0xd4] sm:$0xf]
        %v295 = vld [vmem:[%s221 + $0xd8] sm:$0xf]
        %v296 = vld [vmem:[%s221 + $0xdc] sm:$0xf]
        %v297 = vld [vmem:[%s221 + $0xe0] sm:$0xf]
        %v298 = vld [vmem:[%s221 + $0xe4] sm:$0xf]
        %v299 = vld [vmem:[%s221 + $0xe8] sm:$0xf]
        %v300 = vld [vmem:[%s221 + $0xec] sm:$0xf]
        %v301 = vld [vmem:[%s221 + $0xf0] sm:$0xf]
        %v302 = vld [vmem:[%s221 + $0xf4] sm:$0xf]
        %v303 = vld [vmem:[%s221 + $0xf8] sm:$0xf]
        %v304 = vld [vmem:[%s221 + $0xfc] sm:$0xf]
        %v305 = vld [vmem:[%s1] sm:$0xf]
        %v306 = vld [vmem:[%s1 + $0x4] sm:$0xf]
        %v307 = vld [vmem:[%s1 + $0x8] sm:$0xf]
        %v308 = vld [vmem:[%s1 + $0xc] sm:$0x3]
        %v373 = vunpack.c.l.b16 %v241
        %v374 = vunpack.c.l.b16 %v242
        %v375 = vunpack.c.l.b16 %v243
        %v376 = vunpack.c.l.b16 %v244
        %v377 = vunpack.c.l.b16 %v245
        %v378 = vunpack.c.l.b16 %v246
        %v379 = vunpack.c.l.b16 %v247
        %v380 = vunpack.c.l.b16 %v248
        %v381 = vunpack.c.l.b16 %v249
        %v382 = vunpack.c.l.b16 %v250
        %v383 = vunpack.c.l.b16 %v251
        %v384 = vunpack.c.l.b16 %v252
        %v385 = vunpack.c.l.b16 %v253
        %v386 = vunpack.c.l.b16 %v254
        %v387 = vunpack.c.l.b16 %v255
        %v388 = vunpack.c.l.b16 %v256
        %v389 = vunpack.c.l.b16 %v257
        %v390 = vunpack.c.l.b16 %v258
        %v391 = vunpack.c.l.b16 %v259
        %v392 = vunpack.c.l.b16 %v260
        %v393 = vunpack.c.l.b16 %v261
        %v394 = vunpack.c.l.b16 %v262
        %v395 = vunpack.c.l.b16 %v263
        %v396 = vunpack.c.l.b16 %v264
        %v397 = vunpack.c.l.b16 %v265
        %v398 = vunpack.c.l.b16 %v266
        %v399 = vunpack.c.l.b16 %v267
        %v400 = vunpack.c.l.b16 %v268
        %v401 = vunpack.c.l.b16 %v269
        %v402 = vunpack.c.l.b16 %v270
        %v403 = vunpack.c.l.b16 %v271
        %v404 = vunpack.c.l.b16 %v272
        %v405 = vunpack.c.l.b16 %v273
        %v406 = vunpack.c.l.b16 %v274
        %v407 = vunpack.c.l.b16 %v275
        %v408 = vunpack.c.l.b16 %v276
        %v409 = vunpack.c.l.b16 %v277
        %v410 = vunpack.c.l.b16 %v278
        %v411 = vunpack.c.l.b16 %v279
        %v412 = vunpack.c.l.b16 %v280
        %v413 = vunpack.c.l.b16 %v281
        %v414 = vunpack.c.l.b16 %v282
        %v415 = vunpack.c.l.b16 %v283
        %v416 = vunpack.c.l.b16 %v284
        %v417 = vunpack.c.l.b16 %v285
        %v418 = vunpack.c.l.b16 %v286
        %v419 = vunpack.c.l.b16 %v287
        %v420 = vunpack.c.l.b16 %v288
        %v421 = vunpack.c.l.b16 %v289
        %v422 = vunpack.c.l.b16 %v290
        %v423 = vunpack.c.l.b16 %v291
        %v424 = vunpack.c.l.b16 %v292
        %v425 = vunpack.c.l.b16 %v293
        %v426 = vunpack.c.l.b16 %v294
        %v427 = vunpack.c.l.b16 %v295
        %v428 = vunpack.c.l.b16 %v296
        %v429 = vunpack.c.l.b16 %v297
        %v430 = vunpack.c.l.b16 %v298
        %v431 = vunpack.c.l.b16 %v299
        %v432 = vunpack.c.l.b16 %v300
        %v433 = vunpack.c.l.b16 %v301
        %v434 = vunpack.c.l.b16 %v302
        %v435 = vunpack.c.l.b16 %v303
        %v436 = vunpack.c.l.b16 %v304
        %v437 = vpack.c.b16 %v374, %v373
        %v438 = vpack.c.b16 %v376, %v375
        %v439 = vpack.c.b16 %v378, %v377
        %v440 = vpack.c.b16 %v380, %v379
        %v441 = vpack.c.b16 %v382, %v381
        %v442 = vpack.c.b16 %v384, %v383
        %v443 = vpack.c.b16 %v386, %v385
        %v444 = vpack.c.b16 %v388, %v387
        %v445 = vpack.c.b16 %v390, %v389
        %v446 = vpack.c.b16 %v392, %v391
        %v447 = vpack.c.b16 %v394, %v393
        %v448 = vpack.c.b16 %v396, %v395
        %v449 = vpack.c.b16 %v398, %v397
        %v450 = vpack.c.b16 %v400, %v399
        %v451 = vpack.c.b16 %v402, %v401
        %v452 = vpack.c.b16 %v404, %v403
        %v453 = vpack.c.b16 %v406, %v405
        %v454 = vpack.c.b16 %v408, %v407
        %v455 = vpack.c.b16 %v410, %v409
        %v456 = vpack.c.b16 %v412, %v411
        %v457 = vpack.c.b16 %v414, %v413
        %v458 = vpack.c.b16 %v416, %v415
        %v459 = vpack.c.b16 %v418, %v417
        %v460 = vpack.c.b16 %v420, %v419
        %v461 = vpack.c.b16 %v422, %v421
        %v462 = vpack.c.b16 %v424, %v423
        %v463 = vpack.c.b16 %v426, %v425
        %v464 = vpack.c.b16 %v428, %v427
        %v465 = vpack.c.b16 %v430, %v429
        %v466 = vpack.c.b16 %v432, %v431
        %v467 = vpack.c.b16 %v434, %v433
        %v468 = vpack.c.b16 %v436, %v435
        %v473 = vunpack.c.l.b16 %v305
        %v474 = vunpack.c.l.b16 %v306
        %v475 = vunpack.c.l.b16 %v307
        %v476 = vunpack.c.l.b16 %v308
        %v477 = vpack.c.b16 %v474, %v473
        %v478 = vpack.c.b16 %v476, %v475
        %vm480 = vcmask 220160
        %v482 = vsel %vm480, %v437, 0
        %v485 = vsel %vm480, %v438, 0
        %v488 = vsel %vm480, %v439, 0
        %v491 = vsel %vm480, %v440, 0
        %v494 = vsel %vm480, %v441, 0
        %v497 = vsel %vm480, %v442, 0
        %v500 = vsel %vm480, %v443, 0
        %v503 = vsel %vm480, %v444, 0
        %v506 = vsel %vm480, %v445, 0
        %v509 = vsel %vm480, %v446, 0
        %v512 = vsel %vm480, %v447, 0
        %v515 = vsel %vm480, %v448, 0
        %v518 = vsel %vm480, %v449, 0
        %v521 = vsel %vm480, %v450, 0
        %v524 = vsel %vm480, %v451, 0
        %v527 = vsel %vm480, %v452, 0
        %v530 = vsel %vm480, %v453, 0
        %v533 = vsel %vm480, %v454, 0
        %v536 = vsel %vm480, %v455, 0
        %v539 = vsel %vm480, %v456, 0
        %v542 = vsel %vm480, %v457, 0
        %v545 = vsel %vm480, %v458, 0
        %v548 = vsel %vm480, %v459, 0
        %v551 = vsel %vm480, %v460, 0
        %v554 = vsel %vm480, %v461, 0
        %v557 = vsel %vm480, %v462, 0
        %v560 = vsel %vm480, %v463, 0
        %v563 = vsel %vm480, %v464, 0
        %v566 = vsel %vm480, %v465, 0
        %v569 = vsel %vm480, %v466, 0
        %v572 = vsel %vm480, %v467, 0
        %v575 = vsel %vm480, %v468, 0
        %vm577 = vcmask 1044480
        %vm578 = vcmask 1045504
        %v579 = vsel %vm577, 4294967295, 65535
        %v580 = vsel %vm578, %v579, 0
        %v582 = vand.u32 %v478, %v580
        %584 = vmatpush.bf16.msra.mxu0 0
        %585 = vmatpush.bf16.msra.mxu0 0
        %586 = vmatpush.bf16.msra.mxu0 0
        %587 = vmatpush.bf16.msra.mxu0 0
        %588 = vmatpush.bf16.msra.mxu0 0
        %589 = vmatpush.bf16.msra.mxu0 0
        %590 = vmatpush.bf16.msra.mxu0 %v582
        %591 = vmatpush.bf16.msra.mxu0 %v477
        %592 = vmatmul.bf16.gmra.mxu0 %v482
        %v593 = vpop.f32.mrf.mxu0
        %v594 = vadd.f32 0.0, %v593
        %v595 = vpop.f32.mrf.mxu0
        %v596 = vadd.f32 0.0, %v595
        %597 = vmatmul.bf16.gmra.mxu0 %v485
        %v598 = vpop.f32.mrf.mxu0
        %v599 = vadd.f32 0.0, %v598
        %v600 = vpop.f32.mrf.mxu0
        %v601 = vadd.f32 0.0, %v600
        %602 = vmatmul.bf16.gmra.mxu0 %v488
        %v603 = vpop.f32.mrf.mxu0
        %v604 = vadd.f32 0.0, %v603
        %v605 = vpop.f32.mrf.mxu0
        %v606 = vadd.f32 0.0, %v605
        %607 = vmatmul.bf16.gmra.mxu0 %v491
        %v608 = vpop.f32.mrf.mxu0
        %v609 = vadd.f32 0.0, %v608
        %v610 = vpop.f32.mrf.mxu0
        %v611 = vadd.f32 0.0, %v610
        %612 = vmatmul.bf16.gmra.mxu0 %v494
        %v613 = vpop.f32.mrf.mxu0
        %v614 = vadd.f32 0.0, %v613
        %v615 = vpop.f32.mrf.mxu0
        %v616 = vadd.f32 0.0, %v615
        %617 = vmatmul.bf16.gmra.mxu0 %v497
        %v618 = vpop.f32.mrf.mxu0
        %v619 = vadd.f32 0.0, %v618
        %v620 = vpop.f32.mrf.mxu0
        %v621 = vadd.f32 0.0, %v620
        %622 = vmatmul.bf16.gmra.mxu0 %v500
        %v623 = vpop.f32.mrf.mxu0
        %v624 = vadd.f32 0.0, %v623
        %v625 = vpop.f32.mrf.mxu0
        %v626 = vadd.f32 0.0, %v625
        %627 = vmatmul.bf16.gmra.mxu0 %v503
        %v628 = vpop.f32.mrf.mxu0
        %v629 = vadd.f32 0.0, %v628
        %v630 = vpop.f32.mrf.mxu0
        %v631 = vadd.f32 0.0, %v630
        %632 = vmatmul.bf16.gmra.mxu0 %v506
        %v633 = vpop.f32.mrf.mxu0
        %v634 = vadd.f32 0.0, %v633
        %v635 = vpop.f32.mrf.mxu0
        %v636 = vadd.f32 0.0, %v635
        %637 = vmatmul.bf16.gmra.mxu0 %v509
        %v638 = vpop.f32.mrf.mxu0
        %v639 = vadd.f32 0.0, %v638
        %v640 = vpop.f32.mrf.mxu0
        %v641 = vadd.f32 0.0, %v640
        %642 = vmatmul.bf16.gmra.mxu0 %v512
        %v643 = vpop.f32.mrf.mxu0
        %v644 = vadd.f32 0.0, %v643
        %v645 = vpop.f32.mrf.mxu0
        %v646 = vadd.f32 0.0, %v645
        %647 = vmatmul.bf16.gmra.mxu0 %v515
        %v648 = vpop.f32.mrf.mxu0
        %v649 = vadd.f32 0.0, %v648
        %v650 = vpop.f32.mrf.mxu0
        %v651 = vadd.f32 0.0, %v650
        %652 = vmatmul.bf16.gmra.mxu0 %v518
        %v653 = vpop.f32.mrf.mxu0
        %v654 = vadd.f32 0.0, %v653
        %v655 = vpop.f32.mrf.mxu0
        %v656 = vadd.f32 0.0, %v655
        %657 = vmatmul.bf16.gmra.mxu0 %v521
        %v658 = vpop.f32.mrf.mxu0
        %v659 = vadd.f32 0.0, %v658
        %v660 = vpop.f32.mrf.mxu0
        %v661 = vadd.f32 0.0, %v660
        %662 = vmatmul.bf16.gmra.mxu0 %v524
        %v663 = vpop.f32.mrf.mxu0
        %v664 = vadd.f32 0.0, %v663
        %v665 = vpop.f32.mrf.mxu0
        %v666 = vadd.f32 0.0, %v665
        %667 = vmatmul.bf16.gmra.mxu0 %v527
        %v668 = vpop.f32.mrf.mxu0
        %v669 = vadd.f32 0.0, %v668
        %v670 = vpop.f32.mrf.mxu0
        %v671 = vadd.f32 0.0, %v670
        %672 = vmatmul.bf16.gmra.mxu0 %v530
        %v673 = vpop.f32.mrf.mxu0
        %v674 = vadd.f32 0.0, %v673
        %v675 = vpop.f32.mrf.mxu0
        %v676 = vadd.f32 0.0, %v675
        %677 = vmatmul.bf16.gmra.mxu0 %v533
        %v678 = vpop.f32.mrf.mxu0
        %v679 = vadd.f32 0.0, %v678
        %v680 = vpop.f32.mrf.mxu0
        %v681 = vadd.f32 0.0, %v680
        %682 = vmatmul.bf16.gmra.mxu0 %v536
        %v683 = vpop.f32.mrf.mxu0
        %v684 = vadd.f32 0.0, %v683
        %v685 = vpop.f32.mrf.mxu0
        %v686 = vadd.f32 0.0, %v685
        %687 = vmatmul.bf16.gmra.mxu0 %v539
        %v688 = vpop.f32.mrf.mxu0
        %v689 = vadd.f32 0.0, %v688
        %v690 = vpop.f32.mrf.mxu0
        %v691 = vadd.f32 0.0, %v690
        %692 = vmatmul.bf16.gmra.mxu0 %v542
        %v693 = vpop.f32.mrf.mxu0
        %v694 = vadd.f32 0.0, %v693
        %v695 = vpop.f32.mrf.mxu0
        %v696 = vadd.f32 0.0, %v695
        %697 = vmatmul.bf16.gmra.mxu0 %v545
        %v698 = vpop.f32.mrf.mxu0
        %v699 = vadd.f32 0.0, %v698
        %v700 = vpop.f32.mrf.mxu0
        %v701 = vadd.f32 0.0, %v700
        %702 = vmatmul.bf16.gmra.mxu0 %v548
        %v703 = vpop.f32.mrf.mxu0
        %v704 = vadd.f32 0.0, %v703
        %v705 = vpop.f32.mrf.mxu0
        %v706 = vadd.f32 0.0, %v705
        %707 = vmatmul.bf16.gmra.mxu0 %v551
        %v708 = vpop.f32.mrf.mxu0
        %v709 = vadd.f32 0.0, %v708
        %v710 = vpop.f32.mrf.mxu0
        %v711 = vadd.f32 0.0, %v710
        %712 = vmatmul.bf16.gmra.mxu0 %v554
        %v713 = vpop.f32.mrf.mxu0
        %v714 = vadd.f32 0.0, %v713
        %v715 = vpop.f32.mrf.mxu0
        %v716 = vadd.f32 0.0, %v715
        %717 = vmatmul.bf16.gmra.mxu0 %v557
        %v718 = vpop.f32.mrf.mxu0
        %v719 = vadd.f32 0.0, %v718
        %v720 = vpop.f32.mrf.mxu0
        %v721 = vadd.f32 0.0, %v720
        %722 = vmatmul.bf16.gmra.mxu0 %v560
        %v723 = vpop.f32.mrf.mxu0
        %v724 = vadd.f32 0.0, %v723
        %v725 = vpop.f32.mrf.mxu0
        %v726 = vadd.f32 0.0, %v725
        %727 = vmatmul.bf16.gmra.mxu0 %v563
        %v728 = vpop.f32.mrf.mxu0
        %v729 = vadd.f32 0.0, %v728
        %v730 = vpop.f32.mrf.mxu0
        %v731 = vadd.f32 0.0, %v730
        %732 = vmatmul.bf16.gmra.mxu0 %v566
        %v733 = vpop.f32.mrf.mxu0
        %v734 = vadd.f32 0.0, %v733
        %v735 = vpop.f32.mrf.mxu0
        %v736 = vadd.f32 0.0, %v735
        %737 = vmatmul.bf16.gmra.mxu0 %v569
        %v738 = vpop.f32.mrf.mxu0
        %v739 = vadd.f32 0.0, %v738
        %v740 = vpop.f32.mrf.mxu0
        %v741 = vadd.f32 0.0, %v740
        %742 = vmatmul.bf16.gmra.mxu0 %v572
        %v743 = vpop.f32.mrf.mxu0
        %v744 = vadd.f32 0.0, %v743
        %v745 = vpop.f32.mrf.mxu0
        %v746 = vadd.f32 0.0, %v745
        %747 = vmatmul.bf16.gmra.mxu0 %v575
        %v748 = vpop.f32.mrf.mxu0
        %v749 = vadd.f32 0.0, %v748
        %v750 = vpop.f32.mrf.mxu0
        %v751 = vadd.f32 0.0, %v750
        %752 = vdwg.mxu0
        %v753 = vlaneseq
        %v754 = vshrl.u32 %v753, 7
        %v755 = vadd.s32 %v754, 8
        %v756 = vadd.s32 %v754, 16
        %v757 = vadd.s32 %v754, 24
        %v758 = vadd.s32 %v754, 32
        %v759 = vadd.s32 %v754, 40
        %v760 = vadd.s32 %v754, 48
        %v761 = vadd.s32 %v754, 56
        %v762 = vadd.s32 %v754, 64
        %v763 = vadd.s32 %v754, 72
        %v764 = vadd.s32 %v754, 80
        %v765 = vadd.s32 %v754, 88
        %v766 = vadd.s32 %v754, 96
        %v767 = vadd.s32 %v754, 104
        %v768 = vadd.s32 %v754, 112
        %v769 = vadd.s32 %v754, 120
        %v770 = vadd.s32 %v754, 128
        %v771 = vadd.s32 %v754, 136
        %v772 = vadd.s32 %v754, 144
        %v773 = vadd.s32 %v754, 152
        %v774 = vadd.s32 %v754, 160
        %v775 = vadd.s32 %v754, 168
        %v776 = vadd.s32 %v754, 176
        %v777 = vadd.s32 %v754, 184
        %v778 = vadd.s32 %v754, 192
        %v779 = vadd.s32 %v754, 200
        %v780 = vadd.s32 %v754, 208
        %v781 = vadd.s32 %v754, 216
        %v782 = vadd.s32 %v754, 224
        %v783 = vadd.s32 %v754, 232
        %v784 = vadd.s32 %v754, 240
        %v785 = vadd.s32 %v754, 248
        %v786 = vadd.s32 %v754, 256
        %v787 = vadd.s32 %v754, 264
        %v788 = vadd.s32 %v754, 272
        %v789 = vadd.s32 %v754, 280
        %v790 = vadd.s32 %v754, 288
        %v791 = vadd.s32 %v754, 296
        %v792 = vadd.s32 %v754, 304
        %v793 = vadd.s32 %v754, 312
        %v794 = vadd.s32 %v754, 320
        %v795 = vadd.s32 %v754, 328
        %v796 = vadd.s32 %v754, 336
        %v797 = vadd.s32 %v754, 344
        %v798 = vadd.s32 %v754, 352
        %v799 = vadd.s32 %v754, 360
        %v800 = vadd.s32 %v754, 368
        %v801 = vadd.s32 %v754, 376
        %v802 = vadd.s32 %v754, 384
        %v803 = vadd.s32 %v754, 392
        %v804 = vadd.s32 %v754, 400
        %v805 = vadd.s32 %v754, 408
        %v806 = vadd.s32 %v754, 416
        %v807 = vadd.s32 %v754, 424
        %v808 = vadd.s32 %v754, 432
        %v809 = vadd.s32 %v754, 440
        %v810 = vadd.s32 %v754, 448
        %v811 = vadd.s32 %v754, 456
        %v812 = vadd.s32 %v754, 464
        %v813 = vadd.s32 %v754, 472
        %v814 = vadd.s32 %v754, 480
        %v815 = vadd.s32 %v754, 488
        %v816 = vadd.s32 %v754, 496
        %v817 = vadd.s32 %v754, 504
        %s818 = smul.u32 %s16, 512
        %v819 = vstv %s818
        %v820 = vadd.s32 %v754, %v819
        %v821 = vadd.s32 %v755, %v819
        %v822 = vadd.s32 %v756, %v819
        %v823 = vadd.s32 %v757, %v819
        %v824 = vadd.s32 %v758, %v819
        %v825 = vadd.s32 %v759, %v819
        %v826 = vadd.s32 %v760, %v819
        %v827 = vadd.s32 %v761, %v819
        %v828 = vadd.s32 %v762, %v819
        %v829 = vadd.s32 %v763, %v819
        %v830 = vadd.s32 %v764, %v819
        %v831 = vadd.s32 %v765, %v819
        %v832 = vadd.s32 %v766, %v819
        %v833 = vadd.s32 %v767, %v819
        %v834 = vadd.s32 %v768, %v819
        %v835 = vadd.s32 %v769, %v819
        %v836 = vadd.s32 %v770, %v819
        %v837 = vadd.s32 %v771, %v819
        %v838 = vadd.s32 %v772, %v819
        %v839 = vadd.s32 %v773, %v819
        %v840 = vadd.s32 %v774, %v819
        %v841 = vadd.s32 %v775, %v819
        %v842 = vadd.s32 %v776, %v819
        %v843 = vadd.s32 %v777, %v819
        %v844 = vadd.s32 %v778, %v819
        %v845 = vadd.s32 %v779, %v819
        %v846 = vadd.s32 %v780, %v819
        %v847 = vadd.s32 %v781, %v819
        %v848 = vadd.s32 %v782, %v819
        %v849 = vadd.s32 %v783, %v819
        %v850 = vadd.s32 %v784, %v819
        %v851 = vadd.s32 %v785, %v819
        %v852 = vadd.s32 %v786, %v819
        %v853 = vadd.s32 %v787, %v819
        %v854 = vadd.s32 %v788, %v819
        %v855 = vadd.s32 %v789, %v819
        %v856 = vadd.s32 %v790, %v819
        %v857 = vadd.s32 %v791, %v819
        %v858 = vadd.s32 %v792, %v819
        %v859 = vadd.s32 %v793, %v819
        %v860 = vadd.s32 %v794, %v819
        %v861 = vadd.s32 %v795, %v819
        %v862 = vadd.s32 %v796, %v819
        %v863 = vadd.s32 %v797, %v819
        %v864 = vadd.s32 %v798, %v819
        %v865 = vadd.s32 %v799, %v819
        %v866 = vadd.s32 %v800, %v819
        %v867 = vadd.s32 %v801, %v819
        %v868 = vadd.s32 %v802, %v819
        %v869 = vadd.s32 %v803, %v819
        %v870 = vadd.s32 %v804, %v819
        %v871 = vadd.s32 %v805, %v819
        %v872 = vadd.s32 %v806, %v819
        %v873 = vadd.s32 %v807, %v819
        %v874 = vadd.s32 %v808, %v819
        %v875 = vadd.s32 %v809, %v819
        %v876 = vadd.s32 %v810, %v819
        %v877 = vadd.s32 %v811, %v819
        %v878 = vadd.s32 %v812, %v819
        %v879 = vadd.s32 %v813, %v819
        %v880 = vadd.s32 %v814, %v819
        %v881 = vadd.s32 %v815, %v819
        %v882 = vadd.s32 %v816, %v819
        %v883 = vadd.s32 %v817, %v819
        %vm884 = vcmp.lt.s32.totalorder %v820, 800
        %vm885 = vcmp.lt.s32.totalorder %v821, 800
        %vm886 = vcmp.lt.s32.totalorder %v822, 800
        %vm887 = vcmp.lt.s32.totalorder %v823, 800
        %vm888 = vcmp.lt.s32.totalorder %v824, 800
        %vm889 = vcmp.lt.s32.totalorder %v825, 800
        %vm890 = vcmp.lt.s32.totalorder %v826, 800
        %vm891 = vcmp.lt.s32.totalorder %v827, 800
        %vm892 = vcmp.lt.s32.totalorder %v828, 800
        %vm893 = vcmp.lt.s32.totalorder %v829, 800
        %vm894 = vcmp.lt.s32.totalorder %v830, 800
        %vm895 = vcmp.lt.s32.totalorder %v831, 800
        %vm896 = vcmp.lt.s32.totalorder %v832, 800
        %vm897 = vcmp.lt.s32.totalorder %v833, 800
        %vm898 = vcmp.lt.s32.totalorder %v834, 800
        %vm899 = vcmp.lt.s32.totalorder %v835, 800
        %vm900 = vcmp.lt.s32.totalorder %v836, 800
        %vm901 = vcmp.lt.s32.totalorder %v837, 800
        %vm902 = vcmp.lt.s32.totalorder %v838, 800
        %vm903 = vcmp.lt.s32.totalorder %v839, 800
        %vm904 = vcmp.lt.s32.totalorder %v840, 800
        %vm905 = vcmp.lt.s32.totalorder %v841, 800
        %vm906 = vcmp.lt.s32.totalorder %v842, 800
        %vm907 = vcmp.lt.s32.totalorder %v843, 800
        %vm908 = vcmp.lt.s32.totalorder %v844, 800
        %vm909 = vcmp.lt.s32.totalorder %v845, 800
        %vm910 = vcmp.lt.s32.totalorder %v846, 800
        %vm911 = vcmp.lt.s32.totalorder %v847, 800
        %vm912 = vcmp.lt.s32.totalorder %v848, 800
        %vm913 = vcmp.lt.s32.totalorder %v849, 800
        %vm914 = vcmp.lt.s32.totalorder %v850, 800
        %vm915 = vcmp.lt.s32.totalorder %v851, 800
        %vm916 = vcmp.lt.s32.totalorder %v852, 800
        %vm917 = vcmp.lt.s32.totalorder %v853, 800
        %vm918 = vcmp.lt.s32.totalorder %v854, 800
        %vm919 = vcmp.lt.s32.totalorder %v855, 800
        %vm920 = vcmp.lt.s32.totalorder %v856, 800
        %vm921 = vcmp.lt.s32.totalorder %v857, 800
        %vm922 = vcmp.lt.s32.totalorder %v858, 800
        %vm923 = vcmp.lt.s32.totalorder %v859, 800
        %vm924 = vcmp.lt.s32.totalorder %v860, 800
        %vm925 = vcmp.lt.s32.totalorder %v861, 800
        %vm926 = vcmp.lt.s32.totalorder %v862, 800
        %vm927 = vcmp.lt.s32.totalorder %v863, 800
        %vm928 = vcmp.lt.s32.totalorder %v864, 800
        %vm929 = vcmp.lt.s32.totalorder %v865, 800
        %vm930 = vcmp.lt.s32.totalorder %v866, 800
        %vm931 = vcmp.lt.s32.totalorder %v867, 800
        %vm932 = vcmp.lt.s32.totalorder %v868, 800
        %vm933 = vcmp.lt.s32.totalorder %v869, 800
        %vm934 = vcmp.lt.s32.totalorder %v870, 800
        %vm935 = vcmp.lt.s32.totalorder %v871, 800
        %vm936 = vcmp.lt.s32.totalorder %v872, 800
        %vm937 = vcmp.lt.s32.totalorder %v873, 800
        %vm938 = vcmp.lt.s32.totalorder %v874, 800
        %vm939 = vcmp.lt.s32.totalorder %v875, 800
        %vm940 = vcmp.lt.s32.totalorder %v876, 800
        %vm941 = vcmp.lt.s32.totalorder %v877, 800
        %vm942 = vcmp.lt.s32.totalorder %v878, 800
        %vm943 = vcmp.lt.s32.totalorder %v879, 800
        %vm944 = vcmp.lt.s32.totalorder %v880, 800
        %vm945 = vcmp.lt.s32.totalorder %v881, 800
        %vm946 = vcmp.lt.s32.totalorder %v882, 800
        %vm947 = vcmp.lt.s32.totalorder %v883, 800
        %v948 = vsel %vm884, %v594, 0.0
        %v949 = vsel %vm885, %v596, 0.0
        %v950 = vsel %vm886, %v599, 0.0
        %v951 = vsel %vm887, %v601, 0.0
        %v952 = vsel %vm888, %v604, 0.0
        %v953 = vsel %vm889, %v606, 0.0
        %v954 = vsel %vm890, %v609, 0.0
        %v955 = vsel %vm891, %v611, 0.0
        %v956 = vsel %vm892, %v614, 0.0
        %v957 = vsel %vm893, %v616, 0.0
        %v958 = vsel %vm894, %v619, 0.0
        %v959 = vsel %vm895, %v621, 0.0
        %v960 = vsel %vm896, %v624, 0.0
        %v961 = vsel %vm897, %v626, 0.0
        %v962 = vsel %vm898, %v629, 0.0
        %v963 = vsel %vm899, %v631, 0.0
        %v964 = vsel %vm900, %v634, 0.0
        %v965 = vsel %vm901, %v636, 0.0
        %v966 = vsel %vm902, %v639, 0.0
        %v967 = vsel %vm903, %v641, 0.0
        %v968 = vsel %vm904, %v644, 0.0
        %v969 = vsel %vm905, %v646, 0.0
        %v970 = vsel %vm906, %v649, 0.0
        %v971 = vsel %vm907, %v651, 0.0
        %v972 = vsel %vm908, %v654, 0.0
        %v973 = vsel %vm909, %v656, 0.0
        %v974 = vsel %vm910, %v659, 0.0
        %v975 = vsel %vm911, %v661, 0.0
        %v976 = vsel %vm912, %v664, 0.0
        %v977 = vsel %vm913, %v666, 0.0
        %v978 = vsel %vm914, %v669, 0.0
        %v979 = vsel %vm915, %v671, 0.0
        %v980 = vsel %vm916, %v674, 0.0
        %v981 = vsel %vm917, %v676, 0.0
        %v982 = vsel %vm918, %v679, 0.0
        %v983 = vsel %vm919, %v681, 0.0
        %v984 = vsel %vm920, %v684, 0.0
        %v985 = vsel %vm921, %v686, 0.0
        %v986 = vsel %vm922, %v689, 0.0
        %v987 = vsel %vm923, %v691, 0.0
        %v988 = vsel %vm924, %v694, 0.0
        %v989 = vsel %vm925, %v696, 0.0
        %v990 = vsel %vm926, %v699, 0.0
        %v991 = vsel %vm927, %v701, 0.0
        %v992 = vsel %vm928, %v704, 0.0
        %v993 = vsel %vm929, %v706, 0.0
        %v994 = vsel %vm930, %v709, 0.0
        %v995 = vsel %vm931, %v711, 0.0
        %v996 = vsel %vm932, %v714, 0.0
        %v997 = vsel %vm933, %v716, 0.0
        %v998 = vsel %vm934, %v719, 0.0
        %v999 = vsel %vm935, %v721, 0.0
        %v1000 = vsel %vm936, %v724, 0.0
        %v1001 = vsel %vm937, %v726, 0.0
        %v1002 = vsel %vm938, %v729, 0.0
        %v1003 = vsel %vm939, %v731, 0.0
        %v1004 = vsel %vm940, %v734, 0.0
        %v1005 = vsel %vm941, %v736, 0.0
        %v1006 = vsel %vm942, %v739, 0.0
        %v1007 = vsel %vm943, %v741, 0.0
        %v1008 = vsel %vm944, %v744, 0.0
        %v1009 = vsel %vm945, %v746, 0.0
        %v1010 = vsel %vm946, %v749, 0.0
        %v1011 = vsel %vm947, %v751, 0.0
        %v1012 = vpack.c.bf16 %v948, %v948
        %v1013 = vpack.c.bf16 %v949, %v949
        %v1014 = vpack.c.bf16 %v950, %v950
        %v1015 = vpack.c.bf16 %v951, %v951
        %v1016 = vpack.c.bf16 %v952, %v952
        %v1017 = vpack.c.bf16 %v953, %v953
        %v1018 = vpack.c.bf16 %v954, %v954
        %v1019 = vpack.c.bf16 %v955, %v955
        %v1020 = vpack.c.bf16 %v956, %v956
        %v1021 = vpack.c.bf16 %v957, %v957
        %v1022 = vpack.c.bf16 %v958, %v958
        %v1023 = vpack.c.bf16 %v959, %v959
        %v1024 = vpack.c.bf16 %v960, %v960
        %v1025 = vpack.c.bf16 %v961, %v961
        %v1026 = vpack.c.bf16 %v962, %v962
        %v1027 = vpack.c.bf16 %v963, %v963
        %v1028 = vpack.c.bf16 %v964, %v964
        %v1029 = vpack.c.bf16 %v965, %v965
        %v1030 = vpack.c.bf16 %v966, %v966
        %v1031 = vpack.c.bf16 %v967, %v967
        %v1032 = vpack.c.bf16 %v968, %v968
        %v1033 = vpack.c.bf16 %v969, %v969
        %v1034 = vpack.c.bf16 %v970, %v970
        %v1035 = vpack.c.bf16 %v971, %v971
        %v1036 = vpack.c.bf16 %v972, %v972
        %v1037 = vpack.c.bf16 %v973, %v973
        %v1038 = vpack.c.bf16 %v974, %v974
        %v1039 = vpack.c.bf16 %v975, %v975
        %v1040 = vpack.c.bf16 %v976, %v976
        %v1041 = vpack.c.bf16 %v977, %v977
        %v1042 = vpack.c.bf16 %v978, %v978
        %v1043 = vpack.c.bf16 %v979, %v979
        %v1044 = vpack.c.bf16 %v980, %v980
        %v1045 = vpack.c.bf16 %v981, %v981
        %v1046 = vpack.c.bf16 %v982, %v982
        %v1047 = vpack.c.bf16 %v983, %v983
        %v1048 = vpack.c.bf16 %v984, %v984
        %v1049 = vpack.c.bf16 %v985, %v985
        %v1050 = vpack.c.bf16 %v986, %v986
        %v1051 = vpack.c.bf16 %v987, %v987
        %v1052 = vpack.c.bf16 %v988, %v988
        %v1053 = vpack.c.bf16 %v989, %v989
        %v1054 = vpack.c.bf16 %v990, %v990
        %v1055 = vpack.c.bf16 %v991, %v991
        %v1056 = vpack.c.bf16 %v992, %v992
        %v1057 = vpack.c.bf16 %v993, %v993
        %v1058 = vpack.c.bf16 %v994, %v994
        %v1059 = vpack.c.bf16 %v995, %v995
        %v1060 = vpack.c.bf16 %v996, %v996
        %v1061 = vpack.c.bf16 %v997, %v997
        %v1062 = vpack.c.bf16 %v998, %v998
        %v1063 = vpack.c.bf16 %v999, %v999
        %v1064 = vpack.c.bf16 %v1000, %v1000
        %v1065 = vpack.c.bf16 %v1001, %v1001
        %v1066 = vpack.c.bf16 %v1002, %v1002
        %v1067 = vpack.c.bf16 %v1003, %v1003
        %v1068 = vpack.c.bf16 %v1004, %v1004
        %v1069 = vpack.c.bf16 %v1005, %v1005
        %v1070 = vpack.c.bf16 %v1006, %v1006
        %v1071 = vpack.c.bf16 %v1007, %v1007
        %v1072 = vpack.c.bf16 %v1008, %v1008
        %v1073 = vpack.c.bf16 %v1009, %v1009
        %v1074 = vpack.c.bf16 %v1010, %v1010
        %v1075 = vpack.c.bf16 %v1011, %v1011
        %1076 = vst [vmem:[%s200] sm:$0xf] %v1012
        %1077 = vst [vmem:[%s200 + $0x4] sm:$0xf] %v1013
        %1078 = vst [vmem:[%s200 + $0x8] sm:$0xf] %v1014
        %1079 = vst [vmem:[%s200 + $0xc] sm:$0xf] %v1015
        %1080 = vst [vmem:[%s200 + $0x10] sm:$0xf] %v1016
        %1081 = vst [vmem:[%s200 + $0x14] sm:$0xf] %v1017
        %1082 = vst [vmem:[%s200 + $0x18] sm:$0xf] %v1018
        %1083 = vst [vmem:[%s200 + $0x1c] sm:$0xf] %v1019
        %1084 = vst [vmem:[%s200 + $0x20] sm:$0xf] %v1020
        %1085 = vst [vmem:[%s200 + $0x24] sm:$0xf] %v1021
        %1086 = vst [vmem:[%s200 + $0x28] sm:$0xf] %v1022
        %1087 = vst [vmem:[%s200 + $0x2c] sm:$0xf] %v1023
        %1088 = vst [vmem:[%s200 + $0x30] sm:$0xf] %v1024
        %1089 = vst [vmem:[%s200 + $0x34] sm:$0xf] %v1025
        %1090 = vst [vmem:[%s200 + $0x38] sm:$0xf] %v1026
        %1091 = vst [vmem:[%s200 + $0x3c] sm:$0xf] %v1027
        %1092 = vst [vmem:[%s200 + $0x40] sm:$0xf] %v1028
        %1093 = vst [vmem:[%s200 + $0x44] sm:$0xf] %v1029
        %1094 = vst [vmem:[%s200 + $0x48] sm:$0xf] %v1030
        %1095 = vst [vmem:[%s200 + $0x4c] sm:$0xf] %v1031
        %1096 = vst [vmem:[%s200 + $0x50] sm:$0xf] %v1032
        %1097 = vst [vmem:[%s200 + $0x54] sm:$0xf] %v1033
        %1098 = vst [vmem:[%s200 + $0x58] sm:$0xf] %v1034
        %1099 = vst [vmem:[%s200 + $0x5c] sm:$0xf] %v1035
        %1100 = vst [vmem:[%s200 + $0x60] sm:$0xf] %v1036
        %1101 = vst [vmem:[%s200 + $0x64] sm:$0xf] %v1037
        %1102 = vst [vmem:[%s200 + $0x68] sm:$0xf] %v1038
        %1103 = vst [vmem:[%s200 + $0x6c] sm:$0xf] %v1039
        %1104 = vst [vmem:[%s200 + $0x70] sm:$0xf] %v1040
        %1105 = vst [vmem:[%s200 + $0x74] sm:$0xf] %v1041
        %1106 = vst [vmem:[%s200 + $0x78] sm:$0xf] %v1042
        %1107 = vst [vmem:[%s200 + $0x7c] sm:$0xf] %v1043
        %1108 = vst [vmem:[%s200 + $0x80] sm:$0xf] %v1044
        %1109 = vst [vmem:[%s200 + $0x84] sm:$0xf] %v1045
        %1110 = vst [vmem:[%s200 + $0x88] sm:$0xf] %v1046
        %1111 = vst [vmem:[%s200 + $0x8c] sm:$0xf] %v1047
        %1112 = vst [vmem:[%s200 + $0x90] sm:$0xf] %v1048
        %1113 = vst [vmem:[%s200 + $0x94] sm:$0xf] %v1049
        %1114 = vst [vmem:[%s200 + $0x98] sm:$0xf] %v1050
        %1115 = vst [vmem:[%s200 + $0x9c] sm:$0xf] %v1051
        %1116 = vst [vmem:[%s200 + $0xa0] sm:$0xf] %v1052
        %1117 = vst [vmem:[%s200 + $0xa4] sm:$0xf] %v1053
        %1118 = vst [vmem:[%s200 + $0xa8] sm:$0xf] %v1054
        %1119 = vst [vmem:[%s200 + $0xac] sm:$0xf] %v1055
        %1120 = vst [vmem:[%s200 + $0xb0] sm:$0xf] %v1056
        %1121 = vst [vmem:[%s200 + $0xb4] sm:$0xf] %v1057
        %1122 = vst [vmem:[%s200 + $0xb8] sm:$0xf] %v1058
        %1123 = vst [vmem:[%s200 + $0xbc] sm:$0xf] %v1059
        %1124 = vst [vmem:[%s200 + $0xc0] sm:$0xf] %v1060
        %1125 = vst [vmem:[%s200 + $0xc4] sm:$0xf] %v1061
        %1126 = vst [vmem:[%s200 + $0xc8] sm:$0xf] %v1062
        %1127 = vst [vmem:[%s200 + $0xcc] sm:$0xf] %v1063
        %1128 = vst [vmem:[%s200 + $0xd0] sm:$0xf] %v1064
        %1129 = vst [vmem:[%s200 + $0xd4] sm:$0xf] %v1065
        %1130 = vst [vmem:[%s200 + $0xd8] sm:$0xf] %v1066
        %1131 = vst [vmem:[%s200 + $0xdc] sm:$0xf] %v1067
        %1132 = vst [vmem:[%s200 + $0xe0] sm:$0xf] %v1068
        %1133 = vst [vmem:[%s200 + $0xe4] sm:$0xf] %v1069
        %1134 = vst [vmem:[%s200 + $0xe8] sm:$0xf] %v1070
        %1135 = vst [vmem:[%s200 + $0xec] sm:$0xf] %v1071
        %1136 = vst [vmem:[%s200 + $0xf0] sm:$0xf] %v1072
        %1137 = vst [vmem:[%s200 + $0xf4] sm:$0xf] %v1073
        %1138 = vst [vmem:[%s200 + $0xf8] sm:$0xf] %v1074
        %1139 = vst [vmem:[%s200 + $0xfc] sm:$0xf] %v1075
        %v1140 = vadd.f32 %v948, %v949
        %v1141 = vadd.f32 %v1140, %v950
        %v1142 = vadd.f32 %v1141, %v951
        %v1143 = vadd.f32 %v1142, %v952
        %v1144 = vadd.f32 %v1143, %v953
        %v1145 = vadd.f32 %v1144, %v954
        %v1146 = vadd.f32 %v1145, %v955
        %v1147 = vadd.f32 %v1146, %v956
        %v1148 = vadd.f32 %v1147, %v957
        %v1149 = vadd.f32 %v1148, %v958
        %v1150 = vadd.f32 %v1149, %v959
        %v1151 = vadd.f32 %v1150, %v960
        %v1152 = vadd.f32 %v1151, %v961
        %v1153 = vadd.f32 %v1152, %v962
        %v1154 = vadd.f32 %v1153, %v963
        %v1155 = vadd.f32 %v1154, %v964
        %v1156 = vadd.f32 %v1155, %v965
        %v1157 = vadd.f32 %v1156, %v966
        %v1158 = vadd.f32 %v1157, %v967
        %v1159 = vadd.f32 %v1158, %v968
        %v1160 = vadd.f32 %v1159, %v969
        %v1161 = vadd.f32 %v1160, %v970
        %v1162 = vadd.f32 %v1161, %v971
        %v1163 = vadd.f32 %v1162, %v972
        %v1164 = vadd.f32 %v1163, %v973
        %v1165 = vadd.f32 %v1164, %v974
        %v1166 = vadd.f32 %v1165, %v975
        %v1167 = vadd.f32 %v1166, %v976
        %v1168 = vadd.f32 %v1167, %v977
        %v1169 = vadd.f32 %v1168, %v978
        %v1170 = vadd.f32 %v1169, %v979
        %v1171 = vadd.f32 %v1170, %v980
        %v1172 = vadd.f32 %v1171, %v981
        %v1173 = vadd.f32 %v1172, %v982
        %v1174 = vadd.f32 %v1173, %v983
        %v1175 = vadd.f32 %v1174, %v984
        %v1176 = vadd.f32 %v1175, %v985
        %v1177 = vadd.f32 %v1176, %v986
        %v1178 = vadd.f32 %v1177, %v987
        %v1179 = vadd.f32 %v1178, %v988
        %v1180 = vadd.f32 %v1179, %v989
        %v1181 = vadd.f32 %v1180, %v990
        %v1182 = vadd.f32 %v1181, %v991
        %v1183 = vadd.f32 %v1182, %v992
        %v1184 = vadd.f32 %v1183, %v993
        %v1185 = vadd.f32 %v1184, %v994
        %v1186 = vadd.f32 %v1185, %v995
        %v1187 = vadd.f32 %v1186, %v996
        %v1188 = vadd.f32 %v1187, %v997
        %v1189 = vadd.f32 %v1188, %v998
        %v1190 = vadd.f32 %v1189, %v999
        %v1191 = vadd.f32 %v1190, %v1000
        %v1192 = vadd.f32 %v1191, %v1001
        %v1193 = vadd.f32 %v1192, %v1002
        %v1194 = vadd.f32 %v1193, %v1003
        %v1195 = vadd.f32 %v1194, %v1004
        %v1196 = vadd.f32 %v1195, %v1005
        %v1197 = vadd.f32 %v1196, %v1006
        %v1198 = vadd.f32 %v1197, %v1007
        %v1199 = vadd.f32 %v1198, %v1008
        %v1200 = vadd.f32 %v1199, %v1009
        %v1201 = vadd.f32 %v1200, %v1010
        %v1202 = vadd.f32 %v1201, %v1011
        %v1203 = vrot.slane %v1202, 4
        %v1204 = vadd.f32 %v1202, %v1203
        %v1205 = vrot.slane %v1204, 2
        %v1206 = vadd.f32 %v1204, %v1205
        %v1207 = vrot.slane %v1206, 1
        %v1208 = vadd.f32 %v1206, %v1207
        %v1209 = vmul.f32 %v948, %v948
        %v1210 = vmul.f32 %v949, %v949
        %v1211 = vmul.f32 %v950, %v950
        %v1212 = vmul.f32 %v951, %v951
        %v1213 = vmul.f32 %v952, %v952
        %v1214 = vmul.f32 %v953, %v953
        %v1215 = vmul.f32 %v954, %v954
        %v1216 = vmul.f32 %v955, %v955
        %v1217 = vmul.f32 %v956, %v956
        %v1218 = vmul.f32 %v957, %v957
        %v1219 = vmul.f32 %v958, %v958
        %v1220 = vmul.f32 %v959, %v959
        %v1221 = vmul.f32 %v960, %v960
        %v1222 = vmul.f32 %v961, %v961
        %v1223 = vmul.f32 %v962, %v962
        %v1224 = vmul.f32 %v963, %v963
        %v1225 = vmul.f32 %v964, %v964
        %v1226 = vmul.f32 %v965, %v965
        %v1227 = vmul.f32 %v966, %v966
        %v1228 = vmul.f32 %v967, %v967
        %v1229 = vmul.f32 %v968, %v968
        %v1230 = vmul.f32 %v969, %v969
        %v1231 = vmul.f32 %v970, %v970
        %v1232 = vmul.f32 %v971, %v971
        %v1233 = vmul.f32 %v972, %v972
        %v1234 = vmul.f32 %v973, %v973
        %v1235 = vmul.f32 %v974, %v974
        %v1236 = vmul.f32 %v975, %v975
        %v1237 = vmul.f32 %v976, %v976
        %v1238 = vmul.f32 %v977, %v977
        %v1239 = vmul.f32 %v978, %v978
        %v1240 = vmul.f32 %v979, %v979
        %v1241 = vmul.f32 %v980, %v980
        %v1242 = vmul.f32 %v981, %v981
        %v1243 = vmul.f32 %v982, %v982
        %v1244 = vmul.f32 %v983, %v983
        %v1245 = vmul.f32 %v984, %v984
        %v1246 = vmul.f32 %v985, %v985
        %v1247 = vmul.f32 %v986, %v986
        %v1248 = vmul.f32 %v987, %v987
        %v1249 = vmul.f32 %v988, %v988
        %v1250 = vmul.f32 %v989, %v989
        %v1251 = vmul.f32 %v990, %v990
        %v1252 = vmul.f32 %v991, %v991
        %v1253 = vmul.f32 %v992, %v992
        %v1254 = vmul.f32 %v993, %v993
        %v1255 = vmul.f32 %v994, %v994
        %v1256 = vmul.f32 %v995, %v995
        %v1257 = vmul.f32 %v996, %v996
        %v1258 = vmul.f32 %v997, %v997
        %v1259 = vmul.f32 %v998, %v998
        %v1260 = vmul.f32 %v999, %v999
        %v1261 = vmul.f32 %v1000, %v1000
        %v1262 = vmul.f32 %v1001, %v1001
        %v1263 = vmul.f32 %v1002, %v1002
        %v1264 = vmul.f32 %v1003, %v1003
        %v1265 = vmul.f32 %v1004, %v1004
        %v1266 = vmul.f32 %v1005, %v1005
        %v1267 = vmul.f32 %v1006, %v1006
        %v1268 = vmul.f32 %v1007, %v1007
        %v1269 = vmul.f32 %v1008, %v1008
        %v1270 = vmul.f32 %v1009, %v1009
        %v1271 = vmul.f32 %v1010, %v1010
        %v1272 = vmul.f32 %v1011, %v1011
        %v1273 = vadd.f32 %v1209, %v1210
        %v1274 = vadd.f32 %v1273, %v1211
        %v1275 = vadd.f32 %v1274, %v1212
        %v1276 = vadd.f32 %v1275, %v1213
        %v1277 = vadd.f32 %v1276, %v1214
        %v1278 = vadd.f32 %v1277, %v1215
        %v1279 = vadd.f32 %v1278, %v1216
        %v1280 = vadd.f32 %v1279, %v1217
        %v1281 = vadd.f32 %v1280, %v1218
        %v1282 = vadd.f32 %v1281, %v1219
        %v1283 = vadd.f32 %v1282, %v1220
        %v1284 = vadd.f32 %v1283, %v1221
        %v1285 = vadd.f32 %v1284, %v1222
        %v1286 = vadd.f32 %v1285, %v1223
        %v1287 = vadd.f32 %v1286, %v1224
        %v1288 = vadd.f32 %v1287, %v1225
        %v1289 = vadd.f32 %v1288, %v1226
        %v1290 = vadd.f32 %v1289, %v1227
        %v1291 = vadd.f32 %v1290, %v1228
        %v1292 = vadd.f32 %v1291, %v1229
        %v1293 = vadd.f32 %v1292, %v1230
        %v1294 = vadd.f32 %v1293, %v1231
        %v1295 = vadd.f32 %v1294, %v1232
        %v1296 = vadd.f32 %v1295, %v1233
        %v1297 = vadd.f32 %v1296, %v1234
        %v1298 = vadd.f32 %v1297, %v1235
        %v1299 = vadd.f32 %v1298, %v1236
        %v1300 = vadd.f32 %v1299, %v1237
        %v1301 = vadd.f32 %v1300, %v1238
        %v1302 = vadd.f32 %v1301, %v1239
        %v1303 = vadd.f32 %v1302, %v1240
        %v1304 = vadd.f32 %v1303, %v1241
        %v1305 = vadd.f32 %v1304, %v1242
        %v1306 = vadd.f32 %v1305, %v1243
        %v1307 = vadd.f32 %v1306, %v1244
        %v1308 = vadd.f32 %v1307, %v1245
        %v1309 = vadd.f32 %v1308, %v1246
        %v1310 = vadd.f32 %v1309, %v1247
        %v1311 = vadd.f32 %v1310, %v1248
        %v1312 = vadd.f32 %v1311, %v1249
        %v1313 = vadd.f32 %v1312, %v1250
        %v1314 = vadd.f32 %v1313, %v1251
        %v1315 = vadd.f32 %v1314, %v1252
        %v1316 = vadd.f32 %v1315, %v1253
        %v1317 = vadd.f32 %v1316, %v1254
        %v1318 = vadd.f32 %v1317, %v1255
        %v1319 = vadd.f32 %v1318, %v1256
        %v1320 = vadd.f32 %v1319, %v1257
        %v1321 = vadd.f32 %v1320, %v1258
        %v1322 = vadd.f32 %v1321, %v1259
        %v1323 = vadd.f32 %v1322, %v1260
        %v1324 = vadd.f32 %v1323, %v1261
        %v1325 = vadd.f32 %v1324, %v1262
        %v1326 = vadd.f32 %v1325, %v1263
        %v1327 = vadd.f32 %v1326, %v1264
        %v1328 = vadd.f32 %v1327, %v1265
        %v1329 = vadd.f32 %v1328, %v1266
        %v1330 = vadd.f32 %v1329, %v1267
        %v1331 = vadd.f32 %v1330, %v1268
        %v1332 = vadd.f32 %v1331, %v1269
        %v1333 = vadd.f32 %v1332, %v1270
        %v1334 = vadd.f32 %v1333, %v1271
        %v1335 = vadd.f32 %v1334, %v1272
        %v1336 = vrot.slane %v1335, 4
        %v1337 = vadd.f32 %v1335, %v1336
        %v1338 = vrot.slane %v1337, 2
        %v1339 = vadd.f32 %v1337, %v1338
        %v1340 = vrot.slane %v1339, 1
        %v1341 = vadd.f32 %v1339, %v1340
        %1342 = vst [vmem:[%s235] sm:$0xff] %v1208
        %1343 = vst [vmem:[%s239] sm:$0xff] %v1341
        %s1344 = sand.u32 %s71, 1
        %s1345 = sand.u32 %s71, 1
        %s1346 = smul.addr %s1345, 256
        %s1347 = scalar_lea.vmem [#allocation2], %s1346
        %p1348 = scmp.lt.s32.totalorder %s16, 1
        %s1349 = scalar_select %p1348, %s16, 1
        %s1350 = smul.addr %s1349, 8
        %s1351 = scalar_lea.vmem %s3, %s1350
        %p1352 = scmp.lt.s32.totalorder %s16, 1
        %s1353 = scalar_select %p1352, %s16, 1
        %s1354 = smul.addr %s1353, 8
        %s1355 = scalar_lea.vmem %s4, %s1354
        // Predicated region
        $region29: #{darts_stacked_cells_forward.26} parent=27 // pred_check
          %p1356 = pneg %p81
        $region30: #{darts_stacked_cells_forward.26} parent=27 // pred_check_branch
          %1358 = sbr.rel (%p1356) target = $region32
        $region31: #{darts_stacked_cells_forward.26} parent=27 // pred_region
          %s1359 = smul.u32 64, %s16
          %s1360 = ssub.s32 100, %s1359
          %p1361 = scmp.lt.s32.totalorder %s1360, 64
          %s1362 = scalar_select %p1361, %s1360, 64
          %s1363 = smul.u32 4, %s1362
          %p1364 = scmp.ne.s32.totalorder 0, %s1363
          %s1365 = smul.addr %s1359, 4
          %s1366 = scalar_lea.vmem %s2, %s1365
          // Predicated region
          $region33: #{darts_stacked_cells_forward.26} parent=31 // pred_check
            %p1367 = pneg %p1364
          $region34: #{darts_stacked_cells_forward.26} parent=31 // pred_check_branch
            %1369 = sbr.rel (%p1367) target = $region36
          $region35: #{darts_stacked_cells_forward.26} parent=31 // pred_region
            // Predicated region
            $region37: #{darts_stacked_cells_forward.26} parent=35 // pred_check
              _
            $region38: #{darts_stacked_cells_forward.26} parent=35 // pred_check_branch
              %1371 = sbr.rel target = $region40
            $region39: #{darts_stacked_cells_forward.26} parent=35 // pred_region
              // Predicated region
              $region59: #{darts_stacked_cells_forward.26} parent=39 // pred_check
                _
              $region60: #{darts_stacked_cells_forward.26} parent=39 // pred_check_branch
                %1483 = sbr.rel (0) target = $region62
              $region61: #{darts_stacked_cells_forward.26} parent=39 // pred_region
                %s1485 = ssub.s32 16, 1
                %s1486 = sshrl.u32 %s1362, 5
                // While loop
                $region63: #{darts_stacked_cells_forward.26} parent=61 // loop_pre_header
                  _
                $region64: #{darts_stacked_cells_forward.26} parent=61 // loop_header
                  %s1488 = sphi 0, %s1490
                  %p1489 = scmp.ge.s32.totalorder %s1488, %s1486
                  %s1493 = sphi 0, %s1562
                  %s1494 = sphi %s1347, %s1565
                  %s1495 = sphi %s1366, %s1566
                $region65: #{darts_stacked_cells_forward.26} parent=61 // loop_header_branch
                  %1492 = sbr.rel (%p1489) target = $region69
                $region66: #{darts_stacked_cells_forward.26} parent=61 // loop_body
                  %v1496 = vld [vmem:[%s1494] sm:%s1485]
                  %1497 = vst [vmem:[%s1495] sm:%s1485] %v1496
                  %v1498 = vld [vmem:[%s1494 + $0x4] sm:%s1485]
                  %1499 = vst [vmem:[%s1495 + $0x4] sm:%s1485] %v1498
                  %v1500 = vld [vmem:[%s1494 + $0x8] sm:%s1485]
                  %1501 = vst [vmem:[%s1495 + $0x8] sm:%s1485] %v1500
                  %v1502 = vld [vmem:[%s1494 + $0xc] sm:%s1485]
                  %1503 = vst [vmem:[%s1495 + $0xc] sm:%s1485] %v1502
                  %v1504 = vld [vmem:[%s1494 + $0x10] sm:%s1485]
                  %1505 = vst [vmem:[%s1495 + $0x10] sm:%s1485] %v1504
                  %v1506 = vld [vmem:[%s1494 + $0x14] sm:%s1485]
                  %1507 = vst [vmem:[%s1495 + $0x14] sm:%s1485] %v1506
                  %v1508 = vld [vmem:[%s1494 + $0x18] sm:%s1485]
                  %1509 = vst [vmem:[%s1495 + $0x18] sm:%s1485] %v1508
                  %v1510 = vld [vmem:[%s1494 + $0x1c] sm:%s1485]
                  %1511 = vst [vmem:[%s1495 + $0x1c] sm:%s1485] %v1510
                  %v1512 = vld [vmem:[%s1494 + $0x20] sm:%s1485]
                  %1513 = vst [vmem:[%s1495 + $0x20] sm:%s1485] %v1512
                  %v1514 = vld [vmem:[%s1494 + $0x24] sm:%s1485]
                  %1515 = vst [vmem:[%s1495 + $0x24] sm:%s1485] %v1514
                  %v1516 = vld [vmem:[%s1494 + $0x28] sm:%s1485]
                  %1517 = vst [vmem:[%s1495 + $0x28] sm:%s1485] %v1516
                  %v1518 = vld [vmem:[%s1494 + $0x2c] sm:%s1485]
                  %1519 = vst [vmem:[%s1495 + $0x2c] sm:%s1485] %v1518
                  %v1520 = vld [vmem:[%s1494 + $0x30] sm:%s1485]
                  %1521 = vst [vmem:[%s1495 + $0x30] sm:%s1485] %v1520
                  %v1522 = vld [vmem:[%s1494 + $0x34] sm:%s1485]
                  %1523 = vst [vmem:[%s1495 + $0x34] sm:%s1485] %v1522
                  %v1524 = vld [vmem:[%s1494 + $0x38] sm:%s1485]
                  %1525 = vst [vmem:[%s1495 + $0x38] sm:%s1485] %v1524
                  %v1526 = vld [vmem:[%s1494 + $0x3c] sm:%s1485]
                  %1527 = vst [vmem:[%s1495 + $0x3c] sm:%s1485] %v1526
                  %v1528 = vld [vmem:[%s1494 + $0x40] sm:%s1485]
                  %1529 = vst [vmem:[%s1495 + $0x40] sm:%s1485] %v1528
                  %v1530 = vld [vmem:[%s1494 + $0x44] sm:%s1485]
                  %1531 = vst [vmem:[%s1495 + $0x44] sm:%s1485] %v1530
                  %v1532 = vld [vmem:[%s1494 + $0x48] sm:%s1485]
                  %1533 = vst [vmem:[%s1495 + $0x48] sm:%s1485] %v1532
                  %v1534 = vld [vmem:[%s1494 + $0x4c] sm:%s1485]
                  %1535 = vst [vmem:[%s1495 + $0x4c] sm:%s1485] %v1534
                  %v1536 = vld [vmem:[%s1494 + $0x50] sm:%s1485]
                  %1537 = vst [vmem:[%s1495 + $0x50] sm:%s1485] %v1536
                  %v1538 = vld [vmem:[%s1494 + $0x54] sm:%s1485]
                  %1539 = vst [vmem:[%s1495 + $0x54] sm:%s1485] %v1538
                  %v1540 = vld [vmem:[%s1494 + $0x58] sm:%s1485]
                  %1541 = vst [vmem:[%s1495 + $0x58] sm:%s1485] %v1540
                  %v1542 = vld [vmem:[%s1494 + $0x5c] sm:%s1485]
                  %1543 = vst [vmem:[%s1495 + $0x5c] sm:%s1485] %v1542
                  %v1544 = vld [vmem:[%s1494 + $0x60] sm:%s1485]
                  %1545 = vst [vmem:[%s1495 + $0x60] sm:%s1485] %v1544
                  %v1546 = vld [vmem:[%s1494 + $0x64] sm:%s1485]
                  %1547 = vst [vmem:[%s1495 + $0x64] sm:%s1485] %v1546
                  %v1548 = vld [vmem:[%s1494 + $0x68] sm:%s1485]
                  %1549 = vst [vmem:[%s1495 + $0x68] sm:%s1485] %v1548
                  %v1550 = vld [vmem:[%s1494 + $0x6c] sm:%s1485]
                  %1551 = vst [vmem:[%s1495 + $0x6c] sm:%s1485] %v1550
                  %v1552 = vld [vmem:[%s1494 + $0x70] sm:%s1485]
                  %1553 = vst [vmem:[%s1495 + $0x70] sm:%s1485] %v1552
                  %v1554 = vld [vmem:[%s1494 + $0x74] sm:%s1485]
                  %1555 = vst [vmem:[%s1495 + $0x74] sm:%s1485] %v1554
                  %v1556 = vld [vmem:[%s1494 + $0x78] sm:%s1485]
                  %1557 = vst [vmem:[%s1495 + $0x78] sm:%s1485] %v1556
                  %v1558 = vld [vmem:[%s1494 + $0x7c] sm:%s1485]
                  %1559 = vst [vmem:[%s1495 + $0x7c] sm:%s1485] %v1558
                  %s1560 = sadd.s32 1, %s1493
                  %p1561 = scmp.ge.s32.totalorder %s1560, %s1486
                  %s1562 = scalar_select %p1561, 0, %s1560
                  %s1563 = smul.u32 %s1562, 128
                  %s1564 = smul.u32 %s1562, 128
                  %s1565 = scalar_lea.vmem %s1347, %s1563 [#allocation2]
                  %s1566 = scalar_lea.vmem %s1366, %s1564
                $region67: #{darts_stacked_cells_forward.26} parent=61 // loop_footer
                  %s1490 = sadd.s32 %s1488, 1
                $region68: #{darts_stacked_cells_forward.26} parent=61 // loop_footer_branch
                  %1487 = sbr.rel target = $region64
                $region69: #{darts_stacked_cells_forward.26} parent=61 // loop_exit
                  _
                %s1567 = sshrl.u32 %s1362, 5
                %s1568 = sand.u32 %s1362, 31
                %s1569 = smul.u32 %s1567, 32
                %s1570 = smul.u32 4, %s1569
                %s1571 = scalar_lea.vmem %s1347, %s1570 [#allocation2]
                %s1572 = smul.u32 4, %s1569
                %s1573 = scalar_lea.vmem %s1366, %s1572
                // While loop
                $region70: #{darts_stacked_cells_forward.26} parent=61 // loop_pre_header
                  _
                $region71: #{darts_stacked_cells_forward.26} parent=61 // loop_header
                  %s1575 = sphi 0, %s1577
                  %p1576 = scmp.ge.s32.totalorder %s1575, %s1568
                  %s1580 = sphi 0, %s1587
                  %s1581 = sphi %s1571, %s1590
                  %s1582 = sphi %s1573, %s1591
                $region72: #{darts_stacked_cells_forward.26} parent=61 // loop_header_branch
                  %1579 = sbr.rel (%p1576) target = $region76
                $region73: #{darts_stacked_cells_forward.26} parent=61 // loop_body
                  %v1583 = vld [vmem:[%s1581] sm:%s1485]
                  %1584 = vst [vmem:[%s1582] sm:%s1485] %v1583
                  %s1585 = sadd.s32 1, %s1580
                  %p1586 = scmp.ge.s32.totalorder %s1585, %s1568
                  %s1587 = scalar_select %p1586, 0, %s1585
                  %s1588 = smul.u32 %s1587, 4
                  %s1589 = smul.u32 %s1587, 4
                  %s1590 = scalar_lea.vmem %s1571, %s1588 [#allocation2]
                  %s1591 = scalar_lea.vmem %s1573, %s1589
                $region74: #{darts_stacked_cells_forward.26} parent=61 // loop_footer
                  %s1577 = sadd.s32 %s1575, 1
                $region75: #{darts_stacked_cells_forward.26} parent=61 // loop_footer_branch
                  %1574 = sbr.rel target = $region71
                $region76: #{darts_stacked_cells_forward.26} parent=61 // loop_exit
                  _
              $region62: #{darts_stacked_cells_forward.26} parent=39 // pred_fallthru
                _
            $region40: #{darts_stacked_cells_forward.26} parent=35 // pred_fallthru
              _
            // Predicated region
            $region41: #{darts_stacked_cells_forward.26} parent=35 // pred_check
              _
            $region42: #{darts_stacked_cells_forward.26} parent=35 // pred_check_branch
              %1373 = sbr.rel (0) target = $region44
            $region43: #{darts_stacked_cells_forward.26} parent=35 // pred_region
              %s1375 = ssub.s32 16, 1
              %s1376 = sshrl.u32 %s1362, 5
              // While loop
              $region45: #{darts_stacked_cells_forward.26} parent=43 // loop_pre_header
                _
              $region46: #{darts_stacked_cells_forward.26} parent=43 // loop_header
                %s1378 = sphi 0, %s1380
                %p1379 = scmp.ge.s32.totalorder %s1378, %s1376
                %s1383 = sphi 0, %s1452
                %s1384 = sphi %s1347, %s1455
                %s1385 = sphi %s1366, %s1456
              $region47: #{darts_stacked_cells_forward.26} parent=43 // loop_header_branch
                %1382 = sbr.rel (%p1379) target = $region51
              $region48: #{darts_stacked_cells_forward.26} parent=43 // loop_body
                %v1386 = vld [vmem:[%s1384] sm:%s1375]
                %1387 = vst [vmem:[%s1385] sm:%s1375] %v1386
                %v1388 = vld [vmem:[%s1384 + $0x4] sm:%s1375]
                %1389 = vst [vmem:[%s1385 + $0x4] sm:%s1375] %v1388
                %v1390 = vld [vmem:[%s1384 + $0x8] sm:%s1375]
                %1391 = vst [vmem:[%s1385 + $0x8] sm:%s1375] %v1390
                %v1392 = vld [vmem:[%s1384 + $0xc] sm:%s1375]
                %1393 = vst [vmem:[%s1385 + $0xc] sm:%s1375] %v1392
                %v1394 = vld [vmem:[%s1384 + $0x10] sm:%s1375]
                %1395 = vst [vmem:[%s1385 + $0x10] sm:%s1375] %v1394
                %v1396 = vld [vmem:[%s1384 + $0x14] sm:%s1375]
                %1397 = vst [vmem:[%s1385 + $0x14] sm:%s1375] %v1396
                %v1398 = vld [vmem:[%s1384 + $0x18] sm:%s1375]
                %1399 = vst [vmem:[%s1385 + $0x18] sm:%s1375] %v1398
                %v1400 = vld [vmem:[%s1384 + $0x1c] sm:%s1375]
                %1401 = vst [vmem:[%s1385 + $0x1c] sm:%s1375] %v1400
                %v1402 = vld [vmem:[%s1384 + $0x20] sm:%s1375]
                %1403 = vst [vmem:[%s1385 + $0x20] sm:%s1375] %v1402
                %v1404 = vld [vmem:[%s1384 + $0x24] sm:%s1375]
                %1405 = vst [vmem:[%s1385 + $0x24] sm:%s1375] %v1404
                %v1406 = vld [vmem:[%s1384 + $0x28] sm:%s1375]
                %1407 = vst [vmem:[%s1385 + $0x28] sm:%s1375] %v1406
                %v1408 = vld [vmem:[%s1384 + $0x2c] sm:%s1375]
                %1409 = vst [vmem:[%s1385 + $0x2c] sm:%s1375] %v1408
                %v1410 = vld [vmem:[%s1384 + $0x30] sm:%s1375]
                %1411 = vst [vmem:[%s1385 + $0x30] sm:%s1375] %v1410
                %v1412 = vld [vmem:[%s1384 + $0x34] sm:%s1375]
                %1413 = vst [vmem:[%s1385 + $0x34] sm:%s1375] %v1412
                %v1414 = vld [vmem:[%s1384 + $0x38] sm:%s1375]
                %1415 = vst [vmem:[%s1385 + $0x38] sm:%s1375] %v1414
                %v1416 = vld [vmem:[%s1384 + $0x3c] sm:%s1375]
                %1417 = vst [vmem:[%s1385 + $0x3c] sm:%s1375] %v1416
                %v1418 = vld [vmem:[%s1384 + $0x40] sm:%s1375]
                %1419 = vst [vmem:[%s1385 + $0x40] sm:%s1375] %v1418
                %v1420 = vld [vmem:[%s1384 + $0x44] sm:%s1375]
                %1421 = vst [vmem:[%s1385 + $0x44] sm:%s1375] %v1420
                %v1422 = vld [vmem:[%s1384 + $0x48] sm:%s1375]
                %1423 = vst [vmem:[%s1385 + $0x48] sm:%s1375] %v1422
                %v1424 = vld [vmem:[%s1384 + $0x4c] sm:%s1375]
                %1425 = vst [vmem:[%s1385 + $0x4c] sm:%s1375] %v1424
                %v1426 = vld [vmem:[%s1384 + $0x50] sm:%s1375]
                %1427 = vst [vmem:[%s1385 + $0x50] sm:%s1375] %v1426
                %v1428 = vld [vmem:[%s1384 + $0x54] sm:%s1375]
                %1429 = vst [vmem:[%s1385 + $0x54] sm:%s1375] %v1428
                %v1430 = vld [vmem:[%s1384 + $0x58] sm:%s1375]
                %1431 = vst [vmem:[%s1385 + $0x58] sm:%s1375] %v1430
                %v1432 = vld [vmem:[%s1384 + $0x5c] sm:%s1375]
                %1433 = vst [vmem:[%s1385 + $0x5c] sm:%s1375] %v1432
                %v1434 = vld [vmem:[%s1384 + $0x60] sm:%s1375]
                %1435 = vst [vmem:[%s1385 + $0x60] sm:%s1375] %v1434
                %v1436 = vld [vmem:[%s1384 + $0x64] sm:%s1375]
                %1437 = vst [vmem:[%s1385 + $0x64] sm:%s1375] %v1436
                %v1438 = vld [vmem:[%s1384 + $0x68] sm:%s1375]
                %1439 = vst [vmem:[%s1385 + $0x68] sm:%s1375] %v1438
                %v1440 = vld [vmem:[%s1384 + $0x6c] sm:%s1375]
                %1441 = vst [vmem:[%s1385 + $0x6c] sm:%s1375] %v1440
                %v1442 = vld [vmem:[%s1384 + $0x70] sm:%s1375]
                %1443 = vst [vmem:[%s1385 + $0x70] sm:%s1375] %v1442
                %v1444 = vld [vmem:[%s1384 + $0x74] sm:%s1375]
                %1445 = vst [vmem:[%s1385 + $0x74] sm:%s1375] %v1444
                %v1446 = vld [vmem:[%s1384 + $0x78] sm:%s1375]
                %1447 = vst [vmem:[%s1385 + $0x78] sm:%s1375] %v1446
                %v1448 = vld [vmem:[%s1384 + $0x7c] sm:%s1375]
                %1449 = vst [vmem:[%s1385 + $0x7c] sm:%s1375] %v1448
                %s1450 = sadd.s32 1, %s1383
                %p1451 = scmp.ge.s32.totalorder %s1450, %s1376
                %s1452 = scalar_select %p1451, 0, %s1450
                %s1453 = smul.u32 %s1452, 128
                %s1454 = smul.u32 %s1452, 128
                %s1455 = scalar_lea.vmem %s1347, %s1453 [#allocation2]
                %s1456 = scalar_lea.vmem %s1366, %s1454
              $region49: #{darts_stacked_cells_forward.26} parent=43 // loop_footer
                %s1380 = sadd.s32 %s1378, 1
              $region50: #{darts_stacked_cells_forward.26} parent=43 // loop_footer_branch
                %1377 = sbr.rel target = $region46
              $region51: #{darts_stacked_cells_forward.26} parent=43 // loop_exit
                _
              %s1457 = sshrl.u32 %s1362, 5
              %s1458 = sand.u32 %s1362, 31
              %s1459 = smul.u32 %s1457, 32
              %s1460 = smul.u32 4, %s1459
              %s1461 = scalar_lea.vmem %s1347, %s1460 [#allocation2]
              %s1462 = smul.u32 4, %s1459
              %s1463 = scalar_lea.vmem %s1366, %s1462
              // While loop
              $region52: #{darts_stacked_cells_forward.26} parent=43 // loop_pre_header
                _
              $region53: #{darts_stacked_cells_forward.26} parent=43 // loop_header
                %s1465 = sphi 0, %s1467
                %p1466 = scmp.ge.s32.totalorder %s1465, %s1458
                %s1470 = sphi 0, %s1477
                %s1471 = sphi %s1461, %s1480
                %s1472 = sphi %s1463, %s1481
              $region54: #{darts_stacked_cells_forward.26} parent=43 // loop_header_branch
                %1469 = sbr.rel (%p1466) target = $region58
              $region55: #{darts_stacked_cells_forward.26} parent=43 // loop_body
                %v1473 = vld [vmem:[%s1471] sm:%s1375]
                %1474 = vst [vmem:[%s1472] sm:%s1375] %v1473
                %s1475 = sadd.s32 1, %s1470
                %p1476 = scmp.ge.s32.totalorder %s1475, %s1458
                %s1477 = scalar_select %p1476, 0, %s1475
                %s1478 = smul.u32 %s1477, 4
                %s1479 = smul.u32 %s1477, 4
                %s1480 = scalar_lea.vmem %s1461, %s1478 [#allocation2]
                %s1481 = scalar_lea.vmem %s1463, %s1479
              $region56: #{darts_stacked_cells_forward.26} parent=43 // loop_footer
                %s1467 = sadd.s32 %s1465, 1
              $region57: #{darts_stacked_cells_forward.26} parent=43 // loop_footer_branch
                %1464 = sbr.rel target = $region53
              $region58: #{darts_stacked_cells_forward.26} parent=43 // loop_exit
                _
            $region44: #{darts_stacked_cells_forward.26} parent=35 // pred_fallthru
              _
          $region36: #{darts_stacked_cells_forward.26} parent=31 // pred_fallthru
            _
          %1592 = vnop
        $region32: #{darts_stacked_cells_forward.26} parent=27 // pred_fallthru
          _
        // Predicated region
        $region77: #{darts_stacked_cells_forward.26} parent=27 // pred_check
          %p1593 = pneg %p107
        $region78: #{darts_stacked_cells_forward.26} parent=27 // pred_check_branch
          %1595 = sbr.rel (%p1593) target = $region80
        $region79: #{darts_stacked_cells_forward.26} parent=27 // pred_region
          _
        $region80: #{darts_stacked_cells_forward.26} parent=27 // pred_fallthru
          _
        // Predicated region
        $region81: #{darts_stacked_cells_forward.26} parent=27 // pred_check
          %p1596 = pneg %p133
        $region82: #{darts_stacked_cells_forward.26} parent=27 // pred_check_branch
          %1598 = sbr.rel (%p1596) target = $region84
        $region83: #{darts_stacked_cells_forward.26} parent=27 // pred_region
          _
        $region84: #{darts_stacked_cells_forward.26} parent=27 // pred_fallthru
          _
      $region28: #{darts_stacked_cells_forward.26} parent=5 // pred_fallthru
        _
      %p1599 = scmp.le.s32.totalorder 2, %s11
      // Predicated region
      $region85: #{darts_stacked_cells_forward.26} parent=5 // pred_check
        %p1600 = pneg %p1599
      $region86: #{darts_stacked_cells_forward.26} parent=5 // pred_check_branch
        %1602 = sbr.rel (%p1600) target = $region88
      $region87: #{darts_stacked_cells_forward.26} parent=5 // pred_region
        %s1603 = ssub.s32 %s11, 2
        // Predicated region
        $region89: #{darts_stacked_cells_forward.26} parent=87 // pred_check
          %p1604 = pneg %p87
        $region90: #{darts_stacked_cells_forward.26} parent=87 // pred_check_branch
          %1606 = sbr.rel (%p1604) target = $region92
        $region91: #{darts_stacked_cells_forward.26} parent=87 // pred_region
          %s1607 = sand.u32 %s72, 1
          %s1608 = sand.u32 %s72, 1
          %s1609 = smul.addr %s1608, 256
          %s1610 = scalar_lea.vmem [#allocation2], %s1609
        $region92: #{darts_stacked_cells_forward.26} parent=87 // pred_fallthru
          _
        // Predicated region
        $region93: #{darts_stacked_cells_forward.26} parent=87 // pred_check
          %p1611 = pneg %p113
        $region94: #{darts_stacked_cells_forward.26} parent=87 // pred_check_branch
          %1613 = sbr.rel (%p1611) target = $region96
        $region95: #{darts_stacked_cells_forward.26} parent=87 // pred_region
          %p1614 = scmp.lt.s32.totalorder %s17, 1
          %s1615 = scalar_select %p1614, %s17, 1
          %s1616 = smul.addr %s1615, 8
          %s1617 = scalar_lea.vmem %s3, %s1616
        $region96: #{darts_stacked_cells_forward.26} parent=87 // pred_fallthru
          _
        // Predicated region
        $region97: #{darts_stacked_cells_forward.26} parent=87 // pred_check
          %p1618 = pneg %p139
        $region98: #{darts_stacked_cells_forward.26} parent=87 // pred_check_branch
          %1620 = sbr.rel (%p1618) target = $region100
        $region99: #{darts_stacked_cells_forward.26} parent=87 // pred_region
          %p1621 = scmp.lt.s32.totalorder %s17, 1
          %s1622 = scalar_select %p1621, %s17, 1
          %s1623 = smul.addr %s1622, 8
          %s1624 = scalar_lea.vmem %s4, %s1623
        $region100: #{darts_stacked_cells_forward.26} parent=87 // pred_fallthru
          _
      $region88: #{darts_stacked_cells_forward.26} parent=5 // pred_fallthru
        _
    $region6: #{darts_stacked_cells_forward.26} parent=1 // loop_footer
      %s15 = sadd.s32 1, %s11
    $region7: #{darts_stacked_cells_forward.26} parent=1 // loop_footer_branch
      %10 = sbr.rel target = $region3
    $region8: #{darts_stacked_cells_forward.26} parent=1 // loop_exit
      _

// kernel: darts_stacked_cells_forward.28
$region0: #{darts_stacked_cells_forward.28}
  #allocation0 [shape = 'u32[]', space=smem, size = 0x4, offset = 0x4, fixed_abs, tag = 'smem constant byte address 0x4 - core index']
  #allocation1 [shape = 'u32[72,128]{1,0:T(1,128)}', space=vmem, size = 0x9000, scoped, tag = 'internal scratch']
  %s0 = inlined_call_operand.vmem [shape: bf16[800,8], index: 0, kind: input, shape index: {}]
  %s1 = inlined_call_operand.vmem [shape: bf16[8,128], index: 1, kind: input, shape index: {}]
  %s2 = inlined_call_operand.vmem [shape: bf16[800,128], index: 2, kind: output, shape index: {0}]
  %s3 = inlined_call_operand.vmem [shape: f32[2,8,128], index: 3, kind: output, shape index: {1}]
  %s4 = inlined_call_operand.vmem [shape: f32[2,8,128], index: 4, kind: output, shape index: {2}]
  %5 = xla_tuple %s2, %s3, %s4
  %s6 = sld [smem:[#allocation0]]
  $region101: #{darts_stacked_cells_forward.28} parent=0
    _
  %s8 = ssub.s32 1, %s6
  %s9 = scalar_select 0, %s8, %s6
  $region1: #{darts_stacked_cells_forward.28} parent=0
    #allocation2 [shape = 'u8[262144]{0}', space=vmem, size = 0x40000, scoped, tag = 'output window, operand 0']
    loop: start=0, step=1, limit=4
    $region2: #{darts_stacked_cells_forward.28} parent=1 // loop_pre_header
      _
    $region3: #{darts_stacked_cells_forward.28} parent=1 // loop_header
      %s11 = sphi 0, %s15
      %p12 = scmp.ge.s32.totalorder %s11, 4
      %s21 = sphi 0, %s23
      %s24 = sphi 0, %s21
      %s25 = sphi 0, %s24
      %s41 = sphi 0, %s25
      %s45 = sphi 0, %s45
      %s47 = sphi 0, %s45
      %s48 = sphi 0, %s47
      %s62 = sphi 0, %s48
      %s68 = sphi 0, %s70
      %s71 = sphi 0, %s68
      %s72 = sphi 0, %s71
      %s88 = sphi 0, %s72
      %s94 = sphi 0, %s96
      %s97 = sphi 0, %s94
      %s98 = sphi 0, %s97
      %s114 = sphi 0, %s98
      %s120 = sphi 0, %s122
      %s123 = sphi 0, %s120
      %s124 = sphi 0, %s123
      %s140 = sphi 0, %s124
    $region4: #{darts_stacked_cells_forward.28} parent=1 // loop_header_branch
      %14 = sbr.rel (%p12) target = $region8
    $region5: #{darts_stacked_cells_forward.28} parent=1 // loop_body
      %s16 = ssub.s32 %s11, 1
      %s17 = ssub.s32 %s11, 2
      %s18 = sadd.s32 %s11, 1
      %s19 = ssub.s32 %s11, %s18
      %p20 = scmp.eq.s32.totalorder %s19, 0
      %s22 = sadd.s32 %s21, 1
      %s23 = scalar_select %p20, %s21, %s22
      %p26 = pneg %p20
      %p27 = scmp.eq.s32.totalorder %s11, 1
      %p28 = por %p26, %p27
      %p29 = scmp.ne.s32.totalorder %s21, %s24
      %p30 = scmp.eq.s32.totalorder %s11, 0
      %p31 = por %p29, %p30
      %p32 = scmp.ne.s32.totalorder %s21, %s24
      %p33 = scmp.eq.s32.totalorder %s16, 1
      %p34 = por %p32, %p33
      %p35 = scmp.ne.s32.totalorder %s24, %s25
      %p36 = scmp.eq.s32.totalorder %s16, 0
      %p37 = por %p35, %p36
      %p38 = scmp.ne.s32.totalorder %s24, %s25
      %p39 = scmp.eq.s32.totalorder %s17, 1
      %p40 = por %p38, %p39
      %p42 = scmp.ne.s32.totalorder %s25, %s41
      %p43 = scmp.eq.s32.totalorder %s17, 0
      %p44 = por %p42, %p43
      %s46 = sadd.s32 %s45, 1
      %p49 = scmp.eq.s32.totalorder %s11, 1
      %p50 = scmp.ne.s32.totalorder %s45, %s47
      %p51 = scmp.eq.s32.totalorder %s11, 0
      %p52 = por %p50, %p51
      %p53 = scmp.ne.s32.totalorder %s45, %s47
      %p54 = scmp.eq.s32.totalorder %s16, 1
      %p55 = por %p53, %p54
      %p56 = scmp.ne.s32.totalorder %s47, %s48
      %p57 = scmp.eq.s32.totalorder %s16, 0
      %p58 = por %p56, %p57
      %p59 = scmp.ne.s32.totalorder %s47, %s48
      %p60 = scmp.eq.s32.totalorder %s17, 1
      %p61 = por %p59, %p60
      %p63 = scmp.ne.s32.totalorder %s48, %s62
      %p64 = scmp.eq.s32.totalorder %s17, 0
      %p65 = por %p63, %p64
      %s66 = ssub.s32 %s11, %s18
      %p67 = scmp.eq.s32.totalorder %s66, 0
      %s69 = sadd.s32 %s68, 1
      %s70 = scalar_select %p67, %s68, %s69
      %p73 = pneg %p67
      %p74 = scmp.eq.s32.totalorder %s11, 1
      %p75 = por %p73, %p74
      %p76 = scmp.ne.s32.totalorder %s68, %s71
      %p77 = scmp.eq.s32.totalorder %s11, 0
      %p78 = por %p76, %p77
      %p79 = scmp.ne.s32.totalorder %s68, %s71
      %p80 = scmp.eq.s32.totalorder %s16, 1
      %p81 = por %p79, %p80
      %p82 = scmp.ne.s32.totalorder %s71, %s72
      %p83 = scmp.eq.s32.totalorder %s16, 0
      %p84 = por %p82, %p83
      %p85 = scmp.ne.s32.totalorder %s71, %s72
      %p86 = scmp.eq.s32.totalorder %s17, 1
      %p87 = por %p85, %p86
      %p89 = scmp.ne.s32.totalorder %s72, %s88
      %p90 = scmp.eq.s32.totalorder %s17, 0
      %p91 = por %p89, %p90
      %s92 = ssub.s32 %s11, %s18
      %p93 = scmp.eq.s32.totalorder %s92, 0
      %s95 = sadd.s32 %s94, 1
      %s96 = scalar_select %p93, %s94, %s95
      %p99 = pneg %p93
      %p100 = scmp.eq.s32.totalorder %s11, 1
      %p101 = por %p99, %p100
      %p102 = scmp.ne.s32.totalorder %s94, %s97
      %p103 = scmp.eq.s32.totalorder %s11, 0
      %p104 = por %p102, %p103
      %p105 = scmp.ne.s32.totalorder %s94, %s97
      %p106 = scmp.eq.s32.totalorder %s16, 1
      %p107 = por %p105, %p106
      %p108 = scmp.ne.s32.totalorder %s97, %s98
      %p109 = scmp.eq.s32.totalorder %s16, 0
      %p110 = por %p108, %p109
      %p111 = scmp.ne.s32.totalorder %s97, %s98
      %p112 = scmp.eq.s32.totalorder %s17, 1
      %p113 = por %p111, %p112
      %p115 = scmp.ne.s32.totalorder %s98, %s114
      %p116 = scmp.eq.s32.totalorder %s17, 0
      %p117 = por %p115, %p116
      %s118 = ssub.s32 %s11, %s18
      %p119 = scmp.eq.s32.totalorder %s118, 0
      %s121 = sadd.s32 %s120, 1
      %s122 = scalar_select %p119, %s120, %s121
      %p125 = pneg %p119
      %p126 = scmp.eq.s32.totalorder %s11, 1
      %p127 = por %p125, %p126
      %p128 = scmp.ne.s32.totalorder %s120, %s123
      %p129 = scmp.eq.s32.totalorder %s11, 0
      %p130 = por %p128, %p129
      %p131 = scmp.ne.s32.totalorder %s120, %s123
      %p132 = scmp.eq.s32.totalorder %s16, 1
      %p133 = por %p131, %p132
      %p134 = scmp.ne.s32.totalorder %s123, %s124
      %p135 = scmp.eq.s32.totalorder %s16, 0
      %p136 = por %p134, %p135
      %p137 = scmp.ne.s32.totalorder %s123, %s124
      %p138 = scmp.eq.s32.totalorder %s17, 1
      %p139 = por %p137, %p138
      %p141 = scmp.ne.s32.totalorder %s124, %s140
      %p142 = scmp.eq.s32.totalorder %s17, 0
      %p143 = por %p141, %p142
      %p144 = scmp.le.s32.totalorder 1, %s11
      %p145 = scmp.lt.s32.totalorder %s11, 3
      %p146 = pnand %p144, %p145
      %p147 = pneg %p146
      // Predicated region
      $region9: #{darts_stacked_cells_forward.28} parent=5 // pred_check
        _
      $region10: #{darts_stacked_cells_forward.28} parent=5 // pred_check_branch
        %149 = sbr.rel (%p146) target = $region12
      $region11: #{darts_stacked_cells_forward.28} parent=5 // pred_region
        %s150 = ssub.s32 %s11, 1
        // Predicated region
        $region13: #{darts_stacked_cells_forward.28} parent=11 // pred_check
          %p151 = pneg %p58
        $region14: #{darts_stacked_cells_forward.28} parent=11 // pred_check_branch
          %153 = sbr.rel (%p151) target = $region16
        $region15: #{darts_stacked_cells_forward.28} parent=11 // pred_region
          _
        $region16: #{darts_stacked_cells_forward.28} parent=11 // pred_fallthru
          _
      $region12: #{darts_stacked_cells_forward.28} parent=5 // pred_fallthru
        _
      %p154 = scmp.lt.s32.totalorder %s11, 2
      // Predicated region
      $region17: #{darts_stacked_cells_forward.28} parent=5 // pred_check
        %p155 = pneg %p154
      $region18: #{darts_stacked_cells_forward.28} parent=5 // pred_check_branch
        %157 = sbr.rel (%p155) target = $region20
      $region19: #{darts_stacked_cells_forward.28} parent=5 // pred_region
        // Predicated region
        $region21: #{darts_stacked_cells_forward.28} parent=19 // pred_check
          %p158 = pneg %p31
        $region22: #{darts_stacked_cells_forward.28} parent=19 // pred_check_branch
          %160 = sbr.rel (%p158) target = $region24
        $region23: #{darts_stacked_cells_forward.28} parent=19 // pred_region
          %s161 = smul.u32 64, %s11
          %s162 = ssub.s32 100, %s161
          %p163 = scmp.lt.s32.totalorder %s162, 64
          %s164 = scalar_select %p163, %s162, 64
          %s165 = smul.u32 4, %s164
          %p166 = scmp.lt.s32.totalorder %s161, 99
          %s167 = scalar_select %p166, %s161, 99
          %s168 = smul.addr %s167, 4
          %s169 = scalar_lea.vmem %s0, %s168
          %s170 = smul.u32 64, %s11
          %s171 = ssub.s32 100, %s170
          %p172 = scmp.lt.s32.totalorder %s171, 64
          %s173 = scalar_select %p172, %s171, 64
          %s174 = smul.u32 4, %s173
        $region24: #{darts_stacked_cells_forward.28} parent=19 // pred_fallthru
          _
      $region20: #{darts_stacked_cells_forward.28} parent=5 // pred_fallthru
        _
      %p175 = scmp.le.s32.totalorder 1, %s11
      %p176 = scmp.lt.s32.totalorder %s11, 3
      %p177 = pnand %p175, %p176
      %p178 = pneg %p177
      // Predicated region
      $region25: #{darts_stacked_cells_forward.28} parent=5 // pred_check
        _
      $region26: #{darts_stacked_cells_forward.28} parent=5 // pred_check_branch
        %180 = sbr.rel (%p177) target = $region28
      $region27: #{darts_stacked_cells_forward.28} parent=5 // pred_region
        %s181 = ssub.s32 %s11, 1
        %s182 = smul.u32 64, %s16
        %s183 = ssub.s32 100, %s182
        %p184 = scmp.lt.s32.totalorder %s183, 64
        %s185 = scalar_select %p184, %s183, 64
        %s186 = smul.u32 4, %s185
        %p187 = scmp.lt.s32.totalorder %s182, 99
        %s188 = scalar_select %p187, %s182, 99
        %s189 = smul.addr %s188, 4
        %s190 = scalar_lea.vmem %s0, %s189
        %p191 = pneg %p37
        %p192 = pneg %p34
        %p193 = pneg %p58
        %p194 = pneg %p55
        %p195 = pneg %p84
        %p196 = pneg %p81
        %s197 = sand.u32 %s71, 1
        %s198 = sand.u32 %s71, 1
        %s199 = smul.addr %s198, 256
        %s200 = scalar_lea.vmem [#allocation2], %s199
        %p201 = pneg %p110
        %p202 = pneg %p107
        %p203 = scmp.lt.s32.totalorder %s16, 1
        %s204 = scalar_select %p203, %s16, 1
        %s205 = smul.addr %s204, 8
        %s206 = scalar_lea.vmem %s3, %s205
        %p207 = pneg %p136
        %p208 = pneg %p133
        %p209 = scmp.lt.s32.totalorder %s16, 1
        %s210 = scalar_select %p209, %s16, 1
        %s211 = smul.addr %s210, 8
        %s212 = scalar_lea.vmem %s4, %s211
        %s213 = smul.u32 64, %s16
        %s214 = ssub.s32 100, %s213
        %p215 = scmp.lt.s32.totalorder %s214, 64
        %s216 = scalar_select %p215, %s214, 64
        %s217 = smul.u32 4, %s216
        %p218 = scmp.lt.s32.totalorder %s213, 99
        %s219 = scalar_select %p218, %s213, 99
        %s220 = smul.addr %s219, 4
        %s221 = scalar_lea.vmem %s0, %s220
        %s222 = smul.u32 64, %s16
        %s223 = ssub.s32 100, %s222
        %p224 = scmp.lt.s32.totalorder %s223, 64
        %s225 = scalar_select %p224, %s223, 64
        %s226 = smul.u32 4, %s225
        %s227 = smul.u32 64, %s16
        %s228 = ssub.s32 100, %s227
        %p229 = scmp.lt.s32.totalorder %s228, 64
        %s230 = scalar_select %p229, %s228, 64
        %s231 = smul.u32 4, %s230
        %p232 = scmp.lt.s32.totalorder %s16, 1
        %s233 = scalar_select %p232, %s16, 1
        %s234 = smul.addr %s233, 8
        %s235 = scalar_lea.vmem %s3, %s234
        %p236 = scmp.lt.s32.totalorder %s16, 1
        %s237 = scalar_select %p236, %s16, 1
        %s238 = smul.addr %s237, 8
        %s239 = scalar_lea.vmem %s4, %s238
        %v241 = vld [vmem:[%s221] sm:$0xf]
        %v242 = vld [vmem:[%s221 + $0x4] sm:$0xf]
        %v243 = vld [vmem:[%s221 + $0x8] sm:$0xf]
        %v244 = vld [vmem:[%s221 + $0xc] sm:$0xf]
        %v245 = vld [vmem:[%s221 + $0x10] sm:$0xf]
        %v246 = vld [vmem:[%s221 + $0x14] sm:$0xf]
        %v247 = vld [vmem:[%s221 + $0x18] sm:$0xf]
        %v248 = vld [vmem:[%s221 + $0x1c] sm:$0xf]
        %v249 = vld [vmem:[%s221 + $0x20] sm:$0xf]
        %v250 = vld [vmem:[%s221 + $0x24] sm:$0xf]
        %v251 = vld [vmem:[%s221 + $0x28] sm:$0xf]
        %v252 = vld [vmem:[%s221 + $0x2c] sm:$0xf]
        %v253 = vld [vmem:[%s221 + $0x30] sm:$0xf]
        %v254 = vld [vmem:[%s221 + $0x34] sm:$0xf]
        %v255 = vld [vmem:[%s221 + $0x38] sm:$0xf]
        %v256 = vld [vmem:[%s221 + $0x3c] sm:$0xf]
        %v257 = vld [vmem:[%s221 + $0x40] sm:$0xf]
        %v258 = vld [vmem:[%s221 + $0x44] sm:$0xf]
        %v259 = vld [vmem:[%s221 + $0x48] sm:$0xf]
        %v260 = vld [vmem:[%s221 + $0x4c] sm:$0xf]
        %v261 = vld [vmem:[%s221 + $0x50] sm:$0xf]
        %v262 = vld [vmem:[%s221 + $0x54] sm:$0xf]
        %v263 = vld [vmem:[%s221 + $0x58] sm:$0xf]
        %v264 = vld [vmem:[%s221 + $0x5c] sm:$0xf]
        %v265 = vld [vmem:[%s221 + $0x60] sm:$0xf]
        %v266 = vld [vmem:[%s221 + $0x64] sm:$0xf]
        %v267 = vld [vmem:[%s221 + $0x68] sm:$0xf]
        %v268 = vld [vmem:[%s221 + $0x6c] sm:$0xf]
        %v269 = vld [vmem:[%s221 + $0x70] sm:$0xf]
        %v270 = vld [vmem:[%s221 + $0x74] sm:$0xf]
        %v271 = vld [vmem:[%s221 + $0x78] sm:$0xf]
        %v272 = vld [vmem:[%s221 + $0x7c] sm:$0xf]
        %v273 = vld [vmem:[%s221 + $0x80] sm:$0xf]
        %v274 = vld [vmem:[%s221 + $0x84] sm:$0xf]
        %v275 = vld [vmem:[%s221 + $0x88] sm:$0xf]
        %v276 = vld [vmem:[%s221 + $0x8c] sm:$0xf]
        %v277 = vld [vmem:[%s221 + $0x90] sm:$0xf]
        %v278 = vld [vmem:[%s221 + $0x94] sm:$0xf]
        %v279 = vld [vmem:[%s221 + $0x98] sm:$0xf]
        %v280 = vld [vmem:[%s221 + $0x9c] sm:$0xf]
        %v281 = vld [vmem:[%s221 + $0xa0] sm:$0xf]
        %v282 = vld [vmem:[%s221 + $0xa4] sm:$0xf]
        %v283 = vld [vmem:[%s221 + $0xa8] sm:$0xf]
        %v284 = vld [vmem:[%s221 + $0xac] sm:$0xf]
        %v285 = vld [vmem:[%s221 + $0xb0] sm:$0xf]
        %v286 = vld [vmem:[%s221 + $0xb4] sm:$0xf]
        %v287 = vld [vmem:[%s221 + $0xb8] sm:$0xf]
        %v288 = vld [vmem:[%s221 + $0xbc] sm:$0xf]
        %v289 = vld [vmem:[%s221 + $0xc0] sm:$0xf]
        %v290 = vld [vmem:[%s221 + $0xc4] sm:$0xf]
        %v291 = vld [vmem:[%s221 + $0xc8] sm:$0xf]
        %v292 = vld [vmem:[%s221 + $0xcc] sm:$0xf]
        %v293 = vld [vmem:[%s221 + $0xd0] sm:$0xf]
        %v294 = vld [vmem:[%s221 + $0xd4] sm:$0xf]
        %v295 = vld [vmem:[%s221 + $0xd8] sm:$0xf]
        %v296 = vld [vmem:[%s221 + $0xdc] sm:$0xf]
        %v297 = vld [vmem:[%s221 + $0xe0] sm:$0xf]
        %v298 = vld [vmem:[%s221 + $0xe4] sm:$0xf]
        %v299 = vld [vmem:[%s221 + $0xe8] sm:$0xf]
        %v300 = vld [vmem:[%s221 + $0xec] sm:$0xf]
        %v301 = vld [vmem:[%s221 + $0xf0] sm:$0xf]
        %v302 = vld [vmem:[%s221 + $0xf4] sm:$0xf]
        %v303 = vld [vmem:[%s221 + $0xf8] sm:$0xf]
        %v304 = vld [vmem:[%s221 + $0xfc] sm:$0xf]
        %v305 = vld [vmem:[%s1] sm:$0xf]
        %v370 = vunpack.c.l.b16 %v241
        %v371 = vunpack.c.l.b16 %v242
        %v372 = vunpack.c.l.b16 %v243
        %v373 = vunpack.c.l.b16 %v244
        %v374 = vunpack.c.l.b16 %v245
        %v375 = vunpack.c.l.b16 %v246
        %v376 = vunpack.c.l.b16 %v247
        %v377 = vunpack.c.l.b16 %v248
        %v378 = vunpack.c.l.b16 %v249
        %v379 = vunpack.c.l.b16 %v250
        %v380 = vunpack.c.l.b16 %v251
        %v381 = vunpack.c.l.b16 %v252
        %v382 = vunpack.c.l.b16 %v253
        %v383 = vunpack.c.l.b16 %v254
        %v384 = vunpack.c.l.b16 %v255
        %v385 = vunpack.c.l.b16 %v256
        %v386 = vunpack.c.l.b16 %v257
        %v387 = vunpack.c.l.b16 %v258
        %v388 = vunpack.c.l.b16 %v259
        %v389 = vunpack.c.l.b16 %v260
        %v390 = vunpack.c.l.b16 %v261
        %v391 = vunpack.c.l.b16 %v262
        %v392 = vunpack.c.l.b16 %v263
        %v393 = vunpack.c.l.b16 %v264
        %v394 = vunpack.c.l.b16 %v265
        %v395 = vunpack.c.l.b16 %v266
        %v396 = vunpack.c.l.b16 %v267
        %v397 = vunpack.c.l.b16 %v268
        %v398 = vunpack.c.l.b16 %v269
        %v399 = vunpack.c.l.b16 %v270
        %v400 = vunpack.c.l.b16 %v271
        %v401 = vunpack.c.l.b16 %v272
        %v402 = vunpack.c.l.b16 %v273
        %v403 = vunpack.c.l.b16 %v274
        %v404 = vunpack.c.l.b16 %v275
        %v405 = vunpack.c.l.b16 %v276
        %v406 = vunpack.c.l.b16 %v277
        %v407 = vunpack.c.l.b16 %v278
        %v408 = vunpack.c.l.b16 %v279
        %v409 = vunpack.c.l.b16 %v280
        %v410 = vunpack.c.l.b16 %v281
        %v411 = vunpack.c.l.b16 %v282
        %v412 = vunpack.c.l.b16 %v283
        %v413 = vunpack.c.l.b16 %v284
        %v414 = vunpack.c.l.b16 %v285
        %v415 = vunpack.c.l.b16 %v286
        %v416 = vunpack.c.l.b16 %v287
        %v417 = vunpack.c.l.b16 %v288
        %v418 = vunpack.c.l.b16 %v289
        %v419 = vunpack.c.l.b16 %v290
        %v420 = vunpack.c.l.b16 %v291
        %v421 = vunpack.c.l.b16 %v292
        %v422 = vunpack.c.l.b16 %v293
        %v423 = vunpack.c.l.b16 %v294
        %v424 = vunpack.c.l.b16 %v295
        %v425 = vunpack.c.l.b16 %v296
        %v426 = vunpack.c.l.b16 %v297
        %v427 = vunpack.c.l.b16 %v298
        %v428 = vunpack.c.l.b16 %v299
        %v429 = vunpack.c.l.b16 %v300
        %v430 = vunpack.c.l.b16 %v301
        %v431 = vunpack.c.l.b16 %v302
        %v432 = vunpack.c.l.b16 %v303
        %v433 = vunpack.c.l.b16 %v304
        %v434 = vpack.c.b16 %v371, %v370
        %v435 = vpack.c.b16 %v373, %v372
        %v436 = vpack.c.b16 %v375, %v374
        %v437 = vpack.c.b16 %v377, %v376
        %v438 = vpack.c.b16 %v379, %v378
        %v439 = vpack.c.b16 %v381, %v380
        %v440 = vpack.c.b16 %v383, %v382
        %v441 = vpack.c.b16 %v385, %v384
        %v442 = vpack.c.b16 %v387, %v386
        %v443 = vpack.c.b16 %v389, %v388
        %v444 = vpack.c.b16 %v391, %v390
        %v445 = vpack.c.b16 %v393, %v392
        %v446 = vpack.c.b16 %v395, %v394
        %v447 = vpack.c.b16 %v397, %v396
        %v448 = vpack.c.b16 %v399, %v398
        %v449 = vpack.c.b16 %v401, %v400
        %v450 = vpack.c.b16 %v403, %v402
        %v451 = vpack.c.b16 %v405, %v404
        %v452 = vpack.c.b16 %v407, %v406
        %v453 = vpack.c.b16 %v409, %v408
        %v454 = vpack.c.b16 %v411, %v410
        %v455 = vpack.c.b16 %v413, %v412
        %v456 = vpack.c.b16 %v415, %v414
        %v457 = vpack.c.b16 %v417, %v416
        %v458 = vpack.c.b16 %v419, %v418
        %v459 = vpack.c.b16 %v421, %v420
        %v460 = vpack.c.b16 %v423, %v422
        %v461 = vpack.c.b16 %v425, %v424
        %v462 = vpack.c.b16 %v427, %v426
        %v463 = vpack.c.b16 %v429, %v428
        %v464 = vpack.c.b16 %v431, %v430
        %v465 = vpack.c.b16 %v433, %v432
        %vm466 = vcmask 64512
        %v468 = vsel %vm466, %v434, 0
        %v471 = vsel %vm466, %v435, 0
        %v474 = vsel %vm466, %v436, 0
        %v477 = vsel %vm466, %v437, 0
        %v480 = vsel %vm466, %v438, 0
        %v483 = vsel %vm466, %v439, 0
        %v486 = vsel %vm466, %v440, 0
        %v489 = vsel %vm466, %v441, 0
        %v492 = vsel %vm466, %v442, 0
        %v495 = vsel %vm466, %v443, 0
        %v498 = vsel %vm466, %v444, 0
        %v501 = vsel %vm466, %v445, 0
        %v504 = vsel %vm466, %v446, 0
        %v507 = vsel %vm466, %v447, 0
        %v510 = vsel %vm466, %v448, 0
        %v513 = vsel %vm466, %v449, 0
        %v516 = vsel %vm466, %v450, 0
        %v519 = vsel %vm466, %v451, 0
        %v522 = vsel %vm466, %v452, 0
        %v525 = vsel %vm466, %v453, 0
        %v528 = vsel %vm466, %v454, 0
        %v531 = vsel %vm466, %v455, 0
        %v534 = vsel %vm466, %v456, 0
        %v537 = vsel %vm466, %v457, 0
        %v540 = vsel %vm466, %v458, 0
        %v543 = vsel %vm466, %v459, 0
        %v546 = vsel %vm466, %v460, 0
        %v549 = vsel %vm466, %v461, 0
        %v552 = vsel %vm466, %v462, 0
        %v555 = vsel %vm466, %v463, 0
        %v558 = vsel %vm466, %v464, 0
        %v561 = vsel %vm466, %v465, 0
        %vm563 = vcmask 1043456
        %v565 = vsel %vm563, %v305, 0
        %567 = vmatpush.bf16.msra.mxu0 0
        %568 = vmatpush.bf16.msra.mxu0 0
        %569 = vmatpush.bf16.msra.mxu0 0
        %570 = vmatpush.bf16.msra.mxu0 0
        %571 = vmatpush.bf16.msra.mxu0 0
        %572 = vmatpush.bf16.msra.mxu0 0
        %573 = vmatpush.bf16.msra.mxu0 0
        %574 = vmatpush.bf16.msra.mxu0 %v565
        %575 = vmatmul.bf16.gmra.mxu0 %v468
        %v576 = vpop.f32.mrf.mxu0
        %v577 = vadd.f32 0.0, %v576
        %v578 = vpop.f32.mrf.mxu0
        %v579 = vadd.f32 0.0, %v578
        %580 = vmatmul.bf16.gmra.mxu0 %v471
        %v581 = vpop.f32.mrf.mxu0
        %v582 = vadd.f32 0.0, %v581
        %v583 = vpop.f32.mrf.mxu0
        %v584 = vadd.f32 0.0, %v583
        %585 = vmatmul.bf16.gmra.mxu0 %v474
        %v586 = vpop.f32.mrf.mxu0
        %v587 = vadd.f32 0.0, %v586
        %v588 = vpop.f32.mrf.mxu0
        %v589 = vadd.f32 0.0, %v588
        %590 = vmatmul.bf16.gmra.mxu0 %v477
        %v591 = vpop.f32.mrf.mxu0
        %v592 = vadd.f32 0.0, %v591
        %v593 = vpop.f32.mrf.mxu0
        %v594 = vadd.f32 0.0, %v593
        %595 = vmatmul.bf16.gmra.mxu0 %v480
        %v596 = vpop.f32.mrf.mxu0
        %v597 = vadd.f32 0.0, %v596
        %v598 = vpop.f32.mrf.mxu0
        %v599 = vadd.f32 0.0, %v598
        %600 = vmatmul.bf16.gmra.mxu0 %v483
        %v601 = vpop.f32.mrf.mxu0
        %v602 = vadd.f32 0.0, %v601
        %v603 = vpop.f32.mrf.mxu0
        %v604 = vadd.f32 0.0, %v603
        %605 = vmatmul.bf16.gmra.mxu0 %v486
        %v606 = vpop.f32.mrf.mxu0
        %v607 = vadd.f32 0.0, %v606
        %v608 = vpop.f32.mrf.mxu0
        %v609 = vadd.f32 0.0, %v608
        %610 = vmatmul.bf16.gmra.mxu0 %v489
        %v611 = vpop.f32.mrf.mxu0
        %v612 = vadd.f32 0.0, %v611
        %v613 = vpop.f32.mrf.mxu0
        %v614 = vadd.f32 0.0, %v613
        %615 = vmatmul.bf16.gmra.mxu0 %v492
        %v616 = vpop.f32.mrf.mxu0
        %v617 = vadd.f32 0.0, %v616
        %v618 = vpop.f32.mrf.mxu0
        %v619 = vadd.f32 0.0, %v618
        %620 = vmatmul.bf16.gmra.mxu0 %v495
        %v621 = vpop.f32.mrf.mxu0
        %v622 = vadd.f32 0.0, %v621
        %v623 = vpop.f32.mrf.mxu0
        %v624 = vadd.f32 0.0, %v623
        %625 = vmatmul.bf16.gmra.mxu0 %v498
        %v626 = vpop.f32.mrf.mxu0
        %v627 = vadd.f32 0.0, %v626
        %v628 = vpop.f32.mrf.mxu0
        %v629 = vadd.f32 0.0, %v628
        %630 = vmatmul.bf16.gmra.mxu0 %v501
        %v631 = vpop.f32.mrf.mxu0
        %v632 = vadd.f32 0.0, %v631
        %v633 = vpop.f32.mrf.mxu0
        %v634 = vadd.f32 0.0, %v633
        %635 = vmatmul.bf16.gmra.mxu0 %v504
        %v636 = vpop.f32.mrf.mxu0
        %v637 = vadd.f32 0.0, %v636
        %v638 = vpop.f32.mrf.mxu0
        %v639 = vadd.f32 0.0, %v638
        %640 = vmatmul.bf16.gmra.mxu0 %v507
        %v641 = vpop.f32.mrf.mxu0
        %v642 = vadd.f32 0.0, %v641
        %v643 = vpop.f32.mrf.mxu0
        %v644 = vadd.f32 0.0, %v643
        %645 = vmatmul.bf16.gmra.mxu0 %v510
        %v646 = vpop.f32.mrf.mxu0
        %v647 = vadd.f32 0.0, %v646
        %v648 = vpop.f32.mrf.mxu0
        %v649 = vadd.f32 0.0, %v648
        %650 = vmatmul.bf16.gmra.mxu0 %v513
        %v651 = vpop.f32.mrf.mxu0
        %v652 = vadd.f32 0.0, %v651
        %v653 = vpop.f32.mrf.mxu0
        %v654 = vadd.f32 0.0, %v653
        %655 = vmatmul.bf16.gmra.mxu0 %v516
        %v656 = vpop.f32.mrf.mxu0
        %v657 = vadd.f32 0.0, %v656
        %v658 = vpop.f32.mrf.mxu0
        %v659 = vadd.f32 0.0, %v658
        %660 = vmatmul.bf16.gmra.mxu0 %v519
        %v661 = vpop.f32.mrf.mxu0
        %v662 = vadd.f32 0.0, %v661
        %v663 = vpop.f32.mrf.mxu0
        %v664 = vadd.f32 0.0, %v663
        %665 = vmatmul.bf16.gmra.mxu0 %v522
        %v666 = vpop.f32.mrf.mxu0
        %v667 = vadd.f32 0.0, %v666
        %v668 = vpop.f32.mrf.mxu0
        %v669 = vadd.f32 0.0, %v668
        %670 = vmatmul.bf16.gmra.mxu0 %v525
        %v671 = vpop.f32.mrf.mxu0
        %v672 = vadd.f32 0.0, %v671
        %v673 = vpop.f32.mrf.mxu0
        %v674 = vadd.f32 0.0, %v673
        %675 = vmatmul.bf16.gmra.mxu0 %v528
        %v676 = vpop.f32.mrf.mxu0
        %v677 = vadd.f32 0.0, %v676
        %v678 = vpop.f32.mrf.mxu0
        %v679 = vadd.f32 0.0, %v678
        %680 = vmatmul.bf16.gmra.mxu0 %v531
        %v681 = vpop.f32.mrf.mxu0
        %v682 = vadd.f32 0.0, %v681
        %v683 = vpop.f32.mrf.mxu0
        %v684 = vadd.f32 0.0, %v683
        %685 = vmatmul.bf16.gmra.mxu0 %v534
        %v686 = vpop.f32.mrf.mxu0
        %v687 = vadd.f32 0.0, %v686
        %v688 = vpop.f32.mrf.mxu0
        %v689 = vadd.f32 0.0, %v688
        %690 = vmatmul.bf16.gmra.mxu0 %v537
        %v691 = vpop.f32.mrf.mxu0
        %v692 = vadd.f32 0.0, %v691
        %v693 = vpop.f32.mrf.mxu0
        %v694 = vadd.f32 0.0, %v693
        %695 = vmatmul.bf16.gmra.mxu0 %v540
        %v696 = vpop.f32.mrf.mxu0
        %v697 = vadd.f32 0.0, %v696
        %v698 = vpop.f32.mrf.mxu0
        %v699 = vadd.f32 0.0, %v698
        %700 = vmatmul.bf16.gmra.mxu0 %v543
        %v701 = vpop.f32.mrf.mxu0
        %v702 = vadd.f32 0.0, %v701
        %v703 = vpop.f32.mrf.mxu0
        %v704 = vadd.f32 0.0, %v703
        %705 = vmatmul.bf16.gmra.mxu0 %v546
        %v706 = vpop.f32.mrf.mxu0
        %v707 = vadd.f32 0.0, %v706
        %v708 = vpop.f32.mrf.mxu0
        %v709 = vadd.f32 0.0, %v708
        %710 = vmatmul.bf16.gmra.mxu0 %v549
        %v711 = vpop.f32.mrf.mxu0
        %v712 = vadd.f32 0.0, %v711
        %v713 = vpop.f32.mrf.mxu0
        %v714 = vadd.f32 0.0, %v713
        %715 = vmatmul.bf16.gmra.mxu0 %v552
        %v716 = vpop.f32.mrf.mxu0
        %v717 = vadd.f32 0.0, %v716
        %v718 = vpop.f32.mrf.mxu0
        %v719 = vadd.f32 0.0, %v718
        %720 = vmatmul.bf16.gmra.mxu0 %v555
        %v721 = vpop.f32.mrf.mxu0
        %v722 = vadd.f32 0.0, %v721
        %v723 = vpop.f32.mrf.mxu0
        %v724 = vadd.f32 0.0, %v723
        %725 = vmatmul.bf16.gmra.mxu0 %v558
        %v726 = vpop.f32.mrf.mxu0
        %v727 = vadd.f32 0.0, %v726
        %v728 = vpop.f32.mrf.mxu0
        %v729 = vadd.f32 0.0, %v728
        %730 = vmatmul.bf16.gmra.mxu0 %v561
        %v731 = vpop.f32.mrf.mxu0
        %v732 = vadd.f32 0.0, %v731
        %v733 = vpop.f32.mrf.mxu0
        %v734 = vadd.f32 0.0, %v733
        %735 = vdwg.mxu0
        %v736 = vlaneseq
        %v737 = vshrl.u32 %v736, 7
        %v738 = vadd.s32 %v737, 8
        %v739 = vadd.s32 %v737, 16
        %v740 = vadd.s32 %v737, 24
        %v741 = vadd.s32 %v737, 32
        %v742 = vadd.s32 %v737, 40
        %v743 = vadd.s32 %v737, 48
        %v744 = vadd.s32 %v737, 56
        %v745 = vadd.s32 %v737, 64
        %v746 = vadd.s32 %v737, 72
        %v747 = vadd.s32 %v737, 80
        %v748 = vadd.s32 %v737, 88
        %v749 = vadd.s32 %v737, 96
        %v750 = vadd.s32 %v737, 104
        %v751 = vadd.s32 %v737, 112
        %v752 = vadd.s32 %v737, 120
        %v753 = vadd.s32 %v737, 128
        %v754 = vadd.s32 %v737, 136
        %v755 = vadd.s32 %v737, 144
        %v756 = vadd.s32 %v737, 152
        %v757 = vadd.s32 %v737, 160
        %v758 = vadd.s32 %v737, 168
        %v759 = vadd.s32 %v737, 176
        %v760 = vadd.s32 %v737, 184
        %v761 = vadd.s32 %v737, 192
        %v762 = vadd.s32 %v737, 200
        %v763 = vadd.s32 %v737, 208
        %v764 = vadd.s32 %v737, 216
        %v765 = vadd.s32 %v737, 224
        %v766 = vadd.s32 %v737, 232
        %v767 = vadd.s32 %v737, 240
        %v768 = vadd.s32 %v737, 248
        %v769 = vadd.s32 %v737, 256
        %v770 = vadd.s32 %v737, 264
        %v771 = vadd.s32 %v737, 272
        %v772 = vadd.s32 %v737, 280
        %v773 = vadd.s32 %v737, 288
        %v774 = vadd.s32 %v737, 296
        %v775 = vadd.s32 %v737, 304
        %v776 = vadd.s32 %v737, 312
        %v777 = vadd.s32 %v737, 320
        %v778 = vadd.s32 %v737, 328
        %v779 = vadd.s32 %v737, 336
        %v780 = vadd.s32 %v737, 344
        %v781 = vadd.s32 %v737, 352
        %v782 = vadd.s32 %v737, 360
        %v783 = vadd.s32 %v737, 368
        %v784 = vadd.s32 %v737, 376
        %v785 = vadd.s32 %v737, 384
        %v786 = vadd.s32 %v737, 392
        %v787 = vadd.s32 %v737, 400
        %v788 = vadd.s32 %v737, 408
        %v789 = vadd.s32 %v737, 416
        %v790 = vadd.s32 %v737, 424
        %v791 = vadd.s32 %v737, 432
        %v792 = vadd.s32 %v737, 440
        %v793 = vadd.s32 %v737, 448
        %v794 = vadd.s32 %v737, 456
        %v795 = vadd.s32 %v737, 464
        %v796 = vadd.s32 %v737, 472
        %v797 = vadd.s32 %v737, 480
        %v798 = vadd.s32 %v737, 488
        %v799 = vadd.s32 %v737, 496
        %v800 = vadd.s32 %v737, 504
        %s801 = smul.u32 %s16, 512
        %v802 = vstv %s801
        %v803 = vadd.s32 %v737, %v802
        %v804 = vadd.s32 %v738, %v802
        %v805 = vadd.s32 %v739, %v802
        %v806 = vadd.s32 %v740, %v802
        %v807 = vadd.s32 %v741, %v802
        %v808 = vadd.s32 %v742, %v802
        %v809 = vadd.s32 %v743, %v802
        %v810 = vadd.s32 %v744, %v802
        %v811 = vadd.s32 %v745, %v802
        %v812 = vadd.s32 %v746, %v802
        %v813 = vadd.s32 %v747, %v802
        %v814 = vadd.s32 %v748, %v802
        %v815 = vadd.s32 %v749, %v802
        %v816 = vadd.s32 %v750, %v802
        %v817 = vadd.s32 %v751, %v802
        %v818 = vadd.s32 %v752, %v802
        %v819 = vadd.s32 %v753, %v802
        %v820 = vadd.s32 %v754, %v802
        %v821 = vadd.s32 %v755, %v802
        %v822 = vadd.s32 %v756, %v802
        %v823 = vadd.s32 %v757, %v802
        %v824 = vadd.s32 %v758, %v802
        %v825 = vadd.s32 %v759, %v802
        %v826 = vadd.s32 %v760, %v802
        %v827 = vadd.s32 %v761, %v802
        %v828 = vadd.s32 %v762, %v802
        %v829 = vadd.s32 %v763, %v802
        %v830 = vadd.s32 %v764, %v802
        %v831 = vadd.s32 %v765, %v802
        %v832 = vadd.s32 %v766, %v802
        %v833 = vadd.s32 %v767, %v802
        %v834 = vadd.s32 %v768, %v802
        %v835 = vadd.s32 %v769, %v802
        %v836 = vadd.s32 %v770, %v802
        %v837 = vadd.s32 %v771, %v802
        %v838 = vadd.s32 %v772, %v802
        %v839 = vadd.s32 %v773, %v802
        %v840 = vadd.s32 %v774, %v802
        %v841 = vadd.s32 %v775, %v802
        %v842 = vadd.s32 %v776, %v802
        %v843 = vadd.s32 %v777, %v802
        %v844 = vadd.s32 %v778, %v802
        %v845 = vadd.s32 %v779, %v802
        %v846 = vadd.s32 %v780, %v802
        %v847 = vadd.s32 %v781, %v802
        %v848 = vadd.s32 %v782, %v802
        %v849 = vadd.s32 %v783, %v802
        %v850 = vadd.s32 %v784, %v802
        %v851 = vadd.s32 %v785, %v802
        %v852 = vadd.s32 %v786, %v802
        %v853 = vadd.s32 %v787, %v802
        %v854 = vadd.s32 %v788, %v802
        %v855 = vadd.s32 %v789, %v802
        %v856 = vadd.s32 %v790, %v802
        %v857 = vadd.s32 %v791, %v802
        %v858 = vadd.s32 %v792, %v802
        %v859 = vadd.s32 %v793, %v802
        %v860 = vadd.s32 %v794, %v802
        %v861 = vadd.s32 %v795, %v802
        %v862 = vadd.s32 %v796, %v802
        %v863 = vadd.s32 %v797, %v802
        %v864 = vadd.s32 %v798, %v802
        %v865 = vadd.s32 %v799, %v802
        %v866 = vadd.s32 %v800, %v802
        %vm867 = vcmp.lt.s32.totalorder %v803, 800
        %vm868 = vcmp.lt.s32.totalorder %v804, 800
        %vm869 = vcmp.lt.s32.totalorder %v805, 800
        %vm870 = vcmp.lt.s32.totalorder %v806, 800
        %vm871 = vcmp.lt.s32.totalorder %v807, 800
        %vm872 = vcmp.lt.s32.totalorder %v808, 800
        %vm873 = vcmp.lt.s32.totalorder %v809, 800
        %vm874 = vcmp.lt.s32.totalorder %v810, 800
        %vm875 = vcmp.lt.s32.totalorder %v811, 800
        %vm876 = vcmp.lt.s32.totalorder %v812, 800
        %vm877 = vcmp.lt.s32.totalorder %v813, 800
        %vm878 = vcmp.lt.s32.totalorder %v814, 800
        %vm879 = vcmp.lt.s32.totalorder %v815, 800
        %vm880 = vcmp.lt.s32.totalorder %v816, 800
        %vm881 = vcmp.lt.s32.totalorder %v817, 800
        %vm882 = vcmp.lt.s32.totalorder %v818, 800
        %vm883 = vcmp.lt.s32.totalorder %v819, 800
        %vm884 = vcmp.lt.s32.totalorder %v820, 800
        %vm885 = vcmp.lt.s32.totalorder %v821, 800
        %vm886 = vcmp.lt.s32.totalorder %v822, 800
        %vm887 = vcmp.lt.s32.totalorder %v823, 800
        %vm888 = vcmp.lt.s32.totalorder %v824, 800
        %vm889 = vcmp.lt.s32.totalorder %v825, 800
        %vm890 = vcmp.lt.s32.totalorder %v826, 800
        %vm891 = vcmp.lt.s32.totalorder %v827, 800
        %vm892 = vcmp.lt.s32.totalorder %v828, 800
        %vm893 = vcmp.lt.s32.totalorder %v829, 800
        %vm894 = vcmp.lt.s32.totalorder %v830, 800
        %vm895 = vcmp.lt.s32.totalorder %v831, 800
        %vm896 = vcmp.lt.s32.totalorder %v832, 800
        %vm897 = vcmp.lt.s32.totalorder %v833, 800
        %vm898 = vcmp.lt.s32.totalorder %v834, 800
        %vm899 = vcmp.lt.s32.totalorder %v835, 800
        %vm900 = vcmp.lt.s32.totalorder %v836, 800
        %vm901 = vcmp.lt.s32.totalorder %v837, 800
        %vm902 = vcmp.lt.s32.totalorder %v838, 800
        %vm903 = vcmp.lt.s32.totalorder %v839, 800
        %vm904 = vcmp.lt.s32.totalorder %v840, 800
        %vm905 = vcmp.lt.s32.totalorder %v841, 800
        %vm906 = vcmp.lt.s32.totalorder %v842, 800
        %vm907 = vcmp.lt.s32.totalorder %v843, 800
        %vm908 = vcmp.lt.s32.totalorder %v844, 800
        %vm909 = vcmp.lt.s32.totalorder %v845, 800
        %vm910 = vcmp.lt.s32.totalorder %v846, 800
        %vm911 = vcmp.lt.s32.totalorder %v847, 800
        %vm912 = vcmp.lt.s32.totalorder %v848, 800
        %vm913 = vcmp.lt.s32.totalorder %v849, 800
        %vm914 = vcmp.lt.s32.totalorder %v850, 800
        %vm915 = vcmp.lt.s32.totalorder %v851, 800
        %vm916 = vcmp.lt.s32.totalorder %v852, 800
        %vm917 = vcmp.lt.s32.totalorder %v853, 800
        %vm918 = vcmp.lt.s32.totalorder %v854, 800
        %vm919 = vcmp.lt.s32.totalorder %v855, 800
        %vm920 = vcmp.lt.s32.totalorder %v856, 800
        %vm921 = vcmp.lt.s32.totalorder %v857, 800
        %vm922 = vcmp.lt.s32.totalorder %v858, 800
        %vm923 = vcmp.lt.s32.totalorder %v859, 800
        %vm924 = vcmp.lt.s32.totalorder %v860, 800
        %vm925 = vcmp.lt.s32.totalorder %v861, 800
        %vm926 = vcmp.lt.s32.totalorder %v862, 800
        %vm927 = vcmp.lt.s32.totalorder %v863, 800
        %vm928 = vcmp.lt.s32.totalorder %v864, 800
        %vm929 = vcmp.lt.s32.totalorder %v865, 800
        %vm930 = vcmp.lt.s32.totalorder %v866, 800
        %v931 = vsel %vm867, %v577, 0.0
        %v932 = vsel %vm868, %v579, 0.0
        %v933 = vsel %vm869, %v582, 0.0
        %v934 = vsel %vm870, %v584, 0.0
        %v935 = vsel %vm871, %v587, 0.0
        %v936 = vsel %vm872, %v589, 0.0
        %v937 = vsel %vm873, %v592, 0.0
        %v938 = vsel %vm874, %v594, 0.0
        %v939 = vsel %vm875, %v597, 0.0
        %v940 = vsel %vm876, %v599, 0.0
        %v941 = vsel %vm877, %v602, 0.0
        %v942 = vsel %vm878, %v604, 0.0
        %v943 = vsel %vm879, %v607, 0.0
        %v944 = vsel %vm880, %v609, 0.0
        %v945 = vsel %vm881, %v612, 0.0
        %v946 = vsel %vm882, %v614, 0.0
        %v947 = vsel %vm883, %v617, 0.0
        %v948 = vsel %vm884, %v619, 0.0
        %v949 = vsel %vm885, %v622, 0.0
        %v950 = vsel %vm886, %v624, 0.0
        %v951 = vsel %vm887, %v627, 0.0
        %v952 = vsel %vm888, %v629, 0.0
        %v953 = vsel %vm889, %v632, 0.0
        %v954 = vsel %vm890, %v634, 0.0
        %v955 = vsel %vm891, %v637, 0.0
        %v956 = vsel %vm892, %v639, 0.0
        %v957 = vsel %vm893, %v642, 0.0
        %v958 = vsel %vm894, %v644, 0.0
        %v959 = vsel %vm895, %v647, 0.0
        %v960 = vsel %vm896, %v649, 0.0
        %v961 = vsel %vm897, %v652, 0.0
        %v962 = vsel %vm898, %v654, 0.0
        %v963 = vsel %vm899, %v657, 0.0
        %v964 = vsel %vm900, %v659, 0.0
        %v965 = vsel %vm901, %v662, 0.0
        %v966 = vsel %vm902, %v664, 0.0
        %v967 = vsel %vm903, %v667, 0.0
        %v968 = vsel %vm904, %v669, 0.0
        %v969 = vsel %vm905, %v672, 0.0
        %v970 = vsel %vm906, %v674, 0.0
        %v971 = vsel %vm907, %v677, 0.0
        %v972 = vsel %vm908, %v679, 0.0
        %v973 = vsel %vm909, %v682, 0.0
        %v974 = vsel %vm910, %v684, 0.0
        %v975 = vsel %vm911, %v687, 0.0
        %v976 = vsel %vm912, %v689, 0.0
        %v977 = vsel %vm913, %v692, 0.0
        %v978 = vsel %vm914, %v694, 0.0
        %v979 = vsel %vm915, %v697, 0.0
        %v980 = vsel %vm916, %v699, 0.0
        %v981 = vsel %vm917, %v702, 0.0
        %v982 = vsel %vm918, %v704, 0.0
        %v983 = vsel %vm919, %v707, 0.0
        %v984 = vsel %vm920, %v709, 0.0
        %v985 = vsel %vm921, %v712, 0.0
        %v986 = vsel %vm922, %v714, 0.0
        %v987 = vsel %vm923, %v717, 0.0
        %v988 = vsel %vm924, %v719, 0.0
        %v989 = vsel %vm925, %v722, 0.0
        %v990 = vsel %vm926, %v724, 0.0
        %v991 = vsel %vm927, %v727, 0.0
        %v992 = vsel %vm928, %v729, 0.0
        %v993 = vsel %vm929, %v732, 0.0
        %v994 = vsel %vm930, %v734, 0.0
        %v995 = vpack.c.bf16 %v931, %v931
        %v996 = vpack.c.bf16 %v932, %v932
        %v997 = vpack.c.bf16 %v933, %v933
        %v998 = vpack.c.bf16 %v934, %v934
        %v999 = vpack.c.bf16 %v935, %v935
        %v1000 = vpack.c.bf16 %v936, %v936
        %v1001 = vpack.c.bf16 %v937, %v937
        %v1002 = vpack.c.bf16 %v938, %v938
        %v1003 = vpack.c.bf16 %v939, %v939
        %v1004 = vpack.c.bf16 %v940, %v940
        %v1005 = vpack.c.bf16 %v941, %v941
        %v1006 = vpack.c.bf16 %v942, %v942
        %v1007 = vpack.c.bf16 %v943, %v943
        %v1008 = vpack.c.bf16 %v944, %v944
        %v1009 = vpack.c.bf16 %v945, %v945
        %v1010 = vpack.c.bf16 %v946, %v946
        %v1011 = vpack.c.bf16 %v947, %v947
        %v1012 = vpack.c.bf16 %v948, %v948
        %v1013 = vpack.c.bf16 %v949, %v949
        %v1014 = vpack.c.bf16 %v950, %v950
        %v1015 = vpack.c.bf16 %v951, %v951
        %v1016 = vpack.c.bf16 %v952, %v952
        %v1017 = vpack.c.bf16 %v953, %v953
        %v1018 = vpack.c.bf16 %v954, %v954
        %v1019 = vpack.c.bf16 %v955, %v955
        %v1020 = vpack.c.bf16 %v956, %v956
        %v1021 = vpack.c.bf16 %v957, %v957
        %v1022 = vpack.c.bf16 %v958, %v958
        %v1023 = vpack.c.bf16 %v959, %v959
        %v1024 = vpack.c.bf16 %v960, %v960
        %v1025 = vpack.c.bf16 %v961, %v961
        %v1026 = vpack.c.bf16 %v962, %v962
        %v1027 = vpack.c.bf16 %v963, %v963
        %v1028 = vpack.c.bf16 %v964, %v964
        %v1029 = vpack.c.bf16 %v965, %v965
        %v1030 = vpack.c.bf16 %v966, %v966
        %v1031 = vpack.c.bf16 %v967, %v967
        %v1032 = vpack.c.bf16 %v968, %v968
        %v1033 = vpack.c.bf16 %v969, %v969
        %v1034 = vpack.c.bf16 %v970, %v970
        %v1035 = vpack.c.bf16 %v971, %v971
        %v1036 = vpack.c.bf16 %v972, %v972
        %v1037 = vpack.c.bf16 %v973, %v973
        %v1038 = vpack.c.bf16 %v974, %v974
        %v1039 = vpack.c.bf16 %v975, %v975
        %v1040 = vpack.c.bf16 %v976, %v976
        %v1041 = vpack.c.bf16 %v977, %v977
        %v1042 = vpack.c.bf16 %v978, %v978
        %v1043 = vpack.c.bf16 %v979, %v979
        %v1044 = vpack.c.bf16 %v980, %v980
        %v1045 = vpack.c.bf16 %v981, %v981
        %v1046 = vpack.c.bf16 %v982, %v982
        %v1047 = vpack.c.bf16 %v983, %v983
        %v1048 = vpack.c.bf16 %v984, %v984
        %v1049 = vpack.c.bf16 %v985, %v985
        %v1050 = vpack.c.bf16 %v986, %v986
        %v1051 = vpack.c.bf16 %v987, %v987
        %v1052 = vpack.c.bf16 %v988, %v988
        %v1053 = vpack.c.bf16 %v989, %v989
        %v1054 = vpack.c.bf16 %v990, %v990
        %v1055 = vpack.c.bf16 %v991, %v991
        %v1056 = vpack.c.bf16 %v992, %v992
        %v1057 = vpack.c.bf16 %v993, %v993
        %v1058 = vpack.c.bf16 %v994, %v994
        %1059 = vst [vmem:[%s200] sm:$0xf] %v995
        %1060 = vst [vmem:[%s200 + $0x4] sm:$0xf] %v996
        %1061 = vst [vmem:[%s200 + $0x8] sm:$0xf] %v997
        %1062 = vst [vmem:[%s200 + $0xc] sm:$0xf] %v998
        %1063 = vst [vmem:[%s200 + $0x10] sm:$0xf] %v999
        %1064 = vst [vmem:[%s200 + $0x14] sm:$0xf] %v1000
        %1065 = vst [vmem:[%s200 + $0x18] sm:$0xf] %v1001
        %1066 = vst [vmem:[%s200 + $0x1c] sm:$0xf] %v1002
        %1067 = vst [vmem:[%s200 + $0x20] sm:$0xf] %v1003
        %1068 = vst [vmem:[%s200 + $0x24] sm:$0xf] %v1004
        %1069 = vst [vmem:[%s200 + $0x28] sm:$0xf] %v1005
        %1070 = vst [vmem:[%s200 + $0x2c] sm:$0xf] %v1006
        %1071 = vst [vmem:[%s200 + $0x30] sm:$0xf] %v1007
        %1072 = vst [vmem:[%s200 + $0x34] sm:$0xf] %v1008
        %1073 = vst [vmem:[%s200 + $0x38] sm:$0xf] %v1009
        %1074 = vst [vmem:[%s200 + $0x3c] sm:$0xf] %v1010
        %1075 = vst [vmem:[%s200 + $0x40] sm:$0xf] %v1011
        %1076 = vst [vmem:[%s200 + $0x44] sm:$0xf] %v1012
        %1077 = vst [vmem:[%s200 + $0x48] sm:$0xf] %v1013
        %1078 = vst [vmem:[%s200 + $0x4c] sm:$0xf] %v1014
        %1079 = vst [vmem:[%s200 + $0x50] sm:$0xf] %v1015
        %1080 = vst [vmem:[%s200 + $0x54] sm:$0xf] %v1016
        %1081 = vst [vmem:[%s200 + $0x58] sm:$0xf] %v1017
        %1082 = vst [vmem:[%s200 + $0x5c] sm:$0xf] %v1018
        %1083 = vst [vmem:[%s200 + $0x60] sm:$0xf] %v1019
        %1084 = vst [vmem:[%s200 + $0x64] sm:$0xf] %v1020
        %1085 = vst [vmem:[%s200 + $0x68] sm:$0xf] %v1021
        %1086 = vst [vmem:[%s200 + $0x6c] sm:$0xf] %v1022
        %1087 = vst [vmem:[%s200 + $0x70] sm:$0xf] %v1023
        %1088 = vst [vmem:[%s200 + $0x74] sm:$0xf] %v1024
        %1089 = vst [vmem:[%s200 + $0x78] sm:$0xf] %v1025
        %1090 = vst [vmem:[%s200 + $0x7c] sm:$0xf] %v1026
        %1091 = vst [vmem:[%s200 + $0x80] sm:$0xf] %v1027
        %1092 = vst [vmem:[%s200 + $0x84] sm:$0xf] %v1028
        %1093 = vst [vmem:[%s200 + $0x88] sm:$0xf] %v1029
        %1094 = vst [vmem:[%s200 + $0x8c] sm:$0xf] %v1030
        %1095 = vst [vmem:[%s200 + $0x90] sm:$0xf] %v1031
        %1096 = vst [vmem:[%s200 + $0x94] sm:$0xf] %v1032
        %1097 = vst [vmem:[%s200 + $0x98] sm:$0xf] %v1033
        %1098 = vst [vmem:[%s200 + $0x9c] sm:$0xf] %v1034
        %1099 = vst [vmem:[%s200 + $0xa0] sm:$0xf] %v1035
        %1100 = vst [vmem:[%s200 + $0xa4] sm:$0xf] %v1036
        %1101 = vst [vmem:[%s200 + $0xa8] sm:$0xf] %v1037
        %1102 = vst [vmem:[%s200 + $0xac] sm:$0xf] %v1038
        %1103 = vst [vmem:[%s200 + $0xb0] sm:$0xf] %v1039
        %1104 = vst [vmem:[%s200 + $0xb4] sm:$0xf] %v1040
        %1105 = vst [vmem:[%s200 + $0xb8] sm:$0xf] %v1041
        %1106 = vst [vmem:[%s200 + $0xbc] sm:$0xf] %v1042
        %1107 = vst [vmem:[%s200 + $0xc0] sm:$0xf] %v1043
        %1108 = vst [vmem:[%s200 + $0xc4] sm:$0xf] %v1044
        %1109 = vst [vmem:[%s200 + $0xc8] sm:$0xf] %v1045
        %1110 = vst [vmem:[%s200 + $0xcc] sm:$0xf] %v1046
        %1111 = vst [vmem:[%s200 + $0xd0] sm:$0xf] %v1047
        %1112 = vst [vmem:[%s200 + $0xd4] sm:$0xf] %v1048
        %1113 = vst [vmem:[%s200 + $0xd8] sm:$0xf] %v1049
        %1114 = vst [vmem:[%s200 + $0xdc] sm:$0xf] %v1050
        %1115 = vst [vmem:[%s200 + $0xe0] sm:$0xf] %v1051
        %1116 = vst [vmem:[%s200 + $0xe4] sm:$0xf] %v1052
        %1117 = vst [vmem:[%s200 + $0xe8] sm:$0xf] %v1053
        %1118 = vst [vmem:[%s200 + $0xec] sm:$0xf] %v1054
        %1119 = vst [vmem:[%s200 + $0xf0] sm:$0xf] %v1055
        %1120 = vst [vmem:[%s200 + $0xf4] sm:$0xf] %v1056
        %1121 = vst [vmem:[%s200 + $0xf8] sm:$0xf] %v1057
        %1122 = vst [vmem:[%s200 + $0xfc] sm:$0xf] %v1058
        %v1123 = vadd.f32 %v931, %v932
        %v1124 = vadd.f32 %v1123, %v933
        %v1125 = vadd.f32 %v1124, %v934
        %v1126 = vadd.f32 %v1125, %v935
        %v1127 = vadd.f32 %v1126, %v936
        %v1128 = vadd.f32 %v1127, %v937
        %v1129 = vadd.f32 %v1128, %v938
        %v1130 = vadd.f32 %v1129, %v939
        %v1131 = vadd.f32 %v1130, %v940
        %v1132 = vadd.f32 %v1131, %v941
        %v1133 = vadd.f32 %v1132, %v942
        %v1134 = vadd.f32 %v1133, %v943
        %v1135 = vadd.f32 %v1134, %v944
        %v1136 = vadd.f32 %v1135, %v945
        %v1137 = vadd.f32 %v1136, %v946
        %v1138 = vadd.f32 %v1137, %v947
        %v1139 = vadd.f32 %v1138, %v948
        %v1140 = vadd.f32 %v1139, %v949
        %v1141 = vadd.f32 %v1140, %v950
        %v1142 = vadd.f32 %v1141, %v951
        %v1143 = vadd.f32 %v1142, %v952
        %v1144 = vadd.f32 %v1143, %v953
        %v1145 = vadd.f32 %v1144, %v954
        %v1146 = vadd.f32 %v1145, %v955
        %v1147 = vadd.f32 %v1146, %v956
        %v1148 = vadd.f32 %v1147, %v957
        %v1149 = vadd.f32 %v1148, %v958
        %v1150 = vadd.f32 %v1149, %v959
        %v1151 = vadd.f32 %v1150, %v960
        %v1152 = vadd.f32 %v1151, %v961
        %v1153 = vadd.f32 %v1152, %v962
        %v1154 = vadd.f32 %v1153, %v963
        %v1155 = vadd.f32 %v1154, %v964
        %v1156 = vadd.f32 %v1155, %v965
        %v1157 = vadd.f32 %v1156, %v966
        %v1158 = vadd.f32 %v1157, %v967
        %v1159 = vadd.f32 %v1158, %v968
        %v1160 = vadd.f32 %v1159, %v969
        %v1161 = vadd.f32 %v1160, %v970
        %v1162 = vadd.f32 %v1161, %v971
        %v1163 = vadd.f32 %v1162, %v972
        %v1164 = vadd.f32 %v1163, %v973
        %v1165 = vadd.f32 %v1164, %v974
        %v1166 = vadd.f32 %v1165, %v975
        %v1167 = vadd.f32 %v1166, %v976
        %v1168 = vadd.f32 %v1167, %v977
        %v1169 = vadd.f32 %v1168, %v978
        %v1170 = vadd.f32 %v1169, %v979
        %v1171 = vadd.f32 %v1170, %v980
        %v1172 = vadd.f32 %v1171, %v981
        %v1173 = vadd.f32 %v1172, %v982
        %v1174 = vadd.f32 %v1173, %v983
        %v1175 = vadd.f32 %v1174, %v984
        %v1176 = vadd.f32 %v1175, %v985
        %v1177 = vadd.f32 %v1176, %v986
        %v1178 = vadd.f32 %v1177, %v987
        %v1179 = vadd.f32 %v1178, %v988
        %v1180 = vadd.f32 %v1179, %v989
        %v1181 = vadd.f32 %v1180, %v990
        %v1182 = vadd.f32 %v1181, %v991
        %v1183 = vadd.f32 %v1182, %v992
        %v1184 = vadd.f32 %v1183, %v993
        %v1185 = vadd.f32 %v1184, %v994
        %v1186 = vrot.slane %v1185, 4
        %v1187 = vadd.f32 %v1185, %v1186
        %v1188 = vrot.slane %v1187, 2
        %v1189 = vadd.f32 %v1187, %v1188
        %v1190 = vrot.slane %v1189, 1
        %v1191 = vadd.f32 %v1189, %v1190
        %v1192 = vmul.f32 %v931, %v931
        %v1193 = vmul.f32 %v932, %v932
        %v1194 = vmul.f32 %v933, %v933
        %v1195 = vmul.f32 %v934, %v934
        %v1196 = vmul.f32 %v935, %v935
        %v1197 = vmul.f32 %v936, %v936
        %v1198 = vmul.f32 %v937, %v937
        %v1199 = vmul.f32 %v938, %v938
        %v1200 = vmul.f32 %v939, %v939
        %v1201 = vmul.f32 %v940, %v940
        %v1202 = vmul.f32 %v941, %v941
        %v1203 = vmul.f32 %v942, %v942
        %v1204 = vmul.f32 %v943, %v943
        %v1205 = vmul.f32 %v944, %v944
        %v1206 = vmul.f32 %v945, %v945
        %v1207 = vmul.f32 %v946, %v946
        %v1208 = vmul.f32 %v947, %v947
        %v1209 = vmul.f32 %v948, %v948
        %v1210 = vmul.f32 %v949, %v949
        %v1211 = vmul.f32 %v950, %v950
        %v1212 = vmul.f32 %v951, %v951
        %v1213 = vmul.f32 %v952, %v952
        %v1214 = vmul.f32 %v953, %v953
        %v1215 = vmul.f32 %v954, %v954
        %v1216 = vmul.f32 %v955, %v955
        %v1217 = vmul.f32 %v956, %v956
        %v1218 = vmul.f32 %v957, %v957
        %v1219 = vmul.f32 %v958, %v958
        %v1220 = vmul.f32 %v959, %v959
        %v1221 = vmul.f32 %v960, %v960
        %v1222 = vmul.f32 %v961, %v961
        %v1223 = vmul.f32 %v962, %v962
        %v1224 = vmul.f32 %v963, %v963
        %v1225 = vmul.f32 %v964, %v964
        %v1226 = vmul.f32 %v965, %v965
        %v1227 = vmul.f32 %v966, %v966
        %v1228 = vmul.f32 %v967, %v967
        %v1229 = vmul.f32 %v968, %v968
        %v1230 = vmul.f32 %v969, %v969
        %v1231 = vmul.f32 %v970, %v970
        %v1232 = vmul.f32 %v971, %v971
        %v1233 = vmul.f32 %v972, %v972
        %v1234 = vmul.f32 %v973, %v973
        %v1235 = vmul.f32 %v974, %v974
        %v1236 = vmul.f32 %v975, %v975
        %v1237 = vmul.f32 %v976, %v976
        %v1238 = vmul.f32 %v977, %v977
        %v1239 = vmul.f32 %v978, %v978
        %v1240 = vmul.f32 %v979, %v979
        %v1241 = vmul.f32 %v980, %v980
        %v1242 = vmul.f32 %v981, %v981
        %v1243 = vmul.f32 %v982, %v982
        %v1244 = vmul.f32 %v983, %v983
        %v1245 = vmul.f32 %v984, %v984
        %v1246 = vmul.f32 %v985, %v985
        %v1247 = vmul.f32 %v986, %v986
        %v1248 = vmul.f32 %v987, %v987
        %v1249 = vmul.f32 %v988, %v988
        %v1250 = vmul.f32 %v989, %v989
        %v1251 = vmul.f32 %v990, %v990
        %v1252 = vmul.f32 %v991, %v991
        %v1253 = vmul.f32 %v992, %v992
        %v1254 = vmul.f32 %v993, %v993
        %v1255 = vmul.f32 %v994, %v994
        %v1256 = vadd.f32 %v1192, %v1193
        %v1257 = vadd.f32 %v1256, %v1194
        %v1258 = vadd.f32 %v1257, %v1195
        %v1259 = vadd.f32 %v1258, %v1196
        %v1260 = vadd.f32 %v1259, %v1197
        %v1261 = vadd.f32 %v1260, %v1198
        %v1262 = vadd.f32 %v1261, %v1199
        %v1263 = vadd.f32 %v1262, %v1200
        %v1264 = vadd.f32 %v1263, %v1201
        %v1265 = vadd.f32 %v1264, %v1202
        %v1266 = vadd.f32 %v1265, %v1203
        %v1267 = vadd.f32 %v1266, %v1204
        %v1268 = vadd.f32 %v1267, %v1205
        %v1269 = vadd.f32 %v1268, %v1206
        %v1270 = vadd.f32 %v1269, %v1207
        %v1271 = vadd.f32 %v1270, %v1208
        %v1272 = vadd.f32 %v1271, %v1209
        %v1273 = vadd.f32 %v1272, %v1210
        %v1274 = vadd.f32 %v1273, %v1211
        %v1275 = vadd.f32 %v1274, %v1212
        %v1276 = vadd.f32 %v1275, %v1213
        %v1277 = vadd.f32 %v1276, %v1214
        %v1278 = vadd.f32 %v1277, %v1215
        %v1279 = vadd.f32 %v1278, %v1216
        %v1280 = vadd.f32 %v1279, %v1217
        %v1281 = vadd.f32 %v1280, %v1218
        %v1282 = vadd.f32 %v1281, %v1219
        %v1283 = vadd.f32 %v1282, %v1220
        %v1284 = vadd.f32 %v1283, %v1221
        %v1285 = vadd.f32 %v1284, %v1222
        %v1286 = vadd.f32 %v1285, %v1223
        %v1287 = vadd.f32 %v1286, %v1224
        %v1288 = vadd.f32 %v1287, %v1225
        %v1289 = vadd.f32 %v1288, %v1226
        %v1290 = vadd.f32 %v1289, %v1227
        %v1291 = vadd.f32 %v1290, %v1228
        %v1292 = vadd.f32 %v1291, %v1229
        %v1293 = vadd.f32 %v1292, %v1230
        %v1294 = vadd.f32 %v1293, %v1231
        %v1295 = vadd.f32 %v1294, %v1232
        %v1296 = vadd.f32 %v1295, %v1233
        %v1297 = vadd.f32 %v1296, %v1234
        %v1298 = vadd.f32 %v1297, %v1235
        %v1299 = vadd.f32 %v1298, %v1236
        %v1300 = vadd.f32 %v1299, %v1237
        %v1301 = vadd.f32 %v1300, %v1238
        %v1302 = vadd.f32 %v1301, %v1239
        %v1303 = vadd.f32 %v1302, %v1240
        %v1304 = vadd.f32 %v1303, %v1241
        %v1305 = vadd.f32 %v1304, %v1242
        %v1306 = vadd.f32 %v1305, %v1243
        %v1307 = vadd.f32 %v1306, %v1244
        %v1308 = vadd.f32 %v1307, %v1245
        %v1309 = vadd.f32 %v1308, %v1246
        %v1310 = vadd.f32 %v1309, %v1247
        %v1311 = vadd.f32 %v1310, %v1248
        %v1312 = vadd.f32 %v1311, %v1249
        %v1313 = vadd.f32 %v1312, %v1250
        %v1314 = vadd.f32 %v1313, %v1251
        %v1315 = vadd.f32 %v1314, %v1252
        %v1316 = vadd.f32 %v1315, %v1253
        %v1317 = vadd.f32 %v1316, %v1254
        %v1318 = vadd.f32 %v1317, %v1255
        %v1319 = vrot.slane %v1318, 4
        %v1320 = vadd.f32 %v1318, %v1319
        %v1321 = vrot.slane %v1320, 2
        %v1322 = vadd.f32 %v1320, %v1321
        %v1323 = vrot.slane %v1322, 1
        %v1324 = vadd.f32 %v1322, %v1323
        %1325 = vst [vmem:[%s235] sm:$0xff] %v1191
        %1326 = vst [vmem:[%s239] sm:$0xff] %v1324
        %s1327 = sand.u32 %s71, 1
        %s1328 = sand.u32 %s71, 1
        %s1329 = smul.addr %s1328, 256
        %s1330 = scalar_lea.vmem [#allocation2], %s1329
        %p1331 = scmp.lt.s32.totalorder %s16, 1
        %s1332 = scalar_select %p1331, %s16, 1
        %s1333 = smul.addr %s1332, 8
        %s1334 = scalar_lea.vmem %s3, %s1333
        %p1335 = scmp.lt.s32.totalorder %s16, 1
        %s1336 = scalar_select %p1335, %s16, 1
        %s1337 = smul.addr %s1336, 8
        %s1338 = scalar_lea.vmem %s4, %s1337
        // Predicated region
        $region29: #{darts_stacked_cells_forward.28} parent=27 // pred_check
          %p1339 = pneg %p81
        $region30: #{darts_stacked_cells_forward.28} parent=27 // pred_check_branch
          %1341 = sbr.rel (%p1339) target = $region32
        $region31: #{darts_stacked_cells_forward.28} parent=27 // pred_region
          %s1342 = smul.u32 64, %s16
          %s1343 = ssub.s32 100, %s1342
          %p1344 = scmp.lt.s32.totalorder %s1343, 64
          %s1345 = scalar_select %p1344, %s1343, 64
          %s1346 = smul.u32 4, %s1345
          %p1347 = scmp.ne.s32.totalorder 0, %s1346
          %s1348 = smul.addr %s1342, 4
          %s1349 = scalar_lea.vmem %s2, %s1348
          // Predicated region
          $region33: #{darts_stacked_cells_forward.28} parent=31 // pred_check
            %p1350 = pneg %p1347
          $region34: #{darts_stacked_cells_forward.28} parent=31 // pred_check_branch
            %1352 = sbr.rel (%p1350) target = $region36
          $region35: #{darts_stacked_cells_forward.28} parent=31 // pred_region
            // Predicated region
            $region37: #{darts_stacked_cells_forward.28} parent=35 // pred_check
              _
            $region38: #{darts_stacked_cells_forward.28} parent=35 // pred_check_branch
              %1354 = sbr.rel target = $region40
            $region39: #{darts_stacked_cells_forward.28} parent=35 // pred_region
              // Predicated region
              $region59: #{darts_stacked_cells_forward.28} parent=39 // pred_check
                _
              $region60: #{darts_stacked_cells_forward.28} parent=39 // pred_check_branch
                %1466 = sbr.rel (0) target = $region62
              $region61: #{darts_stacked_cells_forward.28} parent=39 // pred_region
                %s1468 = ssub.s32 16, 1
                %s1469 = sshrl.u32 %s1345, 5
                // While loop
                $region63: #{darts_stacked_cells_forward.28} parent=61 // loop_pre_header
                  _
                $region64: #{darts_stacked_cells_forward.28} parent=61 // loop_header
                  %s1471 = sphi 0, %s1473
                  %p1472 = scmp.ge.s32.totalorder %s1471, %s1469
                  %s1476 = sphi 0, %s1545
                  %s1477 = sphi %s1330, %s1548
                  %s1478 = sphi %s1349, %s1549
                $region65: #{darts_stacked_cells_forward.28} parent=61 // loop_header_branch
                  %1475 = sbr.rel (%p1472) target = $region69
                $region66: #{darts_stacked_cells_forward.28} parent=61 // loop_body
                  %v1479 = vld [vmem:[%s1477] sm:%s1468]
                  %1480 = vst [vmem:[%s1478] sm:%s1468] %v1479
                  %v1481 = vld [vmem:[%s1477 + $0x4] sm:%s1468]
                  %1482 = vst [vmem:[%s1478 + $0x4] sm:%s1468] %v1481
                  %v1483 = vld [vmem:[%s1477 + $0x8] sm:%s1468]
                  %1484 = vst [vmem:[%s1478 + $0x8] sm:%s1468] %v1483
                  %v1485 = vld [vmem:[%s1477 + $0xc] sm:%s1468]
                  %1486 = vst [vmem:[%s1478 + $0xc] sm:%s1468] %v1485
                  %v1487 = vld [vmem:[%s1477 + $0x10] sm:%s1468]
                  %1488 = vst [vmem:[%s1478 + $0x10] sm:%s1468] %v1487
                  %v1489 = vld [vmem:[%s1477 + $0x14] sm:%s1468]
                  %1490 = vst [vmem:[%s1478 + $0x14] sm:%s1468] %v1489
                  %v1491 = vld [vmem:[%s1477 + $0x18] sm:%s1468]
                  %1492 = vst [vmem:[%s1478 + $0x18] sm:%s1468] %v1491
                  %v1493 = vld [vmem:[%s1477 + $0x1c] sm:%s1468]
                  %1494 = vst [vmem:[%s1478 + $0x1c] sm:%s1468] %v1493
                  %v1495 = vld [vmem:[%s1477 + $0x20] sm:%s1468]
                  %1496 = vst [vmem:[%s1478 + $0x20] sm:%s1468] %v1495
                  %v1497 = vld [vmem:[%s1477 + $0x24] sm:%s1468]
                  %1498 = vst [vmem:[%s1478 + $0x24] sm:%s1468] %v1497
                  %v1499 = vld [vmem:[%s1477 + $0x28] sm:%s1468]
                  %1500 = vst [vmem:[%s1478 + $0x28] sm:%s1468] %v1499
                  %v1501 = vld [vmem:[%s1477 + $0x2c] sm:%s1468]
                  %1502 = vst [vmem:[%s1478 + $0x2c] sm:%s1468] %v1501
                  %v1503 = vld [vmem:[%s1477 + $0x30] sm:%s1468]
                  %1504 = vst [vmem:[%s1478 + $0x30] sm:%s1468] %v1503
                  %v1505 = vld [vmem:[%s1477 + $0x34] sm:%s1468]
                  %1506 = vst [vmem:[%s1478 + $0x34] sm:%s1468] %v1505
                  %v1507 = vld [vmem:[%s1477 + $0x38] sm:%s1468]
                  %1508 = vst [vmem:[%s1478 + $0x38] sm:%s1468] %v1507
                  %v1509 = vld [vmem:[%s1477 + $0x3c] sm:%s1468]
                  %1510 = vst [vmem:[%s1478 + $0x3c] sm:%s1468] %v1509
                  %v1511 = vld [vmem:[%s1477 + $0x40] sm:%s1468]
                  %1512 = vst [vmem:[%s1478 + $0x40] sm:%s1468] %v1511
                  %v1513 = vld [vmem:[%s1477 + $0x44] sm:%s1468]
                  %1514 = vst [vmem:[%s1478 + $0x44] sm:%s1468] %v1513
                  %v1515 = vld [vmem:[%s1477 + $0x48] sm:%s1468]
                  %1516 = vst [vmem:[%s1478 + $0x48] sm:%s1468] %v1515
                  %v1517 = vld [vmem:[%s1477 + $0x4c] sm:%s1468]
                  %1518 = vst [vmem:[%s1478 + $0x4c] sm:%s1468] %v1517
                  %v1519 = vld [vmem:[%s1477 + $0x50] sm:%s1468]
                  %1520 = vst [vmem:[%s1478 + $0x50] sm:%s1468] %v1519
                  %v1521 = vld [vmem:[%s1477 + $0x54] sm:%s1468]
                  %1522 = vst [vmem:[%s1478 + $0x54] sm:%s1468] %v1521
                  %v1523 = vld [vmem:[%s1477 + $0x58] sm:%s1468]
                  %1524 = vst [vmem:[%s1478 + $0x58] sm:%s1468] %v1523
                  %v1525 = vld [vmem:[%s1477 + $0x5c] sm:%s1468]
                  %1526 = vst [vmem:[%s1478 + $0x5c] sm:%s1468] %v1525
                  %v1527 = vld [vmem:[%s1477 + $0x60] sm:%s1468]
                  %1528 = vst [vmem:[%s1478 + $0x60] sm:%s1468] %v1527
                  %v1529 = vld [vmem:[%s1477 + $0x64] sm:%s1468]
                  %1530 = vst [vmem:[%s1478 + $0x64] sm:%s1468] %v1529
                  %v1531 = vld [vmem:[%s1477 + $0x68] sm:%s1468]
                  %1532 = vst [vmem:[%s1478 + $0x68] sm:%s1468] %v1531
                  %v1533 = vld [vmem:[%s1477 + $0x6c] sm:%s1468]
                  %1534 = vst [vmem:[%s1478 + $0x6c] sm:%s1468] %v1533
                  %v1535 = vld [vmem:[%s1477 + $0x70] sm:%s1468]
                  %1536 = vst [vmem:[%s1478 + $0x70] sm:%s1468] %v1535
                  %v1537 = vld [vmem:[%s1477 + $0x74] sm:%s1468]
                  %1538 = vst [vmem:[%s1478 + $0x74] sm:%s1468] %v1537
                  %v1539 = vld [vmem:[%s1477 + $0x78] sm:%s1468]
                  %1540 = vst [vmem:[%s1478 + $0x78] sm:%s1468] %v1539
                  %v1541 = vld [vmem:[%s1477 + $0x7c] sm:%s1468]
                  %1542 = vst [vmem:[%s1478 + $0x7c] sm:%s1468] %v1541
                  %s1543 = sadd.s32 1, %s1476
                  %p1544 = scmp.ge.s32.totalorder %s1543, %s1469
                  %s1545 = scalar_select %p1544, 0, %s1543
                  %s1546 = smul.u32 %s1545, 128
                  %s1547 = smul.u32 %s1545, 128
                  %s1548 = scalar_lea.vmem %s1330, %s1546 [#allocation2]
                  %s1549 = scalar_lea.vmem %s1349, %s1547
                $region67: #{darts_stacked_cells_forward.28} parent=61 // loop_footer
                  %s1473 = sadd.s32 %s1471, 1
                $region68: #{darts_stacked_cells_forward.28} parent=61 // loop_footer_branch
                  %1470 = sbr.rel target = $region64
                $region69: #{darts_stacked_cells_forward.28} parent=61 // loop_exit
                  _
                %s1550 = sshrl.u32 %s1345, 5
                %s1551 = sand.u32 %s1345, 31
                %s1552 = smul.u32 %s1550, 32
                %s1553 = smul.u32 4, %s1552
                %s1554 = scalar_lea.vmem %s1330, %s1553 [#allocation2]
                %s1555 = smul.u32 4, %s1552
                %s1556 = scalar_lea.vmem %s1349, %s1555
                // While loop
                $region70: #{darts_stacked_cells_forward.28} parent=61 // loop_pre_header
                  _
                $region71: #{darts_stacked_cells_forward.28} parent=61 // loop_header
                  %s1558 = sphi 0, %s1560
                  %p1559 = scmp.ge.s32.totalorder %s1558, %s1551
                  %s1563 = sphi 0, %s1570
                  %s1564 = sphi %s1554, %s1573
                  %s1565 = sphi %s1556, %s1574
                $region72: #{darts_stacked_cells_forward.28} parent=61 // loop_header_branch
                  %1562 = sbr.rel (%p1559) target = $region76
                $region73: #{darts_stacked_cells_forward.28} parent=61 // loop_body
                  %v1566 = vld [vmem:[%s1564] sm:%s1468]
                  %1567 = vst [vmem:[%s1565] sm:%s1468] %v1566
                  %s1568 = sadd.s32 1, %s1563
                  %p1569 = scmp.ge.s32.totalorder %s1568, %s1551
                  %s1570 = scalar_select %p1569, 0, %s1568
                  %s1571 = smul.u32 %s1570, 4
                  %s1572 = smul.u32 %s1570, 4
                  %s1573 = scalar_lea.vmem %s1554, %s1571 [#allocation2]
                  %s1574 = scalar_lea.vmem %s1556, %s1572
                $region74: #{darts_stacked_cells_forward.28} parent=61 // loop_footer
                  %s1560 = sadd.s32 %s1558, 1
                $region75: #{darts_stacked_cells_forward.28} parent=61 // loop_footer_branch
                  %1557 = sbr.rel target = $region71
                $region76: #{darts_stacked_cells_forward.28} parent=61 // loop_exit
                  _
              $region62: #{darts_stacked_cells_forward.28} parent=39 // pred_fallthru
                _
            $region40: #{darts_stacked_cells_forward.28} parent=35 // pred_fallthru
              _
            // Predicated region
            $region41: #{darts_stacked_cells_forward.28} parent=35 // pred_check
              _
            $region42: #{darts_stacked_cells_forward.28} parent=35 // pred_check_branch
              %1356 = sbr.rel (0) target = $region44
            $region43: #{darts_stacked_cells_forward.28} parent=35 // pred_region
              %s1358 = ssub.s32 16, 1
              %s1359 = sshrl.u32 %s1345, 5
              // While loop
              $region45: #{darts_stacked_cells_forward.28} parent=43 // loop_pre_header
                _
              $region46: #{darts_stacked_cells_forward.28} parent=43 // loop_header
                %s1361 = sphi 0, %s1363
                %p1362 = scmp.ge.s32.totalorder %s1361, %s1359
                %s1366 = sphi 0, %s1435
                %s1367 = sphi %s1330, %s1438
                %s1368 = sphi %s1349, %s1439
              $region47: #{darts_stacked_cells_forward.28} parent=43 // loop_header_branch
                %1365 = sbr.rel (%p1362) target = $region51
              $region48: #{darts_stacked_cells_forward.28} parent=43 // loop_body
                %v1369 = vld [vmem:[%s1367] sm:%s1358]
                %1370 = vst [vmem:[%s1368] sm:%s1358] %v1369
                %v1371 = vld [vmem:[%s1367 + $0x4] sm:%s1358]
                %1372 = vst [vmem:[%s1368 + $0x4] sm:%s1358] %v1371
                %v1373 = vld [vmem:[%s1367 + $0x8] sm:%s1358]
                %1374 = vst [vmem:[%s1368 + $0x8] sm:%s1358] %v1373
                %v1375 = vld [vmem:[%s1367 + $0xc] sm:%s1358]
                %1376 = vst [vmem:[%s1368 + $0xc] sm:%s1358] %v1375
                %v1377 = vld [vmem:[%s1367 + $0x10] sm:%s1358]
                %1378 = vst [vmem:[%s1368 + $0x10] sm:%s1358] %v1377
                %v1379 = vld [vmem:[%s1367 + $0x14] sm:%s1358]
                %1380 = vst [vmem:[%s1368 + $0x14] sm:%s1358] %v1379
                %v1381 = vld [vmem:[%s1367 + $0x18] sm:%s1358]
                %1382 = vst [vmem:[%s1368 + $0x18] sm:%s1358] %v1381
                %v1383 = vld [vmem:[%s1367 + $0x1c] sm:%s1358]
                %1384 = vst [vmem:[%s1368 + $0x1c] sm:%s1358] %v1383
                %v1385 = vld [vmem:[%s1367 + $0x20] sm:%s1358]
                %1386 = vst [vmem:[%s1368 + $0x20] sm:%s1358] %v1385
                %v1387 = vld [vmem:[%s1367 + $0x24] sm:%s1358]
                %1388 = vst [vmem:[%s1368 + $0x24] sm:%s1358] %v1387
                %v1389 = vld [vmem:[%s1367 + $0x28] sm:%s1358]
                %1390 = vst [vmem:[%s1368 + $0x28] sm:%s1358] %v1389
                %v1391 = vld [vmem:[%s1367 + $0x2c] sm:%s1358]
                %1392 = vst [vmem:[%s1368 + $0x2c] sm:%s1358] %v1391
                %v1393 = vld [vmem:[%s1367 + $0x30] sm:%s1358]
                %1394 = vst [vmem:[%s1368 + $0x30] sm:%s1358] %v1393
                %v1395 = vld [vmem:[%s1367 + $0x34] sm:%s1358]
                %1396 = vst [vmem:[%s1368 + $0x34] sm:%s1358] %v1395
                %v1397 = vld [vmem:[%s1367 + $0x38] sm:%s1358]
                %1398 = vst [vmem:[%s1368 + $0x38] sm:%s1358] %v1397
                %v1399 = vld [vmem:[%s1367 + $0x3c] sm:%s1358]
                %1400 = vst [vmem:[%s1368 + $0x3c] sm:%s1358] %v1399
                %v1401 = vld [vmem:[%s1367 + $0x40] sm:%s1358]
                %1402 = vst [vmem:[%s1368 + $0x40] sm:%s1358] %v1401
                %v1403 = vld [vmem:[%s1367 + $0x44] sm:%s1358]
                %1404 = vst [vmem:[%s1368 + $0x44] sm:%s1358] %v1403
                %v1405 = vld [vmem:[%s1367 + $0x48] sm:%s1358]
                %1406 = vst [vmem:[%s1368 + $0x48] sm:%s1358] %v1405
                %v1407 = vld [vmem:[%s1367 + $0x4c] sm:%s1358]
                %1408 = vst [vmem:[%s1368 + $0x4c] sm:%s1358] %v1407
                %v1409 = vld [vmem:[%s1367 + $0x50] sm:%s1358]
                %1410 = vst [vmem:[%s1368 + $0x50] sm:%s1358] %v1409
                %v1411 = vld [vmem:[%s1367 + $0x54] sm:%s1358]
                %1412 = vst [vmem:[%s1368 + $0x54] sm:%s1358] %v1411
                %v1413 = vld [vmem:[%s1367 + $0x58] sm:%s1358]
                %1414 = vst [vmem:[%s1368 + $0x58] sm:%s1358] %v1413
                %v1415 = vld [vmem:[%s1367 + $0x5c] sm:%s1358]
                %1416 = vst [vmem:[%s1368 + $0x5c] sm:%s1358] %v1415
                %v1417 = vld [vmem:[%s1367 + $0x60] sm:%s1358]
                %1418 = vst [vmem:[%s1368 + $0x60] sm:%s1358] %v1417
                %v1419 = vld [vmem:[%s1367 + $0x64] sm:%s1358]
                %1420 = vst [vmem:[%s1368 + $0x64] sm:%s1358] %v1419
                %v1421 = vld [vmem:[%s1367 + $0x68] sm:%s1358]
                %1422 = vst [vmem:[%s1368 + $0x68] sm:%s1358] %v1421
                %v1423 = vld [vmem:[%s1367 + $0x6c] sm:%s1358]
                %1424 = vst [vmem:[%s1368 + $0x6c] sm:%s1358] %v1423
                %v1425 = vld [vmem:[%s1367 + $0x70] sm:%s1358]
                %1426 = vst [vmem:[%s1368 + $0x70] sm:%s1358] %v1425
                %v1427 = vld [vmem:[%s1367 + $0x74] sm:%s1358]
                %1428 = vst [vmem:[%s1368 + $0x74] sm:%s1358] %v1427
                %v1429 = vld [vmem:[%s1367 + $0x78] sm:%s1358]
                %1430 = vst [vmem:[%s1368 + $0x78] sm:%s1358] %v1429
                %v1431 = vld [vmem:[%s1367 + $0x7c] sm:%s1358]
                %1432 = vst [vmem:[%s1368 + $0x7c] sm:%s1358] %v1431
                %s1433 = sadd.s32 1, %s1366
                %p1434 = scmp.ge.s32.totalorder %s1433, %s1359
                %s1435 = scalar_select %p1434, 0, %s1433
                %s1436 = smul.u32 %s1435, 128
                %s1437 = smul.u32 %s1435, 128
                %s1438 = scalar_lea.vmem %s1330, %s1436 [#allocation2]
                %s1439 = scalar_lea.vmem %s1349, %s1437
              $region49: #{darts_stacked_cells_forward.28} parent=43 // loop_footer
                %s1363 = sadd.s32 %s1361, 1
              $region50: #{darts_stacked_cells_forward.28} parent=43 // loop_footer_branch
                %1360 = sbr.rel target = $region46
              $region51: #{darts_stacked_cells_forward.28} parent=43 // loop_exit
                _
              %s1440 = sshrl.u32 %s1345, 5
              %s1441 = sand.u32 %s1345, 31
              %s1442 = smul.u32 %s1440, 32
              %s1443 = smul.u32 4, %s1442
              %s1444 = scalar_lea.vmem %s1330, %s1443 [#allocation2]
              %s1445 = smul.u32 4, %s1442
              %s1446 = scalar_lea.vmem %s1349, %s1445
              // While loop
              $region52: #{darts_stacked_cells_forward.28} parent=43 // loop_pre_header
                _
              $region53: #{darts_stacked_cells_forward.28} parent=43 // loop_header
                %s1448 = sphi 0, %s1450
                %p1449 = scmp.ge.s32.totalorder %s1448, %s1441
                %s1453 = sphi 0, %s1460
                %s1454 = sphi %s1444, %s1463
                %s1455 = sphi %s1446, %s1464
              $region54: #{darts_stacked_cells_forward.28} parent=43 // loop_header_branch
                %1452 = sbr.rel (%p1449) target = $region58
              $region55: #{darts_stacked_cells_forward.28} parent=43 // loop_body
                %v1456 = vld [vmem:[%s1454] sm:%s1358]
                %1457 = vst [vmem:[%s1455] sm:%s1358] %v1456
                %s1458 = sadd.s32 1, %s1453
                %p1459 = scmp.ge.s32.totalorder %s1458, %s1441
                %s1460 = scalar_select %p1459, 0, %s1458
                %s1461 = smul.u32 %s1460, 4
                %s1462 = smul.u32 %s1460, 4
                %s1463 = scalar_lea.vmem %s1444, %s1461 [#allocation2]
                %s1464 = scalar_lea.vmem %s1446, %s1462
              $region56: #{darts_stacked_cells_forward.28} parent=43 // loop_footer
                %s1450 = sadd.s32 %s1448, 1
              $region57: #{darts_stacked_cells_forward.28} parent=43 // loop_footer_branch
                %1447 = sbr.rel target = $region53
              $region58: #{darts_stacked_cells_forward.28} parent=43 // loop_exit
                _
            $region44: #{darts_stacked_cells_forward.28} parent=35 // pred_fallthru
              _
          $region36: #{darts_stacked_cells_forward.28} parent=31 // pred_fallthru
            _
          %1575 = vnop
        $region32: #{darts_stacked_cells_forward.28} parent=27 // pred_fallthru
          _
        // Predicated region
        $region77: #{darts_stacked_cells_forward.28} parent=27 // pred_check
          %p1576 = pneg %p107
        $region78: #{darts_stacked_cells_forward.28} parent=27 // pred_check_branch
          %1578 = sbr.rel (%p1576) target = $region80
        $region79: #{darts_stacked_cells_forward.28} parent=27 // pred_region
          _
        $region80: #{darts_stacked_cells_forward.28} parent=27 // pred_fallthru
          _
        // Predicated region
        $region81: #{darts_stacked_cells_forward.28} parent=27 // pred_check
          %p1579 = pneg %p133
        $region82: #{darts_stacked_cells_forward.28} parent=27 // pred_check_branch
          %1581 = sbr.rel (%p1579) target = $region84
        $region83: #{darts_stacked_cells_forward.28} parent=27 // pred_region
          _
        $region84: #{darts_stacked_cells_forward.28} parent=27 // pred_fallthru
          _
      $region28: #{darts_stacked_cells_forward.28} parent=5 // pred_fallthru
        _
      %p1582 = scmp.le.s32.totalorder 2, %s11
      // Predicated region
      $region85: #{darts_stacked_cells_forward.28} parent=5 // pred_check
        %p1583 = pneg %p1582
      $region86: #{darts_stacked_cells_forward.28} parent=5 // pred_check_branch
        %1585 = sbr.rel (%p1583) target = $region88
      $region87: #{darts_stacked_cells_forward.28} parent=5 // pred_region
        %s1586 = ssub.s32 %s11, 2
        // Predicated region
        $region89: #{darts_stacked_cells_forward.28} parent=87 // pred_check
          %p1587 = pneg %p87
        $region90: #{darts_stacked_cells_forward.28} parent=87 // pred_check_branch
          %1589 = sbr.rel (%p1587) target = $region92
        $region91: #{darts_stacked_cells_forward.28} parent=87 // pred_region
          %s1590 = sand.u32 %s72, 1
          %s1591 = sand.u32 %s72, 1
          %s1592 = smul.addr %s1591, 256
          %s1593 = scalar_lea.vmem [#allocation2], %s1592
        $region92: #{darts_stacked_cells_forward.28} parent=87 // pred_fallthru
          _
        // Predicated region
        $region93: #{darts_stacked_cells_forward.28} parent=87 // pred_check
          %p1594 = pneg %p113
        $region94: #{darts_stacked_cells_forward.28} parent=87 // pred_check_branch
          %1596 = sbr.rel (%p1594) target = $region96
        $region95: #{darts_stacked_cells_forward.28} parent=87 // pred_region
          %p1597 = scmp.lt.s32.totalorder %s17, 1
          %s1598 = scalar_select %p1597, %s17, 1
          %s1599 = smul.addr %s1598, 8
          %s1600 = scalar_lea.vmem %s3, %s1599
        $region96: #{darts_stacked_cells_forward.28} parent=87 // pred_fallthru
          _
        // Predicated region
        $region97: #{darts_stacked_cells_forward.28} parent=87 // pred_check
          %p1601 = pneg %p139
        $region98: #{darts_stacked_cells_forward.28} parent=87 // pred_check_branch
          %1603 = sbr.rel (%p1601) target = $region100
        $region99: #{darts_stacked_cells_forward.28} parent=87 // pred_region
          %p1604 = scmp.lt.s32.totalorder %s17, 1
          %s1605 = scalar_select %p1604, %s17, 1
          %s1606 = smul.addr %s1605, 8
          %s1607 = scalar_lea.vmem %s4, %s1606
        $region100: #{darts_stacked_cells_forward.28} parent=87 // pred_fallthru
          _
      $region88: #{darts_stacked_cells_forward.28} parent=5 // pred_fallthru
        _
    $region6: #{darts_stacked_cells_forward.28} parent=1 // loop_footer
      %s15 = sadd.s32 1, %s11
    $region7: #{darts_stacked_cells_forward.28} parent=1 // loop_footer_branch
      %10 = sbr.rel target = $region3
    $region8: #{darts_stacked_cells_forward.28} parent=1 // loop_exit
      _

// kernel: darts_stacked_cells_forward.33
$region0: #{darts_stacked_cells_forward.33}
  #allocation0 [shape = 'u32[]', space=smem, size = 0x4, offset = 0x4, fixed_abs, tag = 'smem constant byte address 0x4 - core index']
  #allocation1 [shape = 'u32[72,128]{1,0:T(1,128)}', space=vmem, size = 0x9000, scoped, tag = 'internal scratch']
  %s0 = inlined_call_operand.vmem [shape: bf16[800,128], index: 0, kind: input, shape index: {}]
  %s1 = inlined_call_operand.vmem [shape: f32[1,128], index: 1, kind: input, shape index: {}]
  %s2 = inlined_call_operand.vmem [shape: f32[1,128], index: 2, kind: input, shape index: {}]
  %s3 = inlined_call_operand.vmem [shape: f32[1,128], index: 3, kind: input, shape index: {}]
  %s4 = inlined_call_operand.vmem [shape: f32[1,128], index: 4, kind: input, shape index: {}]
  %s5 = inlined_call_operand.vmem [shape: bf16[800,128], index: 5, kind: output, shape index: {}]
  %s6 = sld [smem:[#allocation0]]
  $region97: #{darts_stacked_cells_forward.33} parent=0
    _
  %s8 = ssub.s32 1, %s6
  %s9 = scalar_select 0, %s8, %s6
  $region1: #{darts_stacked_cells_forward.33} parent=0
    #allocation2 [shape = 'u8[262144]{0}', space=vmem, size = 0x40000, scoped, tag = 'output window, operand 0']
    loop: start=0, step=1, limit=4
    $region2: #{darts_stacked_cells_forward.33} parent=1 // loop_pre_header
      _
    $region3: #{darts_stacked_cells_forward.33} parent=1 // loop_header
      %s11 = sphi 0, %s15
      %p12 = scmp.ge.s32.totalorder %s11, 4
      %s21 = sphi 0, %s23
      %s24 = sphi 0, %s21
      %s25 = sphi 0, %s24
      %s41 = sphi 0, %s25
      %s45 = sphi 0, %s45
      %s47 = sphi 0, %s45
      %s48 = sphi 0, %s47
      %s62 = sphi 0, %s48
      %s66 = sphi 0, %s66
      %s68 = sphi 0, %s66
      %s69 = sphi 0, %s68
      %s83 = sphi 0, %s69
      %s87 = sphi 0, %s87
      %s89 = sphi 0, %s87
      %s90 = sphi 0, %s89
      %s104 = sphi 0, %s90
      %s108 = sphi 0, %s108
      %s110 = sphi 0, %s108
      %s111 = sphi 0, %s110
      %s125 = sphi 0, %s111
      %s131 = sphi 0, %s133
      %s134 = sphi 0, %s131
      %s135 = sphi 0, %s134
      %s151 = sphi 0, %s135
    $region4: #{darts_stacked_cells_forward.33} parent=1 // loop_header_branch
      %14 = sbr.rel (%p12) target = $region8
    $region5: #{darts_stacked_cells_forward.33} parent=1 // loop_body
      %s16 = ssub.s32 %s11, 1
      %s17 = ssub.s32 %s11, 2
      %s18 = sadd.s32 %s11, 1
      %s19 = ssub.s32 %s11, %s18
      %p20 = scmp.eq.s32.totalorder %s19, 0
      %s22 = sadd.s32 %s21, 1
      %s23 = scalar_select %p20, %s21, %s22
      %p26 = pneg %p20
      %p27 = scmp.eq.s32.totalorder %s11, 1
      %p28 = por %p26, %p27
      %p29 = scmp.ne.s32.totalorder %s21, %s24
      %p30 = scmp.eq.s32.totalorder %s11, 0
      %p31 = por %p29, %p30
      %p32 = scmp.ne.s32.totalorder %s21, %s24
      %p33 = scmp.eq.s32.totalorder %s16, 1
      %p34 = por %p32, %p33
      %p35 = scmp.ne.s32.totalorder %s24, %s25
      %p36 = scmp.eq.s32.totalorder %s16, 0
      %p37 = por %p35, %p36
      %p38 = scmp.ne.s32.totalorder %s24, %s25
      %p39 = scmp.eq.s32.totalorder %s17, 1
      %p40 = por %p38, %p39
      %p42 = scmp.ne.s32.totalorder %s25, %s41
      %p43 = scmp.eq.s32.totalorder %s17, 0
      %p44 = por %p42, %p43
      %s46 = sadd.s32 %s45, 1
      %p49 = scmp.eq.s32.totalorder %s11, 1
      %p50 = scmp.ne.s32.totalorder %s45, %s47
      %p51 = scmp.eq.s32.totalorder %s11, 0
      %p52 = por %p50, %p51
      %p53 = scmp.ne.s32.totalorder %s45, %s47
      %p54 = scmp.eq.s32.totalorder %s16, 1
      %p55 = por %p53, %p54
      %p56 = scmp.ne.s32.totalorder %s47, %s48
      %p57 = scmp.eq.s32.totalorder %s16, 0
      %p58 = por %p56, %p57
      %p59 = scmp.ne.s32.totalorder %s47, %s48
      %p60 = scmp.eq.s32.totalorder %s17, 1
      %p61 = por %p59, %p60
      %p63 = scmp.ne.s32.totalorder %s48, %s62
      %p64 = scmp.eq.s32.totalorder %s17, 0
      %p65 = por %p63, %p64
      %s67 = sadd.s32 %s66, 1
      %p70 = scmp.eq.s32.totalorder %s11, 1
      %p71 = scmp.ne.s32.totalorder %s66, %s68
      %p72 = scmp.eq.s32.totalorder %s11, 0
      %p73 = por %p71, %p72
      %p74 = scmp.ne.s32.totalorder %s66, %s68
      %p75 = scmp.eq.s32.totalorder %s16, 1
      %p76 = por %p74, %p75
      %p77 = scmp.ne.s32.totalorder %s68, %s69
      %p78 = scmp.eq.s32.totalorder %s16, 0
      %p79 = por %p77, %p78
      %p80 = scmp.ne.s32.totalorder %s68, %s69
      %p81 = scmp.eq.s32.totalorder %s17, 1
      %p82 = por %p80, %p81
      %p84 = scmp.ne.s32.totalorder %s69, %s83
      %p85 = scmp.eq.s32.totalorder %s17, 0
      %p86 = por %p84, %p85
      %s88 = sadd.s32 %s87, 1
      %p91 = scmp.eq.s32.totalorder %s11, 1
      %p92 = scmp.ne.s32.totalorder %s87, %s89
      %p93 = scmp.eq.s32.totalorder %s11, 0
      %p94 = por %p92, %p93
      %p95 = scmp.ne.s32.totalorder %s87, %s89
      %p96 = scmp.eq.s32.totalorder %s16, 1
      %p97 = por %p95, %p96
      %p98 = scmp.ne.s32.totalorder %s89, %s90
      %p99 = scmp.eq.s32.totalorder %s16, 0
      %p100 = por %p98, %p99
      %p101 = scmp.ne.s32.totalorder %s89, %s90
      %p102 = scmp.eq.s32.totalorder %s17, 1
      %p103 = por %p101, %p102
      %p105 = scmp.ne.s32.totalorder %s90, %s104
      %p106 = scmp.eq.s32.totalorder %s17, 0
      %p107 = por %p105, %p106
      %s109 = sadd.s32 %s108, 1
      %p112 = scmp.eq.s32.totalorder %s11, 1
      %p113 = scmp.ne.s32.totalorder %s108, %s110
      %p114 = scmp.eq.s32.totalorder %s11, 0
      %p115 = por %p113, %p114
      %p116 = scmp.ne.s32.totalorder %s108, %s110
      %p117 = scmp.eq.s32.totalorder %s16, 1
      %p118 = por %p116, %p117
      %p119 = scmp.ne.s32.totalorder %s110, %s111
      %p120 = scmp.eq.s32.totalorder %s16, 0
      %p121 = por %p119, %p120
      %p122 = scmp.ne.s32.totalorder %s110, %s111
      %p123 = scmp.eq.s32.totalorder %s17, 1
      %p124 = por %p122, %p123
      %p126 = scmp.ne.s32.totalorder %s111, %s125
      %p127 = scmp.eq.s32.totalorder %s17, 0
      %p128 = por %p126, %p127
      %s129 = ssub.s32 %s11, %s18
      %p130 = scmp.eq.s32.totalorder %s129, 0
      %s132 = sadd.s32 %s131, 1
      %s133 = scalar_select %p130, %s131, %s132
      %p136 = pneg %p130
      %p137 = scmp.eq.s32.totalorder %s11, 1
      %p138 = por %p136, %p137
      %p139 = scmp.ne.s32.totalorder %s131, %s134
      %p140 = scmp.eq.s32.totalorder %s11, 0
      %p141 = por %p139, %p140
      %p142 = scmp.ne.s32.totalorder %s131, %s134
      %p143 = scmp.eq.s32.totalorder %s16, 1
      %p144 = por %p142, %p143
      %p145 = scmp.ne.s32.totalorder %s134, %s135
      %p146 = scmp.eq.s32.totalorder %s16, 0
      %p147 = por %p145, %p146
      %p148 = scmp.ne.s32.totalorder %s134, %s135
      %p149 = scmp.eq.s32.totalorder %s17, 1
      %p150 = por %p148, %p149
      %p152 = scmp.ne.s32.totalorder %s135, %s151
      %p153 = scmp.eq.s32.totalorder %s17, 0
      %p154 = por %p152, %p153
      %p155 = scmp.le.s32.totalorder 1, %s11
      %p156 = scmp.lt.s32.totalorder %s11, 3
      %p157 = pnand %p155, %p156
      %p158 = pneg %p157
      // Predicated region
      $region9: #{darts_stacked_cells_forward.33} parent=5 // pred_check
        _
      $region10: #{darts_stacked_cells_forward.33} parent=5 // pred_check_branch
        %160 = sbr.rel (%p157) target = $region12
      $region11: #{darts_stacked_cells_forward.33} parent=5 // pred_region
        %s161 = ssub.s32 %s11, 1
        // Predicated region
        $region13: #{darts_stacked_cells_forward.33} parent=11 // pred_check
          %p162 = pneg %p58
        $region14: #{darts_stacked_cells_forward.33} parent=11 // pred_check_branch
          %164 = sbr.rel (%p162) target = $region16
        $region15: #{darts_stacked_cells_forward.33} parent=11 // pred_region
          _
        $region16: #{darts_stacked_cells_forward.33} parent=11 // pred_fallthru
          _
        // Predicated region
        $region17: #{darts_stacked_cells_forward.33} parent=11 // pred_check
          %p165 = pneg %p79
        $region18: #{darts_stacked_cells_forward.33} parent=11 // pred_check_branch
          %167 = sbr.rel (%p165) target = $region20
        $region19: #{darts_stacked_cells_forward.33} parent=11 // pred_region
          _
        $region20: #{darts_stacked_cells_forward.33} parent=11 // pred_fallthru
          _
        // Predicated region
        $region21: #{darts_stacked_cells_forward.33} parent=11 // pred_check
          %p168 = pneg %p100
        $region22: #{darts_stacked_cells_forward.33} parent=11 // pred_check_branch
          %170 = sbr.rel (%p168) target = $region24
        $region23: #{darts_stacked_cells_forward.33} parent=11 // pred_region
          _
        $region24: #{darts_stacked_cells_forward.33} parent=11 // pred_fallthru
          _
        // Predicated region
        $region25: #{darts_stacked_cells_forward.33} parent=11 // pred_check
          %p171 = pneg %p121
        $region26: #{darts_stacked_cells_forward.33} parent=11 // pred_check_branch
          %173 = sbr.rel (%p171) target = $region28
        $region27: #{darts_stacked_cells_forward.33} parent=11 // pred_region
          _
        $region28: #{darts_stacked_cells_forward.33} parent=11 // pred_fallthru
          _
      $region12: #{darts_stacked_cells_forward.33} parent=5 // pred_fallthru
        _
      %p174 = scmp.lt.s32.totalorder %s11, 2
      // Predicated region
      $region29: #{darts_stacked_cells_forward.33} parent=5 // pred_check
        %p175 = pneg %p174
      $region30: #{darts_stacked_cells_forward.33} parent=5 // pred_check_branch
        %177 = sbr.rel (%p175) target = $region32
      $region31: #{darts_stacked_cells_forward.33} parent=5 // pred_region
        // Predicated region
        $region33: #{darts_stacked_cells_forward.33} parent=31 // pred_check
          %p178 = pneg %p31
        $region34: #{darts_stacked_cells_forward.33} parent=31 // pred_check_branch
          %180 = sbr.rel (%p178) target = $region36
        $region35: #{darts_stacked_cells_forward.33} parent=31 // pred_region
          %s181 = smul.u32 64, %s11
          %s182 = ssub.s32 100, %s181
          %p183 = scmp.lt.s32.totalorder %s182, 64
          %s184 = scalar_select %p183, %s182, 64
          %s185 = smul.u32 4, %s184
          %p186 = scmp.lt.s32.totalorder %s181, 99
          %s187 = scalar_select %p186, %s181, 99
          %s188 = smul.addr %s187, 4
          %s189 = scalar_lea.vmem %s0, %s188
          %s190 = smul.u32 64, %s11
          %s191 = ssub.s32 100, %s190
          %p192 = scmp.lt.s32.totalorder %s191, 64
          %s193 = scalar_select %p192, %s191, 64
          %s194 = smul.u32 4, %s193
        $region36: #{darts_stacked_cells_forward.33} parent=31 // pred_fallthru
          _
      $region32: #{darts_stacked_cells_forward.33} parent=5 // pred_fallthru
        _
      %p195 = scmp.le.s32.totalorder 1, %s11
      %p196 = scmp.lt.s32.totalorder %s11, 3
      %p197 = pnand %p195, %p196
      %p198 = pneg %p197
      // Predicated region
      $region37: #{darts_stacked_cells_forward.33} parent=5 // pred_check
        _
      $region38: #{darts_stacked_cells_forward.33} parent=5 // pred_check_branch
        %200 = sbr.rel (%p197) target = $region40
      $region39: #{darts_stacked_cells_forward.33} parent=5 // pred_region
        %s201 = ssub.s32 %s11, 1
        %s202 = smul.u32 64, %s16
        %s203 = ssub.s32 100, %s202
        %p204 = scmp.lt.s32.totalorder %s203, 64
        %s205 = scalar_select %p204, %s203, 64
        %s206 = smul.u32 4, %s205
        %p207 = scmp.lt.s32.totalorder %s202, 99
        %s208 = scalar_select %p207, %s202, 99
        %s209 = smul.addr %s208, 4
        %s210 = scalar_lea.vmem %s0, %s209
        %p211 = pneg %p37
        %p212 = pneg %p34
        %p213 = pneg %p58
        %p214 = pneg %p55
        %p215 = pneg %p79
        %p216 = pneg %p76
        %p217 = pneg %p100
        %p218 = pneg %p97
        %p219 = pneg %p121
        %p220 = pneg %p118
        %p221 = pneg %p147
        %p222 = pneg %p144
        %s223 = sand.u32 %s134, 1
        %s224 = sand.u32 %s134, 1
        %s225 = smul.addr %s224, 256
        %s226 = scalar_lea.vmem [#allocation2], %s225
        %s227 = smul.u32 64, %s16
        %s228 = ssub.s32 100, %s227
        %p229 = scmp.lt.s32.totalorder %s228, 64
        %s230 = scalar_select %p229, %s228, 64
        %s231 = smul.u32 4, %s230
        %p232 = scmp.lt.s32.totalorder %s227, 99
        %s233 = scalar_select %p232, %s227, 99
        %s234 = smul.addr %s233, 4
        %s235 = scalar_lea.vmem %s0, %s234
        %s236 = smul.u32 64, %s16
        %s237 = ssub.s32 100, %s236
        %p238 = scmp.lt.s32.totalorder %s237, 64
        %s239 = scalar_select %p238, %s237, 64
        %s240 = smul.u32 4, %s239
        %s241 = smul.u32 64, %s16
        %s242 = ssub.s32 100, %s241
        %p243 = scmp.lt.s32.totalorder %s242, 64
        %s244 = scalar_select %p243, %s242, 64
        %s245 = smul.u32 4, %s244
        %v246 = vld [vmem:[%s1] sm:$0x1]
        %v247 = vmul.f32 %v246, 0.00125
        %v248 = vld [vmem:[%s2] sm:$0x1]
        %v249 = vmul.f32 %v248, 0.00125
        %v250 = vmul.f32 %v247, %v247
        %v251 = vsub.f32 %v249, %v250
        %v252 = vmax.f32 %v251, 0.0
        %v253 = vld [vmem:[%s3] sm:$0x1]
        %v254 = vadd.f32 %v252, 1e-05
        %v255 = vrsqrt.pop %v254
        %v256 = vmul.f32 %v255, %v254
        %v257 = vmul.f32 %v256, %v255
        %v258 = vmul.f32 0.5, %v257
        %v259 = vsub.f32 1.5, %v258
        %v260 = vmul.f32 %v255, %v259
        %vm261 = vweird.f32 %v254
        %vm262 = vweird.f32 %v255
        %vm263 = vmor %vm261, %vm262
        %v264 = vsel %vm263, %v255, %v260
        %v265 = vmul.f32 %v253, %v264
        %v266 = vld [vmem:[%s4] sm:$0x1]
        %v267 = vmul.f32 %v247, %v265
        %v268 = vsub.f32 %v266, %v267
        %v269 = vld [vmem:[%s235] sm:$0xf]
        %v270 = vld [vmem:[%s235 + $0x4] sm:$0xf]
        %v271 = vld [vmem:[%s235 + $0x8] sm:$0xf]
        %v272 = vld [vmem:[%s235 + $0xc] sm:$0xf]
        %v273 = vld [vmem:[%s235 + $0x10] sm:$0xf]
        %v274 = vld [vmem:[%s235 + $0x14] sm:$0xf]
        %v275 = vld [vmem:[%s235 + $0x18] sm:$0xf]
        %v276 = vld [vmem:[%s235 + $0x1c] sm:$0xf]
        %v277 = vld [vmem:[%s235 + $0x20] sm:$0xf]
        %v278 = vld [vmem:[%s235 + $0x24] sm:$0xf]
        %v279 = vld [vmem:[%s235 + $0x28] sm:$0xf]
        %v280 = vld [vmem:[%s235 + $0x2c] sm:$0xf]
        %v281 = vld [vmem:[%s235 + $0x30] sm:$0xf]
        %v282 = vld [vmem:[%s235 + $0x34] sm:$0xf]
        %v283 = vld [vmem:[%s235 + $0x38] sm:$0xf]
        %v284 = vld [vmem:[%s235 + $0x3c] sm:$0xf]
        %v285 = vld [vmem:[%s235 + $0x40] sm:$0xf]
        %v286 = vld [vmem:[%s235 + $0x44] sm:$0xf]
        %v287 = vld [vmem:[%s235 + $0x48] sm:$0xf]
        %v288 = vld [vmem:[%s235 + $0x4c] sm:$0xf]
        %v289 = vld [vmem:[%s235 + $0x50] sm:$0xf]
        %v290 = vld [vmem:[%s235 + $0x54] sm:$0xf]
        %v291 = vld [vmem:[%s235 + $0x58] sm:$0xf]
        %v292 = vld [vmem:[%s235 + $0x5c] sm:$0xf]
        %v293 = vld [vmem:[%s235 + $0x60] sm:$0xf]
        %v294 = vld [vmem:[%s235 + $0x64] sm:$0xf]
        %v295 = vld [vmem:[%s235 + $0x68] sm:$0xf]
        %v296 = vld [vmem:[%s235 + $0x6c] sm:$0xf]
        %v297 = vld [vmem:[%s235 + $0x70] sm:$0xf]
        %v298 = vld [vmem:[%s235 + $0x74] sm:$0xf]
        %v299 = vld [vmem:[%s235 + $0x78] sm:$0xf]
        %v300 = vld [vmem:[%s235 + $0x7c] sm:$0xf]
        %v301 = vld [vmem:[%s235 + $0x80] sm:$0xf]
        %v302 = vld [vmem:[%s235 + $0x84] sm:$0xf]
        %v303 = vld [vmem:[%s235 + $0x88] sm:$0xf]
        %v304 = vld [vmem:[%s235 + $0x8c] sm:$0xf]
        %v305 = vld [vmem:[%s235 + $0x90] sm:$0xf]
        %v306 = vld [vmem:[%s235 + $0x94] sm:$0xf]
        %v307 = vld [vmem:[%s235 + $0x98] sm:$0xf]
        %v308 = vld [vmem:[%s235 + $0x9c] sm:$0xf]
        %v309 = vld [vmem:[%s235 + $0xa0] sm:$0xf]
        %v310 = vld [vmem:[%s235 + $0xa4] sm:$0xf]
        %v311 = vld [vmem:[%s235 + $0xa8] sm:$0xf]
        %v312 = vld [vmem:[%s235 + $0xac] sm:$0xf]
        %v313 = vld [vmem:[%s235 + $0xb0] sm:$0xf]
        %v314 = vld [vmem:[%s235 + $0xb4] sm:$0xf]
        %v315 = vld [vmem:[%s235 + $0xb8] sm:$0xf]
        %v316 = vld [vmem:[%s235 + $0xbc] sm:$0xf]
        %v317 = vld [vmem:[%s235 + $0xc0] sm:$0xf]
        %v318 = vld [vmem:[%s235 + $0xc4] sm:$0xf]
        %v319 = vld [vmem:[%s235 + $0xc8] sm:$0xf]
        %v320 = vld [vmem:[%s235 + $0xcc] sm:$0xf]
        %v321 = vld [vmem:[%s235 + $0xd0] sm:$0xf]
        %v322 = vld [vmem:[%s235 + $0xd4] sm:$0xf]
        %v323 = vld [vmem:[%s235 + $0xd8] sm:$0xf]
        %v324 = vld [vmem:[%s235 + $0xdc] sm:$0xf]
        %v325 = vld [vmem:[%s235 + $0xe0] sm:$0xf]
        %v326 = vld [vmem:[%s235 + $0xe4] sm:$0xf]
        %v327 = vld [vmem:[%s235 + $0xe8] sm:$0xf]
        %v328 = vld [vmem:[%s235 + $0xec] sm:$0xf]
        %v329 = vld [vmem:[%s235 + $0xf0] sm:$0xf]
        %v330 = vld [vmem:[%s235 + $0xf4] sm:$0xf]
        %v331 = vld [vmem:[%s235 + $0xf8] sm:$0xf]
        %v332 = vld [vmem:[%s235 + $0xfc] sm:$0xf]
        %v333 = vunpack.c.l.bf16 %v269
        %v334 = vunpack.c.l.bf16 %v270
        %v335 = vunpack.c.l.bf16 %v271
        %v336 = vunpack.c.l.bf16 %v272
        %v337 = vunpack.c.l.bf16 %v273
        %v338 = vunpack.c.l.bf16 %v274
        %v339 = vunpack.c.l.bf16 %v275
        %v340 = vunpack.c.l.bf16 %v276
        %v341 = vunpack.c.l.bf16 %v277
        %v342 = vunpack.c.l.bf16 %v278
        %v343 = vunpack.c.l.bf16 %v279
        %v344 = vunpack.c.l.bf16 %v280
        %v345 = vunpack.c.l.bf16 %v281
        %v346 = vunpack.c.l.bf16 %v282
        %v347 = vunpack.c.l.bf16 %v283
        %v348 = vunpack.c.l.bf16 %v284
        %v349 = vunpack.c.l.bf16 %v285
        %v350 = vunpack.c.l.bf16 %v286
        %v351 = vunpack.c.l.bf16 %v287
        %v352 = vunpack.c.l.bf16 %v288
        %v353 = vunpack.c.l.bf16 %v289
        %v354 = vunpack.c.l.bf16 %v290
        %v355 = vunpack.c.l.bf16 %v291
        %v356 = vunpack.c.l.bf16 %v292
        %v357 = vunpack.c.l.bf16 %v293
        %v358 = vunpack.c.l.bf16 %v294
        %v359 = vunpack.c.l.bf16 %v295
        %v360 = vunpack.c.l.bf16 %v296
        %v361 = vunpack.c.l.bf16 %v297
        %v362 = vunpack.c.l.bf16 %v298
        %v363 = vunpack.c.l.bf16 %v299
        %v364 = vunpack.c.l.bf16 %v300
        %v365 = vunpack.c.l.bf16 %v301
        %v366 = vunpack.c.l.bf16 %v302
        %v367 = vunpack.c.l.bf16 %v303
        %v368 = vunpack.c.l.bf16 %v304
        %v369 = vunpack.c.l.bf16 %v305
        %v370 = vunpack.c.l.bf16 %v306
        %v371 = vunpack.c.l.bf16 %v307
        %v372 = vunpack.c.l.bf16 %v308
        %v373 = vunpack.c.l.bf16 %v309
        %v374 = vunpack.c.l.bf16 %v310
        %v375 = vunpack.c.l.bf16 %v311
        %v376 = vunpack.c.l.bf16 %v312
        %v377 = vunpack.c.l.bf16 %v313
        %v378 = vunpack.c.l.bf16 %v314
        %v379 = vunpack.c.l.bf16 %v315
        %v380 = vunpack.c.l.bf16 %v316
        %v381 = vunpack.c.l.bf16 %v317
        %v382 = vunpack.c.l.bf16 %v318
        %v383 = vunpack.c.l.bf16 %v319
        %v384 = vunpack.c.l.bf16 %v320
        %v385 = vunpack.c.l.bf16 %v321
        %v386 = vunpack.c.l.bf16 %v322
        %v387 = vunpack.c.l.bf16 %v323
        %v388 = vunpack.c.l.bf16 %v324
        %v389 = vunpack.c.l.bf16 %v325
        %v390 = vunpack.c.l.bf16 %v326
        %v391 = vunpack.c.l.bf16 %v327
        %v392 = vunpack.c.l.bf16 %v328
        %v393 = vunpack.c.l.bf16 %v329
        %v394 = vunpack.c.l.bf16 %v330
        %v395 = vunpack.c.l.bf16 %v331
        %v396 = vunpack.c.l.bf16 %v332
        %v398 = vperm.slane %v265, 0
        %v400 = vmul.f32 %v333, %v398
        %v401 = vmul.f32 %v334, %v398
        %v402 = vmul.f32 %v335, %v398
        %v403 = vmul.f32 %v336, %v398
        %v404 = vmul.f32 %v337, %v398
        %v405 = vmul.f32 %v338, %v398
        %v406 = vmul.f32 %v339, %v398
        %v407 = vmul.f32 %v340, %v398
        %v408 = vmul.f32 %v341, %v398
        %v409 = vmul.f32 %v342, %v398
        %v410 = vmul.f32 %v343, %v398
        %v411 = vmul.f32 %v344, %v398
        %v412 = vmul.f32 %v345, %v398
        %v413 = vmul.f32 %v346, %v398
        %v414 = vmul.f32 %v347, %v398
        %v415 = vmul.f32 %v348, %v398
        %v416 = vmul.f32 %v349, %v398
        %v417 = vmul.f32 %v350, %v398
        %v418 = vmul.f32 %v351, %v398
        %v419 = vmul.f32 %v352, %v398
        %v420 = vmul.f32 %v353, %v398
        %v421 = vmul.f32 %v354, %v398
        %v422 = vmul.f32 %v355, %v398
        %v423 = vmul.f32 %v356, %v398
        %v424 = vmul.f32 %v357, %v398
        %v425 = vmul.f32 %v358, %v398
        %v426 = vmul.f32 %v359, %v398
        %v427 = vmul.f32 %v360, %v398
        %v428 = vmul.f32 %v361, %v398
        %v429 = vmul.f32 %v362, %v398
        %v430 = vmul.f32 %v363, %v398
        %v431 = vmul.f32 %v364, %v398
        %v432 = vmul.f32 %v365, %v398
        %v433 = vmul.f32 %v366, %v398
        %v434 = vmul.f32 %v367, %v398
        %v435 = vmul.f32 %v368, %v398
        %v436 = vmul.f32 %v369, %v398
        %v437 = vmul.f32 %v370, %v398
        %v438 = vmul.f32 %v371, %v398
        %v439 = vmul.f32 %v372, %v398
        %v440 = vmul.f32 %v373, %v398
        %v441 = vmul.f32 %v374, %v398
        %v442 = vmul.f32 %v375, %v398
        %v443 = vmul.f32 %v376, %v398
        %v444 = vmul.f32 %v377, %v398
        %v445 = vmul.f32 %v378, %v398
        %v446 = vmul.f32 %v379, %v398
        %v447 = vmul.f32 %v380, %v398
        %v448 = vmul.f32 %v381, %v398
        %v449 = vmul.f32 %v382, %v398
        %v450 = vmul.f32 %v383, %v398
        %v451 = vmul.f32 %v384, %v398
        %v452 = vmul.f32 %v385, %v398
        %v453 = vmul.f32 %v386, %v398
        %v454 = vmul.f32 %v387, %v398
        %v455 = vmul.f32 %v388, %v398
        %v456 = vmul.f32 %v389, %v398
        %v457 = vmul.f32 %v390, %v398
        %v458 = vmul.f32 %v391, %v398
        %v459 = vmul.f32 %v392, %v398
        %v460 = vmul.f32 %v393, %v398
        %v461 = vmul.f32 %v394, %v398
        %v462 = vmul.f32 %v395, %v398
        %v463 = vmul.f32 %v396, %v398
        %v465 = vperm.slane %v268, 0
        %v467 = vadd.f32 %v400, %v465
        %v468 = vadd.f32 %v401, %v465
        %v469 = vadd.f32 %v402, %v465
        %v470 = vadd.f32 %v403, %v465
        %v471 = vadd.f32 %v404, %v465
        %v472 = vadd.f32 %v405, %v465
        %v473 = vadd.f32 %v406, %v465
        %v474 = vadd.f32 %v407, %v465
        %v475 = vadd.f32 %v408, %v465
        %v476 = vadd.f32 %v409, %v465
        %v477 = vadd.f32 %v410, %v465
        %v478 = vadd.f32 %v411, %v465
        %v479 = vadd.f32 %v412, %v465
        %v480 = vadd.f32 %v413, %v465
        %v481 = vadd.f32 %v414, %v465
        %v482 = vadd.f32 %v415, %v465
        %v483 = vadd.f32 %v416, %v465
        %v484 = vadd.f32 %v417, %v465
        %v485 = vadd.f32 %v418, %v465
        %v486 = vadd.f32 %v419, %v465
        %v487 = vadd.f32 %v420, %v465
        %v488 = vadd.f32 %v421, %v465
        %v489 = vadd.f32 %v422, %v465
        %v490 = vadd.f32 %v423, %v465
        %v491 = vadd.f32 %v424, %v465
        %v492 = vadd.f32 %v425, %v465
        %v493 = vadd.f32 %v426, %v465
        %v494 = vadd.f32 %v427, %v465
        %v495 = vadd.f32 %v428, %v465
        %v496 = vadd.f32 %v429, %v465
        %v497 = vadd.f32 %v430, %v465
        %v498 = vadd.f32 %v431, %v465
        %v499 = vadd.f32 %v432, %v465
        %v500 = vadd.f32 %v433, %v465
        %v501 = vadd.f32 %v434, %v465
        %v502 = vadd.f32 %v435, %v465
        %v503 = vadd.f32 %v436, %v465
        %v504 = vadd.f32 %v437, %v465
        %v505 = vadd.f32 %v438, %v465
        %v506 = vadd.f32 %v439, %v465
        %v507 = vadd.f32 %v440, %v465
        %v508 = vadd.f32 %v441, %v465
        %v509 = vadd.f32 %v442, %v465
        %v510 = vadd.f32 %v443, %v465
        %v511 = vadd.f32 %v444, %v465
        %v512 = vadd.f32 %v445, %v465
        %v513 = vadd.f32 %v446, %v465
        %v514 = vadd.f32 %v447, %v465
        %v515 = vadd.f32 %v448, %v465
        %v516 = vadd.f32 %v449, %v465
        %v517 = vadd.f32 %v450, %v465
        %v518 = vadd.f32 %v451, %v465
        %v519 = vadd.f32 %v452, %v465
        %v520 = vadd.f32 %v453, %v465
        %v521 = vadd.f32 %v454, %v465
        %v522 = vadd.f32 %v455, %v465
        %v523 = vadd.f32 %v456, %v465
        %v524 = vadd.f32 %v457, %v465
        %v525 = vadd.f32 %v458, %v465
        %v526 = vadd.f32 %v459, %v465
        %v527 = vadd.f32 %v460, %v465
        %v528 = vadd.f32 %v461, %v465
        %v529 = vadd.f32 %v462, %v465
        %v530 = vadd.f32 %v463, %v465
        %v531 = vpack.c.bf16 %v467, %v467
        %v532 = vpack.c.bf16 %v468, %v468
        %v533 = vpack.c.bf16 %v469, %v469
        %v534 = vpack.c.bf16 %v470, %v470
        %v535 = vpack.c.bf16 %v471, %v471
        %v536 = vpack.c.bf16 %v472, %v472
        %v537 = vpack.c.bf16 %v473, %v473
        %v538 = vpack.c.bf16 %v474, %v474
        %v539 = vpack.c.bf16 %v475, %v475
        %v540 = vpack.c.bf16 %v476, %v476
        %v541 = vpack.c.bf16 %v477, %v477
        %v542 = vpack.c.bf16 %v478, %v478
        %v543 = vpack.c.bf16 %v479, %v479
        %v544 = vpack.c.bf16 %v480, %v480
        %v545 = vpack.c.bf16 %v481, %v481
        %v546 = vpack.c.bf16 %v482, %v482
        %v547 = vpack.c.bf16 %v483, %v483
        %v548 = vpack.c.bf16 %v484, %v484
        %v549 = vpack.c.bf16 %v485, %v485
        %v550 = vpack.c.bf16 %v486, %v486
        %v551 = vpack.c.bf16 %v487, %v487
        %v552 = vpack.c.bf16 %v488, %v488
        %v553 = vpack.c.bf16 %v489, %v489
        %v554 = vpack.c.bf16 %v490, %v490
        %v555 = vpack.c.bf16 %v491, %v491
        %v556 = vpack.c.bf16 %v492, %v492
        %v557 = vpack.c.bf16 %v493, %v493
        %v558 = vpack.c.bf16 %v494, %v494
        %v559 = vpack.c.bf16 %v495, %v495
        %v560 = vpack.c.bf16 %v496, %v496
        %v561 = vpack.c.bf16 %v497, %v497
        %v562 = vpack.c.bf16 %v498, %v498
        %v563 = vpack.c.bf16 %v499, %v499
        %v564 = vpack.c.bf16 %v500, %v500
        %v565 = vpack.c.bf16 %v501, %v501
        %v566 = vpack.c.bf16 %v502, %v502
        %v567 = vpack.c.bf16 %v503, %v503
        %v568 = vpack.c.bf16 %v504, %v504
        %v569 = vpack.c.bf16 %v505, %v505
        %v570 = vpack.c.bf16 %v506, %v506
        %v571 = vpack.c.bf16 %v507, %v507
        %v572 = vpack.c.bf16 %v508, %v508
        %v573 = vpack.c.bf16 %v509, %v509
        %v574 = vpack.c.bf16 %v510, %v510
        %v575 = vpack.c.bf16 %v511, %v511
        %v576 = vpack.c.bf16 %v512, %v512
        %v577 = vpack.c.bf16 %v513, %v513
        %v578 = vpack.c.bf16 %v514, %v514
        %v579 = vpack.c.bf16 %v515, %v515
        %v580 = vpack.c.bf16 %v516, %v516
        %v581 = vpack.c.bf16 %v517, %v517
        %v582 = vpack.c.bf16 %v518, %v518
        %v583 = vpack.c.bf16 %v519, %v519
        %v584 = vpack.c.bf16 %v520, %v520
        %v585 = vpack.c.bf16 %v521, %v521
        %v586 = vpack.c.bf16 %v522, %v522
        %v587 = vpack.c.bf16 %v523, %v523
        %v588 = vpack.c.bf16 %v524, %v524
        %v589 = vpack.c.bf16 %v525, %v525
        %v590 = vpack.c.bf16 %v526, %v526
        %v591 = vpack.c.bf16 %v527, %v527
        %v592 = vpack.c.bf16 %v528, %v528
        %v593 = vpack.c.bf16 %v529, %v529
        %v594 = vpack.c.bf16 %v530, %v530
        %595 = vst [vmem:[%s226] sm:$0xf] %v531
        %596 = vst [vmem:[%s226 + $0x4] sm:$0xf] %v532
        %597 = vst [vmem:[%s226 + $0x8] sm:$0xf] %v533
        %598 = vst [vmem:[%s226 + $0xc] sm:$0xf] %v534
        %599 = vst [vmem:[%s226 + $0x10] sm:$0xf] %v535
        %600 = vst [vmem:[%s226 + $0x14] sm:$0xf] %v536
        %601 = vst [vmem:[%s226 + $0x18] sm:$0xf] %v537
        %602 = vst [vmem:[%s226 + $0x1c] sm:$0xf] %v538
        %603 = vst [vmem:[%s226 + $0x20] sm:$0xf] %v539
        %604 = vst [vmem:[%s226 + $0x24] sm:$0xf] %v540
        %605 = vst [vmem:[%s226 + $0x28] sm:$0xf] %v541
        %606 = vst [vmem:[%s226 + $0x2c] sm:$0xf] %v542
        %607 = vst [vmem:[%s226 + $0x30] sm:$0xf] %v543
        %608 = vst [vmem:[%s226 + $0x34] sm:$0xf] %v544
        %609 = vst [vmem:[%s226 + $0x38] sm:$0xf] %v545
        %610 = vst [vmem:[%s226 + $0x3c] sm:$0xf] %v546
        %611 = vst [vmem:[%s226 + $0x40] sm:$0xf] %v547
        %612 = vst [vmem:[%s226 + $0x44] sm:$0xf] %v548
        %613 = vst [vmem:[%s226 + $0x48] sm:$0xf] %v549
        %614 = vst [vmem:[%s226 + $0x4c] sm:$0xf] %v550
        %615 = vst [vmem:[%s226 + $0x50] sm:$0xf] %v551
        %616 = vst [vmem:[%s226 + $0x54] sm:$0xf] %v552
        %617 = vst [vmem:[%s226 + $0x58] sm:$0xf] %v553
        %618 = vst [vmem:[%s226 + $0x5c] sm:$0xf] %v554
        %619 = vst [vmem:[%s226 + $0x60] sm:$0xf] %v555
        %620 = vst [vmem:[%s226 + $0x64] sm:$0xf] %v556
        %621 = vst [vmem:[%s226 + $0x68] sm:$0xf] %v557
        %622 = vst [vmem:[%s226 + $0x6c] sm:$0xf] %v558
        %623 = vst [vmem:[%s226 + $0x70] sm:$0xf] %v559
        %624 = vst [vmem:[%s226 + $0x74] sm:$0xf] %v560
        %625 = vst [vmem:[%s226 + $0x78] sm:$0xf] %v561
        %626 = vst [vmem:[%s226 + $0x7c] sm:$0xf] %v562
        %627 = vst [vmem:[%s226 + $0x80] sm:$0xf] %v563
        %628 = vst [vmem:[%s226 + $0x84] sm:$0xf] %v564
        %629 = vst [vmem:[%s226 + $0x88] sm:$0xf] %v565
        %630 = vst [vmem:[%s226 + $0x8c] sm:$0xf] %v566
        %631 = vst [vmem:[%s226 + $0x90] sm:$0xf] %v567
        %632 = vst [vmem:[%s226 + $0x94] sm:$0xf] %v568
        %633 = vst [vmem:[%s226 + $0x98] sm:$0xf] %v569
        %634 = vst [vmem:[%s226 + $0x9c] sm:$0xf] %v570
        %635 = vst [vmem:[%s226 + $0xa0] sm:$0xf] %v571
        %636 = vst [vmem:[%s226 + $0xa4] sm:$0xf] %v572
        %637 = vst [vmem:[%s226 + $0xa8] sm:$0xf] %v573
        %638 = vst [vmem:[%s226 + $0xac] sm:$0xf] %v574
        %639 = vst [vmem:[%s226 + $0xb0] sm:$0xf] %v575
        %640 = vst [vmem:[%s226 + $0xb4] sm:$0xf] %v576
        %641 = vst [vmem:[%s226 + $0xb8] sm:$0xf] %v577
        %642 = vst [vmem:[%s226 + $0xbc] sm:$0xf] %v578
        %643 = vst [vmem:[%s226 + $0xc0] sm:$0xf] %v579
        %644 = vst [vmem:[%s226 + $0xc4] sm:$0xf] %v580
        %645 = vst [vmem:[%s226 + $0xc8] sm:$0xf] %v581
        %646 = vst [vmem:[%s226 + $0xcc] sm:$0xf] %v582
        %647 = vst [vmem:[%s226 + $0xd0] sm:$0xf] %v583
        %648 = vst [vmem:[%s226 + $0xd4] sm:$0xf] %v584
        %649 = vst [vmem:[%s226 + $0xd8] sm:$0xf] %v585
        %650 = vst [vmem:[%s226 + $0xdc] sm:$0xf] %v586
        %651 = vst [vmem:[%s226 + $0xe0] sm:$0xf] %v587
        %652 = vst [vmem:[%s226 + $0xe4] sm:$0xf] %v588
        %653 = vst [vmem:[%s226 + $0xe8] sm:$0xf] %v589
        %654 = vst [vmem:[%s226 + $0xec] sm:$0xf] %v590
        %655 = vst [vmem:[%s226 + $0xf0] sm:$0xf] %v591
        %656 = vst [vmem:[%s226 + $0xf4] sm:$0xf] %v592
        %657 = vst [vmem:[%s226 + $0xf8] sm:$0xf] %v593
        %658 = vst [vmem:[%s226 + $0xfc] sm:$0xf] %v594
        %s659 = sand.u32 %s134, 1
        %s660 = sand.u32 %s134, 1
        %s661 = smul.addr %s660, 256
        %s662 = scalar_lea.vmem [#allocation2], %s661
        // Predicated region
        $region41: #{darts_stacked_cells_forward.33} parent=39 // pred_check
          %p663 = pneg %p144
        $region42: #{darts_stacked_cells_forward.33} parent=39 // pred_check_branch
          %665 = sbr.rel (%p663) target = $region44
        $region43: #{darts_stacked_cells_forward.33} parent=39 // pred_region
          %s666 = smul.u32 64, %s16
          %s667 = ssub.s32 100, %s666
          %p668 = scmp.lt.s32.totalorder %s667, 64
          %s669 = scalar_select %p668, %s667, 64
          %s670 = smul.u32 4, %s669
          %p671 = scmp.ne.s32.totalorder 0, %s670
          %s672 = smul.addr %s666, 4
          %s673 = scalar_lea.vmem %s5, %s672
          // Predicated region
          $region45: #{darts_stacked_cells_forward.33} parent=43 // pred_check
            %p674 = pneg %p671
          $region46: #{darts_stacked_cells_forward.33} parent=43 // pred_check_branch
            %676 = sbr.rel (%p674) target = $region48
          $region47: #{darts_stacked_cells_forward.33} parent=43 // pred_region
            // Predicated region
            $region49: #{darts_stacked_cells_forward.33} parent=47 // pred_check
              _
            $region50: #{darts_stacked_cells_forward.33} parent=47 // pred_check_branch
              %678 = sbr.rel target = $region52
            $region51: #{darts_stacked_cells_forward.33} parent=47 // pred_region
              // Predicated region
              $region71: #{darts_stacked_cells_forward.33} parent=51 // pred_check
                _
              $region72: #{darts_stacked_cells_forward.33} parent=51 // pred_check_branch
                %790 = sbr.rel (0) target = $region74
              $region73: #{darts_stacked_cells_forward.33} parent=51 // pred_region
                %s792 = ssub.s32 16, 1
                %s793 = sshrl.u32 %s669, 5
                // While loop
                $region75: #{darts_stacked_cells_forward.33} parent=73 // loop_pre_header
                  _
                $region76: #{darts_stacked_cells_forward.33} parent=73 // loop_header
                  %s795 = sphi 0, %s797
                  %p796 = scmp.ge.s32.totalorder %s795, %s793
                  %s800 = sphi 0, %s869
                  %s801 = sphi %s662, %s872
                  %s802 = sphi %s673, %s873
                $region77: #{darts_stacked_cells_forward.33} parent=73 // loop_header_branch
                  %799 = sbr.rel (%p796) target = $region81
                $region78: #{darts_stacked_cells_forward.33} parent=73 // loop_body
                  %v803 = vld [vmem:[%s801] sm:%s792]
                  %804 = vst [vmem:[%s802] sm:%s792] %v803
                  %v805 = vld [vmem:[%s801 + $0x4] sm:%s792]
                  %806 = vst [vmem:[%s802 + $0x4] sm:%s792] %v805
                  %v807 = vld [vmem:[%s801 + $0x8] sm:%s792]
                  %808 = vst [vmem:[%s802 + $0x8] sm:%s792] %v807
                  %v809 = vld [vmem:[%s801 + $0xc] sm:%s792]
                  %810 = vst [vmem:[%s802 + $0xc] sm:%s792] %v809
                  %v811 = vld [vmem:[%s801 + $0x10] sm:%s792]
                  %812 = vst [vmem:[%s802 + $0x10] sm:%s792] %v811
                  %v813 = vld [vmem:[%s801 + $0x14] sm:%s792]
                  %814 = vst [vmem:[%s802 + $0x14] sm:%s792] %v813
                  %v815 = vld [vmem:[%s801 + $0x18] sm:%s792]
                  %816 = vst [vmem:[%s802 + $0x18] sm:%s792] %v815
                  %v817 = vld [vmem:[%s801 + $0x1c] sm:%s792]
                  %818 = vst [vmem:[%s802 + $0x1c] sm:%s792] %v817
                  %v819 = vld [vmem:[%s801 + $0x20] sm:%s792]
                  %820 = vst [vmem:[%s802 + $0x20] sm:%s792] %v819
                  %v821 = vld [vmem:[%s801 + $0x24] sm:%s792]
                  %822 = vst [vmem:[%s802 + $0x24] sm:%s792] %v821
                  %v823 = vld [vmem:[%s801 + $0x28] sm:%s792]
                  %824 = vst [vmem:[%s802 + $0x28] sm:%s792] %v823
                  %v825 = vld [vmem:[%s801 + $0x2c] sm:%s792]
                  %826 = vst [vmem:[%s802 + $0x2c] sm:%s792] %v825
                  %v827 = vld [vmem:[%s801 + $0x30] sm:%s792]
                  %828 = vst [vmem:[%s802 + $0x30] sm:%s792] %v827
                  %v829 = vld [vmem:[%s801 + $0x34] sm:%s792]
                  %830 = vst [vmem:[%s802 + $0x34] sm:%s792] %v829
                  %v831 = vld [vmem:[%s801 + $0x38] sm:%s792]
                  %832 = vst [vmem:[%s802 + $0x38] sm:%s792] %v831
                  %v833 = vld [vmem:[%s801 + $0x3c] sm:%s792]
                  %834 = vst [vmem:[%s802 + $0x3c] sm:%s792] %v833
                  %v835 = vld [vmem:[%s801 + $0x40] sm:%s792]
                  %836 = vst [vmem:[%s802 + $0x40] sm:%s792] %v835
                  %v837 = vld [vmem:[%s801 + $0x44] sm:%s792]
                  %838 = vst [vmem:[%s802 + $0x44] sm:%s792] %v837
                  %v839 = vld [vmem:[%s801 + $0x48] sm:%s792]
                  %840 = vst [vmem:[%s802 + $0x48] sm:%s792] %v839
                  %v841 = vld [vmem:[%s801 + $0x4c] sm:%s792]
                  %842 = vst [vmem:[%s802 + $0x4c] sm:%s792] %v841
                  %v843 = vld [vmem:[%s801 + $0x50] sm:%s792]
                  %844 = vst [vmem:[%s802 + $0x50] sm:%s792] %v843
                  %v845 = vld [vmem:[%s801 + $0x54] sm:%s792]
                  %846 = vst [vmem:[%s802 + $0x54] sm:%s792] %v845
                  %v847 = vld [vmem:[%s801 + $0x58] sm:%s792]
                  %848 = vst [vmem:[%s802 + $0x58] sm:%s792] %v847
                  %v849 = vld [vmem:[%s801 + $0x5c] sm:%s792]
                  %850 = vst [vmem:[%s802 + $0x5c] sm:%s792] %v849
                  %v851 = vld [vmem:[%s801 + $0x60] sm:%s792]
                  %852 = vst [vmem:[%s802 + $0x60] sm:%s792] %v851
                  %v853 = vld [vmem:[%s801 + $0x64] sm:%s792]
                  %854 = vst [vmem:[%s802 + $0x64] sm:%s792] %v853
                  %v855 = vld [vmem:[%s801 + $0x68] sm:%s792]
                  %856 = vst [vmem:[%s802 + $0x68] sm:%s792] %v855
                  %v857 = vld [vmem:[%s801 + $0x6c] sm:%s792]
                  %858 = vst [vmem:[%s802 + $0x6c] sm:%s792] %v857
                  %v859 = vld [vmem:[%s801 + $0x70] sm:%s792]
                  %860 = vst [vmem:[%s802 + $0x70] sm:%s792] %v859
                  %v861 = vld [vmem:[%s801 + $0x74] sm:%s792]
                  %862 = vst [vmem:[%s802 + $0x74] sm:%s792] %v861
                  %v863 = vld [vmem:[%s801 + $0x78] sm:%s792]
                  %864 = vst [vmem:[%s802 + $0x78] sm:%s792] %v863
                  %v865 = vld [vmem:[%s801 + $0x7c] sm:%s792]
                  %866 = vst [vmem:[%s802 + $0x7c] sm:%s792] %v865
                  %s867 = sadd.s32 1, %s800
                  %p868 = scmp.ge.s32.totalorder %s867, %s793
                  %s869 = scalar_select %p868, 0, %s867
                  %s870 = smul.u32 %s869, 128
                  %s871 = smul.u32 %s869, 128
                  %s872 = scalar_lea.vmem %s662, %s870 [#allocation2]
                  %s873 = scalar_lea.vmem %s673, %s871
                $region79: #{darts_stacked_cells_forward.33} parent=73 // loop_footer
                  %s797 = sadd.s32 %s795, 1
                $region80: #{darts_stacked_cells_forward.33} parent=73 // loop_footer_branch
                  %794 = sbr.rel target = $region76
                $region81: #{darts_stacked_cells_forward.33} parent=73 // loop_exit
                  _
                %s874 = sshrl.u32 %s669, 5
                %s875 = sand.u32 %s669, 31
                %s876 = smul.u32 %s874, 32
                %s877 = smul.u32 4, %s876
                %s878 = scalar_lea.vmem %s662, %s877 [#allocation2]
                %s879 = smul.u32 4, %s876
                %s880 = scalar_lea.vmem %s673, %s879
                // While loop
                $region82: #{darts_stacked_cells_forward.33} parent=73 // loop_pre_header
                  _
                $region83: #{darts_stacked_cells_forward.33} parent=73 // loop_header
                  %s882 = sphi 0, %s884
                  %p883 = scmp.ge.s32.totalorder %s882, %s875
                  %s887 = sphi 0, %s894
                  %s888 = sphi %s878, %s897
                  %s889 = sphi %s880, %s898
                $region84: #{darts_stacked_cells_forward.33} parent=73 // loop_header_branch
                  %886 = sbr.rel (%p883) target = $region88
                $region85: #{darts_stacked_cells_forward.33} parent=73 // loop_body
                  %v890 = vld [vmem:[%s888] sm:%s792]
                  %891 = vst [vmem:[%s889] sm:%s792] %v890
                  %s892 = sadd.s32 1, %s887
                  %p893 = scmp.ge.s32.totalorder %s892, %s875
                  %s894 = scalar_select %p893, 0, %s892
                  %s895 = smul.u32 %s894, 4
                  %s896 = smul.u32 %s894, 4
                  %s897 = scalar_lea.vmem %s878, %s895 [#allocation2]
                  %s898 = scalar_lea.vmem %s880, %s896
                $region86: #{darts_stacked_cells_forward.33} parent=73 // loop_footer
                  %s884 = sadd.s32 %s882, 1
                $region87: #{darts_stacked_cells_forward.33} parent=73 // loop_footer_branch
                  %881 = sbr.rel target = $region83
                $region88: #{darts_stacked_cells_forward.33} parent=73 // loop_exit
                  _
              $region74: #{darts_stacked_cells_forward.33} parent=51 // pred_fallthru
                _
            $region52: #{darts_stacked_cells_forward.33} parent=47 // pred_fallthru
              _
            // Predicated region
            $region53: #{darts_stacked_cells_forward.33} parent=47 // pred_check
              _
            $region54: #{darts_stacked_cells_forward.33} parent=47 // pred_check_branch
              %680 = sbr.rel (0) target = $region56
            $region55: #{darts_stacked_cells_forward.33} parent=47 // pred_region
              %s682 = ssub.s32 16, 1
              %s683 = sshrl.u32 %s669, 5
              // While loop
              $region57: #{darts_stacked_cells_forward.33} parent=55 // loop_pre_header
                _
              $region58: #{darts_stacked_cells_forward.33} parent=55 // loop_header
                %s685 = sphi 0, %s687
                %p686 = scmp.ge.s32.totalorder %s685, %s683
                %s690 = sphi 0, %s759
                %s691 = sphi %s662, %s762
                %s692 = sphi %s673, %s763
              $region59: #{darts_stacked_cells_forward.33} parent=55 // loop_header_branch
                %689 = sbr.rel (%p686) target = $region63
              $region60: #{darts_stacked_cells_forward.33} parent=55 // loop_body
                %v693 = vld [vmem:[%s691] sm:%s682]
                %694 = vst [vmem:[%s692] sm:%s682] %v693
                %v695 = vld [vmem:[%s691 + $0x4] sm:%s682]
                %696 = vst [vmem:[%s692 + $0x4] sm:%s682] %v695
                %v697 = vld [vmem:[%s691 + $0x8] sm:%s682]
                %698 = vst [vmem:[%s692 + $0x8] sm:%s682] %v697
                %v699 = vld [vmem:[%s691 + $0xc] sm:%s682]
                %700 = vst [vmem:[%s692 + $0xc] sm:%s682] %v699
                %v701 = vld [vmem:[%s691 + $0x10] sm:%s682]
                %702 = vst [vmem:[%s692 + $0x10] sm:%s682] %v701
                %v703 = vld [vmem:[%s691 + $0x14] sm:%s682]
                %704 = vst [vmem:[%s692 + $0x14] sm:%s682] %v703
                %v705 = vld [vmem:[%s691 + $0x18] sm:%s682]
                %706 = vst [vmem:[%s692 + $0x18] sm:%s682] %v705
                %v707 = vld [vmem:[%s691 + $0x1c] sm:%s682]
                %708 = vst [vmem:[%s692 + $0x1c] sm:%s682] %v707
                %v709 = vld [vmem:[%s691 + $0x20] sm:%s682]
                %710 = vst [vmem:[%s692 + $0x20] sm:%s682] %v709
                %v711 = vld [vmem:[%s691 + $0x24] sm:%s682]
                %712 = vst [vmem:[%s692 + $0x24] sm:%s682] %v711
                %v713 = vld [vmem:[%s691 + $0x28] sm:%s682]
                %714 = vst [vmem:[%s692 + $0x28] sm:%s682] %v713
                %v715 = vld [vmem:[%s691 + $0x2c] sm:%s682]
                %716 = vst [vmem:[%s692 + $0x2c] sm:%s682] %v715
                %v717 = vld [vmem:[%s691 + $0x30] sm:%s682]
                %718 = vst [vmem:[%s692 + $0x30] sm:%s682] %v717
                %v719 = vld [vmem:[%s691 + $0x34] sm:%s682]
                %720 = vst [vmem:[%s692 + $0x34] sm:%s682] %v719
                %v721 = vld [vmem:[%s691 + $0x38] sm:%s682]
                %722 = vst [vmem:[%s692 + $0x38] sm:%s682] %v721
                %v723 = vld [vmem:[%s691 + $0x3c] sm:%s682]
                %724 = vst [vmem:[%s692 + $0x3c] sm:%s682] %v723
                %v725 = vld [vmem:[%s691 + $0x40] sm:%s682]
                %726 = vst [vmem:[%s692 + $0x40] sm:%s682] %v725
                %v727 = vld [vmem:[%s691 + $0x44] sm:%s682]
                %728 = vst [vmem:[%s692 + $0x44] sm:%s682] %v727
                %v729 = vld [vmem:[%s691 + $0x48] sm:%s682]
                %730 = vst [vmem:[%s692 + $0x48] sm:%s682] %v729
                %v731 = vld [vmem:[%s691 + $0x4c] sm:%s682]
                %732 = vst [vmem:[%s692 + $0x4c] sm:%s682] %v731
                %v733 = vld [vmem:[%s691 + $0x50] sm:%s682]
                %734 = vst [vmem:[%s692 + $0x50] sm:%s682] %v733
                %v735 = vld [vmem:[%s691 + $0x54] sm:%s682]
                %736 = vst [vmem:[%s692 + $0x54] sm:%s682] %v735
                %v737 = vld [vmem:[%s691 + $0x58] sm:%s682]
                %738 = vst [vmem:[%s692 + $0x58] sm:%s682] %v737
                %v739 = vld [vmem:[%s691 + $0x5c] sm:%s682]
                %740 = vst [vmem:[%s692 + $0x5c] sm:%s682] %v739
                %v741 = vld [vmem:[%s691 + $0x60] sm:%s682]
                %742 = vst [vmem:[%s692 + $0x60] sm:%s682] %v741
                %v743 = vld [vmem:[%s691 + $0x64] sm:%s682]
                %744 = vst [vmem:[%s692 + $0x64] sm:%s682] %v743
                %v745 = vld [vmem:[%s691 + $0x68] sm:%s682]
                %746 = vst [vmem:[%s692 + $0x68] sm:%s682] %v745
                %v747 = vld [vmem:[%s691 + $0x6c] sm:%s682]
                %748 = vst [vmem:[%s692 + $0x6c] sm:%s682] %v747
                %v749 = vld [vmem:[%s691 + $0x70] sm:%s682]
                %750 = vst [vmem:[%s692 + $0x70] sm:%s682] %v749
                %v751 = vld [vmem:[%s691 + $0x74] sm:%s682]
                %752 = vst [vmem:[%s692 + $0x74] sm:%s682] %v751
                %v753 = vld [vmem:[%s691 + $0x78] sm:%s682]
                %754 = vst [vmem:[%s692 + $0x78] sm:%s682] %v753
                %v755 = vld [vmem:[%s691 + $0x7c] sm:%s682]
                %756 = vst [vmem:[%s692 + $0x7c] sm:%s682] %v755
                %s757 = sadd.s32 1, %s690
                %p758 = scmp.ge.s32.totalorder %s757, %s683
                %s759 = scalar_select %p758, 0, %s757
                %s760 = smul.u32 %s759, 128
                %s761 = smul.u32 %s759, 128
                %s762 = scalar_lea.vmem %s662, %s760 [#allocation2]
                %s763 = scalar_lea.vmem %s673, %s761
              $region61: #{darts_stacked_cells_forward.33} parent=55 // loop_footer
                %s687 = sadd.s32 %s685, 1
              $region62: #{darts_stacked_cells_forward.33} parent=55 // loop_footer_branch
                %684 = sbr.rel target = $region58
              $region63: #{darts_stacked_cells_forward.33} parent=55 // loop_exit
                _
              %s764 = sshrl.u32 %s669, 5
              %s765 = sand.u32 %s669, 31
              %s766 = smul.u32 %s764, 32
              %s767 = smul.u32 4, %s766
              %s768 = scalar_lea.vmem %s662, %s767 [#allocation2]
              %s769 = smul.u32 4, %s766
              %s770 = scalar_lea.vmem %s673, %s769
              // While loop
              $region64: #{darts_stacked_cells_forward.33} parent=55 // loop_pre_header
                _
              $region65: #{darts_stacked_cells_forward.33} parent=55 // loop_header
                %s772 = sphi 0, %s774
                %p773 = scmp.ge.s32.totalorder %s772, %s765
                %s777 = sphi 0, %s784
                %s778 = sphi %s768, %s787
                %s779 = sphi %s770, %s788
              $region66: #{darts_stacked_cells_forward.33} parent=55 // loop_header_branch
                %776 = sbr.rel (%p773) target = $region70
              $region67: #{darts_stacked_cells_forward.33} parent=55 // loop_body
                %v780 = vld [vmem:[%s778] sm:%s682]
                %781 = vst [vmem:[%s779] sm:%s682] %v780
                %s782 = sadd.s32 1, %s777
                %p783 = scmp.ge.s32.totalorder %s782, %s765
                %s784 = scalar_select %p783, 0, %s782
                %s785 = smul.u32 %s784, 4
                %s786 = smul.u32 %s784, 4
                %s787 = scalar_lea.vmem %s768, %s785 [#allocation2]
                %s788 = scalar_lea.vmem %s770, %s786
              $region68: #{darts_stacked_cells_forward.33} parent=55 // loop_footer
                %s774 = sadd.s32 %s772, 1
              $region69: #{darts_stacked_cells_forward.33} parent=55 // loop_footer_branch
                %771 = sbr.rel target = $region65
              $region70: #{darts_stacked_cells_forward.33} parent=55 // loop_exit
                _
            $region56: #{darts_stacked_cells_forward.33} parent=47 // pred_fallthru
              _
          $region48: #{darts_stacked_cells_forward.33} parent=43 // pred_fallthru
            _
          %899 = vnop
        $region44: #{darts_stacked_cells_forward.33} parent=39 // pred_fallthru
          _
      $region40: #{darts_stacked_cells_forward.33} parent=5 // pred_fallthru
        _
      %p900 = scmp.le.s32.totalorder 2, %s11
      // Predicated region
      $region89: #{darts_stacked_cells_forward.33} parent=5 // pred_check
        %p901 = pneg %p900
      $region90: #{darts_stacked_cells_forward.33} parent=5 // pred_check_branch
        %903 = sbr.rel (%p901) target = $region92
      $region91: #{darts_stacked_cells_forward.33} parent=5 // pred_region
        %s904 = ssub.s32 %s11, 2
        // Predicated region
        $region93: #{darts_stacked_cells_forward.33} parent=91 // pred_check
          %p905 = pneg %p150
        $region94: #{darts_stacked_cells_forward.33} parent=91 // pred_check_branch
          %907 = sbr.rel (%p905) target = $region96
        $region95: #{darts_stacked_cells_forward.33} parent=91 // pred_region
          %s908 = sand.u32 %s135, 1
          %s909 = sand.u32 %s135, 1
          %s910 = smul.addr %s909, 256
          %s911 = scalar_lea.vmem [#allocation2], %s910
        $region96: #{darts_stacked_cells_forward.33} parent=91 // pred_fallthru
          _
      $region92: #{darts_stacked_cells_forward.33} parent=5 // pred_fallthru
        _
    $region6: #{darts_stacked_cells_forward.33} parent=1 // loop_footer
      %s15 = sadd.s32 1, %s11
    $region7: #{darts_stacked_cells_forward.33} parent=1 // loop_footer_branch
      %10 = sbr.rel target = $region3
    $region8: #{darts_stacked_cells_forward.33} parent=1 // loop_exit
      _

// kernel: darts_stacked_cells_forward.32
$region0: #{darts_stacked_cells_forward.32}
  #allocation0 [shape = 'u32[]', space=smem, size = 0x4, offset = 0x4, fixed_abs, tag = 'smem constant byte address 0x4 - core index']
  #allocation1 [shape = 'u32[72,128]{1,0:T(1,128)}', space=vmem, size = 0x9000, scoped, tag = 'internal scratch']
  %s0 = inlined_call_operand.vmem [shape: bf16[800,36], index: 0, kind: input, shape index: {}]
  %s1 = inlined_call_operand.vmem [shape: bf16[36,128], index: 1, kind: input, shape index: {}]
  %s2 = inlined_call_operand.vmem [shape: bf16[800,128], index: 2, kind: output, shape index: {0}]
  %s3 = inlined_call_operand.vmem [shape: f32[2,8,128], index: 3, kind: output, shape index: {1}]
  %s4 = inlined_call_operand.vmem [shape: f32[2,8,128], index: 4, kind: output, shape index: {2}]
  %5 = xla_tuple %s2, %s3, %s4
  %s6 = sld [smem:[#allocation0]]
  $region101: #{darts_stacked_cells_forward.32} parent=0
    _
  %s8 = ssub.s32 1, %s6
  %s9 = scalar_select 0, %s8, %s6
  $region1: #{darts_stacked_cells_forward.32} parent=0
    #allocation2 [shape = 'u8[262144]{0}', space=vmem, size = 0x40000, scoped, tag = 'output window, operand 0']
    loop: start=0, step=1, limit=4
    $region2: #{darts_stacked_cells_forward.32} parent=1 // loop_pre_header
      _
    $region3: #{darts_stacked_cells_forward.32} parent=1 // loop_header
      %s11 = sphi 0, %s15
      %p12 = scmp.ge.s32.totalorder %s11, 4
      %s21 = sphi 0, %s23
      %s24 = sphi 0, %s21
      %s25 = sphi 0, %s24
      %s41 = sphi 0, %s25
      %s45 = sphi 0, %s45
      %s47 = sphi 0, %s45
      %s48 = sphi 0, %s47
      %s62 = sphi 0, %s48
      %s68 = sphi 0, %s70
      %s71 = sphi 0, %s68
      %s72 = sphi 0, %s71
      %s88 = sphi 0, %s72
      %s94 = sphi 0, %s96
      %s97 = sphi 0, %s94
      %s98 = sphi 0, %s97
      %s114 = sphi 0, %s98
      %s120 = sphi 0, %s122
      %s123 = sphi 0, %s120
      %s124 = sphi 0, %s123
      %s140 = sphi 0, %s124
    $region4: #{darts_stacked_cells_forward.32} parent=1 // loop_header_branch
      %14 = sbr.rel (%p12) target = $region8
    $region5: #{darts_stacked_cells_forward.32} parent=1 // loop_body
      %s16 = ssub.s32 %s11, 1
      %s17 = ssub.s32 %s11, 2
      %s18 = sadd.s32 %s11, 1
      %s19 = ssub.s32 %s11, %s18
      %p20 = scmp.eq.s32.totalorder %s19, 0
      %s22 = sadd.s32 %s21, 1
      %s23 = scalar_select %p20, %s21, %s22
      %p26 = pneg %p20
      %p27 = scmp.eq.s32.totalorder %s11, 1
      %p28 = por %p26, %p27
      %p29 = scmp.ne.s32.totalorder %s21, %s24
      %p30 = scmp.eq.s32.totalorder %s11, 0
      %p31 = por %p29, %p30
      %p32 = scmp.ne.s32.totalorder %s21, %s24
      %p33 = scmp.eq.s32.totalorder %s16, 1
      %p34 = por %p32, %p33
      %p35 = scmp.ne.s32.totalorder %s24, %s25
      %p36 = scmp.eq.s32.totalorder %s16, 0
      %p37 = por %p35, %p36
      %p38 = scmp.ne.s32.totalorder %s24, %s25
      %p39 = scmp.eq.s32.totalorder %s17, 1
      %p40 = por %p38, %p39
      %p42 = scmp.ne.s32.totalorder %s25, %s41
      %p43 = scmp.eq.s32.totalorder %s17, 0
      %p44 = por %p42, %p43
      %s46 = sadd.s32 %s45, 1
      %p49 = scmp.eq.s32.totalorder %s11, 1
      %p50 = scmp.ne.s32.totalorder %s45, %s47
      %p51 = scmp.eq.s32.totalorder %s11, 0
      %p52 = por %p50, %p51
      %p53 = scmp.ne.s32.totalorder %s45, %s47
      %p54 = scmp.eq.s32.totalorder %s16, 1
      %p55 = por %p53, %p54
      %p56 = scmp.ne.s32.totalorder %s47, %s48
      %p57 = scmp.eq.s32.totalorder %s16, 0
      %p58 = por %p56, %p57
      %p59 = scmp.ne.s32.totalorder %s47, %s48
      %p60 = scmp.eq.s32.totalorder %s17, 1
      %p61 = por %p59, %p60
      %p63 = scmp.ne.s32.totalorder %s48, %s62
      %p64 = scmp.eq.s32.totalorder %s17, 0
      %p65 = por %p63, %p64
      %s66 = ssub.s32 %s11, %s18
      %p67 = scmp.eq.s32.totalorder %s66, 0
      %s69 = sadd.s32 %s68, 1
      %s70 = scalar_select %p67, %s68, %s69
      %p73 = pneg %p67
      %p74 = scmp.eq.s32.totalorder %s11, 1
      %p75 = por %p73, %p74
      %p76 = scmp.ne.s32.totalorder %s68, %s71
      %p77 = scmp.eq.s32.totalorder %s11, 0
      %p78 = por %p76, %p77
      %p79 = scmp.ne.s32.totalorder %s68, %s71
      %p80 = scmp.eq.s32.totalorder %s16, 1
      %p81 = por %p79, %p80
      %p82 = scmp.ne.s32.totalorder %s71, %s72
      %p83 = scmp.eq.s32.totalorder %s16, 0
      %p84 = por %p82, %p83
      %p85 = scmp.ne.s32.totalorder %s71, %s72
      %p86 = scmp.eq.s32.totalorder %s17, 1
      %p87 = por %p85, %p86
      %p89 = scmp.ne.s32.totalorder %s72, %s88
      %p90 = scmp.eq.s32.totalorder %s17, 0
      %p91 = por %p89, %p90
      %s92 = ssub.s32 %s11, %s18
      %p93 = scmp.eq.s32.totalorder %s92, 0
      %s95 = sadd.s32 %s94, 1
      %s96 = scalar_select %p93, %s94, %s95
      %p99 = pneg %p93
      %p100 = scmp.eq.s32.totalorder %s11, 1
      %p101 = por %p99, %p100
      %p102 = scmp.ne.s32.totalorder %s94, %s97
      %p103 = scmp.eq.s32.totalorder %s11, 0
      %p104 = por %p102, %p103
      %p105 = scmp.ne.s32.totalorder %s94, %s97
      %p106 = scmp.eq.s32.totalorder %s16, 1
      %p107 = por %p105, %p106
      %p108 = scmp.ne.s32.totalorder %s97, %s98
      %p109 = scmp.eq.s32.totalorder %s16, 0
      %p110 = por %p108, %p109
      %p111 = scmp.ne.s32.totalorder %s97, %s98
      %p112 = scmp.eq.s32.totalorder %s17, 1
      %p113 = por %p111, %p112
      %p115 = scmp.ne.s32.totalorder %s98, %s114
      %p116 = scmp.eq.s32.totalorder %s17, 0
      %p117 = por %p115, %p116
      %s118 = ssub.s32 %s11, %s18
      %p119 = scmp.eq.s32.totalorder %s118, 0
      %s121 = sadd.s32 %s120, 1
      %s122 = scalar_select %p119, %s120, %s121
      %p125 = pneg %p119
      %p126 = scmp.eq.s32.totalorder %s11, 1
      %p127 = por %p125, %p126
      %p128 = scmp.ne.s32.totalorder %s120, %s123
      %p129 = scmp.eq.s32.totalorder %s11, 0
      %p130 = por %p128, %p129
      %p131 = scmp.ne.s32.totalorder %s120, %s123
      %p132 = scmp.eq.s32.totalorder %s16, 1
      %p133 = por %p131, %p132
      %p134 = scmp.ne.s32.totalorder %s123, %s124
      %p135 = scmp.eq.s32.totalorder %s16, 0
      %p136 = por %p134, %p135
      %p137 = scmp.ne.s32.totalorder %s123, %s124
      %p138 = scmp.eq.s32.totalorder %s17, 1
      %p139 = por %p137, %p138
      %p141 = scmp.ne.s32.totalorder %s124, %s140
      %p142 = scmp.eq.s32.totalorder %s17, 0
      %p143 = por %p141, %p142
      %p144 = scmp.le.s32.totalorder 1, %s11
      %p145 = scmp.lt.s32.totalorder %s11, 3
      %p146 = pnand %p144, %p145
      %p147 = pneg %p146
      // Predicated region
      $region9: #{darts_stacked_cells_forward.32} parent=5 // pred_check
        _
      $region10: #{darts_stacked_cells_forward.32} parent=5 // pred_check_branch
        %149 = sbr.rel (%p146) target = $region12
      $region11: #{darts_stacked_cells_forward.32} parent=5 // pred_region
        %s150 = ssub.s32 %s11, 1
        // Predicated region
        $region13: #{darts_stacked_cells_forward.32} parent=11 // pred_check
          %p151 = pneg %p58
        $region14: #{darts_stacked_cells_forward.32} parent=11 // pred_check_branch
          %153 = sbr.rel (%p151) target = $region16
        $region15: #{darts_stacked_cells_forward.32} parent=11 // pred_region
          _
        $region16: #{darts_stacked_cells_forward.32} parent=11 // pred_fallthru
          _
      $region12: #{darts_stacked_cells_forward.32} parent=5 // pred_fallthru
        _
      %p154 = scmp.lt.s32.totalorder %s11, 2
      // Predicated region
      $region17: #{darts_stacked_cells_forward.32} parent=5 // pred_check
        %p155 = pneg %p154
      $region18: #{darts_stacked_cells_forward.32} parent=5 // pred_check_branch
        %157 = sbr.rel (%p155) target = $region20
      $region19: #{darts_stacked_cells_forward.32} parent=5 // pred_region
        // Predicated region
        $region21: #{darts_stacked_cells_forward.32} parent=19 // pred_check
          %p158 = pneg %p31
        $region22: #{darts_stacked_cells_forward.32} parent=19 // pred_check_branch
          %160 = sbr.rel (%p158) target = $region24
        $region23: #{darts_stacked_cells_forward.32} parent=19 // pred_region
          %s161 = smul.u32 64, %s11
          %s162 = ssub.s32 100, %s161
          %p163 = scmp.lt.s32.totalorder %s162, 64
          %s164 = scalar_select %p163, %s162, 64
          %s165 = smul.u32 4, %s164
          %p166 = scmp.lt.s32.totalorder %s161, 99
          %s167 = scalar_select %p166, %s161, 99
          %s168 = smul.addr %s167, 4
          %s169 = scalar_lea.vmem %s0, %s168
          %s170 = smul.u32 64, %s11
          %s171 = ssub.s32 100, %s170
          %p172 = scmp.lt.s32.totalorder %s171, 64
          %s173 = scalar_select %p172, %s171, 64
          %s174 = smul.u32 4, %s173
        $region24: #{darts_stacked_cells_forward.32} parent=19 // pred_fallthru
          _
      $region20: #{darts_stacked_cells_forward.32} parent=5 // pred_fallthru
        _
      %p175 = scmp.le.s32.totalorder 1, %s11
      %p176 = scmp.lt.s32.totalorder %s11, 3
      %p177 = pnand %p175, %p176
      %p178 = pneg %p177
      // Predicated region
      $region25: #{darts_stacked_cells_forward.32} parent=5 // pred_check
        _
      $region26: #{darts_stacked_cells_forward.32} parent=5 // pred_check_branch
        %180 = sbr.rel (%p177) target = $region28
      $region27: #{darts_stacked_cells_forward.32} parent=5 // pred_region
        %s181 = ssub.s32 %s11, 1
        %s182 = smul.u32 64, %s16
        %s183 = ssub.s32 100, %s182
        %p184 = scmp.lt.s32.totalorder %s183, 64
        %s185 = scalar_select %p184, %s183, 64
        %s186 = smul.u32 4, %s185
        %p187 = scmp.lt.s32.totalorder %s182, 99
        %s188 = scalar_select %p187, %s182, 99
        %s189 = smul.addr %s188, 4
        %s190 = scalar_lea.vmem %s0, %s189
        %p191 = pneg %p37
        %p192 = pneg %p34
        %p193 = pneg %p58
        %p194 = pneg %p55
        %p195 = pneg %p84
        %p196 = pneg %p81
        %s197 = sand.u32 %s71, 1
        %s198 = sand.u32 %s71, 1
        %s199 = smul.addr %s198, 256
        %s200 = scalar_lea.vmem [#allocation2], %s199
        %p201 = pneg %p110
        %p202 = pneg %p107
        %p203 = scmp.lt.s32.totalorder %s16, 1
        %s204 = scalar_select %p203, %s16, 1
        %s205 = smul.addr %s204, 8
        %s206 = scalar_lea.vmem %s3, %s205
        %p207 = pneg %p136
        %p208 = pneg %p133
        %p209 = scmp.lt.s32.totalorder %s16, 1
        %s210 = scalar_select %p209, %s16, 1
        %s211 = smul.addr %s210, 8
        %s212 = scalar_lea.vmem %s4, %s211
        %s213 = smul.u32 64, %s16
        %s214 = ssub.s32 100, %s213
        %p215 = scmp.lt.s32.totalorder %s214, 64
        %s216 = scalar_select %p215, %s214, 64
        %s217 = smul.u32 4, %s216
        %p218 = scmp.lt.s32.totalorder %s213, 99
        %s219 = scalar_select %p218, %s213, 99
        %s220 = smul.addr %s219, 4
        %s221 = scalar_lea.vmem %s0, %s220
        %s222 = smul.u32 64, %s16
        %s223 = ssub.s32 100, %s222
        %p224 = scmp.lt.s32.totalorder %s223, 64
        %s225 = scalar_select %p224, %s223, 64
        %s226 = smul.u32 4, %s225
        %s227 = smul.u32 64, %s16
        %s228 = ssub.s32 100, %s227
        %p229 = scmp.lt.s32.totalorder %s228, 64
        %s230 = scalar_select %p229, %s228, 64
        %s231 = smul.u32 4, %s230
        %p232 = scmp.lt.s32.totalorder %s16, 1
        %s233 = scalar_select %p232, %s16, 1
        %s234 = smul.addr %s233, 8
        %s235 = scalar_lea.vmem %s3, %s234
        %p236 = scmp.lt.s32.totalorder %s16, 1
        %s237 = scalar_select %p236, %s16, 1
        %s238 = smul.addr %s237, 8
        %s239 = scalar_lea.vmem %s4, %s238
        %v241 = vld [vmem:[%s221] sm:$0xf]
        %v242 = vld [vmem:[%s221 + $0x4] sm:$0xf]
        %v243 = vld [vmem:[%s221 + $0x8] sm:$0xf]
        %v244 = vld [vmem:[%s221 + $0xc] sm:$0xf]
        %v245 = vld [vmem:[%s221 + $0x10] sm:$0xf]
        %v246 = vld [vmem:[%s221 + $0x14] sm:$0xf]
        %v247 = vld [vmem:[%s221 + $0x18] sm:$0xf]
        %v248 = vld [vmem:[%s221 + $0x1c] sm:$0xf]
        %v249 = vld [vmem:[%s221 + $0x20] sm:$0xf]
        %v250 = vld [vmem:[%s221 + $0x24] sm:$0xf]
        %v251 = vld [vmem:[%s221 + $0x28] sm:$0xf]
        %v252 = vld [vmem:[%s221 + $0x2c] sm:$0xf]
        %v253 = vld [vmem:[%s221 + $0x30] sm:$0xf]
        %v254 = vld [vmem:[%s221 + $0x34] sm:$0xf]
        %v255 = vld [vmem:[%s221 + $0x38] sm:$0xf]
        %v256 = vld [vmem:[%s221 + $0x3c] sm:$0xf]
        %v257 = vld [vmem:[%s221 + $0x40] sm:$0xf]
        %v258 = vld [vmem:[%s221 + $0x44] sm:$0xf]
        %v259 = vld [vmem:[%s221 + $0x48] sm:$0xf]
        %v260 = vld [vmem:[%s221 + $0x4c] sm:$0xf]
        %v261 = vld [vmem:[%s221 + $0x50] sm:$0xf]
        %v262 = vld [vmem:[%s221 + $0x54] sm:$0xf]
        %v263 = vld [vmem:[%s221 + $0x58] sm:$0xf]
        %v264 = vld [vmem:[%s221 + $0x5c] sm:$0xf]
        %v265 = vld [vmem:[%s221 + $0x60] sm:$0xf]
        %v266 = vld [vmem:[%s221 + $0x64] sm:$0xf]
        %v267 = vld [vmem:[%s221 + $0x68] sm:$0xf]
        %v268 = vld [vmem:[%s221 + $0x6c] sm:$0xf]
        %v269 = vld [vmem:[%s221 + $0x70] sm:$0xf]
        %v270 = vld [vmem:[%s221 + $0x74] sm:$0xf]
        %v271 = vld [vmem:[%s221 + $0x78] sm:$0xf]
        %v272 = vld [vmem:[%s221 + $0x7c] sm:$0xf]
        %v273 = vld [vmem:[%s221 + $0x80] sm:$0xf]
        %v274 = vld [vmem:[%s221 + $0x84] sm:$0xf]
        %v275 = vld [vmem:[%s221 + $0x88] sm:$0xf]
        %v276 = vld [vmem:[%s221 + $0x8c] sm:$0xf]
        %v277 = vld [vmem:[%s221 + $0x90] sm:$0xf]
        %v278 = vld [vmem:[%s221 + $0x94] sm:$0xf]
        %v279 = vld [vmem:[%s221 + $0x98] sm:$0xf]
        %v280 = vld [vmem:[%s221 + $0x9c] sm:$0xf]
        %v281 = vld [vmem:[%s221 + $0xa0] sm:$0xf]
        %v282 = vld [vmem:[%s221 + $0xa4] sm:$0xf]
        %v283 = vld [vmem:[%s221 + $0xa8] sm:$0xf]
        %v284 = vld [vmem:[%s221 + $0xac] sm:$0xf]
        %v285 = vld [vmem:[%s221 + $0xb0] sm:$0xf]
        %v286 = vld [vmem:[%s221 + $0xb4] sm:$0xf]
        %v287 = vld [vmem:[%s221 + $0xb8] sm:$0xf]
        %v288 = vld [vmem:[%s221 + $0xbc] sm:$0xf]
        %v289 = vld [vmem:[%s221 + $0xc0] sm:$0xf]
        %v290 = vld [vmem:[%s221 + $0xc4] sm:$0xf]
        %v291 = vld [vmem:[%s221 + $0xc8] sm:$0xf]
        %v292 = vld [vmem:[%s221 + $0xcc] sm:$0xf]
        %v293 = vld [vmem:[%s221 + $0xd0] sm:$0xf]
        %v294 = vld [vmem:[%s221 + $0xd4] sm:$0xf]
        %v295 = vld [vmem:[%s221 + $0xd8] sm:$0xf]
        %v296 = vld [vmem:[%s221 + $0xdc] sm:$0xf]
        %v297 = vld [vmem:[%s221 + $0xe0] sm:$0xf]
        %v298 = vld [vmem:[%s221 + $0xe4] sm:$0xf]
        %v299 = vld [vmem:[%s221 + $0xe8] sm:$0xf]
        %v300 = vld [vmem:[%s221 + $0xec] sm:$0xf]
        %v301 = vld [vmem:[%s221 + $0xf0] sm:$0xf]
        %v302 = vld [vmem:[%s221 + $0xf4] sm:$0xf]
        %v303 = vld [vmem:[%s221 + $0xf8] sm:$0xf]
        %v304 = vld [vmem:[%s221 + $0xfc] sm:$0xf]
        %v305 = vld [vmem:[%s1] sm:$0xf]
        %v306 = vld [vmem:[%s1 + $0x4] sm:$0xf]
        %v307 = vld [vmem:[%s1 + $0x8] sm:$0xf]
        %v308 = vld [vmem:[%s1 + $0xc] sm:$0xf]
        %v309 = vld [vmem:[%s1 + $0x10] sm:$0x3]
        %v374 = vunpack.c.l.b16 %v241
        %v375 = vunpack.c.l.b16 %v242
        %v376 = vunpack.c.l.b16 %v243
        %v377 = vunpack.c.l.b16 %v244
        %v378 = vunpack.c.l.b16 %v245
        %v379 = vunpack.c.l.b16 %v246
        %v380 = vunpack.c.l.b16 %v247
        %v381 = vunpack.c.l.b16 %v248
        %v382 = vunpack.c.l.b16 %v249
        %v383 = vunpack.c.l.b16 %v250
        %v384 = vunpack.c.l.b16 %v251
        %v385 = vunpack.c.l.b16 %v252
        %v386 = vunpack.c.l.b16 %v253
        %v387 = vunpack.c.l.b16 %v254
        %v388 = vunpack.c.l.b16 %v255
        %v389 = vunpack.c.l.b16 %v256
        %v390 = vunpack.c.l.b16 %v257
        %v391 = vunpack.c.l.b16 %v258
        %v392 = vunpack.c.l.b16 %v259
        %v393 = vunpack.c.l.b16 %v260
        %v394 = vunpack.c.l.b16 %v261
        %v395 = vunpack.c.l.b16 %v262
        %v396 = vunpack.c.l.b16 %v263
        %v397 = vunpack.c.l.b16 %v264
        %v398 = vunpack.c.l.b16 %v265
        %v399 = vunpack.c.l.b16 %v266
        %v400 = vunpack.c.l.b16 %v267
        %v401 = vunpack.c.l.b16 %v268
        %v402 = vunpack.c.l.b16 %v269
        %v403 = vunpack.c.l.b16 %v270
        %v404 = vunpack.c.l.b16 %v271
        %v405 = vunpack.c.l.b16 %v272
        %v406 = vunpack.c.l.b16 %v273
        %v407 = vunpack.c.l.b16 %v274
        %v408 = vunpack.c.l.b16 %v275
        %v409 = vunpack.c.l.b16 %v276
        %v410 = vunpack.c.l.b16 %v277
        %v411 = vunpack.c.l.b16 %v278
        %v412 = vunpack.c.l.b16 %v279
        %v413 = vunpack.c.l.b16 %v280
        %v414 = vunpack.c.l.b16 %v281
        %v415 = vunpack.c.l.b16 %v282
        %v416 = vunpack.c.l.b16 %v283
        %v417 = vunpack.c.l.b16 %v284
        %v418 = vunpack.c.l.b16 %v285
        %v419 = vunpack.c.l.b16 %v286
        %v420 = vunpack.c.l.b16 %v287
        %v421 = vunpack.c.l.b16 %v288
        %v422 = vunpack.c.l.b16 %v289
        %v423 = vunpack.c.l.b16 %v290
        %v424 = vunpack.c.l.b16 %v291
        %v425 = vunpack.c.l.b16 %v292
        %v426 = vunpack.c.l.b16 %v293
        %v427 = vunpack.c.l.b16 %v294
        %v428 = vunpack.c.l.b16 %v295
        %v429 = vunpack.c.l.b16 %v296
        %v430 = vunpack.c.l.b16 %v297
        %v431 = vunpack.c.l.b16 %v298
        %v432 = vunpack.c.l.b16 %v299
        %v433 = vunpack.c.l.b16 %v300
        %v434 = vunpack.c.l.b16 %v301
        %v435 = vunpack.c.l.b16 %v302
        %v436 = vunpack.c.l.b16 %v303
        %v437 = vunpack.c.l.b16 %v304
        %v438 = vpack.c.b16 %v375, %v374
        %v439 = vpack.c.b16 %v377, %v376
        %v440 = vpack.c.b16 %v379, %v378
        %v441 = vpack.c.b16 %v381, %v380
        %v442 = vpack.c.b16 %v383, %v382
        %v443 = vpack.c.b16 %v385, %v384
        %v444 = vpack.c.b16 %v387, %v386
        %v445 = vpack.c.b16 %v389, %v388
        %v446 = vpack.c.b16 %v391, %v390
        %v447 = vpack.c.b16 %v393, %v392
        %v448 = vpack.c.b16 %v395, %v394
        %v449 = vpack.c.b16 %v397, %v396
        %v450 = vpack.c.b16 %v399, %v398
        %v451 = vpack.c.b16 %v401, %v400
        %v452 = vpack.c.b16 %v403, %v402
        %v453 = vpack.c.b16 %v405, %v404
        %v454 = vpack.c.b16 %v407, %v406
        %v455 = vpack.c.b16 %v409, %v408
        %v456 = vpack.c.b16 %v411, %v410
        %v457 = vpack.c.b16 %v413, %v412
        %v458 = vpack.c.b16 %v415, %v414
        %v459 = vpack.c.b16 %v417, %v416
        %v460 = vpack.c.b16 %v419, %v418
        %v461 = vpack.c.b16 %v421, %v420
        %v462 = vpack.c.b16 %v423, %v422
        %v463 = vpack.c.b16 %v425, %v424
        %v464 = vpack.c.b16 %v427, %v426
        %v465 = vpack.c.b16 %v429, %v428
        %v466 = vpack.c.b16 %v431, %v430
        %v467 = vpack.c.b16 %v433, %v432
        %v468 = vpack.c.b16 %v435, %v434
        %v469 = vpack.c.b16 %v437, %v436
        %v475 = vunpack.c.l.b16 %v305
        %v476 = vunpack.c.l.b16 %v306
        %v477 = vunpack.c.l.b16 %v307
        %v478 = vunpack.c.l.b16 %v308
        %v479 = vunpack.c.l.b16 %v309
        %v480 = vpack.c.b16 %v476, %v475
        %v481 = vpack.c.b16 %v478, %v477
        %v482 = vpack.c.b16 %v479, %v479
        %vm485 = vcmask 293888
        %v487 = vsel %vm485, %v438, 0
        %v490 = vsel %vm485, %v439, 0
        %v493 = vsel %vm485, %v440, 0
        %v496 = vsel %vm485, %v441, 0
        %v499 = vsel %vm485, %v442, 0
        %v502 = vsel %vm485, %v443, 0
        %v505 = vsel %vm485, %v444, 0
        %v508 = vsel %vm485, %v445, 0
        %v511 = vsel %vm485, %v446, 0
        %v514 = vsel %vm485, %v447, 0
        %v517 = vsel %vm485, %v448, 0
        %v520 = vsel %vm485, %v449, 0
        %v523 = vsel %vm485, %v450, 0
        %v526 = vsel %vm485, %v451, 0
        %v529 = vsel %vm485, %v452, 0
        %v532 = vsel %vm485, %v453, 0
        %v535 = vsel %vm485, %v454, 0
        %v538 = vsel %vm485, %v455, 0
        %v541 = vsel %vm485, %v456, 0
        %v544 = vsel %vm485, %v457, 0
        %v547 = vsel %vm485, %v458, 0
        %v550 = vsel %vm485, %v459, 0
        %v553 = vsel %vm485, %v460, 0
        %v556 = vsel %vm485, %v461, 0
        %v559 = vsel %vm485, %v462, 0
        %v562 = vsel %vm485, %v463, 0
        %v565 = vsel %vm485, %v464, 0
        %v568 = vsel %vm485, %v465, 0
        %v571 = vsel %vm485, %v466, 0
        %v574 = vsel %vm485, %v467, 0
        %v577 = vsel %vm485, %v468, 0
        %v580 = vsel %vm485, %v469, 0
        %vm582 = vcmask 1041408
        %v584 = vsel %vm582, %v482, 0
        %586 = vmatpush.bf16.msra.mxu0 0
        %587 = vmatpush.bf16.msra.mxu0 0
        %588 = vmatpush.bf16.msra.mxu0 0
        %589 = vmatpush.bf16.msra.mxu0 0
        %590 = vmatpush.bf16.msra.mxu0 0
        %591 = vmatpush.bf16.msra.mxu0 %v584
        %592 = vmatpush.bf16.msra.mxu0 %v481
        %593 = vmatpush.bf16.msra.mxu0 %v480
        %594 = vmatmul.bf16.gmra.mxu0 %v487
        %v595 = vpop.f32.mrf.mxu0
        %v596 = vadd.f32 0.0, %v595
        %v597 = vpop.f32.mrf.mxu0
        %v598 = vadd.f32 0.0, %v597
        %599 = vmatmul.bf16.gmra.mxu0 %v490
        %v600 = vpop.f32.mrf.mxu0
        %v601 = vadd.f32 0.0, %v600
        %v602 = vpop.f32.mrf.mxu0
        %v603 = vadd.f32 0.0, %v602
        %604 = vmatmul.bf16.gmra.mxu0 %v493
        %v605 = vpop.f32.mrf.mxu0
        %v606 = vadd.f32 0.0, %v605
        %v607 = vpop.f32.mrf.mxu0
        %v608 = vadd.f32 0.0, %v607
        %609 = vmatmul.bf16.gmra.mxu0 %v496
        %v610 = vpop.f32.mrf.mxu0
        %v611 = vadd.f32 0.0, %v610
        %v612 = vpop.f32.mrf.mxu0
        %v613 = vadd.f32 0.0, %v612
        %614 = vmatmul.bf16.gmra.mxu0 %v499
        %v615 = vpop.f32.mrf.mxu0
        %v616 = vadd.f32 0.0, %v615
        %v617 = vpop.f32.mrf.mxu0
        %v618 = vadd.f32 0.0, %v617
        %619 = vmatmul.bf16.gmra.mxu0 %v502
        %v620 = vpop.f32.mrf.mxu0
        %v621 = vadd.f32 0.0, %v620
        %v622 = vpop.f32.mrf.mxu0
        %v623 = vadd.f32 0.0, %v622
        %624 = vmatmul.bf16.gmra.mxu0 %v505
        %v625 = vpop.f32.mrf.mxu0
        %v626 = vadd.f32 0.0, %v625
        %v627 = vpop.f32.mrf.mxu0
        %v628 = vadd.f32 0.0, %v627
        %629 = vmatmul.bf16.gmra.mxu0 %v508
        %v630 = vpop.f32.mrf.mxu0
        %v631 = vadd.f32 0.0, %v630
        %v632 = vpop.f32.mrf.mxu0
        %v633 = vadd.f32 0.0, %v632
        %634 = vmatmul.bf16.gmra.mxu0 %v511
        %v635 = vpop.f32.mrf.mxu0
        %v636 = vadd.f32 0.0, %v635
        %v637 = vpop.f32.mrf.mxu0
        %v638 = vadd.f32 0.0, %v637
        %639 = vmatmul.bf16.gmra.mxu0 %v514
        %v640 = vpop.f32.mrf.mxu0
        %v641 = vadd.f32 0.0, %v640
        %v642 = vpop.f32.mrf.mxu0
        %v643 = vadd.f32 0.0, %v642
        %644 = vmatmul.bf16.gmra.mxu0 %v517
        %v645 = vpop.f32.mrf.mxu0
        %v646 = vadd.f32 0.0, %v645
        %v647 = vpop.f32.mrf.mxu0
        %v648 = vadd.f32 0.0, %v647
        %649 = vmatmul.bf16.gmra.mxu0 %v520
        %v650 = vpop.f32.mrf.mxu0
        %v651 = vadd.f32 0.0, %v650
        %v652 = vpop.f32.mrf.mxu0
        %v653 = vadd.f32 0.0, %v652
        %654 = vmatmul.bf16.gmra.mxu0 %v523
        %v655 = vpop.f32.mrf.mxu0
        %v656 = vadd.f32 0.0, %v655
        %v657 = vpop.f32.mrf.mxu0
        %v658 = vadd.f32 0.0, %v657
        %659 = vmatmul.bf16.gmra.mxu0 %v526
        %v660 = vpop.f32.mrf.mxu0
        %v661 = vadd.f32 0.0, %v660
        %v662 = vpop.f32.mrf.mxu0
        %v663 = vadd.f32 0.0, %v662
        %664 = vmatmul.bf16.gmra.mxu0 %v529
        %v665 = vpop.f32.mrf.mxu0
        %v666 = vadd.f32 0.0, %v665
        %v667 = vpop.f32.mrf.mxu0
        %v668 = vadd.f32 0.0, %v667
        %669 = vmatmul.bf16.gmra.mxu0 %v532
        %v670 = vpop.f32.mrf.mxu0
        %v671 = vadd.f32 0.0, %v670
        %v672 = vpop.f32.mrf.mxu0
        %v673 = vadd.f32 0.0, %v672
        %674 = vmatmul.bf16.gmra.mxu0 %v535
        %v675 = vpop.f32.mrf.mxu0
        %v676 = vadd.f32 0.0, %v675
        %v677 = vpop.f32.mrf.mxu0
        %v678 = vadd.f32 0.0, %v677
        %679 = vmatmul.bf16.gmra.mxu0 %v538
        %v680 = vpop.f32.mrf.mxu0
        %v681 = vadd.f32 0.0, %v680
        %v682 = vpop.f32.mrf.mxu0
        %v683 = vadd.f32 0.0, %v682
        %684 = vmatmul.bf16.gmra.mxu0 %v541
        %v685 = vpop.f32.mrf.mxu0
        %v686 = vadd.f32 0.0, %v685
        %v687 = vpop.f32.mrf.mxu0
        %v688 = vadd.f32 0.0, %v687
        %689 = vmatmul.bf16.gmra.mxu0 %v544
        %v690 = vpop.f32.mrf.mxu0
        %v691 = vadd.f32 0.0, %v690
        %v692 = vpop.f32.mrf.mxu0
        %v693 = vadd.f32 0.0, %v692
        %694 = vmatmul.bf16.gmra.mxu0 %v547
        %v695 = vpop.f32.mrf.mxu0
        %v696 = vadd.f32 0.0, %v695
        %v697 = vpop.f32.mrf.mxu0
        %v698 = vadd.f32 0.0, %v697
        %699 = vmatmul.bf16.gmra.mxu0 %v550
        %v700 = vpop.f32.mrf.mxu0
        %v701 = vadd.f32 0.0, %v700
        %v702 = vpop.f32.mrf.mxu0
        %v703 = vadd.f32 0.0, %v702
        %704 = vmatmul.bf16.gmra.mxu0 %v553
        %v705 = vpop.f32.mrf.mxu0
        %v706 = vadd.f32 0.0, %v705
        %v707 = vpop.f32.mrf.mxu0
        %v708 = vadd.f32 0.0, %v707
        %709 = vmatmul.bf16.gmra.mxu0 %v556
        %v710 = vpop.f32.mrf.mxu0
        %v711 = vadd.f32 0.0, %v710
        %v712 = vpop.f32.mrf.mxu0
        %v713 = vadd.f32 0.0, %v712
        %714 = vmatmul.bf16.gmra.mxu0 %v559
        %v715 = vpop.f32.mrf.mxu0
        %v716 = vadd.f32 0.0, %v715
        %v717 = vpop.f32.mrf.mxu0
        %v718 = vadd.f32 0.0, %v717
        %719 = vmatmul.bf16.gmra.mxu0 %v562
        %v720 = vpop.f32.mrf.mxu0
        %v721 = vadd.f32 0.0, %v720
        %v722 = vpop.f32.mrf.mxu0
        %v723 = vadd.f32 0.0, %v722
        %724 = vmatmul.bf16.gmra.mxu0 %v565
        %v725 = vpop.f32.mrf.mxu0
        %v726 = vadd.f32 0.0, %v725
        %v727 = vpop.f32.mrf.mxu0
        %v728 = vadd.f32 0.0, %v727
        %729 = vmatmul.bf16.gmra.mxu0 %v568
        %v730 = vpop.f32.mrf.mxu0
        %v731 = vadd.f32 0.0, %v730
        %v732 = vpop.f32.mrf.mxu0
        %v733 = vadd.f32 0.0, %v732
        %734 = vmatmul.bf16.gmra.mxu0 %v571
        %v735 = vpop.f32.mrf.mxu0
        %v736 = vadd.f32 0.0, %v735
        %v737 = vpop.f32.mrf.mxu0
        %v738 = vadd.f32 0.0, %v737
        %739 = vmatmul.bf16.gmra.mxu0 %v574
        %v740 = vpop.f32.mrf.mxu0
        %v741 = vadd.f32 0.0, %v740
        %v742 = vpop.f32.mrf.mxu0
        %v743 = vadd.f32 0.0, %v742
        %744 = vmatmul.bf16.gmra.mxu0 %v577
        %v745 = vpop.f32.mrf.mxu0
        %v746 = vadd.f32 0.0, %v745
        %v747 = vpop.f32.mrf.mxu0
        %v748 = vadd.f32 0.0, %v747
        %749 = vmatmul.bf16.gmra.mxu0 %v580
        %v750 = vpop.f32.mrf.mxu0
        %v751 = vadd.f32 0.0, %v750
        %v752 = vpop.f32.mrf.mxu0
        %v753 = vadd.f32 0.0, %v752
        %754 = vdwg.mxu0
        %v755 = vlaneseq
        %v756 = vshrl.u32 %v755, 7
        %v757 = vadd.s32 %v756, 8
        %v758 = vadd.s32 %v756, 16
        %v759 = vadd.s32 %v756, 24
        %v760 = vadd.s32 %v756, 32
        %v761 = vadd.s32 %v756, 40
        %v762 = vadd.s32 %v756, 48
        %v763 = vadd.s32 %v756, 56
        %v764 = vadd.s32 %v756, 64
        %v765 = vadd.s32 %v756, 72
        %v766 = vadd.s32 %v756, 80
        %v767 = vadd.s32 %v756, 88
        %v768 = vadd.s32 %v756, 96
        %v769 = vadd.s32 %v756, 104
        %v770 = vadd.s32 %v756, 112
        %v771 = vadd.s32 %v756, 120
        %v772 = vadd.s32 %v756, 128
        %v773 = vadd.s32 %v756, 136
        %v774 = vadd.s32 %v756, 144
        %v775 = vadd.s32 %v756, 152
        %v776 = vadd.s32 %v756, 160
        %v777 = vadd.s32 %v756, 168
        %v778 = vadd.s32 %v756, 176
        %v779 = vadd.s32 %v756, 184
        %v780 = vadd.s32 %v756, 192
        %v781 = vadd.s32 %v756, 200
        %v782 = vadd.s32 %v756, 208
        %v783 = vadd.s32 %v756, 216
        %v784 = vadd.s32 %v756, 224
        %v785 = vadd.s32 %v756, 232
        %v786 = vadd.s32 %v756, 240
        %v787 = vadd.s32 %v756, 248
        %v788 = vadd.s32 %v756, 256
        %v789 = vadd.s32 %v756, 264
        %v790 = vadd.s32 %v756, 272
        %v791 = vadd.s32 %v756, 280
        %v792 = vadd.s32 %v756, 288
        %v793 = vadd.s32 %v756, 296
        %v794 = vadd.s32 %v756, 304
        %v795 = vadd.s32 %v756, 312
        %v796 = vadd.s32 %v756, 320
        %v797 = vadd.s32 %v756, 328
        %v798 = vadd.s32 %v756, 336
        %v799 = vadd.s32 %v756, 344
        %v800 = vadd.s32 %v756, 352
        %v801 = vadd.s32 %v756, 360
        %v802 = vadd.s32 %v756, 368
        %v803 = vadd.s32 %v756, 376
        %v804 = vadd.s32 %v756, 384
        %v805 = vadd.s32 %v756, 392
        %v806 = vadd.s32 %v756, 400
        %v807 = vadd.s32 %v756, 408
        %v808 = vadd.s32 %v756, 416
        %v809 = vadd.s32 %v756, 424
        %v810 = vadd.s32 %v756, 432
        %v811 = vadd.s32 %v756, 440
        %v812 = vadd.s32 %v756, 448
        %v813 = vadd.s32 %v756, 456
        %v814 = vadd.s32 %v756, 464
        %v815 = vadd.s32 %v756, 472
        %v816 = vadd.s32 %v756, 480
        %v817 = vadd.s32 %v756, 488
        %v818 = vadd.s32 %v756, 496
        %v819 = vadd.s32 %v756, 504
        %s820 = smul.u32 %s16, 512
        %v821 = vstv %s820
        %v822 = vadd.s32 %v756, %v821
        %v823 = vadd.s32 %v757, %v821
        %v824 = vadd.s32 %v758, %v821
        %v825 = vadd.s32 %v759, %v821
        %v826 = vadd.s32 %v760, %v821
        %v827 = vadd.s32 %v761, %v821
        %v828 = vadd.s32 %v762, %v821
        %v829 = vadd.s32 %v763, %v821
        %v830 = vadd.s32 %v764, %v821
        %v831 = vadd.s32 %v765, %v821
        %v832 = vadd.s32 %v766, %v821
        %v833 = vadd.s32 %v767, %v821
        %v834 = vadd.s32 %v768, %v821
        %v835 = vadd.s32 %v769, %v821
        %v836 = vadd.s32 %v770, %v821
        %v837 = vadd.s32 %v771, %v821
        %v838 = vadd.s32 %v772, %v821
        %v839 = vadd.s32 %v773, %v821
        %v840 = vadd.s32 %v774, %v821
        %v841 = vadd.s32 %v775, %v821
        %v842 = vadd.s32 %v776, %v821
        %v843 = vadd.s32 %v777, %v821
        %v844 = vadd.s32 %v778, %v821
        %v845 = vadd.s32 %v779, %v821
        %v846 = vadd.s32 %v780, %v821
        %v847 = vadd.s32 %v781, %v821
        %v848 = vadd.s32 %v782, %v821
        %v849 = vadd.s32 %v783, %v821
        %v850 = vadd.s32 %v784, %v821
        %v851 = vadd.s32 %v785, %v821
        %v852 = vadd.s32 %v786, %v821
        %v853 = vadd.s32 %v787, %v821
        %v854 = vadd.s32 %v788, %v821
        %v855 = vadd.s32 %v789, %v821
        %v856 = vadd.s32 %v790, %v821
        %v857 = vadd.s32 %v791, %v821
        %v858 = vadd.s32 %v792, %v821
        %v859 = vadd.s32 %v793, %v821
        %v860 = vadd.s32 %v794, %v821
        %v861 = vadd.s32 %v795, %v821
        %v862 = vadd.s32 %v796, %v821
        %v863 = vadd.s32 %v797, %v821
        %v864 = vadd.s32 %v798, %v821
        %v865 = vadd.s32 %v799, %v821
        %v866 = vadd.s32 %v800, %v821
        %v867 = vadd.s32 %v801, %v821
        %v868 = vadd.s32 %v802, %v821
        %v869 = vadd.s32 %v803, %v821
        %v870 = vadd.s32 %v804, %v821
        %v871 = vadd.s32 %v805, %v821
        %v872 = vadd.s32 %v806, %v821
        %v873 = vadd.s32 %v807, %v821
        %v874 = vadd.s32 %v808, %v821
        %v875 = vadd.s32 %v809, %v821
        %v876 = vadd.s32 %v810, %v821
        %v877 = vadd.s32 %v811, %v821
        %v878 = vadd.s32 %v812, %v821
        %v879 = vadd.s32 %v813, %v821
        %v880 = vadd.s32 %v814, %v821
        %v881 = vadd.s32 %v815, %v821
        %v882 = vadd.s32 %v816, %v821
        %v883 = vadd.s32 %v817, %v821
        %v884 = vadd.s32 %v818, %v821
        %v885 = vadd.s32 %v819, %v821
        %vm886 = vcmp.lt.s32.totalorder %v822, 800
        %vm887 = vcmp.lt.s32.totalorder %v823, 800
        %vm888 = vcmp.lt.s32.totalorder %v824, 800
        %vm889 = vcmp.lt.s32.totalorder %v825, 800
        %vm890 = vcmp.lt.s32.totalorder %v826, 800
        %vm891 = vcmp.lt.s32.totalorder %v827, 800
        %vm892 = vcmp.lt.s32.totalorder %v828, 800
        %vm893 = vcmp.lt.s32.totalorder %v829, 800
        %vm894 = vcmp.lt.s32.totalorder %v830, 800
        %vm895 = vcmp.lt.s32.totalorder %v831, 800
        %vm896 = vcmp.lt.s32.totalorder %v832, 800
        %vm897 = vcmp.lt.s32.totalorder %v833, 800
        %vm898 = vcmp.lt.s32.totalorder %v834, 800
        %vm899 = vcmp.lt.s32.totalorder %v835, 800
        %vm900 = vcmp.lt.s32.totalorder %v836, 800
        %vm901 = vcmp.lt.s32.totalorder %v837, 800
        %vm902 = vcmp.lt.s32.totalorder %v838, 800
        %vm903 = vcmp.lt.s32.totalorder %v839, 800
        %vm904 = vcmp.lt.s32.totalorder %v840, 800
        %vm905 = vcmp.lt.s32.totalorder %v841, 800
        %vm906 = vcmp.lt.s32.totalorder %v842, 800
        %vm907 = vcmp.lt.s32.totalorder %v843, 800
        %vm908 = vcmp.lt.s32.totalorder %v844, 800
        %vm909 = vcmp.lt.s32.totalorder %v845, 800
        %vm910 = vcmp.lt.s32.totalorder %v846, 800
        %vm911 = vcmp.lt.s32.totalorder %v847, 800
        %vm912 = vcmp.lt.s32.totalorder %v848, 800
        %vm913 = vcmp.lt.s32.totalorder %v849, 800
        %vm914 = vcmp.lt.s32.totalorder %v850, 800
        %vm915 = vcmp.lt.s32.totalorder %v851, 800
        %vm916 = vcmp.lt.s32.totalorder %v852, 800
        %vm917 = vcmp.lt.s32.totalorder %v853, 800
        %vm918 = vcmp.lt.s32.totalorder %v854, 800
        %vm919 = vcmp.lt.s32.totalorder %v855, 800
        %vm920 = vcmp.lt.s32.totalorder %v856, 800
        %vm921 = vcmp.lt.s32.totalorder %v857, 800
        %vm922 = vcmp.lt.s32.totalorder %v858, 800
        %vm923 = vcmp.lt.s32.totalorder %v859, 800
        %vm924 = vcmp.lt.s32.totalorder %v860, 800
        %vm925 = vcmp.lt.s32.totalorder %v861, 800
        %vm926 = vcmp.lt.s32.totalorder %v862, 800
        %vm927 = vcmp.lt.s32.totalorder %v863, 800
        %vm928 = vcmp.lt.s32.totalorder %v864, 800
        %vm929 = vcmp.lt.s32.totalorder %v865, 800
        %vm930 = vcmp.lt.s32.totalorder %v866, 800
        %vm931 = vcmp.lt.s32.totalorder %v867, 800
        %vm932 = vcmp.lt.s32.totalorder %v868, 800
        %vm933 = vcmp.lt.s32.totalorder %v869, 800
        %vm934 = vcmp.lt.s32.totalorder %v870, 800
        %vm935 = vcmp.lt.s32.totalorder %v871, 800
        %vm936 = vcmp.lt.s32.totalorder %v872, 800
        %vm937 = vcmp.lt.s32.totalorder %v873, 800
        %vm938 = vcmp.lt.s32.totalorder %v874, 800
        %vm939 = vcmp.lt.s32.totalorder %v875, 800
        %vm940 = vcmp.lt.s32.totalorder %v876, 800
        %vm941 = vcmp.lt.s32.totalorder %v877, 800
        %vm942 = vcmp.lt.s32.totalorder %v878, 800
        %vm943 = vcmp.lt.s32.totalorder %v879, 800
        %vm944 = vcmp.lt.s32.totalorder %v880, 800
        %vm945 = vcmp.lt.s32.totalorder %v881, 800
        %vm946 = vcmp.lt.s32.totalorder %v882, 800
        %vm947 = vcmp.lt.s32.totalorder %v883, 800
        %vm948 = vcmp.lt.s32.totalorder %v884, 800
        %vm949 = vcmp.lt.s32.totalorder %v885, 800
        %v950 = vsel %vm886, %v596, 0.0
        %v951 = vsel %vm887, %v598, 0.0
        %v952 = vsel %vm888, %v601, 0.0
        %v953 = vsel %vm889, %v603, 0.0
        %v954 = vsel %vm890, %v606, 0.0
        %v955 = vsel %vm891, %v608, 0.0
        %v956 = vsel %vm892, %v611, 0.0
        %v957 = vsel %vm893, %v613, 0.0
        %v958 = vsel %vm894, %v616, 0.0
        %v959 = vsel %vm895, %v618, 0.0
        %v960 = vsel %vm896, %v621, 0.0
        %v961 = vsel %vm897, %v623, 0.0
        %v962 = vsel %vm898, %v626, 0.0
        %v963 = vsel %vm899, %v628, 0.0
        %v964 = vsel %vm900, %v631, 0.0
        %v965 = vsel %vm901, %v633, 0.0
        %v966 = vsel %vm902, %v636, 0.0
        %v967 = vsel %vm903, %v638, 0.0
        %v968 = vsel %vm904, %v641, 0.0
        %v969 = vsel %vm905, %v643, 0.0
        %v970 = vsel %vm906, %v646, 0.0
        %v971 = vsel %vm907, %v648, 0.0
        %v972 = vsel %vm908, %v651, 0.0
        %v973 = vsel %vm909, %v653, 0.0
        %v974 = vsel %vm910, %v656, 0.0
        %v975 = vsel %vm911, %v658, 0.0
        %v976 = vsel %vm912, %v661, 0.0
        %v977 = vsel %vm913, %v663, 0.0
        %v978 = vsel %vm914, %v666, 0.0
        %v979 = vsel %vm915, %v668, 0.0
        %v980 = vsel %vm916, %v671, 0.0
        %v981 = vsel %vm917, %v673, 0.0
        %v982 = vsel %vm918, %v676, 0.0
        %v983 = vsel %vm919, %v678, 0.0
        %v984 = vsel %vm920, %v681, 0.0
        %v985 = vsel %vm921, %v683, 0.0
        %v986 = vsel %vm922, %v686, 0.0
        %v987 = vsel %vm923, %v688, 0.0
        %v988 = vsel %vm924, %v691, 0.0
        %v989 = vsel %vm925, %v693, 0.0
        %v990 = vsel %vm926, %v696, 0.0
        %v991 = vsel %vm927, %v698, 0.0
        %v992 = vsel %vm928, %v701, 0.0
        %v993 = vsel %vm929, %v703, 0.0
        %v994 = vsel %vm930, %v706, 0.0
        %v995 = vsel %vm931, %v708, 0.0
        %v996 = vsel %vm932, %v711, 0.0
        %v997 = vsel %vm933, %v713, 0.0
        %v998 = vsel %vm934, %v716, 0.0
        %v999 = vsel %vm935, %v718, 0.0
        %v1000 = vsel %vm936, %v721, 0.0
        %v1001 = vsel %vm937, %v723, 0.0
        %v1002 = vsel %vm938, %v726, 0.0
        %v1003 = vsel %vm939, %v728, 0.0
        %v1004 = vsel %vm940, %v731, 0.0
        %v1005 = vsel %vm941, %v733, 0.0
        %v1006 = vsel %vm942, %v736, 0.0
        %v1007 = vsel %vm943, %v738, 0.0
        %v1008 = vsel %vm944, %v741, 0.0
        %v1009 = vsel %vm945, %v743, 0.0
        %v1010 = vsel %vm946, %v746, 0.0
        %v1011 = vsel %vm947, %v748, 0.0
        %v1012 = vsel %vm948, %v751, 0.0
        %v1013 = vsel %vm949, %v753, 0.0
        %v1014 = vpack.c.bf16 %v950, %v950
        %v1015 = vpack.c.bf16 %v951, %v951
        %v1016 = vpack.c.bf16 %v952, %v952
        %v1017 = vpack.c.bf16 %v953, %v953
        %v1018 = vpack.c.bf16 %v954, %v954
        %v1019 = vpack.c.bf16 %v955, %v955
        %v1020 = vpack.c.bf16 %v956, %v956
        %v1021 = vpack.c.bf16 %v957, %v957
        %v1022 = vpack.c.bf16 %v958, %v958
        %v1023 = vpack.c.bf16 %v959, %v959
        %v1024 = vpack.c.bf16 %v960, %v960
        %v1025 = vpack.c.bf16 %v961, %v961
        %v1026 = vpack.c.bf16 %v962, %v962
        %v1027 = vpack.c.bf16 %v963, %v963
        %v1028 = vpack.c.bf16 %v964, %v964
        %v1029 = vpack.c.bf16 %v965, %v965
        %v1030 = vpack.c.bf16 %v966, %v966
        %v1031 = vpack.c.bf16 %v967, %v967
        %v1032 = vpack.c.bf16 %v968, %v968
        %v1033 = vpack.c.bf16 %v969, %v969
        %v1034 = vpack.c.bf16 %v970, %v970
        %v1035 = vpack.c.bf16 %v971, %v971
        %v1036 = vpack.c.bf16 %v972, %v972
        %v1037 = vpack.c.bf16 %v973, %v973
        %v1038 = vpack.c.bf16 %v974, %v974
        %v1039 = vpack.c.bf16 %v975, %v975
        %v1040 = vpack.c.bf16 %v976, %v976
        %v1041 = vpack.c.bf16 %v977, %v977
        %v1042 = vpack.c.bf16 %v978, %v978
        %v1043 = vpack.c.bf16 %v979, %v979
        %v1044 = vpack.c.bf16 %v980, %v980
        %v1045 = vpack.c.bf16 %v981, %v981
        %v1046 = vpack.c.bf16 %v982, %v982
        %v1047 = vpack.c.bf16 %v983, %v983
        %v1048 = vpack.c.bf16 %v984, %v984
        %v1049 = vpack.c.bf16 %v985, %v985
        %v1050 = vpack.c.bf16 %v986, %v986
        %v1051 = vpack.c.bf16 %v987, %v987
        %v1052 = vpack.c.bf16 %v988, %v988
        %v1053 = vpack.c.bf16 %v989, %v989
        %v1054 = vpack.c.bf16 %v990, %v990
        %v1055 = vpack.c.bf16 %v991, %v991
        %v1056 = vpack.c.bf16 %v992, %v992
        %v1057 = vpack.c.bf16 %v993, %v993
        %v1058 = vpack.c.bf16 %v994, %v994
        %v1059 = vpack.c.bf16 %v995, %v995
        %v1060 = vpack.c.bf16 %v996, %v996
        %v1061 = vpack.c.bf16 %v997, %v997
        %v1062 = vpack.c.bf16 %v998, %v998
        %v1063 = vpack.c.bf16 %v999, %v999
        %v1064 = vpack.c.bf16 %v1000, %v1000
        %v1065 = vpack.c.bf16 %v1001, %v1001
        %v1066 = vpack.c.bf16 %v1002, %v1002
        %v1067 = vpack.c.bf16 %v1003, %v1003
        %v1068 = vpack.c.bf16 %v1004, %v1004
        %v1069 = vpack.c.bf16 %v1005, %v1005
        %v1070 = vpack.c.bf16 %v1006, %v1006
        %v1071 = vpack.c.bf16 %v1007, %v1007
        %v1072 = vpack.c.bf16 %v1008, %v1008
        %v1073 = vpack.c.bf16 %v1009, %v1009
        %v1074 = vpack.c.bf16 %v1010, %v1010
        %v1075 = vpack.c.bf16 %v1011, %v1011
        %v1076 = vpack.c.bf16 %v1012, %v1012
        %v1077 = vpack.c.bf16 %v1013, %v1013
        %1078 = vst [vmem:[%s200] sm:$0xf] %v1014
        %1079 = vst [vmem:[%s200 + $0x4] sm:$0xf] %v1015
        %1080 = vst [vmem:[%s200 + $0x8] sm:$0xf] %v1016
        %1081 = vst [vmem:[%s200 + $0xc] sm:$0xf] %v1017
        %1082 = vst [vmem:[%s200 + $0x10] sm:$0xf] %v1018
        %1083 = vst [vmem:[%s200 + $0x14] sm:$0xf] %v1019
        %1084 = vst [vmem:[%s200 + $0x18] sm:$0xf] %v1020
        %1085 = vst [vmem:[%s200 + $0x1c] sm:$0xf] %v1021
        %1086 = vst [vmem:[%s200 + $0x20] sm:$0xf] %v1022
        %1087 = vst [vmem:[%s200 + $0x24] sm:$0xf] %v1023
        %1088 = vst [vmem:[%s200 + $0x28] sm:$0xf] %v1024
        %1089 = vst [vmem:[%s200 + $0x2c] sm:$0xf] %v1025
        %1090 = vst [vmem:[%s200 + $0x30] sm:$0xf] %v1026
        %1091 = vst [vmem:[%s200 + $0x34] sm:$0xf] %v1027
        %1092 = vst [vmem:[%s200 + $0x38] sm:$0xf] %v1028
        %1093 = vst [vmem:[%s200 + $0x3c] sm:$0xf] %v1029
        %1094 = vst [vmem:[%s200 + $0x40] sm:$0xf] %v1030
        %1095 = vst [vmem:[%s200 + $0x44] sm:$0xf] %v1031
        %1096 = vst [vmem:[%s200 + $0x48] sm:$0xf] %v1032
        %1097 = vst [vmem:[%s200 + $0x4c] sm:$0xf] %v1033
        %1098 = vst [vmem:[%s200 + $0x50] sm:$0xf] %v1034
        %1099 = vst [vmem:[%s200 + $0x54] sm:$0xf] %v1035
        %1100 = vst [vmem:[%s200 + $0x58] sm:$0xf] %v1036
        %1101 = vst [vmem:[%s200 + $0x5c] sm:$0xf] %v1037
        %1102 = vst [vmem:[%s200 + $0x60] sm:$0xf] %v1038
        %1103 = vst [vmem:[%s200 + $0x64] sm:$0xf] %v1039
        %1104 = vst [vmem:[%s200 + $0x68] sm:$0xf] %v1040
        %1105 = vst [vmem:[%s200 + $0x6c] sm:$0xf] %v1041
        %1106 = vst [vmem:[%s200 + $0x70] sm:$0xf] %v1042
        %1107 = vst [vmem:[%s200 + $0x74] sm:$0xf] %v1043
        %1108 = vst [vmem:[%s200 + $0x78] sm:$0xf] %v1044
        %1109 = vst [vmem:[%s200 + $0x7c] sm:$0xf] %v1045
        %1110 = vst [vmem:[%s200 + $0x80] sm:$0xf] %v1046
        %1111 = vst [vmem:[%s200 + $0x84] sm:$0xf] %v1047
        %1112 = vst [vmem:[%s200 + $0x88] sm:$0xf] %v1048
        %1113 = vst [vmem:[%s200 + $0x8c] sm:$0xf] %v1049
        %1114 = vst [vmem:[%s200 + $0x90] sm:$0xf] %v1050
        %1115 = vst [vmem:[%s200 + $0x94] sm:$0xf] %v1051
        %1116 = vst [vmem:[%s200 + $0x98] sm:$0xf] %v1052
        %1117 = vst [vmem:[%s200 + $0x9c] sm:$0xf] %v1053
        %1118 = vst [vmem:[%s200 + $0xa0] sm:$0xf] %v1054
        %1119 = vst [vmem:[%s200 + $0xa4] sm:$0xf] %v1055
        %1120 = vst [vmem:[%s200 + $0xa8] sm:$0xf] %v1056
        %1121 = vst [vmem:[%s200 + $0xac] sm:$0xf] %v1057
        %1122 = vst [vmem:[%s200 + $0xb0] sm:$0xf] %v1058
        %1123 = vst [vmem:[%s200 + $0xb4] sm:$0xf] %v1059
        %1124 = vst [vmem:[%s200 + $0xb8] sm:$0xf] %v1060
        %1125 = vst [vmem:[%s200 + $0xbc] sm:$0xf] %v1061
        %1126 = vst [vmem:[%s200 + $0xc0] sm:$0xf] %v1062
        %1127 = vst [vmem:[%s200 + $0xc4] sm:$0xf] %v1063
        %1128 = vst [vmem:[%s200 + $0xc8] sm:$0xf] %v1064
        %1129 = vst [vmem:[%s200 + $0xcc] sm:$0xf] %v1065
        %1130 = vst [vmem:[%s200 + $0xd0] sm:$0xf] %v1066
        %1131 = vst [vmem:[%s200 + $0xd4] sm:$0xf] %v1067
        %1132 = vst [vmem:[%s200 + $0xd8] sm:$0xf] %v1068
        %1133 = vst [vmem:[%s200 + $0xdc] sm:$0xf] %v1069
        %1134 = vst [vmem:[%s200 + $0xe0] sm:$0xf] %v1070
        %1135 = vst [vmem:[%s200 + $0xe4] sm:$0xf] %v1071
        %1136 = vst [vmem:[%s200 + $0xe8] sm:$0xf] %v1072
        %1137 = vst [vmem:[%s200 + $0xec] sm:$0xf] %v1073
        %1138 = vst [vmem:[%s200 + $0xf0] sm:$0xf] %v1074
        %1139 = vst [vmem:[%s200 + $0xf4] sm:$0xf] %v1075
        %1140 = vst [vmem:[%s200 + $0xf8] sm:$0xf] %v1076
        %1141 = vst [vmem:[%s200 + $0xfc] sm:$0xf] %v1077
        %v1142 = vadd.f32 %v950, %v951
        %v1143 = vadd.f32 %v1142, %v952
        %v1144 = vadd.f32 %v1143, %v953
        %v1145 = vadd.f32 %v1144, %v954
        %v1146 = vadd.f32 %v1145, %v955
        %v1147 = vadd.f32 %v1146, %v956
        %v1148 = vadd.f32 %v1147, %v957
        %v1149 = vadd.f32 %v1148, %v958
        %v1150 = vadd.f32 %v1149, %v959
        %v1151 = vadd.f32 %v1150, %v960
        %v1152 = vadd.f32 %v1151, %v961
        %v1153 = vadd.f32 %v1152, %v962
        %v1154 = vadd.f32 %v1153, %v963
        %v1155 = vadd.f32 %v1154, %v964
        %v1156 = vadd.f32 %v1155, %v965
        %v1157 = vadd.f32 %v1156, %v966
        %v1158 = vadd.f32 %v1157, %v967
        %v1159 = vadd.f32 %v1158, %v968
        %v1160 = vadd.f32 %v1159, %v969
        %v1161 = vadd.f32 %v1160, %v970
        %v1162 = vadd.f32 %v1161, %v971
        %v1163 = vadd.f32 %v1162, %v972
        %v1164 = vadd.f32 %v1163, %v973
        %v1165 = vadd.f32 %v1164, %v974
        %v1166 = vadd.f32 %v1165, %v975
        %v1167 = vadd.f32 %v1166, %v976
        %v1168 = vadd.f32 %v1167, %v977
        %v1169 = vadd.f32 %v1168, %v978
        %v1170 = vadd.f32 %v1169, %v979
        %v1171 = vadd.f32 %v1170, %v980
        %v1172 = vadd.f32 %v1171, %v981
        %v1173 = vadd.f32 %v1172, %v982
        %v1174 = vadd.f32 %v1173, %v983
        %v1175 = vadd.f32 %v1174, %v984
        %v1176 = vadd.f32 %v1175, %v985
        %v1177 = vadd.f32 %v1176, %v986
        %v1178 = vadd.f32 %v1177, %v987
        %v1179 = vadd.f32 %v1178, %v988
        %v1180 = vadd.f32 %v1179, %v989
        %v1181 = vadd.f32 %v1180, %v990
        %v1182 = vadd.f32 %v1181, %v991
        %v1183 = vadd.f32 %v1182, %v992
        %v1184 = vadd.f32 %v1183, %v993
        %v1185 = vadd.f32 %v1184, %v994
        %v1186 = vadd.f32 %v1185, %v995
        %v1187 = vadd.f32 %v1186, %v996
        %v1188 = vadd.f32 %v1187, %v997
        %v1189 = vadd.f32 %v1188, %v998
        %v1190 = vadd.f32 %v1189, %v999
        %v1191 = vadd.f32 %v1190, %v1000
        %v1192 = vadd.f32 %v1191, %v1001
        %v1193 = vadd.f32 %v1192, %v1002
        %v1194 = vadd.f32 %v1193, %v1003
        %v1195 = vadd.f32 %v1194, %v1004
        %v1196 = vadd.f32 %v1195, %v1005
        %v1197 = vadd.f32 %v1196, %v1006
        %v1198 = vadd.f32 %v1197, %v1007
        %v1199 = vadd.f32 %v1198, %v1008
        %v1200 = vadd.f32 %v1199, %v1009
        %v1201 = vadd.f32 %v1200, %v1010
        %v1202 = vadd.f32 %v1201, %v1011
        %v1203 = vadd.f32 %v1202, %v1012
        %v1204 = vadd.f32 %v1203, %v1013
        %v1205 = vrot.slane %v1204, 4
        %v1206 = vadd.f32 %v1204, %v1205
        %v1207 = vrot.slane %v1206, 2
        %v1208 = vadd.f32 %v1206, %v1207
        %v1209 = vrot.slane %v1208, 1
        %v1210 = vadd.f32 %v1208, %v1209
        %v1211 = vmul.f32 %v950, %v950
        %v1212 = vmul.f32 %v951, %v951
        %v1213 = vmul.f32 %v952, %v952
        %v1214 = vmul.f32 %v953, %v953
        %v1215 = vmul.f32 %v954, %v954
        %v1216 = vmul.f32 %v955, %v955
        %v1217 = vmul.f32 %v956, %v956
        %v1218 = vmul.f32 %v957, %v957
        %v1219 = vmul.f32 %v958, %v958
        %v1220 = vmul.f32 %v959, %v959
        %v1221 = vmul.f32 %v960, %v960
        %v1222 = vmul.f32 %v961, %v961
        %v1223 = vmul.f32 %v962, %v962
        %v1224 = vmul.f32 %v963, %v963
        %v1225 = vmul.f32 %v964, %v964
        %v1226 = vmul.f32 %v965, %v965
        %v1227 = vmul.f32 %v966, %v966
        %v1228 = vmul.f32 %v967, %v967
        %v1229 = vmul.f32 %v968, %v968
        %v1230 = vmul.f32 %v969, %v969
        %v1231 = vmul.f32 %v970, %v970
        %v1232 = vmul.f32 %v971, %v971
        %v1233 = vmul.f32 %v972, %v972
        %v1234 = vmul.f32 %v973, %v973
        %v1235 = vmul.f32 %v974, %v974
        %v1236 = vmul.f32 %v975, %v975
        %v1237 = vmul.f32 %v976, %v976
        %v1238 = vmul.f32 %v977, %v977
        %v1239 = vmul.f32 %v978, %v978
        %v1240 = vmul.f32 %v979, %v979
        %v1241 = vmul.f32 %v980, %v980
        %v1242 = vmul.f32 %v981, %v981
        %v1243 = vmul.f32 %v982, %v982
        %v1244 = vmul.f32 %v983, %v983
        %v1245 = vmul.f32 %v984, %v984
        %v1246 = vmul.f32 %v985, %v985
        %v1247 = vmul.f32 %v986, %v986
        %v1248 = vmul.f32 %v987, %v987
        %v1249 = vmul.f32 %v988, %v988
        %v1250 = vmul.f32 %v989, %v989
        %v1251 = vmul.f32 %v990, %v990
        %v1252 = vmul.f32 %v991, %v991
        %v1253 = vmul.f32 %v992, %v992
        %v1254 = vmul.f32 %v993, %v993
        %v1255 = vmul.f32 %v994, %v994
        %v1256 = vmul.f32 %v995, %v995
        %v1257 = vmul.f32 %v996, %v996
        %v1258 = vmul.f32 %v997, %v997
        %v1259 = vmul.f32 %v998, %v998
        %v1260 = vmul.f32 %v999, %v999
        %v1261 = vmul.f32 %v1000, %v1000
        %v1262 = vmul.f32 %v1001, %v1001
        %v1263 = vmul.f32 %v1002, %v1002
        %v1264 = vmul.f32 %v1003, %v1003
        %v1265 = vmul.f32 %v1004, %v1004
        %v1266 = vmul.f32 %v1005, %v1005
        %v1267 = vmul.f32 %v1006, %v1006
        %v1268 = vmul.f32 %v1007, %v1007
        %v1269 = vmul.f32 %v1008, %v1008
        %v1270 = vmul.f32 %v1009, %v1009
        %v1271 = vmul.f32 %v1010, %v1010
        %v1272 = vmul.f32 %v1011, %v1011
        %v1273 = vmul.f32 %v1012, %v1012
        %v1274 = vmul.f32 %v1013, %v1013
        %v1275 = vadd.f32 %v1211, %v1212
        %v1276 = vadd.f32 %v1275, %v1213
        %v1277 = vadd.f32 %v1276, %v1214
        %v1278 = vadd.f32 %v1277, %v1215
        %v1279 = vadd.f32 %v1278, %v1216
        %v1280 = vadd.f32 %v1279, %v1217
        %v1281 = vadd.f32 %v1280, %v1218
        %v1282 = vadd.f32 %v1281, %v1219
        %v1283 = vadd.f32 %v1282, %v1220
        %v1284 = vadd.f32 %v1283, %v1221
        %v1285 = vadd.f32 %v1284, %v1222
        %v1286 = vadd.f32 %v1285, %v1223
        %v1287 = vadd.f32 %v1286, %v1224
        %v1288 = vadd.f32 %v1287, %v1225
        %v1289 = vadd.f32 %v1288, %v1226
        %v1290 = vadd.f32 %v1289, %v1227
        %v1291 = vadd.f32 %v1290, %v1228
        %v1292 = vadd.f32 %v1291, %v1229
        %v1293 = vadd.f32 %v1292, %v1230
        %v1294 = vadd.f32 %v1293, %v1231
        %v1295 = vadd.f32 %v1294, %v1232
        %v1296 = vadd.f32 %v1295, %v1233
        %v1297 = vadd.f32 %v1296, %v1234
        %v1298 = vadd.f32 %v1297, %v1235
        %v1299 = vadd.f32 %v1298, %v1236
        %v1300 = vadd.f32 %v1299, %v1237
        %v1301 = vadd.f32 %v1300, %v1238
        %v1302 = vadd.f32 %v1301, %v1239
        %v1303 = vadd.f32 %v1302, %v1240
        %v1304 = vadd.f32 %v1303, %v1241
        %v1305 = vadd.f32 %v1304, %v1242
        %v1306 = vadd.f32 %v1305, %v1243
        %v1307 = vadd.f32 %v1306, %v1244
        %v1308 = vadd.f32 %v1307, %v1245
        %v1309 = vadd.f32 %v1308, %v1246
        %v1310 = vadd.f32 %v1309, %v1247
        %v1311 = vadd.f32 %v1310, %v1248
        %v1312 = vadd.f32 %v1311, %v1249
        %v1313 = vadd.f32 %v1312, %v1250
        %v1314 = vadd.f32 %v1313, %v1251
        %v1315 = vadd.f32 %v1314, %v1252
        %v1316 = vadd.f32 %v1315, %v1253
        %v1317 = vadd.f32 %v1316, %v1254
        %v1318 = vadd.f32 %v1317, %v1255
        %v1319 = vadd.f32 %v1318, %v1256
        %v1320 = vadd.f32 %v1319, %v1257
        %v1321 = vadd.f32 %v1320, %v1258
        %v1322 = vadd.f32 %v1321, %v1259
        %v1323 = vadd.f32 %v1322, %v1260
        %v1324 = vadd.f32 %v1323, %v1261
        %v1325 = vadd.f32 %v1324, %v1262
        %v1326 = vadd.f32 %v1325, %v1263
        %v1327 = vadd.f32 %v1326, %v1264
        %v1328 = vadd.f32 %v1327, %v1265
        %v1329 = vadd.f32 %v1328, %v1266
        %v1330 = vadd.f32 %v1329, %v1267
        %v1331 = vadd.f32 %v1330, %v1268
        %v1332 = vadd.f32 %v1331, %v1269
        %v1333 = vadd.f32 %v1332, %v1270
        %v1334 = vadd.f32 %v1333, %v1271
        %v1335 = vadd.f32 %v1334, %v1272
        %v1336 = vadd.f32 %v1335, %v1273
        %v1337 = vadd.f32 %v1336, %v1274
        %v1338 = vrot.slane %v1337, 4
        %v1339 = vadd.f32 %v1337, %v1338
        %v1340 = vrot.slane %v1339, 2
        %v1341 = vadd.f32 %v1339, %v1340
        %v1342 = vrot.slane %v1341, 1
        %v1343 = vadd.f32 %v1341, %v1342
        %1344 = vst [vmem:[%s235] sm:$0xff] %v1210
        %1345 = vst [vmem:[%s239] sm:$0xff] %v1343
        %s1346 = sand.u32 %s71, 1
        %s1347 = sand.u32 %s71, 1
        %s1348 = smul.addr %s1347, 256
        %s1349 = scalar_lea.vmem [#allocation2], %s1348
        %p1350 = scmp.lt.s32.totalorder %s16, 1
        %s1351 = scalar_select %p1350, %s16, 1
        %s1352 = smul.addr %s1351, 8
        %s1353 = scalar_lea.vmem %s3, %s1352
        %p1354 = scmp.lt.s32.totalorder %s16, 1
        %s1355 = scalar_select %p1354, %s16, 1
        %s1356 = smul.addr %s1355, 8
        %s1357 = scalar_lea.vmem %s4, %s1356
        // Predicated region
        $region29: #{darts_stacked_cells_forward.32} parent=27 // pred_check
          %p1358 = pneg %p81
        $region30: #{darts_stacked_cells_forward.32} parent=27 // pred_check_branch
          %1360 = sbr.rel (%p1358) target = $region32
        $region31: #{darts_stacked_cells_forward.32} parent=27 // pred_region
          %s1361 = smul.u32 64, %s16
          %s1362 = ssub.s32 100, %s1361
          %p1363 = scmp.lt.s32.totalorder %s1362, 64
          %s1364 = scalar_select %p1363, %s1362, 64
          %s1365 = smul.u32 4, %s1364
          %p1366 = scmp.ne.s32.totalorder 0, %s1365
          %s1367 = smul.addr %s1361, 4
          %s1368 = scalar_lea.vmem %s2, %s1367
          // Predicated region
          $region33: #{darts_stacked_cells_forward.32} parent=31 // pred_check
            %p1369 = pneg %p1366
          $region34: #{darts_stacked_cells_forward.32} parent=31 // pred_check_branch
            %1371 = sbr.rel (%p1369) target = $region36
          $region35: #{darts_stacked_cells_forward.32} parent=31 // pred_region
            // Predicated region
            $region37: #{darts_stacked_cells_forward.32} parent=35 // pred_check
              _
            $region38: #{darts_stacked_cells_forward.32} parent=35 // pred_check_branch
              %1373 = sbr.rel target = $region40
            $region39: #{darts_stacked_cells_forward.32} parent=35 // pred_region
              // Predicated region
              $region59: #{darts_stacked_cells_forward.32} parent=39 // pred_check
                _
              $region60: #{darts_stacked_cells_forward.32} parent=39 // pred_check_branch
                %1485 = sbr.rel (0) target = $region62
              $region61: #{darts_stacked_cells_forward.32} parent=39 // pred_region
                %s1487 = ssub.s32 16, 1
                %s1488 = sshrl.u32 %s1364, 5
                // While loop
                $region63: #{darts_stacked_cells_forward.32} parent=61 // loop_pre_header
                  _
                $region64: #{darts_stacked_cells_forward.32} parent=61 // loop_header
                  %s1490 = sphi 0, %s1492
                  %p1491 = scmp.ge.s32.totalorder %s1490, %s1488
                  %s1495 = sphi 0, %s1564
                  %s1496 = sphi %s1349, %s1567
                  %s1497 = sphi %s1368, %s1568
                $region65: #{darts_stacked_cells_forward.32} parent=61 // loop_header_branch
                  %1494 = sbr.rel (%p1491) target = $region69
                $region66: #{darts_stacked_cells_forward.32} parent=61 // loop_body
                  %v1498 = vld [vmem:[%s1496] sm:%s1487]
                  %1499 = vst [vmem:[%s1497] sm:%s1487] %v1498
                  %v1500 = vld [vmem:[%s1496 + $0x4] sm:%s1487]
                  %1501 = vst [vmem:[%s1497 + $0x4] sm:%s1487] %v1500
                  %v1502 = vld [vmem:[%s1496 + $0x8] sm:%s1487]
                  %1503 = vst [vmem:[%s1497 + $0x8] sm:%s1487] %v1502
                  %v1504 = vld [vmem:[%s1496 + $0xc] sm:%s1487]
                  %1505 = vst [vmem:[%s1497 + $0xc] sm:%s1487] %v1504
                  %v1506 = vld [vmem:[%s1496 + $0x10] sm:%s1487]
                  %1507 = vst [vmem:[%s1497 + $0x10] sm:%s1487] %v1506
                  %v1508 = vld [vmem:[%s1496 + $0x14] sm:%s1487]
                  %1509 = vst [vmem:[%s1497 + $0x14] sm:%s1487] %v1508
                  %v1510 = vld [vmem:[%s1496 + $0x18] sm:%s1487]
                  %1511 = vst [vmem:[%s1497 + $0x18] sm:%s1487] %v1510
                  %v1512 = vld [vmem:[%s1496 + $0x1c] sm:%s1487]
                  %1513 = vst [vmem:[%s1497 + $0x1c] sm:%s1487] %v1512
                  %v1514 = vld [vmem:[%s1496 + $0x20] sm:%s1487]
                  %1515 = vst [vmem:[%s1497 + $0x20] sm:%s1487] %v1514
                  %v1516 = vld [vmem:[%s1496 + $0x24] sm:%s1487]
                  %1517 = vst [vmem:[%s1497 + $0x24] sm:%s1487] %v1516
                  %v1518 = vld [vmem:[%s1496 + $0x28] sm:%s1487]
                  %1519 = vst [vmem:[%s1497 + $0x28] sm:%s1487] %v1518
                  %v1520 = vld [vmem:[%s1496 + $0x2c] sm:%s1487]
                  %1521 = vst [vmem:[%s1497 + $0x2c] sm:%s1487] %v1520
                  %v1522 = vld [vmem:[%s1496 + $0x30] sm:%s1487]
                  %1523 = vst [vmem:[%s1497 + $0x30] sm:%s1487] %v1522
                  %v1524 = vld [vmem:[%s1496 + $0x34] sm:%s1487]
                  %1525 = vst [vmem:[%s1497 + $0x34] sm:%s1487] %v1524
                  %v1526 = vld [vmem:[%s1496 + $0x38] sm:%s1487]
                  %1527 = vst [vmem:[%s1497 + $0x38] sm:%s1487] %v1526
                  %v1528 = vld [vmem:[%s1496 + $0x3c] sm:%s1487]
                  %1529 = vst [vmem:[%s1497 + $0x3c] sm:%s1487] %v1528
                  %v1530 = vld [vmem:[%s1496 + $0x40] sm:%s1487]
                  %1531 = vst [vmem:[%s1497 + $0x40] sm:%s1487] %v1530
                  %v1532 = vld [vmem:[%s1496 + $0x44] sm:%s1487]
                  %1533 = vst [vmem:[%s1497 + $0x44] sm:%s1487] %v1532
                  %v1534 = vld [vmem:[%s1496 + $0x48] sm:%s1487]
                  %1535 = vst [vmem:[%s1497 + $0x48] sm:%s1487] %v1534
                  %v1536 = vld [vmem:[%s1496 + $0x4c] sm:%s1487]
                  %1537 = vst [vmem:[%s1497 + $0x4c] sm:%s1487] %v1536
                  %v1538 = vld [vmem:[%s1496 + $0x50] sm:%s1487]
                  %1539 = vst [vmem:[%s1497 + $0x50] sm:%s1487] %v1538
                  %v1540 = vld [vmem:[%s1496 + $0x54] sm:%s1487]
                  %1541 = vst [vmem:[%s1497 + $0x54] sm:%s1487] %v1540
                  %v1542 = vld [vmem:[%s1496 + $0x58] sm:%s1487]
                  %1543 = vst [vmem:[%s1497 + $0x58] sm:%s1487] %v1542
                  %v1544 = vld [vmem:[%s1496 + $0x5c] sm:%s1487]
                  %1545 = vst [vmem:[%s1497 + $0x5c] sm:%s1487] %v1544
                  %v1546 = vld [vmem:[%s1496 + $0x60] sm:%s1487]
                  %1547 = vst [vmem:[%s1497 + $0x60] sm:%s1487] %v1546
                  %v1548 = vld [vmem:[%s1496 + $0x64] sm:%s1487]
                  %1549 = vst [vmem:[%s1497 + $0x64] sm:%s1487] %v1548
                  %v1550 = vld [vmem:[%s1496 + $0x68] sm:%s1487]
                  %1551 = vst [vmem:[%s1497 + $0x68] sm:%s1487] %v1550
                  %v1552 = vld [vmem:[%s1496 + $0x6c] sm:%s1487]
                  %1553 = vst [vmem:[%s1497 + $0x6c] sm:%s1487] %v1552
                  %v1554 = vld [vmem:[%s1496 + $0x70] sm:%s1487]
                  %1555 = vst [vmem:[%s1497 + $0x70] sm:%s1487] %v1554
                  %v1556 = vld [vmem:[%s1496 + $0x74] sm:%s1487]
                  %1557 = vst [vmem:[%s1497 + $0x74] sm:%s1487] %v1556
                  %v1558 = vld [vmem:[%s1496 + $0x78] sm:%s1487]
                  %1559 = vst [vmem:[%s1497 + $0x78] sm:%s1487] %v1558
                  %v1560 = vld [vmem:[%s1496 + $0x7c] sm:%s1487]
                  %1561 = vst [vmem:[%s1497 + $0x7c] sm:%s1487] %v1560
                  %s1562 = sadd.s32 1, %s1495
                  %p1563 = scmp.ge.s32.totalorder %s1562, %s1488
                  %s1564 = scalar_select %p1563, 0, %s1562
                  %s1565 = smul.u32 %s1564, 128
                  %s1566 = smul.u32 %s1564, 128
                  %s1567 = scalar_lea.vmem %s1349, %s1565 [#allocation2]
                  %s1568 = scalar_lea.vmem %s1368, %s1566
                $region67: #{darts_stacked_cells_forward.32} parent=61 // loop_footer
                  %s1492 = sadd.s32 %s1490, 1
                $region68: #{darts_stacked_cells_forward.32} parent=61 // loop_footer_branch
                  %1489 = sbr.rel target = $region64
                $region69: #{darts_stacked_cells_forward.32} parent=61 // loop_exit
                  _
                %s1569 = sshrl.u32 %s1364, 5
                %s1570 = sand.u32 %s1364, 31
                %s1571 = smul.u32 %s1569, 32
                %s1572 = smul.u32 4, %s1571
                %s1573 = scalar_lea.vmem %s1349, %s1572 [#allocation2]
                %s1574 = smul.u32 4, %s1571
                %s1575 = scalar_lea.vmem %s1368, %s1574
                // While loop
                $region70: #{darts_stacked_cells_forward.32} parent=61 // loop_pre_header
                  _
                $region71: #{darts_stacked_cells_forward.32} parent=61 // loop_header
                  %s1577 = sphi 0, %s1579
                  %p1578 = scmp.ge.s32.totalorder %s1577, %s1570
                  %s1582 = sphi 0, %s1589
                  %s1583 = sphi %s1573, %s1592
                  %s1584 = sphi %s1575, %s1593
                $region72: #{darts_stacked_cells_forward.32} parent=61 // loop_header_branch
                  %1581 = sbr.rel (%p1578) target = $region76
                $region73: #{darts_stacked_cells_forward.32} parent=61 // loop_body
                  %v1585 = vld [vmem:[%s1583] sm:%s1487]
                  %1586 = vst [vmem:[%s1584] sm:%s1487] %v1585
                  %s1587 = sadd.s32 1, %s1582
                  %p1588 = scmp.ge.s32.totalorder %s1587, %s1570
                  %s1589 = scalar_select %p1588, 0, %s1587
                  %s1590 = smul.u32 %s1589, 4
                  %s1591 = smul.u32 %s1589, 4
                  %s1592 = scalar_lea.vmem %s1573, %s1590 [#allocation2]
                  %s1593 = scalar_lea.vmem %s1575, %s1591
                $region74: #{darts_stacked_cells_forward.32} parent=61 // loop_footer
                  %s1579 = sadd.s32 %s1577, 1
                $region75: #{darts_stacked_cells_forward.32} parent=61 // loop_footer_branch
                  %1576 = sbr.rel target = $region71
                $region76: #{darts_stacked_cells_forward.32} parent=61 // loop_exit
                  _
              $region62: #{darts_stacked_cells_forward.32} parent=39 // pred_fallthru
                _
            $region40: #{darts_stacked_cells_forward.32} parent=35 // pred_fallthru
              _
            // Predicated region
            $region41: #{darts_stacked_cells_forward.32} parent=35 // pred_check
              _
            $region42: #{darts_stacked_cells_forward.32} parent=35 // pred_check_branch
              %1375 = sbr.rel (0) target = $region44
            $region43: #{darts_stacked_cells_forward.32} parent=35 // pred_region
              %s1377 = ssub.s32 16, 1
              %s1378 = sshrl.u32 %s1364, 5
              // While loop
              $region45: #{darts_stacked_cells_forward.32} parent=43 // loop_pre_header
                _
              $region46: #{darts_stacked_cells_forward.32} parent=43 // loop_header
                %s1380 = sphi 0, %s1382
                %p1381 = scmp.ge.s32.totalorder %s1380, %s1378
                %s1385 = sphi 0, %s1454
                %s1386 = sphi %s1349, %s1457
                %s1387 = sphi %s1368, %s1458
              $region47: #{darts_stacked_cells_forward.32} parent=43 // loop_header_branch
                %1384 = sbr.rel (%p1381) target = $region51
              $region48: #{darts_stacked_cells_forward.32} parent=43 // loop_body
                %v1388 = vld [vmem:[%s1386] sm:%s1377]
                %1389 = vst [vmem:[%s1387] sm:%s1377] %v1388
                %v1390 = vld [vmem:[%s1386 + $0x4] sm:%s1377]
                %1391 = vst [vmem:[%s1387 + $0x4] sm:%s1377] %v1390
                %v1392 = vld [vmem:[%s1386 + $0x8] sm:%s1377]
                %1393 = vst [vmem:[%s1387 + $0x8] sm:%s1377] %v1392
                %v1394 = vld [vmem:[%s1386 + $0xc] sm:%s1377]
                %1395 = vst [vmem:[%s1387 + $0xc] sm:%s1377] %v1394
                %v1396 = vld [vmem:[%s1386 + $0x10] sm:%s1377]
                %1397 = vst [vmem:[%s1387 + $0x10] sm:%s1377] %v1396
                %v1398 = vld [vmem:[%s1386 + $0x14] sm:%s1377]
                %1399 = vst [vmem:[%s1387 + $0x14] sm:%s1377] %v1398
                %v1400 = vld [vmem:[%s1386 + $0x18] sm:%s1377]
                %1401 = vst [vmem:[%s1387 + $0x18] sm:%s1377] %v1400
                %v1402 = vld [vmem:[%s1386 + $0x1c] sm:%s1377]
                %1403 = vst [vmem:[%s1387 + $0x1c] sm:%s1377] %v1402
                %v1404 = vld [vmem:[%s1386 + $0x20] sm:%s1377]
                %1405 = vst [vmem:[%s1387 + $0x20] sm:%s1377] %v1404
                %v1406 = vld [vmem:[%s1386 + $0x24] sm:%s1377]
                %1407 = vst [vmem:[%s1387 + $0x24] sm:%s1377] %v1406
                %v1408 = vld [vmem:[%s1386 + $0x28] sm:%s1377]
                %1409 = vst [vmem:[%s1387 + $0x28] sm:%s1377] %v1408
                %v1410 = vld [vmem:[%s1386 + $0x2c] sm:%s1377]
                %1411 = vst [vmem:[%s1387 + $0x2c] sm:%s1377] %v1410
                %v1412 = vld [vmem:[%s1386 + $0x30] sm:%s1377]
                %1413 = vst [vmem:[%s1387 + $0x30] sm:%s1377] %v1412
                %v1414 = vld [vmem:[%s1386 + $0x34] sm:%s1377]
                %1415 = vst [vmem:[%s1387 + $0x34] sm:%s1377] %v1414
                %v1416 = vld [vmem:[%s1386 + $0x38] sm:%s1377]
                %1417 = vst [vmem:[%s1387 + $0x38] sm:%s1377] %v1416
                %v1418 = vld [vmem:[%s1386 + $0x3c] sm:%s1377]
                %1419 = vst [vmem:[%s1387 + $0x3c] sm:%s1377] %v1418
                %v1420 = vld [vmem:[%s1386 + $0x40] sm:%s1377]
                %1421 = vst [vmem:[%s1387 + $0x40] sm:%s1377] %v1420
                %v1422 = vld [vmem:[%s1386 + $0x44] sm:%s1377]
                %1423 = vst [vmem:[%s1387 + $0x44] sm:%s1377] %v1422
                %v1424 = vld [vmem:[%s1386 + $0x48] sm:%s1377]
                %1425 = vst [vmem:[%s1387 + $0x48] sm:%s1377] %v1424
                %v1426 = vld [vmem:[%s1386 + $0x4c] sm:%s1377]
                %1427 = vst [vmem:[%s1387 + $0x4c] sm:%s1377] %v1426
                %v1428 = vld [vmem:[%s1386 + $0x50] sm:%s1377]
                %1429 = vst [vmem:[%s1387 + $0x50] sm:%s1377] %v1428
                %v1430 = vld [vmem:[%s1386 + $0x54] sm:%s1377]
                %1431 = vst [vmem:[%s1387 + $0x54] sm:%s1377] %v1430
                %v1432 = vld [vmem:[%s1386 + $0x58] sm:%s1377]
                %1433 = vst [vmem:[%s1387 + $0x58] sm:%s1377] %v1432
                %v1434 = vld [vmem:[%s1386 + $0x5c] sm:%s1377]
                %1435 = vst [vmem:[%s1387 + $0x5c] sm:%s1377] %v1434
                %v1436 = vld [vmem:[%s1386 + $0x60] sm:%s1377]
                %1437 = vst [vmem:[%s1387 + $0x60] sm:%s1377] %v1436
                %v1438 = vld [vmem:[%s1386 + $0x64] sm:%s1377]
                %1439 = vst [vmem:[%s1387 + $0x64] sm:%s1377] %v1438
                %v1440 = vld [vmem:[%s1386 + $0x68] sm:%s1377]
                %1441 = vst [vmem:[%s1387 + $0x68] sm:%s1377] %v1440
                %v1442 = vld [vmem:[%s1386 + $0x6c] sm:%s1377]
                %1443 = vst [vmem:[%s1387 + $0x6c] sm:%s1377] %v1442
                %v1444 = vld [vmem:[%s1386 + $0x70] sm:%s1377]
                %1445 = vst [vmem:[%s1387 + $0x70] sm:%s1377] %v1444
                %v1446 = vld [vmem:[%s1386 + $0x74] sm:%s1377]
                %1447 = vst [vmem:[%s1387 + $0x74] sm:%s1377] %v1446
                %v1448 = vld [vmem:[%s1386 + $0x78] sm:%s1377]
                %1449 = vst [vmem:[%s1387 + $0x78] sm:%s1377] %v1448
                %v1450 = vld [vmem:[%s1386 + $0x7c] sm:%s1377]
                %1451 = vst [vmem:[%s1387 + $0x7c] sm:%s1377] %v1450
                %s1452 = sadd.s32 1, %s1385
                %p1453 = scmp.ge.s32.totalorder %s1452, %s1378
                %s1454 = scalar_select %p1453, 0, %s1452
                %s1455 = smul.u32 %s1454, 128
                %s1456 = smul.u32 %s1454, 128
                %s1457 = scalar_lea.vmem %s1349, %s1455 [#allocation2]
                %s1458 = scalar_lea.vmem %s1368, %s1456
              $region49: #{darts_stacked_cells_forward.32} parent=43 // loop_footer
                %s1382 = sadd.s32 %s1380, 1
              $region50: #{darts_stacked_cells_forward.32} parent=43 // loop_footer_branch
                %1379 = sbr.rel target = $region46
              $region51: #{darts_stacked_cells_forward.32} parent=43 // loop_exit
                _
              %s1459 = sshrl.u32 %s1364, 5
              %s1460 = sand.u32 %s1364, 31
              %s1461 = smul.u32 %s1459, 32
              %s1462 = smul.u32 4, %s1461
              %s1463 = scalar_lea.vmem %s1349, %s1462 [#allocation2]
              %s1464 = smul.u32 4, %s1461
              %s1465 = scalar_lea.vmem %s1368, %s1464
              // While loop
              $region52: #{darts_stacked_cells_forward.32} parent=43 // loop_pre_header
                _
              $region53: #{darts_stacked_cells_forward.32} parent=43 // loop_header
                %s1467 = sphi 0, %s1469
                %p1468 = scmp.ge.s32.totalorder %s1467, %s1460
                %s1472 = sphi 0, %s1479
                %s1473 = sphi %s1463, %s1482
                %s1474 = sphi %s1465, %s1483
              $region54: #{darts_stacked_cells_forward.32} parent=43 // loop_header_branch
                %1471 = sbr.rel (%p1468) target = $region58
              $region55: #{darts_stacked_cells_forward.32} parent=43 // loop_body
                %v1475 = vld [vmem:[%s1473] sm:%s1377]
                %1476 = vst [vmem:[%s1474] sm:%s1377] %v1475
                %s1477 = sadd.s32 1, %s1472
                %p1478 = scmp.ge.s32.totalorder %s1477, %s1460
                %s1479 = scalar_select %p1478, 0, %s1477
                %s1480 = smul.u32 %s1479, 4
                %s1481 = smul.u32 %s1479, 4
                %s1482 = scalar_lea.vmem %s1463, %s1480 [#allocation2]
                %s1483 = scalar_lea.vmem %s1465, %s1481
              $region56: #{darts_stacked_cells_forward.32} parent=43 // loop_footer
                %s1469 = sadd.s32 %s1467, 1
              $region57: #{darts_stacked_cells_forward.32} parent=43 // loop_footer_branch
                %1466 = sbr.rel target = $region53
              $region58: #{darts_stacked_cells_forward.32} parent=43 // loop_exit
                _
            $region44: #{darts_stacked_cells_forward.32} parent=35 // pred_fallthru
              _
          $region36: #{darts_stacked_cells_forward.32} parent=31 // pred_fallthru
            _
          %1594 = vnop
        $region32: #{darts_stacked_cells_forward.32} parent=27 // pred_fallthru
          _
        // Predicated region
        $region77: #{darts_stacked_cells_forward.32} parent=27 // pred_check
          %p1595 = pneg %p107
        $region78: #{darts_stacked_cells_forward.32} parent=27 // pred_check_branch
          %1597 = sbr.rel (%p1595) target = $region80
        $region79: #{darts_stacked_cells_forward.32} parent=27 // pred_region
          _
        $region80: #{darts_stacked_cells_forward.32} parent=27 // pred_fallthru
          _
        // Predicated region
        $region81: #{darts_stacked_cells_forward.32} parent=27 // pred_check
          %p1598 = pneg %p133
        $region82: #{darts_stacked_cells_forward.32} parent=27 // pred_check_branch
          %1600 = sbr.rel (%p1598) target = $region84
        $region83: #{darts_stacked_cells_forward.32} parent=27 // pred_region
          _
        $region84: #{darts_stacked_cells_forward.32} parent=27 // pred_fallthru
          _
      $region28: #{darts_stacked_cells_forward.32} parent=5 // pred_fallthru
        _
      %p1601 = scmp.le.s32.totalorder 2, %s11
      // Predicated region
      $region85: #{darts_stacked_cells_forward.32} parent=5 // pred_check
        %p1602 = pneg %p1601
      $region86: #{darts_stacked_cells_forward.32} parent=5 // pred_check_branch
        %1604 = sbr.rel (%p1602) target = $region88
      $region87: #{darts_stacked_cells_forward.32} parent=5 // pred_region
        %s1605 = ssub.s32 %s11, 2
        // Predicated region
        $region89: #{darts_stacked_cells_forward.32} parent=87 // pred_check
          %p1606 = pneg %p87
        $region90: #{darts_stacked_cells_forward.32} parent=87 // pred_check_branch
          %1608 = sbr.rel (%p1606) target = $region92
        $region91: #{darts_stacked_cells_forward.32} parent=87 // pred_region
          %s1609 = sand.u32 %s72, 1
          %s1610 = sand.u32 %s72, 1
          %s1611 = smul.addr %s1610, 256
          %s1612 = scalar_lea.vmem [#allocation2], %s1611
        $region92: #{darts_stacked_cells_forward.32} parent=87 // pred_fallthru
          _
        // Predicated region
        $region93: #{darts_stacked_cells_forward.32} parent=87 // pred_check
          %p1613 = pneg %p113
        $region94: #{darts_stacked_cells_forward.32} parent=87 // pred_check_branch
          %1615 = sbr.rel (%p1613) target = $region96
        $region95: #{darts_stacked_cells_forward.32} parent=87 // pred_region
          %p1616 = scmp.lt.s32.totalorder %s17, 1
          %s1617 = scalar_select %p1616, %s17, 1
          %s1618 = smul.addr %s1617, 8
          %s1619 = scalar_lea.vmem %s3, %s1618
        $region96: #{darts_stacked_cells_forward.32} parent=87 // pred_fallthru
          _
        // Predicated region
        $region97: #{darts_stacked_cells_forward.32} parent=87 // pred_check
          %p1620 = pneg %p139
        $region98: #{darts_stacked_cells_forward.32} parent=87 // pred_check_branch
          %1622 = sbr.rel (%p1620) target = $region100
        $region99: #{darts_stacked_cells_forward.32} parent=87 // pred_region
          %p1623 = scmp.lt.s32.totalorder %s17, 1
          %s1624 = scalar_select %p1623, %s17, 1
          %s1625 = smul.addr %s1624, 8
          %s1626 = scalar_lea.vmem %s4, %s1625
        $region100: #{darts_stacked_cells_forward.32} parent=87 // pred_fallthru
          _
      $region88: #{darts_stacked_cells_forward.32} parent=5 // pred_fallthru
        _
    $region6: #{darts_stacked_cells_forward.32} parent=1 // loop_footer
      %s15 = sadd.s32 1, %s11
    $region7: #{darts_stacked_cells_forward.32} parent=1 // loop_footer_branch
      %10 = sbr.rel target = $region3
    $region8: #{darts_stacked_cells_forward.32} parent=1 // loop_exit
      _

// kernel: darts_stacked_cells_forward.46
$region0: #{darts_stacked_cells_forward.46}
  #allocation0 [shape = 'u32[]', space=smem, size = 0x4, offset = 0x4, fixed_abs, tag = 'smem constant byte address 0x4 - core index']
  #allocation1 [shape = 'u32[72,128]{1,0:T(1,128)}', space=vmem, size = 0x9000, scoped, tag = 'internal scratch']
  %s0 = inlined_call_operand.vmem [shape: bf16[200,8], index: 0, kind: input, shape index: {}]
  %s1 = inlined_call_operand.vmem [shape: bf16[8,128], index: 1, kind: input, shape index: {}]
  %s2 = inlined_call_operand.vmem [shape: f32[1,128], index: 2, kind: input, shape index: {}]
  %s3 = inlined_call_operand.vmem [shape: f32[1,128], index: 3, kind: input, shape index: {}]
  %s4 = inlined_call_operand.vmem [shape: bf16[200,128], index: 4, kind: output, shape index: {}]
  %s5 = sld [smem:[#allocation0]]
  $region26: #{darts_stacked_cells_forward.46} parent=0
    _
  %s7 = ssub.s32 1, %s5
  %s8 = scalar_select 0, %s7, %s5
  // Predicated region
  $region2: #{darts_stacked_cells_forward.46} parent=0 // pred_check
    _
  $region3: #{darts_stacked_cells_forward.46} parent=0 // pred_check_branch
    %10 = sbr.rel (0) target = $region5
  $region4: #{darts_stacked_cells_forward.46} parent=0 // pred_region
    _
  $region5: #{darts_stacked_cells_forward.46} parent=0 // pred_fallthru
    _
  // Predicated region
  $region6: #{darts_stacked_cells_forward.46} parent=0 // pred_check
    _
  $region7: #{darts_stacked_cells_forward.46} parent=0 // pred_check_branch
    %12 = sbr.rel (0) target = $region9
  $region8: #{darts_stacked_cells_forward.46} parent=0 // pred_region
    _
  $region9: #{darts_stacked_cells_forward.46} parent=0 // pred_fallthru
    _
  // Predicated region
  $region10: #{darts_stacked_cells_forward.46} parent=0 // pred_check
    _
  $region11: #{darts_stacked_cells_forward.46} parent=0 // pred_check_branch
    %14 = sbr.rel (0) target = $region13
  $region12: #{darts_stacked_cells_forward.46} parent=0 // pred_region
    _
  $region13: #{darts_stacked_cells_forward.46} parent=0 // pred_fallthru
    _
  // Predicated region
  $region14: #{darts_stacked_cells_forward.46} parent=0 // pred_check
    _
  $region15: #{darts_stacked_cells_forward.46} parent=0 // pred_check_branch
    %16 = sbr.rel (0) target = $region17
  $region16: #{darts_stacked_cells_forward.46} parent=0 // pred_region
    _
  $region17: #{darts_stacked_cells_forward.46} parent=0 // pred_fallthru
    _
  %v18 = vld [vmem:[%s0] sm:$0xf]
  %v19 = vld [vmem:[%s0 + $0x4] sm:$0xf]
  %v20 = vld [vmem:[%s0 + $0x8] sm:$0xf]
  %v21 = vld [vmem:[%s0 + $0xc] sm:$0xf]
  %v22 = vld [vmem:[%s0 + $0x10] sm:$0xf]
  %v23 = vld [vmem:[%s0 + $0x14] sm:$0xf]
  %v24 = vld [vmem:[%s0 + $0x18] sm:$0xf]
  %v25 = vld [vmem:[%s0 + $0x1c] sm:$0xf]
  %v26 = vld [vmem:[%s0 + $0x20] sm:$0xf]
  %v27 = vld [vmem:[%s0 + $0x24] sm:$0xf]
  %v28 = vld [vmem:[%s0 + $0x28] sm:$0xf]
  %v29 = vld [vmem:[%s0 + $0x2c] sm:$0xf]
  %v30 = vld [vmem:[%s0 + $0x30] sm:$0xf]
  %v31 = vld [vmem:[%s0 + $0x34] sm:$0xf]
  %v32 = vld [vmem:[%s0 + $0x38] sm:$0xf]
  %v33 = vld [vmem:[%s0 + $0x3c] sm:$0xf]
  %v34 = vld [vmem:[%s0 + $0x40] sm:$0xf]
  %v35 = vld [vmem:[%s0 + $0x44] sm:$0xf]
  %v36 = vld [vmem:[%s0 + $0x48] sm:$0xf]
  %v37 = vld [vmem:[%s0 + $0x4c] sm:$0xf]
  %v38 = vld [vmem:[%s0 + $0x50] sm:$0xf]
  %v39 = vld [vmem:[%s0 + $0x54] sm:$0xf]
  %v40 = vld [vmem:[%s0 + $0x58] sm:$0xf]
  %v41 = vld [vmem:[%s0 + $0x5c] sm:$0xf]
  %v42 = vld [vmem:[%s0 + $0x60] sm:$0xf]
  %v43 = vld [vmem:[%s1] sm:$0xf]
  %v69 = vunpack.c.l.b16 %v18
  %v70 = vunpack.c.l.b16 %v19
  %v71 = vunpack.c.l.b16 %v20
  %v72 = vunpack.c.l.b16 %v21
  %v73 = vunpack.c.l.b16 %v22
  %v74 = vunpack.c.l.b16 %v23
  %v75 = vunpack.c.l.b16 %v24
  %v76 = vunpack.c.l.b16 %v25
  %v77 = vunpack.c.l.b16 %v26
  %v78 = vunpack.c.l.b16 %v27
  %v79 = vunpack.c.l.b16 %v28
  %v80 = vunpack.c.l.b16 %v29
  %v81 = vunpack.c.l.b16 %v30
  %v82 = vunpack.c.l.b16 %v31
  %v83 = vunpack.c.l.b16 %v32
  %v84 = vunpack.c.l.b16 %v33
  %v85 = vunpack.c.l.b16 %v34
  %v86 = vunpack.c.l.b16 %v35
  %v87 = vunpack.c.l.b16 %v36
  %v88 = vunpack.c.l.b16 %v37
  %v89 = vunpack.c.l.b16 %v38
  %v90 = vunpack.c.l.b16 %v39
  %v91 = vunpack.c.l.b16 %v40
  %v92 = vunpack.c.l.b16 %v41
  %v93 = vunpack.c.l.b16 %v42
  %v94 = vpack.c.b16 %v70, %v69
  %v95 = vpack.c.b16 %v72, %v71
  %v96 = vpack.c.b16 %v74, %v73
  %v97 = vpack.c.b16 %v76, %v75
  %v98 = vpack.c.b16 %v78, %v77
  %v99 = vpack.c.b16 %v80, %v79
  %v100 = vpack.c.b16 %v82, %v81
  %v101 = vpack.c.b16 %v84, %v83
  %v102 = vpack.c.b16 %v86, %v85
  %v103 = vpack.c.b16 %v88, %v87
  %v104 = vpack.c.b16 %v90, %v89
  %v105 = vpack.c.b16 %v92, %v91
  %v106 = vpack.c.b16 %v93, %v93
  %vm107 = vcmask 64512
  %v109 = vsel %vm107, %v94, 0
  %v112 = vsel %vm107, %v95, 0
  %v115 = vsel %vm107, %v96, 0
  %v118 = vsel %vm107, %v97, 0
  %v121 = vsel %vm107, %v98, 0
  %v124 = vsel %vm107, %v99, 0
  %v127 = vsel %vm107, %v100, 0
  %v130 = vsel %vm107, %v101, 0
  %v133 = vsel %vm107, %v102, 0
  %v136 = vsel %vm107, %v103, 0
  %v139 = vsel %vm107, %v104, 0
  %v142 = vsel %vm107, %v105, 0
  %v145 = vsel %vm107, %v106, 0
  %vm147 = vcmask 1043456
  %v149 = vsel %vm147, %v43, 0
  %151 = vmatpush.bf16.msra.mxu0 0
  %152 = vmatpush.bf16.msra.mxu0 0
  %153 = vmatpush.bf16.msra.mxu0 0
  %154 = vmatpush.bf16.msra.mxu0 0
  %155 = vmatpush.bf16.msra.mxu0 0
  %156 = vmatpush.bf16.msra.mxu0 0
  %157 = vmatpush.bf16.msra.mxu0 0
  %158 = vmatpush.bf16.msra.mxu0 %v149
  %159 = vmatmul.bf16.gmra.mxu0 %v109
  %v160 = vpop.f32.mrf.mxu0
  %v161 = vadd.f32 0.0, %v160
  %v162 = vpop.f32.mrf.mxu0
  %v163 = vadd.f32 0.0, %v162
  %164 = vmatmul.bf16.gmra.mxu0 %v112
  %v165 = vpop.f32.mrf.mxu0
  %v166 = vadd.f32 0.0, %v165
  %v167 = vpop.f32.mrf.mxu0
  %v168 = vadd.f32 0.0, %v167
  %169 = vmatmul.bf16.gmra.mxu0 %v115
  %v170 = vpop.f32.mrf.mxu0
  %v171 = vadd.f32 0.0, %v170
  %v172 = vpop.f32.mrf.mxu0
  %v173 = vadd.f32 0.0, %v172
  %174 = vmatmul.bf16.gmra.mxu0 %v118
  %v175 = vpop.f32.mrf.mxu0
  %v176 = vadd.f32 0.0, %v175
  %v177 = vpop.f32.mrf.mxu0
  %v178 = vadd.f32 0.0, %v177
  %179 = vmatmul.bf16.gmra.mxu0 %v121
  %v180 = vpop.f32.mrf.mxu0
  %v181 = vadd.f32 0.0, %v180
  %v182 = vpop.f32.mrf.mxu0
  %v183 = vadd.f32 0.0, %v182
  %184 = vmatmul.bf16.gmra.mxu0 %v124
  %v185 = vpop.f32.mrf.mxu0
  %v186 = vadd.f32 0.0, %v185
  %v187 = vpop.f32.mrf.mxu0
  %v188 = vadd.f32 0.0, %v187
  %189 = vmatmul.bf16.gmra.mxu0 %v127
  %v190 = vpop.f32.mrf.mxu0
  %v191 = vadd.f32 0.0, %v190
  %v192 = vpop.f32.mrf.mxu0
  %v193 = vadd.f32 0.0, %v192
  %194 = vmatmul.bf16.gmra.mxu0 %v130
  %v195 = vpop.f32.mrf.mxu0
  %v196 = vadd.f32 0.0, %v195
  %v197 = vpop.f32.mrf.mxu0
  %v198 = vadd.f32 0.0, %v197
  %199 = vmatmul.bf16.gmra.mxu0 %v133
  %v200 = vpop.f32.mrf.mxu0
  %v201 = vadd.f32 0.0, %v200
  %v202 = vpop.f32.mrf.mxu0
  %v203 = vadd.f32 0.0, %v202
  %204 = vmatmul.bf16.gmra.mxu0 %v136
  %v205 = vpop.f32.mrf.mxu0
  %v206 = vadd.f32 0.0, %v205
  %v207 = vpop.f32.mrf.mxu0
  %v208 = vadd.f32 0.0, %v207
  %209 = vmatmul.bf16.gmra.mxu0 %v139
  %v210 = vpop.f32.mrf.mxu0
  %v211 = vadd.f32 0.0, %v210
  %v212 = vpop.f32.mrf.mxu0
  %v213 = vadd.f32 0.0, %v212
  %214 = vmatmul.bf16.gmra.mxu0 %v142
  %v215 = vpop.f32.mrf.mxu0
  %v216 = vadd.f32 0.0, %v215
  %v217 = vpop.f32.mrf.mxu0
  %v218 = vadd.f32 0.0, %v217
  %219 = vmatmul.bf16.gmra.mxu0 %v145
  %v220 = vpop.f32.mrf.mxu0
  %v221 = vadd.f32 0.0, %v220
  %v222 = vpop.f32.mrf.mxu0
  %223 = vdwg.mxu0
  %v224 = vadd.f32 %v161, %v163
  %v225 = vadd.f32 %v224, %v166
  %v226 = vadd.f32 %v225, %v168
  %v227 = vadd.f32 %v226, %v171
  %v228 = vadd.f32 %v227, %v173
  %v229 = vadd.f32 %v228, %v176
  %v230 = vadd.f32 %v229, %v178
  %v231 = vadd.f32 %v230, %v181
  %v232 = vadd.f32 %v231, %v183
  %v233 = vadd.f32 %v232, %v186
  %v234 = vadd.f32 %v233, %v188
  %v235 = vadd.f32 %v234, %v191
  %v236 = vadd.f32 %v235, %v193
  %v237 = vadd.f32 %v236, %v196
  %v238 = vadd.f32 %v237, %v198
  %v239 = vadd.f32 %v238, %v201
  %v240 = vadd.f32 %v239, %v203
  %v241 = vadd.f32 %v240, %v206
  %v242 = vadd.f32 %v241, %v208
  %v243 = vadd.f32 %v242, %v211
  %v244 = vadd.f32 %v243, %v213
  %v245 = vadd.f32 %v244, %v216
  %v246 = vadd.f32 %v245, %v218
  %v247 = vadd.f32 %v246, %v221
  %v248 = vrot.slane %v247, 4
  %v249 = vadd.f32 %v247, %v248
  %v250 = vrot.slane %v249, 2
  %v251 = vadd.f32 %v249, %v250
  %v252 = vrot.slane %v251, 1
  %v253 = vadd.f32 %v251, %v252
  %v254 = vmul.f32 %v253, 0.005
  %v255 = vmul.f32 %v161, %v161
  %v256 = vmul.f32 %v163, %v163
  %v257 = vmul.f32 %v166, %v166
  %v258 = vmul.f32 %v168, %v168
  %v259 = vmul.f32 %v171, %v171
  %v260 = vmul.f32 %v173, %v173
  %v261 = vmul.f32 %v176, %v176
  %v262 = vmul.f32 %v178, %v178
  %v263 = vmul.f32 %v181, %v181
  %v264 = vmul.f32 %v183, %v183
  %v265 = vmul.f32 %v186, %v186
  %v266 = vmul.f32 %v188, %v188
  %v267 = vmul.f32 %v191, %v191
  %v268 = vmul.f32 %v193, %v193
  %v269 = vmul.f32 %v196, %v196
  %v270 = vmul.f32 %v198, %v198
  %v271 = vmul.f32 %v201, %v201
  %v272 = vmul.f32 %v203, %v203
  %v273 = vmul.f32 %v206, %v206
  %v274 = vmul.f32 %v208, %v208
  %v275 = vmul.f32 %v211, %v211
  %v276 = vmul.f32 %v213, %v213
  %v277 = vmul.f32 %v216, %v216
  %v278 = vmul.f32 %v218, %v218
  %v279 = vmul.f32 %v221, %v221
  %v280 = vadd.f32 %v255, %v256
  %v281 = vadd.f32 %v280, %v257
  %v282 = vadd.f32 %v281, %v258
  %v283 = vadd.f32 %v282, %v259
  %v284 = vadd.f32 %v283, %v260
  %v285 = vadd.f32 %v284, %v261
  %v286 = vadd.f32 %v285, %v262
  %v287 = vadd.f32 %v286, %v263
  %v288 = vadd.f32 %v287, %v264
  %v289 = vadd.f32 %v288, %v265
  %v290 = vadd.f32 %v289, %v266
  %v291 = vadd.f32 %v290, %v267
  %v292 = vadd.f32 %v291, %v268
  %v293 = vadd.f32 %v292, %v269
  %v294 = vadd.f32 %v293, %v270
  %v295 = vadd.f32 %v294, %v271
  %v296 = vadd.f32 %v295, %v272
  %v297 = vadd.f32 %v296, %v273
  %v298 = vadd.f32 %v297, %v274
  %v299 = vadd.f32 %v298, %v275
  %v300 = vadd.f32 %v299, %v276
  %v301 = vadd.f32 %v300, %v277
  %v302 = vadd.f32 %v301, %v278
  %v303 = vadd.f32 %v302, %v279
  %v304 = vrot.slane %v303, 4
  %v305 = vadd.f32 %v303, %v304
  %v306 = vrot.slane %v305, 2
  %v307 = vadd.f32 %v305, %v306
  %v308 = vrot.slane %v307, 1
  %v309 = vadd.f32 %v307, %v308
  %v310 = vmul.f32 %v309, 0.005
  %v311 = vmul.f32 %v254, %v254
  %v312 = vsub.f32 %v310, %v311
  %v313 = vmax.f32 %v312, 0.0
  %v314 = vld [vmem:[%s2] sm:$0x1]
  %v315 = vadd.f32 %v313, 1e-05
  %v316 = vrsqrt.pop %v315
  %v317 = vmul.f32 %v316, %v315
  %v318 = vmul.f32 %v317, %v316
  %v319 = vmul.f32 0.5, %v318
  %v320 = vsub.f32 1.5, %v319
  %v321 = vmul.f32 %v316, %v320
  %vm322 = vweird.f32 %v315
  %vm323 = vweird.f32 %v316
  %vm324 = vmor %vm322, %vm323
  %v325 = vsel %vm324, %v316, %v321
  %v326 = vmul.f32 %v314, %v325
  %v328 = vperm.slane %v326, 0
  %v330 = vmul.f32 %v161, %v328
  %v331 = vmul.f32 %v163, %v328
  %v332 = vmul.f32 %v166, %v328
  %v333 = vmul.f32 %v168, %v328
  %v334 = vmul.f32 %v171, %v328
  %v335 = vmul.f32 %v173, %v328
  %v336 = vmul.f32 %v176, %v328
  %v337 = vmul.f32 %v178, %v328
  %v338 = vmul.f32 %v181, %v328
  %v339 = vmul.f32 %v183, %v328
  %v340 = vmul.f32 %v186, %v328
  %v341 = vmul.f32 %v188, %v328
  %v342 = vmul.f32 %v191, %v328
  %v343 = vmul.f32 %v193, %v328
  %v344 = vmul.f32 %v196, %v328
  %v345 = vmul.f32 %v198, %v328
  %v346 = vmul.f32 %v201, %v328
  %v347 = vmul.f32 %v203, %v328
  %v348 = vmul.f32 %v206, %v328
  %v349 = vmul.f32 %v208, %v328
  %v350 = vmul.f32 %v211, %v328
  %v351 = vmul.f32 %v213, %v328
  %v352 = vmul.f32 %v216, %v328
  %v353 = vmul.f32 %v218, %v328
  %v354 = vmul.f32 %v221, %v328
  %v355 = vld [vmem:[%s3] sm:$0x1]
  %v356 = vmul.f32 %v254, %v326
  %v357 = vsub.f32 %v355, %v356
  %v359 = vperm.slane %v357, 0
  %v361 = vadd.f32 %v330, %v359
  %v362 = vadd.f32 %v331, %v359
  %v363 = vadd.f32 %v332, %v359
  %v364 = vadd.f32 %v333, %v359
  %v365 = vadd.f32 %v334, %v359
  %v366 = vadd.f32 %v335, %v359
  %v367 = vadd.f32 %v336, %v359
  %v368 = vadd.f32 %v337, %v359
  %v369 = vadd.f32 %v338, %v359
  %v370 = vadd.f32 %v339, %v359
  %v371 = vadd.f32 %v340, %v359
  %v372 = vadd.f32 %v341, %v359
  %v373 = vadd.f32 %v342, %v359
  %v374 = vadd.f32 %v343, %v359
  %v375 = vadd.f32 %v344, %v359
  %v376 = vadd.f32 %v345, %v359
  %v377 = vadd.f32 %v346, %v359
  %v378 = vadd.f32 %v347, %v359
  %v379 = vadd.f32 %v348, %v359
  %v380 = vadd.f32 %v349, %v359
  %v381 = vadd.f32 %v350, %v359
  %v382 = vadd.f32 %v351, %v359
  %v383 = vadd.f32 %v352, %v359
  %v384 = vadd.f32 %v353, %v359
  %v385 = vadd.f32 %v354, %v359
  %v386 = vmax.f32 %v361, 0.0
  %v387 = vmax.f32 %v362, 0.0
  %v388 = vmax.f32 %v363, 0.0
  %v389 = vmax.f32 %v364, 0.0
  %v390 = vmax.f32 %v365, 0.0
  %v391 = vmax.f32 %v366, 0.0
  %v392 = vmax.f32 %v367, 0.0
  %v393 = vmax.f32 %v368, 0.0
  %v394 = vmax.f32 %v369, 0.0
  %v395 = vmax.f32 %v370, 0.0
  %v396 = vmax.f32 %v371, 0.0
  %v397 = vmax.f32 %v372, 0.0
  %v398 = vmax.f32 %v373, 0.0
  %v399 = vmax.f32 %v374, 0.0
  %v400 = vmax.f32 %v375, 0.0
  %v401 = vmax.f32 %v376, 0.0
  %v402 = vmax.f32 %v377, 0.0
  %v403 = vmax.f32 %v378, 0.0
  %v404 = vmax.f32 %v379, 0.0
  %v405 = vmax.f32 %v380, 0.0
  %v406 = vmax.f32 %v381, 0.0
  %v407 = vmax.f32 %v382, 0.0
  %v408 = vmax.f32 %v383, 0.0
  %v409 = vmax.f32 %v384, 0.0
  %v410 = vmax.f32 %v385, 0.0
  %v411 = vpack.c.bf16 %v386, %v386
  %v412 = vpack.c.bf16 %v387, %v387
  %v413 = vpack.c.bf16 %v388, %v388
  %v414 = vpack.c.bf16 %v389, %v389
  %v415 = vpack.c.bf16 %v390, %v390
  %v416 = vpack.c.bf16 %v391, %v391
  %v417 = vpack.c.bf16 %v392, %v392
  %v418 = vpack.c.bf16 %v393, %v393
  %v419 = vpack.c.bf16 %v394, %v394
  %v420 = vpack.c.bf16 %v395, %v395
  %v421 = vpack.c.bf16 %v396, %v396
  %v422 = vpack.c.bf16 %v397, %v397
  %v423 = vpack.c.bf16 %v398, %v398
  %v424 = vpack.c.bf16 %v399, %v399
  %v425 = vpack.c.bf16 %v400, %v400
  %v426 = vpack.c.bf16 %v401, %v401
  %v427 = vpack.c.bf16 %v402, %v402
  %v428 = vpack.c.bf16 %v403, %v403
  %v429 = vpack.c.bf16 %v404, %v404
  %v430 = vpack.c.bf16 %v405, %v405
  %v431 = vpack.c.bf16 %v406, %v406
  %v432 = vpack.c.bf16 %v407, %v407
  %v433 = vpack.c.bf16 %v408, %v408
  %v434 = vpack.c.bf16 %v409, %v409
  %v435 = vpack.c.bf16 %v410, %v410
  %436 = vst [vmem:[%s4] sm:$0xf] %v411
  %437 = vst [vmem:[%s4 + $0x4] sm:$0xf] %v412
  %438 = vst [vmem:[%s4 + $0x8] sm:$0xf] %v413
  %439 = vst [vmem:[%s4 + $0xc] sm:$0xf] %v414
  %440 = vst [vmem:[%s4 + $0x10] sm:$0xf] %v415
  %441 = vst [vmem:[%s4 + $0x14] sm:$0xf] %v416
  %442 = vst [vmem:[%s4 + $0x18] sm:$0xf] %v417
  %443 = vst [vmem:[%s4 + $0x1c] sm:$0xf] %v418
  %444 = vst [vmem:[%s4 + $0x20] sm:$0xf] %v419
  %445 = vst [vmem:[%s4 + $0x24] sm:$0xf] %v420
  %446 = vst [vmem:[%s4 + $0x28] sm:$0xf] %v421
  %447 = vst [vmem:[%s4 + $0x2c] sm:$0xf] %v422
  %448 = vst [vmem:[%s4 + $0x30] sm:$0xf] %v423
  %449 = vst [vmem:[%s4 + $0x34] sm:$0xf] %v424
  %450 = vst [vmem:[%s4 + $0x38] sm:$0xf] %v425
  %451 = vst [vmem:[%s4 + $0x3c] sm:$0xf] %v426
  %452 = vst [vmem:[%s4 + $0x40] sm:$0xf] %v427
  %453 = vst [vmem:[%s4 + $0x44] sm:$0xf] %v428
  %454 = vst [vmem:[%s4 + $0x48] sm:$0xf] %v429
  %455 = vst [vmem:[%s4 + $0x4c] sm:$0xf] %v430
  %456 = vst [vmem:[%s4 + $0x50] sm:$0xf] %v431
  %457 = vst [vmem:[%s4 + $0x54] sm:$0xf] %v432
  %458 = vst [vmem:[%s4 + $0x58] sm:$0xf] %v433
  %459 = vst [vmem:[%s4 + $0x5c] sm:$0xf] %v434
  %460 = vst [vmem:[%s4 + $0x60] sm:$0xf] %v435
  // Predicated region
  $region18: #{darts_stacked_cells_forward.46} parent=0 // pred_check
    _
  $region19: #{darts_stacked_cells_forward.46} parent=0 // pred_check_branch
    %462 = sbr.rel (0) target = $region21
  $region20: #{darts_stacked_cells_forward.46} parent=0 // pred_region
    _
  $region21: #{darts_stacked_cells_forward.46} parent=0 // pred_fallthru
    _
  // Predicated region
  $region22: #{darts_stacked_cells_forward.46} parent=0 // pred_check
    _
  $region23: #{darts_stacked_cells_forward.46} parent=0 // pred_check_branch
    %464 = sbr.rel (0) target = $region25
  $region24: #{darts_stacked_cells_forward.46} parent=0 // pred_region
    _
  $region25: #{darts_stacked_cells_forward.46} parent=0 // pred_fallthru
    _

// kernel: darts_stacked_cells_forward.48
$region0: #{darts_stacked_cells_forward.48}
  #allocation0 [shape = 'u32[]', space=smem, size = 0x4, offset = 0x4, fixed_abs, tag = 'smem constant byte address 0x4 - core index']
  #allocation1 [shape = 'u32[72,128]{1,0:T(1,128)}', space=vmem, size = 0x9000, scoped, tag = 'internal scratch']
  %s0 = inlined_call_operand.vmem [shape: bf16[50,144], index: 0, kind: input, shape index: {}]
  %s1 = inlined_call_operand.vmem [shape: bf16[144,128], index: 1, kind: input, shape index: {}]
  %s2 = inlined_call_operand.vmem [shape: f32[1,128], index: 2, kind: input, shape index: {}]
  %s3 = inlined_call_operand.vmem [shape: f32[1,128], index: 3, kind: input, shape index: {}]
  %s4 = inlined_call_operand.vmem [shape: bf16[50,128], index: 4, kind: output, shape index: {}]
  %s5 = sld [smem:[#allocation0]]
  $region26: #{darts_stacked_cells_forward.48} parent=0
    _
  %s7 = ssub.s32 1, %s5
  %s8 = scalar_select 0, %s7, %s5
  // Predicated region
  $region2: #{darts_stacked_cells_forward.48} parent=0 // pred_check
    _
  $region3: #{darts_stacked_cells_forward.48} parent=0 // pred_check_branch
    %10 = sbr.rel (0) target = $region5
  $region4: #{darts_stacked_cells_forward.48} parent=0 // pred_region
    _
  $region5: #{darts_stacked_cells_forward.48} parent=0 // pred_fallthru
    _
  // Predicated region
  $region6: #{darts_stacked_cells_forward.48} parent=0 // pred_check
    _
  $region7: #{darts_stacked_cells_forward.48} parent=0 // pred_check_branch
    %12 = sbr.rel (0) target = $region9
  $region8: #{darts_stacked_cells_forward.48} parent=0 // pred_region
    _
  $region9: #{darts_stacked_cells_forward.48} parent=0 // pred_fallthru
    _
  // Predicated region
  $region10: #{darts_stacked_cells_forward.48} parent=0 // pred_check
    _
  $region11: #{darts_stacked_cells_forward.48} parent=0 // pred_check_branch
    %14 = sbr.rel (0) target = $region13
  $region12: #{darts_stacked_cells_forward.48} parent=0 // pred_region
    _
  $region13: #{darts_stacked_cells_forward.48} parent=0 // pred_fallthru
    _
  // Predicated region
  $region14: #{darts_stacked_cells_forward.48} parent=0 // pred_check
    _
  $region15: #{darts_stacked_cells_forward.48} parent=0 // pred_check_branch
    %16 = sbr.rel (0) target = $region17
  $region16: #{darts_stacked_cells_forward.48} parent=0 // pred_region
    _
  $region17: #{darts_stacked_cells_forward.48} parent=0 // pred_fallthru
    _
  %v18 = vld [vmem:[%s0] sm:$0xff]
  %v19 = vld [vmem:[%s0 + $0x8] sm:$0xff]
  %v20 = vld [vmem:[%s0 + $0x10] sm:$0xff]
  %v21 = vld [vmem:[%s0 + $0x18] sm:$0xff]
  %v22 = vld [vmem:[%s0 + $0x20] sm:$0xff]
  %v23 = vld [vmem:[%s0 + $0x28] sm:$0xff]
  %v24 = vld [vmem:[%s0 + $0x30] sm:$0x11]
  %v25 = vld [vmem:[%s1] sm:$0xf]
  %v26 = vld [vmem:[%s1 + $0x4] sm:$0xf]
  %v27 = vld [vmem:[%s1 + $0x8] sm:$0xf]
  %v28 = vld [vmem:[%s1 + $0xc] sm:$0xf]
  %v29 = vld [vmem:[%s1 + $0x10] sm:$0xf]
  %v30 = vld [vmem:[%s1 + $0x14] sm:$0xf]
  %v31 = vld [vmem:[%s1 + $0x18] sm:$0xf]
  %v32 = vld [vmem:[%s1 + $0x1c] sm:$0xf]
  %v33 = vld [vmem:[%s1 + $0x20] sm:$0xf]
  %v34 = vld [vmem:[%s1 + $0x24] sm:$0xf]
  %v35 = vld [vmem:[%s1 + $0x28] sm:$0xf]
  %v36 = vld [vmem:[%s1 + $0x2c] sm:$0xf]
  %v37 = vld [vmem:[%s1 + $0x30] sm:$0xf]
  %v38 = vld [vmem:[%s1 + $0x34] sm:$0xf]
  %v39 = vld [vmem:[%s1 + $0x38] sm:$0xf]
  %v40 = vld [vmem:[%s1 + $0x3c] sm:$0xf]
  %v41 = vld [vmem:[%s1 + $0x40] sm:$0xf]
  %v42 = vld [vmem:[%s1 + $0x44] sm:$0xf]
  %v50 = vunpack.c.l.b16 %v18
  %v51 = vunpack.c.h.b16 %v18
  %v52 = vunpack.c.l.b16 %v19
  %v53 = vunpack.c.h.b16 %v19
  %v54 = vunpack.c.l.b16 %v20
  %v55 = vunpack.c.h.b16 %v20
  %v56 = vunpack.c.l.b16 %v21
  %v57 = vunpack.c.h.b16 %v21
  %v58 = vunpack.c.l.b16 %v22
  %v59 = vunpack.c.h.b16 %v22
  %v60 = vunpack.c.l.b16 %v23
  %v61 = vunpack.c.h.b16 %v23
  %v62 = vunpack.c.l.b16 %v24
  %v63 = vunpack.c.h.b16 %v24
  %v64 = vpack.c.b16 %v52, %v50
  %v65 = vpack.c.b16 %v53, %v51
  %v66 = vpack.c.b16 %v56, %v54
  %v67 = vpack.c.b16 %v57, %v55
  %v68 = vpack.c.b16 %v60, %v58
  %v69 = vpack.c.b16 %v61, %v59
  %v70 = vpack.c.b16 %v62, %v62
  %v71 = vpack.c.b16 %v63, %v63
  %v94 = vunpack.c.l.b16 %v25
  %v95 = vunpack.c.l.b16 %v26
  %v96 = vunpack.c.l.b16 %v27
  %v97 = vunpack.c.l.b16 %v28
  %v98 = vunpack.c.l.b16 %v29
  %v99 = vunpack.c.l.b16 %v30
  %v100 = vunpack.c.l.b16 %v31
  %v101 = vunpack.c.l.b16 %v32
  %v102 = vunpack.c.l.b16 %v33
  %v103 = vunpack.c.l.b16 %v34
  %v104 = vunpack.c.l.b16 %v35
  %v105 = vunpack.c.l.b16 %v36
  %v106 = vunpack.c.l.b16 %v37
  %v107 = vunpack.c.l.b16 %v38
  %v108 = vunpack.c.l.b16 %v39
  %v109 = vunpack.c.l.b16 %v40
  %v110 = vunpack.c.l.b16 %v41
  %v111 = vunpack.c.l.b16 %v42
  %v112 = vpack.c.b16 %v95, %v94
  %v113 = vpack.c.b16 %v97, %v96
  %v114 = vpack.c.b16 %v99, %v98
  %v115 = vpack.c.b16 %v101, %v100
  %v116 = vpack.c.b16 %v103, %v102
  %v117 = vpack.c.b16 %v105, %v104
  %v118 = vpack.c.b16 %v107, %v106
  %v119 = vpack.c.b16 %v109, %v108
  %v120 = vpack.c.b16 %v111, %v110
  %vm130 = vcmask 130048
  %v132 = vsel %vm130, %v65, 0
  %v135 = vsel %vm130, %v67, 0
  %v138 = vsel %vm130, %v69, 0
  %v141 = vsel %vm130, %v71, 0
  %143 = vmatpush.bf16.msra.mxu0 %v119
  %144 = vmatpush.bf16.msra.mxu0 %v118
  %145 = vmatpush.bf16.msra.mxu0 %v117
  %146 = vmatpush.bf16.msra.mxu0 %v116
  %147 = vmatpush.bf16.msra.mxu0 %v115
  %148 = vmatpush.bf16.msra.mxu0 %v114
  %149 = vmatpush.bf16.msra.mxu0 %v113
  %150 = vmatpush.bf16.msra.mxu0 %v112
  %151 = vmatmul.bf16.gmra.mxu0 %v64
  %v152 = vpop.f32.mrf.mxu0
  %v153 = vadd.f32 0.0, %v152
  %v154 = vpop.f32.mrf.mxu0
  %v155 = vadd.f32 0.0, %v154
  %156 = vmatmul.bf16.gmra.mxu0 %v66
  %v157 = vpop.f32.mrf.mxu0
  %v158 = vadd.f32 0.0, %v157
  %v159 = vpop.f32.mrf.mxu0
  %v160 = vadd.f32 0.0, %v159
  %161 = vmatmul.bf16.gmra.mxu0 %v68
  %v162 = vpop.f32.mrf.mxu0
  %v163 = vadd.f32 0.0, %v162
  %v164 = vpop.f32.mrf.mxu0
  %v165 = vadd.f32 0.0, %v164
  %166 = vmatmul.bf16.gmra.mxu0 %v70
  %v167 = vpop.f32.mrf.mxu0
  %v168 = vadd.f32 0.0, %v167
  %v169 = vpop.f32.mrf.mxu0
  %170 = vdwg.mxu0
  %171 = vmatpush.bf16.msra.mxu0 0
  %172 = vmatpush.bf16.msra.mxu0 0
  %173 = vmatpush.bf16.msra.mxu0 0
  %174 = vmatpush.bf16.msra.mxu0 0
  %175 = vmatpush.bf16.msra.mxu0 0
  %176 = vmatpush.bf16.msra.mxu0 0
  %177 = vmatpush.bf16.msra.mxu0 0
  %178 = vmatpush.bf16.msra.mxu0 %v120
  %179 = vmatmul.bf16.gmra.mxu0 %v132
  %v180 = vpop.f32.mrf.mxu0
  %v181 = vadd.f32 %v153, %v180
  %v182 = vpop.f32.mrf.mxu0
  %v183 = vadd.f32 %v155, %v182
  %184 = vmatmul.bf16.gmra.mxu0 %v135
  %v185 = vpop.f32.mrf.mxu0
  %v186 = vadd.f32 %v158, %v185
  %v187 = vpop.f32.mrf.mxu0
  %v188 = vadd.f32 %v160, %v187
  %189 = vmatmul.bf16.gmra.mxu0 %v138
  %v190 = vpop.f32.mrf.mxu0
  %v191 = vadd.f32 %v163, %v190
  %v192 = vpop.f32.mrf.mxu0
  %v193 = vadd.f32 %v165, %v192
  %194 = vmatmul.bf16.gmra.mxu0 %v141
  %v195 = vpop.f32.mrf.mxu0
  %v196 = vadd.f32 %v168, %v195
  %v197 = vpop.f32.mrf.mxu0
  %198 = vdwg.mxu0
  %v199 = vadd.f32 %v181, %v183
  %v200 = vadd.f32 %v199, %v186
  %v201 = vadd.f32 %v200, %v188
  %v202 = vadd.f32 %v201, %v191
  %v203 = vadd.f32 %v202, %v193
  %vm204 = vcmask 1041408
  %v205 = vsel %vm204, %v196, 0.0
  %v206 = vadd.f32 %v203, %v205
  %v207 = vrot.slane %v206, 4
  %v208 = vadd.f32 %v206, %v207
  %v209 = vrot.slane %v208, 2
  %v210 = vadd.f32 %v208, %v209
  %v211 = vrot.slane %v210, 1
  %v212 = vadd.f32 %v210, %v211
  %v213 = vmul.f32 %v212, 0.02
  %v214 = vmul.f32 %v181, %v181
  %v215 = vmul.f32 %v183, %v183
  %v216 = vmul.f32 %v186, %v186
  %v217 = vmul.f32 %v188, %v188
  %v218 = vmul.f32 %v191, %v191
  %v219 = vmul.f32 %v193, %v193
  %v220 = vmul.f32 %v196, %v196
  %v221 = vadd.f32 %v214, %v215
  %v222 = vadd.f32 %v221, %v216
  %v223 = vadd.f32 %v222, %v217
  %v224 = vadd.f32 %v223, %v218
  %v225 = vadd.f32 %v224, %v219
  %v226 = vsel %vm204, %v220, 0.0
  %v227 = vadd.f32 %v225, %v226
  %v228 = vrot.slane %v227, 4
  %v229 = vadd.f32 %v227, %v228
  %v230 = vrot.slane %v229, 2
  %v231 = vadd.f32 %v229, %v230
  %v232 = vrot.slane %v231, 1
  %v233 = vadd.f32 %v231, %v232
  %v234 = vmul.f32 %v233, 0.02
  %v235 = vmul.f32 %v213, %v213
  %v236 = vsub.f32 %v234, %v235
  %v237 = vmax.f32 %v236, 0.0
  %v238 = vld [vmem:[%s2] sm:$0x1]
  %v239 = vadd.f32 %v237, 1e-05
  %v240 = vrsqrt.pop %v239
  %v241 = vmul.f32 %v240, %v239
  %v242 = vmul.f32 %v241, %v240
  %v243 = vmul.f32 0.5, %v242
  %v244 = vsub.f32 1.5, %v243
  %v245 = vmul.f32 %v240, %v244
  %vm246 = vweird.f32 %v239
  %vm247 = vweird.f32 %v240
  %vm248 = vmor %vm246, %vm247
  %v249 = vsel %vm248, %v240, %v245
  %v250 = vmul.f32 %v238, %v249
  %v252 = vperm.slane %v250, 0
  %v254 = vmul.f32 %v181, %v252
  %v255 = vmul.f32 %v183, %v252
  %v256 = vmul.f32 %v186, %v252
  %v257 = vmul.f32 %v188, %v252
  %v258 = vmul.f32 %v191, %v252
  %v259 = vmul.f32 %v193, %v252
  %v260 = vmul.f32 %v196, %v252
  %v261 = vld [vmem:[%s3] sm:$0x1]
  %v262 = vmul.f32 %v213, %v250
  %v263 = vsub.f32 %v261, %v262
  %v265 = vperm.slane %v263, 0
  %v267 = vadd.f32 %v254, %v265
  %v268 = vadd.f32 %v255, %v265
  %v269 = vadd.f32 %v256, %v265
  %v270 = vadd.f32 %v257, %v265
  %v271 = vadd.f32 %v258, %v265
  %v272 = vadd.f32 %v259, %v265
  %v273 = vadd.f32 %v260, %v265
  %v274 = vpack.c.bf16 %v267, %v267
  %v275 = vpack.c.bf16 %v268, %v268
  %v276 = vpack.c.bf16 %v269, %v269
  %v277 = vpack.c.bf16 %v270, %v270
  %v278 = vpack.c.bf16 %v271, %v271
  %v279 = vpack.c.bf16 %v272, %v272
  %v280 = vpack.c.bf16 %v273, %v273
  %281 = vst [vmem:[%s4] sm:$0xf] %v274
  %282 = vst [vmem:[%s4 + $0x4] sm:$0xf] %v275
  %283 = vst [vmem:[%s4 + $0x8] sm:$0xf] %v276
  %284 = vst [vmem:[%s4 + $0xc] sm:$0xf] %v277
  %285 = vst [vmem:[%s4 + $0x10] sm:$0xf] %v278
  %286 = vst [vmem:[%s4 + $0x14] sm:$0xf] %v279
  %287 = vst [vmem:[%s4 + $0x18] sm:$0x1] %v280
  // Predicated region
  $region18: #{darts_stacked_cells_forward.48} parent=0 // pred_check
    _
  $region19: #{darts_stacked_cells_forward.48} parent=0 // pred_check_branch
    %289 = sbr.rel (0) target = $region21
  $region20: #{darts_stacked_cells_forward.48} parent=0 // pred_region
    _
  $region21: #{darts_stacked_cells_forward.48} parent=0 // pred_fallthru
    _
  // Predicated region
  $region22: #{darts_stacked_cells_forward.48} parent=0 // pred_check
    _
  $region23: #{darts_stacked_cells_forward.48} parent=0 // pred_check_branch
    %291 = sbr.rel (0) target = $region25
  $region24: #{darts_stacked_cells_forward.48} parent=0 // pred_region
    _
  $region25: #{darts_stacked_cells_forward.48} parent=0 // pred_fallthru
    _

// kernel: darts_stacked_cells_forward.42
$region0: #{darts_stacked_cells_forward.42}
  #allocation0 [shape = 'u32[]', space=smem, size = 0x4, offset = 0x4, fixed_abs, tag = 'smem constant byte address 0x4 - core index']
  #allocation1 [shape = 'u32[72,128]{1,0:T(1,128)}', space=vmem, size = 0x9000, scoped, tag = 'internal scratch']
  %s0 = inlined_call_operand.vmem [shape: bf16[200,72], index: 0, kind: input, shape index: {}]
  %s1 = inlined_call_operand.vmem [shape: bf16[72,128], index: 1, kind: input, shape index: {}]
  %s2 = inlined_call_operand.vmem [shape: f32[1,128], index: 2, kind: input, shape index: {}]
  %s3 = inlined_call_operand.vmem [shape: f32[1,128], index: 3, kind: input, shape index: {}]
  %s4 = inlined_call_operand.vmem [shape: bf16[200,128], index: 4, kind: output, shape index: {}]
  %s5 = sld [smem:[#allocation0]]
  $region26: #{darts_stacked_cells_forward.42} parent=0
    _
  %s7 = ssub.s32 1, %s5
  %s8 = scalar_select 0, %s7, %s5
  // Predicated region
  $region2: #{darts_stacked_cells_forward.42} parent=0 // pred_check
    _
  $region3: #{darts_stacked_cells_forward.42} parent=0 // pred_check_branch
    %10 = sbr.rel (0) target = $region5
  $region4: #{darts_stacked_cells_forward.42} parent=0 // pred_region
    _
  $region5: #{darts_stacked_cells_forward.42} parent=0 // pred_fallthru
    _
  // Predicated region
  $region6: #{darts_stacked_cells_forward.42} parent=0 // pred_check
    _
  $region7: #{darts_stacked_cells_forward.42} parent=0 // pred_check_branch
    %12 = sbr.rel (0) target = $region9
  $region8: #{darts_stacked_cells_forward.42} parent=0 // pred_region
    _
  $region9: #{darts_stacked_cells_forward.42} parent=0 // pred_fallthru
    _
  // Predicated region
  $region10: #{darts_stacked_cells_forward.42} parent=0 // pred_check
    _
  $region11: #{darts_stacked_cells_forward.42} parent=0 // pred_check_branch
    %14 = sbr.rel (0) target = $region13
  $region12: #{darts_stacked_cells_forward.42} parent=0 // pred_region
    _
  $region13: #{darts_stacked_cells_forward.42} parent=0 // pred_fallthru
    _
  // Predicated region
  $region14: #{darts_stacked_cells_forward.42} parent=0 // pred_check
    _
  $region15: #{darts_stacked_cells_forward.42} parent=0 // pred_check_branch
    %16 = sbr.rel (0) target = $region17
  $region16: #{darts_stacked_cells_forward.42} parent=0 // pred_region
    _
  $region17: #{darts_stacked_cells_forward.42} parent=0 // pred_fallthru
    _
  %v18 = vld [vmem:[%s0] sm:$0xf]
  %v19 = vld [vmem:[%s0 + $0x4] sm:$0xf]
  %v20 = vld [vmem:[%s0 + $0x8] sm:$0xf]
  %v21 = vld [vmem:[%s0 + $0xc] sm:$0xf]
  %v22 = vld [vmem:[%s0 + $0x10] sm:$0xf]
  %v23 = vld [vmem:[%s0 + $0x14] sm:$0xf]
  %v24 = vld [vmem:[%s0 + $0x18] sm:$0xf]
  %v25 = vld [vmem:[%s0 + $0x1c] sm:$0xf]
  %v26 = vld [vmem:[%s0 + $0x20] sm:$0xf]
  %v27 = vld [vmem:[%s0 + $0x24] sm:$0xf]
  %v28 = vld [vmem:[%s0 + $0x28] sm:$0xf]
  %v29 = vld [vmem:[%s0 + $0x2c] sm:$0xf]
  %v30 = vld [vmem:[%s0 + $0x30] sm:$0xf]
  %v31 = vld [vmem:[%s0 + $0x34] sm:$0xf]
  %v32 = vld [vmem:[%s0 + $0x38] sm:$0xf]
  %v33 = vld [vmem:[%s0 + $0x3c] sm:$0xf]
  %v34 = vld [vmem:[%s0 + $0x40] sm:$0xf]
  %v35 = vld [vmem:[%s0 + $0x44] sm:$0xf]
  %v36 = vld [vmem:[%s0 + $0x48] sm:$0xf]
  %v37 = vld [vmem:[%s0 + $0x4c] sm:$0xf]
  %v38 = vld [vmem:[%s0 + $0x50] sm:$0xf]
  %v39 = vld [vmem:[%s0 + $0x54] sm:$0xf]
  %v40 = vld [vmem:[%s0 + $0x58] sm:$0xf]
  %v41 = vld [vmem:[%s0 + $0x5c] sm:$0xf]
  %v42 = vld [vmem:[%s0 + $0x60] sm:$0xf]
  %v43 = vld [vmem:[%s1] sm:$0xf]
  %v44 = vld [vmem:[%s1 + $0x4] sm:$0xf]
  %v45 = vld [vmem:[%s1 + $0x8] sm:$0xf]
  %v46 = vld [vmem:[%s1 + $0xc] sm:$0xf]
  %v47 = vld [vmem:[%s1 + $0x10] sm:$0xf]
  %v48 = vld [vmem:[%s1 + $0x14] sm:$0xf]
  %v49 = vld [vmem:[%s1 + $0x18] sm:$0xf]
  %v50 = vld [vmem:[%s1 + $0x1c] sm:$0xf]
  %v51 = vld [vmem:[%s1 + $0x20] sm:$0xf]
  %v77 = vunpack.c.l.b16 %v18
  %v78 = vunpack.c.l.b16 %v19
  %v79 = vunpack.c.l.b16 %v20
  %v80 = vunpack.c.l.b16 %v21
  %v81 = vunpack.c.l.b16 %v22
  %v82 = vunpack.c.l.b16 %v23
  %v83 = vunpack.c.l.b16 %v24
  %v84 = vunpack.c.l.b16 %v25
  %v85 = vunpack.c.l.b16 %v26
  %v86 = vunpack.c.l.b16 %v27
  %v87 = vunpack.c.l.b16 %v28
  %v88 = vunpack.c.l.b16 %v29
  %v89 = vunpack.c.l.b16 %v30
  %v90 = vunpack.c.l.b16 %v31
  %v91 = vunpack.c.l.b16 %v32
  %v92 = vunpack.c.l.b16 %v33
  %v93 = vunpack.c.l.b16 %v34
  %v94 = vunpack.c.l.b16 %v35
  %v95 = vunpack.c.l.b16 %v36
  %v96 = vunpack.c.l.b16 %v37
  %v97 = vunpack.c.l.b16 %v38
  %v98 = vunpack.c.l.b16 %v39
  %v99 = vunpack.c.l.b16 %v40
  %v100 = vunpack.c.l.b16 %v41
  %v101 = vunpack.c.l.b16 %v42
  %v102 = vpack.c.b16 %v78, %v77
  %v103 = vpack.c.b16 %v80, %v79
  %v104 = vpack.c.b16 %v82, %v81
  %v105 = vpack.c.b16 %v84, %v83
  %v106 = vpack.c.b16 %v86, %v85
  %v107 = vpack.c.b16 %v88, %v87
  %v108 = vpack.c.b16 %v90, %v89
  %v109 = vpack.c.b16 %v92, %v91
  %v110 = vpack.c.b16 %v94, %v93
  %v111 = vpack.c.b16 %v96, %v95
  %v112 = vpack.c.b16 %v98, %v97
  %v113 = vpack.c.b16 %v100, %v99
  %v114 = vpack.c.b16 %v101, %v101
  %v124 = vunpack.c.l.b16 %v43
  %v125 = vunpack.c.l.b16 %v44
  %v126 = vunpack.c.l.b16 %v45
  %v127 = vunpack.c.l.b16 %v46
  %v128 = vunpack.c.l.b16 %v47
  %v129 = vunpack.c.l.b16 %v48
  %v130 = vunpack.c.l.b16 %v49
  %v131 = vunpack.c.l.b16 %v50
  %v132 = vunpack.c.l.b16 %v51
  %v133 = vpack.c.b16 %v125, %v124
  %v134 = vpack.c.b16 %v127, %v126
  %v135 = vpack.c.b16 %v129, %v128
  %v136 = vpack.c.b16 %v131, %v130
  %v137 = vpack.c.b16 %v132, %v132
  %vm142 = vcmask 588800
  %v144 = vsel %vm142, %v102, 0
  %v147 = vsel %vm142, %v103, 0
  %v150 = vsel %vm142, %v104, 0
  %v153 = vsel %vm142, %v105, 0
  %v156 = vsel %vm142, %v106, 0
  %v159 = vsel %vm142, %v107, 0
  %v162 = vsel %vm142, %v108, 0
  %v165 = vsel %vm142, %v109, 0
  %v168 = vsel %vm142, %v110, 0
  %v171 = vsel %vm142, %v111, 0
  %v174 = vsel %vm142, %v112, 0
  %v177 = vsel %vm142, %v113, 0
  %v180 = vsel %vm142, %v114, 0
  %vm182 = vcmask 1043456
  %v184 = vsel %vm182, %v137, 0
  %186 = vmatpush.bf16.msra.mxu0 0
  %187 = vmatpush.bf16.msra.mxu0 0
  %188 = vmatpush.bf16.msra.mxu0 0
  %189 = vmatpush.bf16.msra.mxu0 %v184
  %190 = vmatpush.bf16.msra.mxu0 %v136
  %191 = vmatpush.bf16.msra.mxu0 %v135
  %192 = vmatpush.bf16.msra.mxu0 %v134
  %193 = vmatpush.bf16.msra.mxu0 %v133
  %194 = vmatmul.bf16.gmra.mxu0 %v144
  %v195 = vpop.f32.mrf.mxu0
  %v196 = vadd.f32 0.0, %v195
  %v197 = vpop.f32.mrf.mxu0
  %v198 = vadd.f32 0.0, %v197
  %199 = vmatmul.bf16.gmra.mxu0 %v147
  %v200 = vpop.f32.mrf.mxu0
  %v201 = vadd.f32 0.0, %v200
  %v202 = vpop.f32.mrf.mxu0
  %v203 = vadd.f32 0.0, %v202
  %204 = vmatmul.bf16.gmra.mxu0 %v150
  %v205 = vpop.f32.mrf.mxu0
  %v206 = vadd.f32 0.0, %v205
  %v207 = vpop.f32.mrf.mxu0
  %v208 = vadd.f32 0.0, %v207
  %209 = vmatmul.bf16.gmra.mxu0 %v153
  %v210 = vpop.f32.mrf.mxu0
  %v211 = vadd.f32 0.0, %v210
  %v212 = vpop.f32.mrf.mxu0
  %v213 = vadd.f32 0.0, %v212
  %214 = vmatmul.bf16.gmra.mxu0 %v156
  %v215 = vpop.f32.mrf.mxu0
  %v216 = vadd.f32 0.0, %v215
  %v217 = vpop.f32.mrf.mxu0
  %v218 = vadd.f32 0.0, %v217
  %219 = vmatmul.bf16.gmra.mxu0 %v159
  %v220 = vpop.f32.mrf.mxu0
  %v221 = vadd.f32 0.0, %v220
  %v222 = vpop.f32.mrf.mxu0
  %v223 = vadd.f32 0.0, %v222
  %224 = vmatmul.bf16.gmra.mxu0 %v162
  %v225 = vpop.f32.mrf.mxu0
  %v226 = vadd.f32 0.0, %v225
  %v227 = vpop.f32.mrf.mxu0
  %v228 = vadd.f32 0.0, %v227
  %229 = vmatmul.bf16.gmra.mxu0 %v165
  %v230 = vpop.f32.mrf.mxu0
  %v231 = vadd.f32 0.0, %v230
  %v232 = vpop.f32.mrf.mxu0
  %v233 = vadd.f32 0.0, %v232
  %234 = vmatmul.bf16.gmra.mxu0 %v168
  %v235 = vpop.f32.mrf.mxu0
  %v236 = vadd.f32 0.0, %v235
  %v237 = vpop.f32.mrf.mxu0
  %v238 = vadd.f32 0.0, %v237
  %239 = vmatmul.bf16.gmra.mxu0 %v171
  %v240 = vpop.f32.mrf.mxu0
  %v241 = vadd.f32 0.0, %v240
  %v242 = vpop.f32.mrf.mxu0
  %v243 = vadd.f32 0.0, %v242
  %244 = vmatmul.bf16.gmra.mxu0 %v174
  %v245 = vpop.f32.mrf.mxu0
  %v246 = vadd.f32 0.0, %v245
  %v247 = vpop.f32.mrf.mxu0
  %v248 = vadd.f32 0.0, %v247
  %249 = vmatmul.bf16.gmra.mxu0 %v177
  %v250 = vpop.f32.mrf.mxu0
  %v251 = vadd.f32 0.0, %v250
  %v252 = vpop.f32.mrf.mxu0
  %v253 = vadd.f32 0.0, %v252
  %254 = vmatmul.bf16.gmra.mxu0 %v180
  %v255 = vpop.f32.mrf.mxu0
  %v256 = vadd.f32 0.0, %v255
  %v257 = vpop.f32.mrf.mxu0
  %258 = vdwg.mxu0
  %v259 = vadd.f32 %v196, %v198
  %v260 = vadd.f32 %v259, %v201
  %v261 = vadd.f32 %v260, %v203
  %v262 = vadd.f32 %v261, %v206
  %v263 = vadd.f32 %v262, %v208
  %v264 = vadd.f32 %v263, %v211
  %v265 = vadd.f32 %v264, %v213
  %v266 = vadd.f32 %v265, %v216
  %v267 = vadd.f32 %v266, %v218
  %v268 = vadd.f32 %v267, %v221
  %v269 = vadd.f32 %v268, %v223
  %v270 = vadd.f32 %v269, %v226
  %v271 = vadd.f32 %v270, %v228
  %v272 = vadd.f32 %v271, %v231
  %v273 = vadd.f32 %v272, %v233
  %v274 = vadd.f32 %v273, %v236
  %v275 = vadd.f32 %v274, %v238
  %v276 = vadd.f32 %v275, %v241
  %v277 = vadd.f32 %v276, %v243
  %v278 = vadd.f32 %v277, %v246
  %v279 = vadd.f32 %v278, %v248
  %v280 = vadd.f32 %v279, %v251
  %v281 = vadd.f32 %v280, %v253
  %v282 = vadd.f32 %v281, %v256
  %v283 = vrot.slane %v282, 4
  %v284 = vadd.f32 %v282, %v283
  %v285 = vrot.slane %v284, 2
  %v286 = vadd.f32 %v284, %v285
  %v287 = vrot.slane %v286, 1
  %v288 = vadd.f32 %v286, %v287
  %v289 = vmul.f32 %v288, 0.005
  %v290 = vmul.f32 %v196, %v196
  %v291 = vmul.f32 %v198, %v198
  %v292 = vmul.f32 %v201, %v201
  %v293 = vmul.f32 %v203, %v203
  %v294 = vmul.f32 %v206, %v206
  %v295 = vmul.f32 %v208, %v208
  %v296 = vmul.f32 %v211, %v211
  %v297 = vmul.f32 %v213, %v213
  %v298 = vmul.f32 %v216, %v216
  %v299 = vmul.f32 %v218, %v218
  %v300 = vmul.f32 %v221, %v221
  %v301 = vmul.f32 %v223, %v223
  %v302 = vmul.f32 %v226, %v226
  %v303 = vmul.f32 %v228, %v228
  %v304 = vmul.f32 %v231, %v231
  %v305 = vmul.f32 %v233, %v233
  %v306 = vmul.f32 %v236, %v236
  %v307 = vmul.f32 %v238, %v238
  %v308 = vmul.f32 %v241, %v241
  %v309 = vmul.f32 %v243, %v243
  %v310 = vmul.f32 %v246, %v246
  %v311 = vmul.f32 %v248, %v248
  %v312 = vmul.f32 %v251, %v251
  %v313 = vmul.f32 %v253, %v253
  %v314 = vmul.f32 %v256, %v256
  %v315 = vadd.f32 %v290, %v291
  %v316 = vadd.f32 %v315, %v292
  %v317 = vadd.f32 %v316, %v293
  %v318 = vadd.f32 %v317, %v294
  %v319 = vadd.f32 %v318, %v295
  %v320 = vadd.f32 %v319, %v296
  %v321 = vadd.f32 %v320, %v297
  %v322 = vadd.f32 %v321, %v298
  %v323 = vadd.f32 %v322, %v299
  %v324 = vadd.f32 %v323, %v300
  %v325 = vadd.f32 %v324, %v301
  %v326 = vadd.f32 %v325, %v302
  %v327 = vadd.f32 %v326, %v303
  %v328 = vadd.f32 %v327, %v304
  %v329 = vadd.f32 %v328, %v305
  %v330 = vadd.f32 %v329, %v306
  %v331 = vadd.f32 %v330, %v307
  %v332 = vadd.f32 %v331, %v308
  %v333 = vadd.f32 %v332, %v309
  %v334 = vadd.f32 %v333, %v310
  %v335 = vadd.f32 %v334, %v311
  %v336 = vadd.f32 %v335, %v312
  %v337 = vadd.f32 %v336, %v313
  %v338 = vadd.f32 %v337, %v314
  %v339 = vrot.slane %v338, 4
  %v340 = vadd.f32 %v338, %v339
  %v341 = vrot.slane %v340, 2
  %v342 = vadd.f32 %v340, %v341
  %v343 = vrot.slane %v342, 1
  %v344 = vadd.f32 %v342, %v343
  %v345 = vmul.f32 %v344, 0.005
  %v346 = vmul.f32 %v289, %v289
  %v347 = vsub.f32 %v345, %v346
  %v348 = vmax.f32 %v347, 0.0
  %v349 = vld [vmem:[%s2] sm:$0x1]
  %v350 = vadd.f32 %v348, 1e-05
  %v351 = vrsqrt.pop %v350
  %v352 = vmul.f32 %v351, %v350
  %v353 = vmul.f32 %v352, %v351
  %v354 = vmul.f32 0.5, %v353
  %v355 = vsub.f32 1.5, %v354
  %v356 = vmul.f32 %v351, %v355
  %vm357 = vweird.f32 %v350
  %vm358 = vweird.f32 %v351
  %vm359 = vmor %vm357, %vm358
  %v360 = vsel %vm359, %v351, %v356
  %v361 = vmul.f32 %v349, %v360
  %v363 = vperm.slane %v361, 0
  %v365 = vmul.f32 %v196, %v363
  %v366 = vmul.f32 %v198, %v363
  %v367 = vmul.f32 %v201, %v363
  %v368 = vmul.f32 %v203, %v363
  %v369 = vmul.f32 %v206, %v363
  %v370 = vmul.f32 %v208, %v363
  %v371 = vmul.f32 %v211, %v363
  %v372 = vmul.f32 %v213, %v363
  %v373 = vmul.f32 %v216, %v363
  %v374 = vmul.f32 %v218, %v363
  %v375 = vmul.f32 %v221, %v363
  %v376 = vmul.f32 %v223, %v363
  %v377 = vmul.f32 %v226, %v363
  %v378 = vmul.f32 %v228, %v363
  %v379 = vmul.f32 %v231, %v363
  %v380 = vmul.f32 %v233, %v363
  %v381 = vmul.f32 %v236, %v363
  %v382 = vmul.f32 %v238, %v363
  %v383 = vmul.f32 %v241, %v363
  %v384 = vmul.f32 %v243, %v363
  %v385 = vmul.f32 %v246, %v363
  %v386 = vmul.f32 %v248, %v363
  %v387 = vmul.f32 %v251, %v363
  %v388 = vmul.f32 %v253, %v363
  %v389 = vmul.f32 %v256, %v363
  %v390 = vld [vmem:[%s3] sm:$0x1]
  %v391 = vmul.f32 %v289, %v361
  %v392 = vsub.f32 %v390, %v391
  %v394 = vperm.slane %v392, 0
  %v396 = vadd.f32 %v365, %v394
  %v397 = vadd.f32 %v366, %v394
  %v398 = vadd.f32 %v367, %v394
  %v399 = vadd.f32 %v368, %v394
  %v400 = vadd.f32 %v369, %v394
  %v401 = vadd.f32 %v370, %v394
  %v402 = vadd.f32 %v371, %v394
  %v403 = vadd.f32 %v372, %v394
  %v404 = vadd.f32 %v373, %v394
  %v405 = vadd.f32 %v374, %v394
  %v406 = vadd.f32 %v375, %v394
  %v407 = vadd.f32 %v376, %v394
  %v408 = vadd.f32 %v377, %v394
  %v409 = vadd.f32 %v378, %v394
  %v410 = vadd.f32 %v379, %v394
  %v411 = vadd.f32 %v380, %v394
  %v412 = vadd.f32 %v381, %v394
  %v413 = vadd.f32 %v382, %v394
  %v414 = vadd.f32 %v383, %v394
  %v415 = vadd.f32 %v384, %v394
  %v416 = vadd.f32 %v385, %v394
  %v417 = vadd.f32 %v386, %v394
  %v418 = vadd.f32 %v387, %v394
  %v419 = vadd.f32 %v388, %v394
  %v420 = vadd.f32 %v389, %v394
  %v421 = vpack.c.bf16 %v396, %v396
  %v422 = vpack.c.bf16 %v397, %v397
  %v423 = vpack.c.bf16 %v398, %v398
  %v424 = vpack.c.bf16 %v399, %v399
  %v425 = vpack.c.bf16 %v400, %v400
  %v426 = vpack.c.bf16 %v401, %v401
  %v427 = vpack.c.bf16 %v402, %v402
  %v428 = vpack.c.bf16 %v403, %v403
  %v429 = vpack.c.bf16 %v404, %v404
  %v430 = vpack.c.bf16 %v405, %v405
  %v431 = vpack.c.bf16 %v406, %v406
  %v432 = vpack.c.bf16 %v407, %v407
  %v433 = vpack.c.bf16 %v408, %v408
  %v434 = vpack.c.bf16 %v409, %v409
  %v435 = vpack.c.bf16 %v410, %v410
  %v436 = vpack.c.bf16 %v411, %v411
  %v437 = vpack.c.bf16 %v412, %v412
  %v438 = vpack.c.bf16 %v413, %v413
  %v439 = vpack.c.bf16 %v414, %v414
  %v440 = vpack.c.bf16 %v415, %v415
  %v441 = vpack.c.bf16 %v416, %v416
  %v442 = vpack.c.bf16 %v417, %v417
  %v443 = vpack.c.bf16 %v418, %v418
  %v444 = vpack.c.bf16 %v419, %v419
  %v445 = vpack.c.bf16 %v420, %v420
  %446 = vst [vmem:[%s4] sm:$0xf] %v421
  %447 = vst [vmem:[%s4 + $0x4] sm:$0xf] %v422
  %448 = vst [vmem:[%s4 + $0x8] sm:$0xf] %v423
  %449 = vst [vmem:[%s4 + $0xc] sm:$0xf] %v424
  %450 = vst [vmem:[%s4 + $0x10] sm:$0xf] %v425
  %451 = vst [vmem:[%s4 + $0x14] sm:$0xf] %v426
  %452 = vst [vmem:[%s4 + $0x18] sm:$0xf] %v427
  %453 = vst [vmem:[%s4 + $0x1c] sm:$0xf] %v428
  %454 = vst [vmem:[%s4 + $0x20] sm:$0xf] %v429
  %455 = vst [vmem:[%s4 + $0x24] sm:$0xf] %v430
  %456 = vst [vmem:[%s4 + $0x28] sm:$0xf] %v431
  %457 = vst [vmem:[%s4 + $0x2c] sm:$0xf] %v432
  %458 = vst [vmem:[%s4 + $0x30] sm:$0xf] %v433
  %459 = vst [vmem:[%s4 + $0x34] sm:$0xf] %v434
  %460 = vst [vmem:[%s4 + $0x38] sm:$0xf] %v435
  %461 = vst [vmem:[%s4 + $0x3c] sm:$0xf] %v436
  %462 = vst [vmem:[%s4 + $0x40] sm:$0xf] %v437
  %463 = vst [vmem:[%s4 + $0x44] sm:$0xf] %v438
  %464 = vst [vmem:[%s4 + $0x48] sm:$0xf] %v439
  %465 = vst [vmem:[%s4 + $0x4c] sm:$0xf] %v440
  %466 = vst [vmem:[%s4 + $0x50] sm:$0xf] %v441
  %467 = vst [vmem:[%s4 + $0x54] sm:$0xf] %v442
  %468 = vst [vmem:[%s4 + $0x58] sm:$0xf] %v443
  %469 = vst [vmem:[%s4 + $0x5c] sm:$0xf] %v444
  %470 = vst [vmem:[%s4 + $0x60] sm:$0xf] %v445
  // Predicated region
  $region18: #{darts_stacked_cells_forward.42} parent=0 // pred_check
    _
  $region19: #{darts_stacked_cells_forward.42} parent=0 // pred_check_branch
    %472 = sbr.rel (0) target = $region21
  $region20: #{darts_stacked_cells_forward.42} parent=0 // pred_region
    _
  $region21: #{darts_stacked_cells_forward.42} parent=0 // pred_fallthru
    _
  // Predicated region
  $region22: #{darts_stacked_cells_forward.42} parent=0 // pred_check
    _
  $region23: #{darts_stacked_cells_forward.42} parent=0 // pred_check_branch
    %474 = sbr.rel (0) target = $region25
  $region24: #{darts_stacked_cells_forward.42} parent=0 // pred_region
    _
  $region25: #{darts_stacked_cells_forward.42} parent=0 // pred_fallthru
    _

// kernel: darts_stacked_cells_forward.47
$region0: #{darts_stacked_cells_forward.47}
  #allocation0 [shape = 'u32[]', space=smem, size = 0x4, offset = 0x4, fixed_abs, tag = 'smem constant byte address 0x4 - core index']
  #allocation1 [shape = 'u32[72,128]{1,0:T(1,128)}', space=vmem, size = 0x9000, scoped, tag = 'internal scratch']
  %s0 = inlined_call_operand.vmem [shape: bf16[200,16], index: 0, kind: input, shape index: {}]
  %s1 = inlined_call_operand.vmem [shape: bf16[16,128], index: 1, kind: input, shape index: {}]
  %s2 = inlined_call_operand.vmem [shape: f32[1,128], index: 2, kind: input, shape index: {}]
  %s3 = inlined_call_operand.vmem [shape: f32[1,128], index: 3, kind: input, shape index: {}]
  %s4 = inlined_call_operand.vmem [shape: bf16[200,128], index: 4, kind: output, shape index: {}]
  %s5 = sld [smem:[#allocation0]]
  $region26: #{darts_stacked_cells_forward.47} parent=0
    _
  %s7 = ssub.s32 1, %s5
  %s8 = scalar_select 0, %s7, %s5
  // Predicated region
  $region2: #{darts_stacked_cells_forward.47} parent=0 // pred_check
    _
  $region3: #{darts_stacked_cells_forward.47} parent=0 // pred_check_branch
    %10 = sbr.rel (0) target = $region5
  $region4: #{darts_stacked_cells_forward.47} parent=0 // pred_region
    _
  $region5: #{darts_stacked_cells_forward.47} parent=0 // pred_fallthru
    _
  // Predicated region
  $region6: #{darts_stacked_cells_forward.47} parent=0 // pred_check
    _
  $region7: #{darts_stacked_cells_forward.47} parent=0 // pred_check_branch
    %12 = sbr.rel (0) target = $region9
  $region8: #{darts_stacked_cells_forward.47} parent=0 // pred_region
    _
  $region9: #{darts_stacked_cells_forward.47} parent=0 // pred_fallthru
    _
  // Predicated region
  $region10: #{darts_stacked_cells_forward.47} parent=0 // pred_check
    _
  $region11: #{darts_stacked_cells_forward.47} parent=0 // pred_check_branch
    %14 = sbr.rel (0) target = $region13
  $region12: #{darts_stacked_cells_forward.47} parent=0 // pred_region
    _
  $region13: #{darts_stacked_cells_forward.47} parent=0 // pred_fallthru
    _
  // Predicated region
  $region14: #{darts_stacked_cells_forward.47} parent=0 // pred_check
    _
  $region15: #{darts_stacked_cells_forward.47} parent=0 // pred_check_branch
    %16 = sbr.rel (0) target = $region17
  $region16: #{darts_stacked_cells_forward.47} parent=0 // pred_region
    _
  $region17: #{darts_stacked_cells_forward.47} parent=0 // pred_fallthru
    _
  %v18 = vld [vmem:[%s0] sm:$0xf]
  %v19 = vld [vmem:[%s0 + $0x4] sm:$0xf]
  %v20 = vld [vmem:[%s0 + $0x8] sm:$0xf]
  %v21 = vld [vmem:[%s0 + $0xc] sm:$0xf]
  %v22 = vld [vmem:[%s0 + $0x10] sm:$0xf]
  %v23 = vld [vmem:[%s0 + $0x14] sm:$0xf]
  %v24 = vld [vmem:[%s0 + $0x18] sm:$0xf]
  %v25 = vld [vmem:[%s0 + $0x1c] sm:$0xf]
  %v26 = vld [vmem:[%s0 + $0x20] sm:$0xf]
  %v27 = vld [vmem:[%s0 + $0x24] sm:$0xf]
  %v28 = vld [vmem:[%s0 + $0x28] sm:$0xf]
  %v29 = vld [vmem:[%s0 + $0x2c] sm:$0xf]
  %v30 = vld [vmem:[%s0 + $0x30] sm:$0xf]
  %v31 = vld [vmem:[%s0 + $0x34] sm:$0xf]
  %v32 = vld [vmem:[%s0 + $0x38] sm:$0xf]
  %v33 = vld [vmem:[%s0 + $0x3c] sm:$0xf]
  %v34 = vld [vmem:[%s0 + $0x40] sm:$0xf]
  %v35 = vld [vmem:[%s0 + $0x44] sm:$0xf]
  %v36 = vld [vmem:[%s0 + $0x48] sm:$0xf]
  %v37 = vld [vmem:[%s0 + $0x4c] sm:$0xf]
  %v38 = vld [vmem:[%s0 + $0x50] sm:$0xf]
  %v39 = vld [vmem:[%s0 + $0x54] sm:$0xf]
  %v40 = vld [vmem:[%s0 + $0x58] sm:$0xf]
  %v41 = vld [vmem:[%s0 + $0x5c] sm:$0xf]
  %v42 = vld [vmem:[%s0 + $0x60] sm:$0xf]
  %v43 = vld [vmem:[%s1] sm:$0xf]
  %v44 = vld [vmem:[%s1 + $0x4] sm:$0xf]
  %v70 = vunpack.c.l.b16 %v18
  %v71 = vunpack.c.l.b16 %v19
  %v72 = vunpack.c.l.b16 %v20
  %v73 = vunpack.c.l.b16 %v21
  %v74 = vunpack.c.l.b16 %v22
  %v75 = vunpack.c.l.b16 %v23
  %v76 = vunpack.c.l.b16 %v24
  %v77 = vunpack.c.l.b16 %v25
  %v78 = vunpack.c.l.b16 %v26
  %v79 = vunpack.c.l.b16 %v27
  %v80 = vunpack.c.l.b16 %v28
  %v81 = vunpack.c.l.b16 %v29
  %v82 = vunpack.c.l.b16 %v30
  %v83 = vunpack.c.l.b16 %v31
  %v84 = vunpack.c.l.b16 %v32
  %v85 = vunpack.c.l.b16 %v33
  %v86 = vunpack.c.l.b16 %v34
  %v87 = vunpack.c.l.b16 %v35
  %v88 = vunpack.c.l.b16 %v36
  %v89 = vunpack.c.l.b16 %v37
  %v90 = vunpack.c.l.b16 %v38
  %v91 = vunpack.c.l.b16 %v39
  %v92 = vunpack.c.l.b16 %v40
  %v93 = vunpack.c.l.b16 %v41
  %v94 = vunpack.c.l.b16 %v42
  %v95 = vpack.c.b16 %v71, %v70
  %v96 = vpack.c.b16 %v73, %v72
  %v97 = vpack.c.b16 %v75, %v74
  %v98 = vpack.c.b16 %v77, %v76
  %v99 = vpack.c.b16 %v79, %v78
  %v100 = vpack.c.b16 %v81, %v80
  %v101 = vpack.c.b16 %v83, %v82
  %v102 = vpack.c.b16 %v85, %v84
  %v103 = vpack.c.b16 %v87, %v86
  %v104 = vpack.c.b16 %v89, %v88
  %v105 = vpack.c.b16 %v91, %v90
  %v106 = vpack.c.b16 %v93, %v92
  %v107 = vpack.c.b16 %v94, %v94
  %v110 = vunpack.c.l.b16 %v43
  %v111 = vunpack.c.l.b16 %v44
  %v112 = vpack.c.b16 %v111, %v110
  %vm114 = vcmask 130048
  %v116 = vsel %vm114, %v95, 0
  %v119 = vsel %vm114, %v96, 0
  %v122 = vsel %vm114, %v97, 0
  %v125 = vsel %vm114, %v98, 0
  %v128 = vsel %vm114, %v99, 0
  %v131 = vsel %vm114, %v100, 0
  %v134 = vsel %vm114, %v101, 0
  %v137 = vsel %vm114, %v102, 0
  %v140 = vsel %vm114, %v103, 0
  %v143 = vsel %vm114, %v104, 0
  %v146 = vsel %vm114, %v105, 0
  %v149 = vsel %vm114, %v106, 0
  %v152 = vsel %vm114, %v107, 0
  %154 = vmatpush.bf16.msra.mxu0 0
  %155 = vmatpush.bf16.msra.mxu0 0
  %156 = vmatpush.bf16.msra.mxu0 0
  %157 = vmatpush.bf16.msra.mxu0 0
  %158 = vmatpush.bf16.msra.mxu0 0
  %159 = vmatpush.bf16.msra.mxu0 0
  %160 = vmatpush.bf16.msra.mxu0 0
  %161 = vmatpush.bf16.msra.mxu0 %v112
  %162 = vmatmul.bf16.gmra.mxu0 %v116
  %v163 = vpop.f32.mrf.mxu0
  %v164 = vadd.f32 0.0, %v163
  %v165 = vpop.f32.mrf.mxu0
  %v166 = vadd.f32 0.0, %v165
  %167 = vmatmul.bf16.gmra.mxu0 %v119
  %v168 = vpop.f32.mrf.mxu0
  %v169 = vadd.f32 0.0, %v168
  %v170 = vpop.f32.mrf.mxu0
  %v171 = vadd.f32 0.0, %v170
  %172 = vmatmul.bf16.gmra.mxu0 %v122
  %v173 = vpop.f32.mrf.mxu0
  %v174 = vadd.f32 0.0, %v173
  %v175 = vpop.f32.mrf.mxu0
  %v176 = vadd.f32 0.0, %v175
  %177 = vmatmul.bf16.gmra.mxu0 %v125
  %v178 = vpop.f32.mrf.mxu0
  %v179 = vadd.f32 0.0, %v178
  %v180 = vpop.f32.mrf.mxu0
  %v181 = vadd.f32 0.0, %v180
  %182 = vmatmul.bf16.gmra.mxu0 %v128
  %v183 = vpop.f32.mrf.mxu0
  %v184 = vadd.f32 0.0, %v183
  %v185 = vpop.f32.mrf.mxu0
  %v186 = vadd.f32 0.0, %v185
  %187 = vmatmul.bf16.gmra.mxu0 %v131
  %v188 = vpop.f32.mrf.mxu0
  %v189 = vadd.f32 0.0, %v188
  %v190 = vpop.f32.mrf.mxu0
  %v191 = vadd.f32 0.0, %v190
  %192 = vmatmul.bf16.gmra.mxu0 %v134
  %v193 = vpop.f32.mrf.mxu0
  %v194 = vadd.f32 0.0, %v193
  %v195 = vpop.f32.mrf.mxu0
  %v196 = vadd.f32 0.0, %v195
  %197 = vmatmul.bf16.gmra.mxu0 %v137
  %v198 = vpop.f32.mrf.mxu0
  %v199 = vadd.f32 0.0, %v198
  %v200 = vpop.f32.mrf.mxu0
  %v201 = vadd.f32 0.0, %v200
  %202 = vmatmul.bf16.gmra.mxu0 %v140
  %v203 = vpop.f32.mrf.mxu0
  %v204 = vadd.f32 0.0, %v203
  %v205 = vpop.f32.mrf.mxu0
  %v206 = vadd.f32 0.0, %v205
  %207 = vmatmul.bf16.gmra.mxu0 %v143
  %v208 = vpop.f32.mrf.mxu0
  %v209 = vadd.f32 0.0, %v208
  %v210 = vpop.f32.mrf.mxu0
  %v211 = vadd.f32 0.0, %v210
  %212 = vmatmul.bf16.gmra.mxu0 %v146
  %v213 = vpop.f32.mrf.mxu0
  %v214 = vadd.f32 0.0, %v213
  %v215 = vpop.f32.mrf.mxu0
  %v216 = vadd.f32 0.0, %v215
  %217 = vmatmul.bf16.gmra.mxu0 %v149
  %v218 = vpop.f32.mrf.mxu0
  %v219 = vadd.f32 0.0, %v218
  %v220 = vpop.f32.mrf.mxu0
  %v221 = vadd.f32 0.0, %v220
  %222 = vmatmul.bf16.gmra.mxu0 %v152
  %v223 = vpop.f32.mrf.mxu0
  %v224 = vadd.f32 0.0, %v223
  %v225 = vpop.f32.mrf.mxu0
  %226 = vdwg.mxu0
  %v227 = vadd.f32 %v164, %v166
  %v228 = vadd.f32 %v227, %v169
  %v229 = vadd.f32 %v228, %v171
  %v230 = vadd.f32 %v229, %v174
  %v231 = vadd.f32 %v230, %v176
  %v232 = vadd.f32 %v231, %v179
  %v233 = vadd.f32 %v232, %v181
  %v234 = vadd.f32 %v233, %v184
  %v235 = vadd.f32 %v234, %v186
  %v236 = vadd.f32 %v235, %v189
  %v237 = vadd.f32 %v236, %v191
  %v238 = vadd.f32 %v237, %v194
  %v239 = vadd.f32 %v238, %v196
  %v240 = vadd.f32 %v239, %v199
  %v241 = vadd.f32 %v240, %v201
  %v242 = vadd.f32 %v241, %v204
  %v243 = vadd.f32 %v242, %v206
  %v244 = vadd.f32 %v243, %v209
  %v245 = vadd.f32 %v244, %v211
  %v246 = vadd.f32 %v245, %v214
  %v247 = vadd.f32 %v246, %v216
  %v248 = vadd.f32 %v247, %v219
  %v249 = vadd.f32 %v248, %v221
  %v250 = vadd.f32 %v249, %v224
  %v251 = vrot.slane %v250, 4
  %v252 = vadd.f32 %v250, %v251
  %v253 = vrot.slane %v252, 2
  %v254 = vadd.f32 %v252, %v253
  %v255 = vrot.slane %v254, 1
  %v256 = vadd.f32 %v254, %v255
  %v257 = vmul.f32 %v256, 0.005
  %v258 = vmul.f32 %v164, %v164
  %v259 = vmul.f32 %v166, %v166
  %v260 = vmul.f32 %v169, %v169
  %v261 = vmul.f32 %v171, %v171
  %v262 = vmul.f32 %v174, %v174
  %v263 = vmul.f32 %v176, %v176
  %v264 = vmul.f32 %v179, %v179
  %v265 = vmul.f32 %v181, %v181
  %v266 = vmul.f32 %v184, %v184
  %v267 = vmul.f32 %v186, %v186
  %v268 = vmul.f32 %v189, %v189
  %v269 = vmul.f32 %v191, %v191
  %v270 = vmul.f32 %v194, %v194
  %v271 = vmul.f32 %v196, %v196
  %v272 = vmul.f32 %v199, %v199
  %v273 = vmul.f32 %v201, %v201
  %v274 = vmul.f32 %v204, %v204
  %v275 = vmul.f32 %v206, %v206
  %v276 = vmul.f32 %v209, %v209
  %v277 = vmul.f32 %v211, %v211
  %v278 = vmul.f32 %v214, %v214
  %v279 = vmul.f32 %v216, %v216
  %v280 = vmul.f32 %v219, %v219
  %v281 = vmul.f32 %v221, %v221
  %v282 = vmul.f32 %v224, %v224
  %v283 = vadd.f32 %v258, %v259
  %v284 = vadd.f32 %v283, %v260
  %v285 = vadd.f32 %v284, %v261
  %v286 = vadd.f32 %v285, %v262
  %v287 = vadd.f32 %v286, %v263
  %v288 = vadd.f32 %v287, %v264
  %v289 = vadd.f32 %v288, %v265
  %v290 = vadd.f32 %v289, %v266
  %v291 = vadd.f32 %v290, %v267
  %v292 = vadd.f32 %v291, %v268
  %v293 = vadd.f32 %v292, %v269
  %v294 = vadd.f32 %v293, %v270
  %v295 = vadd.f32 %v294, %v271
  %v296 = vadd.f32 %v295, %v272
  %v297 = vadd.f32 %v296, %v273
  %v298 = vadd.f32 %v297, %v274
  %v299 = vadd.f32 %v298, %v275
  %v300 = vadd.f32 %v299, %v276
  %v301 = vadd.f32 %v300, %v277
  %v302 = vadd.f32 %v301, %v278
  %v303 = vadd.f32 %v302, %v279
  %v304 = vadd.f32 %v303, %v280
  %v305 = vadd.f32 %v304, %v281
  %v306 = vadd.f32 %v305, %v282
  %v307 = vrot.slane %v306, 4
  %v308 = vadd.f32 %v306, %v307
  %v309 = vrot.slane %v308, 2
  %v310 = vadd.f32 %v308, %v309
  %v311 = vrot.slane %v310, 1
  %v312 = vadd.f32 %v310, %v311
  %v313 = vmul.f32 %v312, 0.005
  %v314 = vmul.f32 %v257, %v257
  %v315 = vsub.f32 %v313, %v314
  %v316 = vmax.f32 %v315, 0.0
  %v317 = vld [vmem:[%s2] sm:$0x1]
  %v318 = vadd.f32 %v316, 1e-05
  %v319 = vrsqrt.pop %v318
  %v320 = vmul.f32 %v319, %v318
  %v321 = vmul.f32 %v320, %v319
  %v322 = vmul.f32 0.5, %v321
  %v323 = vsub.f32 1.5, %v322
  %v324 = vmul.f32 %v319, %v323
  %vm325 = vweird.f32 %v318
  %vm326 = vweird.f32 %v319
  %vm327 = vmor %vm325, %vm326
  %v328 = vsel %vm327, %v319, %v324
  %v329 = vmul.f32 %v317, %v328
  %v331 = vperm.slane %v329, 0
  %v333 = vmul.f32 %v164, %v331
  %v334 = vmul.f32 %v166, %v331
  %v335 = vmul.f32 %v169, %v331
  %v336 = vmul.f32 %v171, %v331
  %v337 = vmul.f32 %v174, %v331
  %v338 = vmul.f32 %v176, %v331
  %v339 = vmul.f32 %v179, %v331
  %v340 = vmul.f32 %v181, %v331
  %v341 = vmul.f32 %v184, %v331
  %v342 = vmul.f32 %v186, %v331
  %v343 = vmul.f32 %v189, %v331
  %v344 = vmul.f32 %v191, %v331
  %v345 = vmul.f32 %v194, %v331
  %v346 = vmul.f32 %v196, %v331
  %v347 = vmul.f32 %v199, %v331
  %v348 = vmul.f32 %v201, %v331
  %v349 = vmul.f32 %v204, %v331
  %v350 = vmul.f32 %v206, %v331
  %v351 = vmul.f32 %v209, %v331
  %v352 = vmul.f32 %v211, %v331
  %v353 = vmul.f32 %v214, %v331
  %v354 = vmul.f32 %v216, %v331
  %v355 = vmul.f32 %v219, %v331
  %v356 = vmul.f32 %v221, %v331
  %v357 = vmul.f32 %v224, %v331
  %v358 = vld [vmem:[%s3] sm:$0x1]
  %v359 = vmul.f32 %v257, %v329
  %v360 = vsub.f32 %v358, %v359
  %v362 = vperm.slane %v360, 0
  %v364 = vadd.f32 %v333, %v362
  %v365 = vadd.f32 %v334, %v362
  %v366 = vadd.f32 %v335, %v362
  %v367 = vadd.f32 %v336, %v362
  %v368 = vadd.f32 %v337, %v362
  %v369 = vadd.f32 %v338, %v362
  %v370 = vadd.f32 %v339, %v362
  %v371 = vadd.f32 %v340, %v362
  %v372 = vadd.f32 %v341, %v362
  %v373 = vadd.f32 %v342, %v362
  %v374 = vadd.f32 %v343, %v362
  %v375 = vadd.f32 %v344, %v362
  %v376 = vadd.f32 %v345, %v362
  %v377 = vadd.f32 %v346, %v362
  %v378 = vadd.f32 %v347, %v362
  %v379 = vadd.f32 %v348, %v362
  %v380 = vadd.f32 %v349, %v362
  %v381 = vadd.f32 %v350, %v362
  %v382 = vadd.f32 %v351, %v362
  %v383 = vadd.f32 %v352, %v362
  %v384 = vadd.f32 %v353, %v362
  %v385 = vadd.f32 %v354, %v362
  %v386 = vadd.f32 %v355, %v362
  %v387 = vadd.f32 %v356, %v362
  %v388 = vadd.f32 %v357, %v362
  %v389 = vmax.f32 %v364, 0.0
  %v390 = vmax.f32 %v365, 0.0
  %v391 = vmax.f32 %v366, 0.0
  %v392 = vmax.f32 %v367, 0.0
  %v393 = vmax.f32 %v368, 0.0
  %v394 = vmax.f32 %v369, 0.0
  %v395 = vmax.f32 %v370, 0.0
  %v396 = vmax.f32 %v371, 0.0
  %v397 = vmax.f32 %v372, 0.0
  %v398 = vmax.f32 %v373, 0.0
  %v399 = vmax.f32 %v374, 0.0
  %v400 = vmax.f32 %v375, 0.0
  %v401 = vmax.f32 %v376, 0.0
  %v402 = vmax.f32 %v377, 0.0
  %v403 = vmax.f32 %v378, 0.0
  %v404 = vmax.f32 %v379, 0.0
  %v405 = vmax.f32 %v380, 0.0
  %v406 = vmax.f32 %v381, 0.0
  %v407 = vmax.f32 %v382, 0.0
  %v408 = vmax.f32 %v383, 0.0
  %v409 = vmax.f32 %v384, 0.0
  %v410 = vmax.f32 %v385, 0.0
  %v411 = vmax.f32 %v386, 0.0
  %v412 = vmax.f32 %v387, 0.0
  %v413 = vmax.f32 %v388, 0.0
  %v414 = vpack.c.bf16 %v389, %v389
  %v415 = vpack.c.bf16 %v390, %v390
  %v416 = vpack.c.bf16 %v391, %v391
  %v417 = vpack.c.bf16 %v392, %v392
  %v418 = vpack.c.bf16 %v393, %v393
  %v419 = vpack.c.bf16 %v394, %v394
  %v420 = vpack.c.bf16 %v395, %v395
  %v421 = vpack.c.bf16 %v396, %v396
  %v422 = vpack.c.bf16 %v397, %v397
  %v423 = vpack.c.bf16 %v398, %v398
  %v424 = vpack.c.bf16 %v399, %v399
  %v425 = vpack.c.bf16 %v400, %v400
  %v426 = vpack.c.bf16 %v401, %v401
  %v427 = vpack.c.bf16 %v402, %v402
  %v428 = vpack.c.bf16 %v403, %v403
  %v429 = vpack.c.bf16 %v404, %v404
  %v430 = vpack.c.bf16 %v405, %v405
  %v431 = vpack.c.bf16 %v406, %v406
  %v432 = vpack.c.bf16 %v407, %v407
  %v433 = vpack.c.bf16 %v408, %v408
  %v434 = vpack.c.bf16 %v409, %v409
  %v435 = vpack.c.bf16 %v410, %v410
  %v436 = vpack.c.bf16 %v411, %v411
  %v437 = vpack.c.bf16 %v412, %v412
  %v438 = vpack.c.bf16 %v413, %v413
  %439 = vst [vmem:[%s4] sm:$0xf] %v414
  %440 = vst [vmem:[%s4 + $0x4] sm:$0xf] %v415
  %441 = vst [vmem:[%s4 + $0x8] sm:$0xf] %v416
  %442 = vst [vmem:[%s4 + $0xc] sm:$0xf] %v417
  %443 = vst [vmem:[%s4 + $0x10] sm:$0xf] %v418
  %444 = vst [vmem:[%s4 + $0x14] sm:$0xf] %v419
  %445 = vst [vmem:[%s4 + $0x18] sm:$0xf] %v420
  %446 = vst [vmem:[%s4 + $0x1c] sm:$0xf] %v421
  %447 = vst [vmem:[%s4 + $0x20] sm:$0xf] %v422
  %448 = vst [vmem:[%s4 + $0x24] sm:$0xf] %v423
  %449 = vst [vmem:[%s4 + $0x28] sm:$0xf] %v424
  %450 = vst [vmem:[%s4 + $0x2c] sm:$0xf] %v425
  %451 = vst [vmem:[%s4 + $0x30] sm:$0xf] %v426
  %452 = vst [vmem:[%s4 + $0x34] sm:$0xf] %v427
  %453 = vst [vmem:[%s4 + $0x38] sm:$0xf] %v428
  %454 = vst [vmem:[%s4 + $0x3c] sm:$0xf] %v429
  %455 = vst [vmem:[%s4 + $0x40] sm:$0xf] %v430
  %456 = vst [vmem:[%s4 + $0x44] sm:$0xf] %v431
  %457 = vst [vmem:[%s4 + $0x48] sm:$0xf] %v432
  %458 = vst [vmem:[%s4 + $0x4c] sm:$0xf] %v433
  %459 = vst [vmem:[%s4 + $0x50] sm:$0xf] %v434
  %460 = vst [vmem:[%s4 + $0x54] sm:$0xf] %v435
  %461 = vst [vmem:[%s4 + $0x58] sm:$0xf] %v436
  %462 = vst [vmem:[%s4 + $0x5c] sm:$0xf] %v437
  %463 = vst [vmem:[%s4 + $0x60] sm:$0xf] %v438
  // Predicated region
  $region18: #{darts_stacked_cells_forward.47} parent=0 // pred_check
    _
  $region19: #{darts_stacked_cells_forward.47} parent=0 // pred_check_branch
    %465 = sbr.rel (0) target = $region21
  $region20: #{darts_stacked_cells_forward.47} parent=0 // pred_region
    _
  $region21: #{darts_stacked_cells_forward.47} parent=0 // pred_fallthru
    _
  // Predicated region
  $region22: #{darts_stacked_cells_forward.47} parent=0 // pred_check
    _
  $region23: #{darts_stacked_cells_forward.47} parent=0 // pred_check_branch
    %467 = sbr.rel (0) target = $region25
  $region24: #{darts_stacked_cells_forward.47} parent=0 // pred_region
    _
  $region25: #{darts_stacked_cells_forward.47} parent=0 // pred_fallthru
    _

// kernel: darts_stacked_cells_forward.51
$region0: #{darts_stacked_cells_forward.51}
  #allocation0 [shape = 'u32[]', space=smem, size = 0x4, offset = 0x4, fixed_abs, tag = 'smem constant byte address 0x4 - core index']
  #allocation1 [shape = 'u32[72,128]{1,0:T(1,128)}', space=vmem, size = 0x9000, scoped, tag = 'internal scratch']
  %s0 = inlined_call_operand.vmem [shape: bf16[2,25,32], index: 0, kind: input, shape index: {}]
  %s1 = inlined_call_operand.vmem [shape: f32[32,10], index: 1, kind: input, shape index: {}]
  %s2 = inlined_call_operand.vmem [shape: f32[1,10], index: 2, kind: input, shape index: {}]
  %s3 = inlined_call_operand.hbm [shape: f32[2,10], index: 3, kind: output, shape index: {}]
  %s4 = sld [smem:[#allocation0]]
  $region22: #{darts_stacked_cells_forward.51} parent=0
    _
  %s6 = ssub.s32 1, %s4
  %s7 = scalar_select 0, %s6, %s4
  $region1: #{darts_stacked_cells_forward.51} parent=0
    #allocation2 [shape = 'u8[1024]{0}', space=vmem, size = 0x400, scoped, tag = 'output window, operand 0, single buffered']
    #allocation3 [shape = 's32[1]{0}', space=sflag, size = 0x4, scoped, tag = 'scoped memory for darts_stacked_cells_forward.51']
    %8 = vsyncpa [#allocation3], 0
    // Predicated region
    $region2: #{darts_stacked_cells_forward.51} parent=1 // pred_check
      _
    $region3: #{darts_stacked_cells_forward.51} parent=1 // pred_check_branch
      %10 = sbr.rel (0) target = $region5
    $region4: #{darts_stacked_cells_forward.51} parent=1 // pred_region
      _
    $region5: #{darts_stacked_cells_forward.51} parent=1 // pred_fallthru
      _
    // Predicated region
    $region6: #{darts_stacked_cells_forward.51} parent=1 // pred_check
      _
    $region7: #{darts_stacked_cells_forward.51} parent=1 // pred_check_branch
      %12 = sbr.rel (0) target = $region9
    $region8: #{darts_stacked_cells_forward.51} parent=1 // pred_region
      _
    $region9: #{darts_stacked_cells_forward.51} parent=1 // pred_fallthru
      _
    // Predicated region
    $region10: #{darts_stacked_cells_forward.51} parent=1 // pred_check
      _
    $region11: #{darts_stacked_cells_forward.51} parent=1 // pred_check_branch
      %14 = sbr.rel (0) target = $region13
    $region12: #{darts_stacked_cells_forward.51} parent=1 // pred_region
      _
    $region13: #{darts_stacked_cells_forward.51} parent=1 // pred_fallthru
      _
    %v15 = vld [vmem:[%s0] sm:$0xf]
    %v16 = vld [vmem:[%s0 + $0x4] sm:$0xf]
    %v17 = vld [vmem:[%s0 + $0x8] sm:$0xf]
    %v18 = vld [vmem:[%s0 + $0xc] sm:$0x1]
    %v19 = vld [vmem:[%s0 + $0x10] sm:$0xf]
    %v20 = vld [vmem:[%s0 + $0x14] sm:$0xf]
    %v21 = vld [vmem:[%s0 + $0x18] sm:$0xf]
    %v22 = vld [vmem:[%s0 + $0x1c] sm:$0x1]
    %v23 = vunpack.c.l.bf16 %v15
    %v24 = vunpack.c.l.bf16 %v16
    %v25 = vunpack.c.l.bf16 %v17
    %v26 = vunpack.c.l.bf16 %v18
    %v27 = vunpack.c.l.bf16 %v19
    %v28 = vunpack.c.l.bf16 %v20
    %v29 = vunpack.c.l.bf16 %v21
    %v30 = vunpack.c.l.bf16 %v22
    %vm31 = vcmask 261120
    %v32 = vsel %vm31, %v23, 0.0
    %v33 = vsel %vm31, %v24, 0.0
    %v34 = vadd.f32 %v32, %v33
    %v35 = vsel %vm31, %v25, 0.0
    %v36 = vadd.f32 %v34, %v35
    %vm37 = vcmask 253952
    %v38 = vsel %vm37, %v26, 0.0
    %v39 = vadd.f32 %v36, %v38
    %v40 = vrot.slane %v39, 4
    %v41 = vadd.f32 %v39, %v40
    %v42 = vrot.slane %v41, 2
    %v43 = vadd.f32 %v41, %v42
    %v44 = vrot.slane %v43, 1
    %v45 = vadd.f32 %v43, %v44
    %v46 = vsel %vm31, %v27, 0.0
    %v47 = vsel %vm31, %v28, 0.0
    %v48 = vadd.f32 %v46, %v47
    %v49 = vsel %vm31, %v29, 0.0
    %v50 = vadd.f32 %v48, %v49
    %v51 = vsel %vm37, %v30, 0.0
    %v52 = vadd.f32 %v50, %v51
    %v53 = vrot.slane %v52, 4
    %v54 = vadd.f32 %v52, %v53
    %v55 = vrot.slane %v54, 2
    %v56 = vadd.f32 %v54, %v55
    %v57 = vrot.slane %v56, 1
    %v58 = vadd.f32 %v56, %v57
    %v59 = vrcp.pop 25.0
    %v60 = vmul.f32 25.0, %v59
    %v61 = vsub.f32 1.0, %v60
    %v62 = vmul.f32 %v59, %v61
    %v63 = vadd.f32 %v59, %v62
    %vm64 = vweird.f32 %v59
    %v65 = vsel %vm64, %v59, %v63
    %v66 = vmul.f32 %v45, %v65
    %v67 = vmul.f32 %v58, %v65
    %v68 = vld [vmem:[%s1] sm:$0xff]
    %v69 = vld [vmem:[%s1 + $0x8] sm:$0xff]
    %v70 = vld [vmem:[%s1 + $0x10] sm:$0xff]
    %v71 = vld [vmem:[%s1 + $0x18] sm:$0xff]
    %v72 = vld [vmem:[%s2] sm:$0x1]
    %v74 = vperm.slane %v72, 0
    %vm78 = vcmask 1041409
    %v79 = vsel %vm78, %v67, %v66
    %v80 = vsel %vm31, %v79, 0
    %82 = vmatpush.msra.mxu0 0.0
    %83 = vmatpush.msra.mxu0 0.0
    %84 = vmatpush.msra.mxu0 0.0
    %85 = vmatpush.msra.mxu0 0.0
    %86 = vmatpush.msra.mxu0 0.0
    %87 = vmatpush.msra.mxu0 0.0
    %88 = vmatpush.msra.mxu0 0.0
    %89 = vmatpush.msra.mxu0 0.0
    %90 = vmatpush.msra.mxu0 0.0
    %91 = vmatpush.msra.mxu0 0.0
    %92 = vmatpush.msra.mxu0 0.0
    %93 = vmatpush.msra.mxu0 0.0
    %94 = vmatpush.msra.mxu0 %v71
    %95 = vmatpush.msra.mxu0 %v70
    %96 = vmatpush.msra.mxu0 %v69
    %97 = vmatpush.msra.mxu0 %v68
    %98 = vmatmul.f32.gmra.mxu0 %v80
    %v99 = vpop.f32.mrf.mxu0
    %v100 = vadd.f32 %v74, %v99
    %101 = vdwg.mxu0
    %vm102 = vcmask 74752
    %103 = vst.msk [vmem:[#allocation2] sm:$0x3] %vm102, %v100
    // Predicated region
    $region14: #{darts_stacked_cells_forward.51} parent=1 // pred_check
      _
    $region15: #{darts_stacked_cells_forward.51} parent=1 // pred_check_branch
      %105 = sbr.rel (0) target = $region17
    $region16: #{darts_stacked_cells_forward.51} parent=1 // pred_region
      %107 = vsyncadd [#allocation3], 0
      %s109 = sshll.u32 [#allocation2], 4
      %s110 = int_to_ptr.vmem [resolvable:$true] %s109
      %s111 = sshll.u32 %s3, 4
      %s112 = int_to_ptr.hbm [resolvable:$true] %s111
      %114 = dma.vmem_to_hbm [thread:$0]  %s110, 32, %s112, [#allocation3]
    $region17: #{darts_stacked_cells_forward.51} parent=1 // pred_fallthru
      _
    // Predicated region
    $region18: #{darts_stacked_cells_forward.51} parent=1 // pred_check
      _
    $region19: #{darts_stacked_cells_forward.51} parent=1 // pred_check_branch
      %116 = sbr.rel (0) target = $region21
    $region20: #{darts_stacked_cells_forward.51} parent=1 // pred_region
      %118 = dma.done [#allocation3], 32
    $region21: #{darts_stacked_cells_forward.51} parent=1 // pred_fallthru
      _
    %119 = vsyncpa [#allocation3], 1

</llo_original>
